<compile_context>
chip_gen: v5e
topology: v5e:2x2
jax: 0.10.0
libtpu: 0.0.40
codegen_flags: <defaults>
</compile_context>

<pallas_src>
import functools

import jax
import jax.numpy as jnp
from jax.experimental import pallas as pl
from jax.experimental.pallas import tpu as pltpu

NUM_CLASSES = 2
OUT_PAD = 128          # lane-dense padded logits width (sliced to NUM_CLASSES on host)

# Only the big mid-layer weights go to bf16; tiny / accuracy-critical ones stay f32.
_BF16_WEIGHT_IDX = {2, 4, 6, 8, 14, 16, 18, 20}


# --------------------------------------------------------------------------------------
# Generation-aware configuration
# --------------------------------------------------------------------------------------
def _chip_config():
    try:
        kind = jax.devices()[0].device_kind.lower()
    except Exception:
        kind = ""
    if "v5" in kind:
        # v5e: 128 MiB VMEM, no bf16 VPU -> keep f32 elementwise, cast at matmul boundary.
        return dict(act_dtype=jnp.float32, vmem_limit=96 * 1024 * 1024, rows_target=2048)
    if "v6" in kind:
        # v6e: 128 MiB VMEM, native bf16 VPU -> bf16 activations.
        return dict(act_dtype=jnp.bfloat16, vmem_limit=96 * 1024 * 1024, rows_target=2048)
    if "7" in kind:
        # v7x: only 64 MiB VMEM -> stay under ~48 MiB; bf16 activations halve the slabs.
        return dict(act_dtype=jnp.bfloat16, vmem_limit=48 * 1024 * 1024, rows_target=2048)
    # Unknown chip: conservative (default scoped VMEM limit).
    return dict(act_dtype=jnp.float32, vmem_limit=None, rows_target=512)


def _round_up(v, m):
    return -(-v // m) * m


def _choose_b_tile(batch, n_pts, rows_target):
    """Samples per grid step.

    Targets M = b_tile * n_pts in the 512-2048 row range (MXU row fill), stays a multiple
    of 8 (sublane / out_specs constraint) and leaves >=2 grid steps when the batch allows
    it so v7x megacore sharding has work for both TensorCores.
    """
    bt = max(8, (rows_target // max(n_pts, 1)) // 8 * 8)
    half_batch = max(8, _round_up(max(_round_up(batch, 2) // 2, 1), 8))
    return max(8, min(bt, half_batch))


# --------------------------------------------------------------------------------------
# Kernel
# --------------------------------------------------------------------------------------
def _mm(a, w_ref):
    """MXU matmul with f32 accumulation; LHS cast to the weight dtype."""
    w = w_ref[...]
    return jnp.dot(a.astype(w.dtype), w, preferred_element_type=jnp.float32)


def _layer(a, w_ref, b_ref, act_dtype):
    """matmul + bias + ReLU, activation stored in act_dtype."""
    return jnp.maximum(_mm(a, w_ref) + b_ref[...], 0.0).astype(act_dtype)


def _k4_fma(x3, w_rows, bias, act_dtype):
    """(bt, N, 4) x (4, Cout) contraction done as 4 VPU broadcast FMAs instead of a K=4
    MXU pass (a 4-deep contraction wastes almost the whole 256-deep MXU pass)."""
    acc = (x3[:, :, 0:1] * w_rows[0:1, :]
           + x3[:, :, 1:2] * w_rows[1:2, :]
           + x3[:, :, 2:3] * w_rows[2:3, :]
           + x3[:, :, 3:4] * w_rows[3:4, :])                    # (bt, N, Cout) f32
    acc = jnp.maximum(acc + bias, 0.0).astype(act_dtype)
    bt, n, co = acc.shape
    return acc.reshape(bt * n, co)


def pointnet_kernel(
    x_ref,
    # feature-transform TNet params
    tw1, tb1, tw2, tb2, tw3, tb3, tfw1, tfb1, tfw2, tfb2, tfw3, tfb3,
    # main trunk params (fw3 / fb3 lane-padded to OUT_PAD columns)
    w1, b1, w2, b2, w3, b3, fw1, fb1, fw2, fb2, fw3, fb3,
    out_ref,
    *, n_pts, act_dtype,
):
    x = x_ref[...]                                     # (M, 4) f32, M = b_tile * n_pts
    m, c_dim = x.shape
    bt = m // n_pts
    x3 = x.reshape(bt, n_pts, c_dim)                   # (bt, N, 4) f32

    # ---------------- TNet (feature_transform) ----------------
    th = _k4_fma(x3, tw1[...], tb1[...], act_dtype)    # (M, 64)   layer 1 on the VPU
    th = _layer(th, tw2, tb2, act_dtype)               # (M, 128)
    th = _layer(th, tw3, tb3, act_dtype)               # (M, 1024)
    tg = jnp.max(th.reshape(bt, n_pts, th.shape[-1]), axis=1)     # (bt, 1024)
    tf = _layer(tg, tfw1, tfb1, act_dtype)             # (bt, 512)
    tf = _layer(tf, tfw2, tfb2, act_dtype)             # (bt, 256)
    # TNet head kept in f32 (tiny; its output multiplies every input point).
    # tfw3 / tfb3 columns are pre-permuted on host so that t[:, 4*j + i] == trans[:, i, j].
    t = _mm(tf, tfw3) + tfb3[...]                      # (bt, 16) f32

    # ---------------- y = bmm(trans, x), per sample, in f32 ----------------
    # y[b, n, i] = sum_j trans[b, i, j] * x[b, n, j]  ==  sum_j x3[b,n,j] * t[b, 4*j + i]
    y3 = (x3[:, :, 0:1] * t[:, None, 0:4]
          + x3[:, :, 1:2] * t[:, None, 4:8]
          + x3[:, :, 2:3] * t[:, None, 8:12]
          + x3[:, :, 3:4] * t[:, None, 12:16])         # (bt, N, 4) f32

    # ---------------- main trunk ----------------
    h = _k4_fma(y3, w1[...], b1[...], act_dtype)       # (M, 64)   layer 1 on the VPU
    h = _layer(h, w2, b2, act_dtype)                   # (M, 128)
    h = _layer(h, w3, b3, act_dtype)                   # (M, 1024)
    g = jnp.max(h.reshape(bt, n_pts, h.shape[-1]), axis=1)        # (bt, 1024)
    f = _layer(g, fw1, fb1, act_dtype)                 # (bt, 512)
    f = _layer(f, fw2, fb2, act_dtype)                 # (bt, 256)
    out_ref[...] = _mm(f, fw3) + fb3[...]              # (bt, OUT_PAD) f32, lane-dense store


# --------------------------------------------------------------------------------------
# Host wrapper
# --------------------------------------------------------------------------------------
def pointnet_cls_pallas(x_bnc, flat_params):
    """x_bnc: (B, N, 4) float32 (i.e. the PyTorch (B, 4, N) input transposed)."""
    B, N, C = x_bnc.shape
    assert C == 4

    cfg = _chip_config()
    act_dtype = cfg["act_dtype"]

    # ---- host-side parameter prep (layout / dtype only; no semantic change) ----
    params = list(flat_params)
    # PyTorch: trans = t.view(-1, 4, 4) row-major -> trans[i, j] = t[4*i + j].
    # Permute the TNet head columns so the kernel sees t[:, 4*j + i] == trans[:, i, j].
    perm = jnp.array([4 * (p % 4) + p // 4 for p in range(16)], dtype=jnp.int32)
    params[10] = params[10][:, perm]                   # tfw3
    params[11] = params[11][:, perm]                   # tfb3
    # Pad the classifier head to a lane-dense OUT_PAD-wide output.
    fw3, fb3 = params[22], params[23]
    params[22] = jnp.pad(fw3, ((0, 0), (0, OUT_PAD - fw3.shape[1])))
    params[23] = jnp.pad(fb3, ((0, 0), (0, OUT_PAD - fb3.shape[1])))
    # Big mid-layer weights -> bf16 (fast MXU path, half the VMEM); everything else f32.
    prepped = [p.astype(jnp.bfloat16) if i in _BF16_WEIGHT_IDX else p.astype(jnp.float32)
               for i, p in enumerate(params)]

    # ---- batch tiling (padded samples are sliced off afterwards) ----
    b_tile = _choose_b_tile(B, N, cfg["rows_target"])
    num_tiles = pl.cdiv(B, b_tile)
    B_pad = num_tiles * b_tile
    if B_pad != B:
        x_bnc = jnp.pad(x_bnc, ((0, B_pad - B), (0, 0), (0, 0)))
    x2d = x_bnc.reshape(B_pad * N, C)

    x_spec = pl.BlockSpec((b_tile * N, C), lambda i: (i, 0))
    param_specs = [pl.BlockSpec(p.shape, lambda i: (0, 0)) for p in prepped]

    out = pl.pallas_call(
        functools.partial(pointnet_kernel, n_pts=N, act_dtype=act_dtype),
        out_shape=jax.ShapeDtypeStruct((B_pad, OUT_PAD), jnp.float32),
        grid=(num_tiles,),
        in_specs=[x_spec] + param_specs,
        out_specs=pl.BlockSpec((b_tile, OUT_PAD), lambda i: (i, 0)),
        compiler_params=pltpu.CompilerParams(
            dimension_semantics=("parallel",),
            vmem_limit_bytes=cfg["vmem_limit"],
        ),
    )(x2d, *prepped)
    return out[:B, :NUM_CLASSES]


# --------------------------------------------------------------------------------------
# Parameters / pure-JAX reference
# --------------------------------------------------------------------------------------
def init_params(key):
    """Deterministic PyTorch-style uniform(-1/sqrt(fan_in), 1/sqrt(fan_in)) init.

    Returns flat list in kernel order:
      [tw1, tb1, tw2, tb2, tw3, tb3, tfw1, tfb1, tfw2, tfb2, tfw3, tfb3,
       w1,  b1,  w2,  b2,  w3,  b3,  fw1,  fb1,  fw2,  fb2,  fw3,  fb3]
    Weights are stored as (Cin, Cout) == PyTorch weight.T (conv kernel dim squeezed).
    """
    dims = [
        (4, 64), (64, 128), (128, 1024), (1024, 512), (512, 256), (256, 16),           # feature TNet
        (4, 64), (64, 128), (128, 1024), (1024, 512), (512, 256), (256, NUM_CLASSES),  # main trunk
    ]
    keys = jax.random.split(key, len(dims))
    flat = []
    for k, (fi, fo) in zip(keys, dims):
        kw, kb = jax.random.split(k)
        bound = fi ** -0.5
        w = jax.random.uniform(kw, (fi, fo), jnp.float32, -bound, bound)
        b = jax.random.uniform(kb, (1, fo), jnp.float32, -bound, bound)
        flat += [w, b]
    return flat


def pointnet_ref(x, flat):
    """Pure-JAX f32 reference of the PyTorch forward (same (B, N, C) layout)."""
    (tw1, tb1, tw2, tb2, tw3, tb3, tfw1, tfb1, tfw2, tfb2, tfw3, tfb3,
     w1, b1, w2, b2, w3, b3, fw1, fb1, fw2, fb2, fw3, fb3) = flat
    hp = jax.lax.Precision.HIGHEST
    mm = lambda a, b: jnp.matmul(a, b, precision=hp)
    relu = jax.nn.relu
    B = x.shape[0]

    h = relu(mm(x, tw1) + tb1)
    h = relu(mm(h, tw2) + tb2)
    h = relu(mm(h, tw3) + tb3)
    g = jnp.max(h, axis=1, keepdims=True)          # (B, 1, 1024)
    f = relu(mm(g, tfw1) + tfb1)
    f = relu(mm(f, tfw2) + tfb2)
    t = mm(f, tfw3) + tfb3                         # (B, 1, 16)
    trans = t.reshape(B, 4, 4)

    y = jnp.einsum("bij,bnj->bni", trans, x, precision=hp)   # torch.bmm(trans, k)

    h = relu(mm(y, w1) + b1)
    h = relu(mm(h, w2) + b2)
    h = relu(mm(h, w3) + b3)
    g = jnp.max(h, axis=1, keepdims=True)
    f = relu(mm(g, fw1) + fb1)
    f = relu(mm(f, fw2) + fb2)
    out = mm(f, fw3) + fb3                         # (B, 1, NUM_CLASSES)
    return out[:, 0, :]


if __name__ == "__main__":
    key = jax.random.PRNGKey(0)
    kx, kp = jax.random.split(key)

    B, C, N = 2, 4, 16                              # PyTorch input (B, 4, N)
    x_torch_layout = jax.random.normal(kx, (B, C, N), jnp.float32)
    x_bnc = jnp.transpose(x_torch_layout, (0, 2, 1))  # kernel layout (B, N, 4)

    params = init_params(kp)

    out = jax.block_until_ready(pointnet_cls_pallas(x_bnc, params))
    ref = jax.block_until_ready(pointnet_ref(x_bnc, params))

    assert out.shape == (B, NUM_CLASSES), out.shape
    # Tolerances account for bf16 mid-layer weights / bf16 activations (f32 accumulation,
    # f32 TNet / classifier heads).
    if not jnp.allclose(out, ref, rtol=5e-2, atol=3e-2):
        raise AssertionError(f"mismatch:\nkernel={out}\nref={ref}")

    print("KERNEL_OK")
</pallas_src>

<mosaic_0001>
module attributes {stable_mosaic.version = 11 : i64} {
  func.func @pointnet_kernel(%arg0: i32, %arg1: memref<128x4xf32, #tpu.memory_space<vmem>>, %arg2: memref<4x64xf32, #tpu.memory_space<vmem>>, %arg3: memref<1x64xf32, #tpu.memory_space<vmem>>, %arg4: memref<64x128xbf16, #tpu.memory_space<vmem>>, %arg5: memref<1x128xf32, #tpu.memory_space<vmem>>, %arg6: memref<128x1024xbf16, #tpu.memory_space<vmem>>, %arg7: memref<1x1024xf32, #tpu.memory_space<vmem>>, %arg8: memref<1024x512xbf16, #tpu.memory_space<vmem>>, %arg9: memref<1x512xf32, #tpu.memory_space<vmem>>, %arg10: memref<512x256xbf16, #tpu.memory_space<vmem>>, %arg11: memref<1x256xf32, #tpu.memory_space<vmem>>, %arg12: memref<256x16xf32, #tpu.memory_space<vmem>>, %arg13: memref<1x16xf32, #tpu.memory_space<vmem>>, %arg14: memref<4x64xf32, #tpu.memory_space<vmem>>, %arg15: memref<1x64xf32, #tpu.memory_space<vmem>>, %arg16: memref<64x128xbf16, #tpu.memory_space<vmem>>, %arg17: memref<1x128xf32, #tpu.memory_space<vmem>>, %arg18: memref<128x1024xbf16, #tpu.memory_space<vmem>>, %arg19: memref<1x1024xf32, #tpu.memory_space<vmem>>, %arg20: memref<1024x512xbf16, #tpu.memory_space<vmem>>, %arg21: memref<1x512xf32, #tpu.memory_space<vmem>>, %arg22: memref<512x256xbf16, #tpu.memory_space<vmem>>, %arg23: memref<1x256xf32, #tpu.memory_space<vmem>>, %arg24: memref<256x128xf32, #tpu.memory_space<vmem>>, %arg25: memref<1x128xf32, #tpu.memory_space<vmem>>, %arg26: memref<8x128xf32, #tpu.memory_space<vmem>>) attributes {dimension_semantics = [#tpu.dimension_semantics<parallel>], iteration_bounds = array<i64: 1>, scalar_prefetch = 0 : i64, scratch_operands = 0 : i64, tpu.core_type = #tpu.core_type<tc>, window_params = [{transform_indices = @transform_0, window_bounds = array<i64: 128, 4>}, {pipeline_mode = #tpu.pipeline_mode<synchronous>, transform_indices = @transform_1, window_bounds = array<i64: 4, 64>}, {pipeline_mode = #tpu.pipeline_mode<synchronous>, transform_indices = @transform_2, window_bounds = array<i64: 1, 64>}, {pipeline_mode = #tpu.pipeline_mode<synchronous>, transform_indices = @transform_3, window_bounds = array<i64: 64, 128>}, {pipeline_mode = #tpu.pipeline_mode<synchronous>, transform_indices = @transform_4, window_bounds = array<i64: 1, 128>}, {pipeline_mode = #tpu.pipeline_mode<synchronous>, transform_indices = @transform_5, window_bounds = array<i64: 128, 1024>}, {pipeline_mode = #tpu.pipeline_mode<synchronous>, transform_indices = @transform_6, window_bounds = array<i64: 1, 1024>}, {pipeline_mode = #tpu.pipeline_mode<synchronous>, transform_indices = @transform_7, window_bounds = array<i64: 1024, 512>}, {pipeline_mode = #tpu.pipeline_mode<synchronous>, transform_indices = @transform_8, window_bounds = array<i64: 1, 512>}, {pipeline_mode = #tpu.pipeline_mode<synchronous>, transform_indices = @transform_9, window_bounds = array<i64: 512, 256>}, {pipeline_mode = #tpu.pipeline_mode<synchronous>, transform_indices = @transform_10, window_bounds = array<i64: 1, 256>}, {pipeline_mode = #tpu.pipeline_mode<synchronous>, transform_indices = @transform_11, window_bounds = array<i64: 256, 16>}, {pipeline_mode = #tpu.pipeline_mode<synchronous>, transform_indices = @transform_12, window_bounds = array<i64: 1, 16>}, {pipeline_mode = #tpu.pipeline_mode<synchronous>, transform_indices = @transform_13, window_bounds = array<i64: 4, 64>}, {pipeline_mode = #tpu.pipeline_mode<synchronous>, transform_indices = @transform_14, window_bounds = array<i64: 1, 64>}, {pipeline_mode = #tpu.pipeline_mode<synchronous>, transform_indices = @transform_15, window_bounds = array<i64: 64, 128>}, {pipeline_mode = #tpu.pipeline_mode<synchronous>, transform_indices = @transform_16, window_bounds = array<i64: 1, 128>}, {pipeline_mode = #tpu.pipeline_mode<synchronous>, transform_indices = @transform_17, window_bounds = array<i64: 128, 1024>}, {pipeline_mode = #tpu.pipeline_mode<synchronous>, transform_indices = @transform_18, window_bounds = array<i64: 1, 1024>}, {pipeline_mode = #tpu.pipeline_mode<synchronous>, transform_indices = @transform_19, window_bounds = array<i64: 1024, 512>}, {pipeline_mode = #tpu.pipeline_mode<synchronous>, transform_indices = @transform_20, window_bounds = array<i64: 1, 512>}, {pipeline_mode = #tpu.pipeline_mode<synchronous>, transform_indices = @transform_21, window_bounds = array<i64: 512, 256>}, {pipeline_mode = #tpu.pipeline_mode<synchronous>, transform_indices = @transform_22, window_bounds = array<i64: 1, 256>}, {pipeline_mode = #tpu.pipeline_mode<synchronous>, transform_indices = @transform_23, window_bounds = array<i64: 256, 128>}, {pipeline_mode = #tpu.pipeline_mode<synchronous>, transform_indices = @transform_24, window_bounds = array<i64: 1, 128>}, {transform_indices = @transform_25, window_bounds = array<i64: 8, 128>}]} {
    %c0 = arith.constant 0 : index
    %c0_0 = arith.constant 0 : index
    %0 = vector.load %arg1[%c0, %c0_0] : memref<128x4xf32, #tpu.memory_space<vmem>>, vector<128x4xf32>
    %1 = vector.shape_cast %0 : vector<128x4xf32> to vector<8x16x4xf32>
    %c0_1 = arith.constant 0 : index
    %c0_2 = arith.constant 0 : index
    %2 = vector.load %arg2[%c0_1, %c0_2] : memref<4x64xf32, #tpu.memory_space<vmem>>, vector<4x64xf32>
    %c0_3 = arith.constant 0 : index
    %c0_4 = arith.constant 0 : index
    %3 = vector.load %arg3[%c0_3, %c0_4] : memref<1x64xf32, #tpu.memory_space<vmem>>, vector<1x64xf32>
    %4 = vector.extract_strided_slice %1 {offsets = [0, 0, 0], sizes = [8, 16, 1], strides = [1, 1, 1]} : vector<8x16x4xf32> to vector<8x16x1xf32>
    %5 = vector.extract_strided_slice %2 {offsets = [0, 0], sizes = [1, 64], strides = [1, 1]} : vector<4x64xf32> to vector<1x64xf32>
    %6 = vector.shape_cast %5 : vector<1x64xf32> to vector<1x1x64xf32>
    %7 = vector.broadcast %4 : vector<8x16x1xf32> to vector<8x16x64xf32>
    %8 = vector.broadcast %6 : vector<1x1x64xf32> to vector<8x16x64xf32>
    %9 = arith.mulf %7, %8 : vector<8x16x64xf32>
    %10 = vector.extract_strided_slice %1 {offsets = [0, 0, 1], sizes = [8, 16, 1], strides = [1, 1, 1]} : vector<8x16x4xf32> to vector<8x16x1xf32>
    %11 = vector.extract_strided_slice %2 {offsets = [1, 0], sizes = [1, 64], strides = [1, 1]} : vector<4x64xf32> to vector<1x64xf32>
    %12 = vector.shape_cast %11 : vector<1x64xf32> to vector<1x1x64xf32>
    %13 = vector.broadcast %10 : vector<8x16x1xf32> to vector<8x16x64xf32>
    %14 = vector.broadcast %12 : vector<1x1x64xf32> to vector<8x16x64xf32>
    %15 = arith.mulf %13, %14 : vector<8x16x64xf32>
    %16 = arith.addf %9, %15 : vector<8x16x64xf32>
    %17 = vector.extract_strided_slice %1 {offsets = [0, 0, 2], sizes = [8, 16, 1], strides = [1, 1, 1]} : vector<8x16x4xf32> to vector<8x16x1xf32>
    %18 = vector.extract_strided_slice %2 {offsets = [2, 0], sizes = [1, 64], strides = [1, 1]} : vector<4x64xf32> to vector<1x64xf32>
    %19 = vector.shape_cast %18 : vector<1x64xf32> to vector<1x1x64xf32>
    %20 = vector.broadcast %17 : vector<8x16x1xf32> to vector<8x16x64xf32>
    %21 = vector.broadcast %19 : vector<1x1x64xf32> to vector<8x16x64xf32>
    %22 = arith.mulf %20, %21 : vector<8x16x64xf32>
    %23 = arith.addf %16, %22 : vector<8x16x64xf32>
    %24 = vector.extract_strided_slice %1 {offsets = [0, 0, 3], sizes = [8, 16, 1], strides = [1, 1, 1]} : vector<8x16x4xf32> to vector<8x16x1xf32>
    %25 = vector.extract_strided_slice %2 {offsets = [3, 0], sizes = [1, 64], strides = [1, 1]} : vector<4x64xf32> to vector<1x64xf32>
    %26 = vector.shape_cast %25 : vector<1x64xf32> to vector<1x1x64xf32>
    %27 = vector.broadcast %24 : vector<8x16x1xf32> to vector<8x16x64xf32>
    %28 = vector.broadcast %26 : vector<1x1x64xf32> to vector<8x16x64xf32>
    %29 = arith.mulf %27, %28 : vector<8x16x64xf32>
    %30 = arith.addf %23, %29 : vector<8x16x64xf32>
    %31 = vector.shape_cast %3 : vector<1x64xf32> to vector<1x1x64xf32>
    %32 = vector.broadcast %31 : vector<1x1x64xf32> to vector<8x16x64xf32>
    %33 = arith.addf %30, %32 : vector<8x16x64xf32>
    %cst = arith.constant 0.000000e+00 : f32
    %34 = vector.broadcast %cst : f32 to vector<8x16x64xf32>
    %35 = arith.maximumf %33, %34 : vector<8x16x64xf32>
    %36 = vector.shape_cast %35 : vector<8x16x64xf32> to vector<128x64xf32>
    %c0_5 = arith.constant 0 : index
    %c0_6 = arith.constant 0 : index
    %37 = vector.load %arg4[%c0_5, %c0_6] : memref<64x128xbf16, #tpu.memory_space<vmem>>, vector<64x128xbf16>
    %38 = arith.truncf %36 : vector<128x64xf32> to vector<128x64xbf16>
    %cst_7 = arith.constant dense<0.000000e+00> : vector<128x128xf32>
    %39 = tpu.matmul %38, %37, %cst_7 {dimension_numbers = #tpu.dot_dimension_numbers<[1], [0], [0], [1], [0, 0, 1, 1], [], []>} : vector<128x64xbf16>, vector<64x128xbf16>, vector<128x128xf32> -> vector<128x128xf32>
    %c0_8 = arith.constant 0 : index
    %c0_9 = arith.constant 0 : index
    %40 = vector.load %arg5[%c0_8, %c0_9] : memref<1x128xf32, #tpu.memory_space<vmem>>, vector<1x128xf32>
    %41 = vector.broadcast %40 : vector<1x128xf32> to vector<128x128xf32>
    %42 = arith.addf %39, %41 : vector<128x128xf32>
    %cst_10 = arith.constant 0.000000e+00 : f32
    %43 = vector.broadcast %cst_10 : f32 to vector<128x128xf32>
    %44 = arith.maximumf %42, %43 : vector<128x128xf32>
    %c0_11 = arith.constant 0 : index
    %c0_12 = arith.constant 0 : index
    %45 = vector.load %arg6[%c0_11, %c0_12] : memref<128x1024xbf16, #tpu.memory_space<vmem>>, vector<128x1024xbf16>
    %46 = arith.truncf %44 : vector<128x128xf32> to vector<128x128xbf16>
    %cst_13 = arith.constant dense<0.000000e+00> : vector<128x1024xf32>
    %47 = tpu.matmul %46, %45, %cst_13 {dimension_numbers = #tpu.dot_dimension_numbers<[1], [0], [0], [1], [0, 0, 1, 1], [], []>} : vector<128x128xbf16>, vector<128x1024xbf16>, vector<128x1024xf32> -> vector<128x1024xf32>
    %c0_14 = arith.constant 0 : index
    %c0_15 = arith.constant 0 : index
    %48 = vector.load %arg7[%c0_14, %c0_15] : memref<1x1024xf32, #tpu.memory_space<vmem>>, vector<1x1024xf32>
    %49 = vector.broadcast %48 : vector<1x1024xf32> to vector<128x1024xf32>
    %50 = arith.addf %47, %49 : vector<128x1024xf32>
    %cst_16 = arith.constant 0.000000e+00 : f32
    %51 = vector.broadcast %cst_16 : f32 to vector<128x1024xf32>
    %52 = arith.maximumf %50, %51 : vector<128x1024xf32>
    %53 = vector.shape_cast %52 : vector<128x1024xf32> to vector<8x16x1024xf32>
    %cst_17 = arith.constant dense<0xFF800000> : vector<8x1024xf32>
    %54 = vector.multi_reduction <maximumf>, %53, %cst_17 [1] : vector<8x16x1024xf32> to vector<8x1024xf32>
    %c0_18 = arith.constant 0 : index
    %c0_19 = arith.constant 0 : index
    %55 = vector.load %arg8[%c0_18, %c0_19] : memref<1024x512xbf16, #tpu.memory_space<vmem>>, vector<1024x512xbf16>
    %56 = arith.truncf %54 : vector<8x1024xf32> to vector<8x1024xbf16>
    %cst_20 = arith.constant dense<0.000000e+00> : vector<8x512xf32>
    %57 = tpu.matmul %56, %55, %cst_20 {dimension_numbers = #tpu.dot_dimension_numbers<[1], [0], [0], [1], [0, 0, 1, 1], [], []>} : vector<8x1024xbf16>, vector<1024x512xbf16>, vector<8x512xf32> -> vector<8x512xf32>
    %c0_21 = arith.constant 0 : index
    %c0_22 = arith.constant 0 : index
    %58 = vector.load %arg9[%c0_21, %c0_22] : memref<1x512xf32, #tpu.memory_space<vmem>>, vector<1x512xf32>
    %59 = vector.broadcast %58 : vector<1x512xf32> to vector<8x512xf32>
    %60 = arith.addf %57, %59 : vector<8x512xf32>
    %cst_23 = arith.constant 0.000000e+00 : f32
    %61 = vector.broadcast %cst_23 : f32 to vector<8x512xf32>
    %62 = arith.maximumf %60, %61 : vector<8x512xf32>
    %c0_24 = arith.constant 0 : index
    %c0_25 = arith.constant 0 : index
    %63 = vector.load %arg10[%c0_24, %c0_25] : memref<512x256xbf16, #tpu.memory_space<vmem>>, vector<512x256xbf16>
    %64 = arith.truncf %62 : vector<8x512xf32> to vector<8x512xbf16>
    %cst_26 = arith.constant dense<0.000000e+00> : vector<8x256xf32>
    %65 = tpu.matmul %64, %63, %cst_26 {dimension_numbers = #tpu.dot_dimension_numbers<[1], [0], [0], [1], [0, 0, 1, 1], [], []>} : vector<8x512xbf16>, vector<512x256xbf16>, vector<8x256xf32> -> vector<8x256xf32>
    %c0_27 = arith.constant 0 : index
    %c0_28 = arith.constant 0 : index
    %66 = vector.load %arg11[%c0_27, %c0_28] : memref<1x256xf32, #tpu.memory_space<vmem>>, vector<1x256xf32>
    %67 = vector.broadcast %66 : vector<1x256xf32> to vector<8x256xf32>
    %68 = arith.addf %65, %67 : vector<8x256xf32>
    %cst_29 = arith.constant 0.000000e+00 : f32
    %69 = vector.broadcast %cst_29 : f32 to vector<8x256xf32>
    %70 = arith.maximumf %68, %69 : vector<8x256xf32>
    %c0_30 = arith.constant 0 : index
    %c0_31 = arith.constant 0 : index
    %71 = vector.load %arg12[%c0_30, %c0_31] : memref<256x16xf32, #tpu.memory_space<vmem>>, vector<256x16xf32>
    %cst_32 = arith.constant dense<0.000000e+00> : vector<8x16xf32>
    %72 = tpu.matmul %70, %71, %cst_32 {dimension_numbers = #tpu.dot_dimension_numbers<[1], [0], [0], [1], [0, 0, 1, 1], [], []>} : vector<8x256xf32>, vector<256x16xf32>, vector<8x16xf32> -> vector<8x16xf32>
    %c0_33 = arith.constant 0 : index
    %c0_34 = arith.constant 0 : index
    %73 = vector.load %arg13[%c0_33, %c0_34] : memref<1x16xf32, #tpu.memory_space<vmem>>, vector<1x16xf32>
    %74 = vector.broadcast %73 : vector<1x16xf32> to vector<8x16xf32>
    %75 = arith.addf %72, %74 : vector<8x16xf32>
    %76 = vector.extract_strided_slice %1 {offsets = [0, 0, 0], sizes = [8, 16, 1], strides = [1, 1, 1]} : vector<8x16x4xf32> to vector<8x16x1xf32>
    %77 = vector.extract_strided_slice %75 {offsets = [0, 0], sizes = [8, 4], strides = [1, 1]} : vector<8x16xf32> to vector<8x4xf32>
    %78 = vector.shape_cast %77 : vector<8x4xf32> to vector<8x1x4xf32>
    %79 = vector.broadcast %76 : vector<8x16x1xf32> to vector<8x16x4xf32>
    %80 = vector.broadcast %78 : vector<8x1x4xf32> to vector<8x16x4xf32>
    %81 = arith.mulf %79, %80 : vector<8x16x4xf32>
    %82 = vector.extract_strided_slice %1 {offsets = [0, 0, 1], sizes = [8, 16, 1], strides = [1, 1, 1]} : vector<8x16x4xf32> to vector<8x16x1xf32>
    %83 = vector.extract_strided_slice %75 {offsets = [0, 4], sizes = [8, 4], strides = [1, 1]} : vector<8x16xf32> to vector<8x4xf32>
    %84 = vector.shape_cast %83 : vector<8x4xf32> to vector<8x1x4xf32>
    %85 = vector.broadcast %82 : vector<8x16x1xf32> to vector<8x16x4xf32>
    %86 = vector.broadcast %84 : vector<8x1x4xf32> to vector<8x16x4xf32>
    %87 = arith.mulf %85, %86 : vector<8x16x4xf32>
    %88 = arith.addf %81, %87 : vector<8x16x4xf32>
    %89 = vector.extract_strided_slice %1 {offsets = [0, 0, 2], sizes = [8, 16, 1], strides = [1, 1, 1]} : vector<8x16x4xf32> to vector<8x16x1xf32>
    %90 = vector.extract_strided_slice %75 {offsets = [0, 8], sizes = [8, 4], strides = [1, 1]} : vector<8x16xf32> to vector<8x4xf32>
    %91 = vector.shape_cast %90 : vector<8x4xf32> to vector<8x1x4xf32>
    %92 = vector.broadcast %89 : vector<8x16x1xf32> to vector<8x16x4xf32>
    %93 = vector.broadcast %91 : vector<8x1x4xf32> to vector<8x16x4xf32>
    %94 = arith.mulf %92, %93 : vector<8x16x4xf32>
    %95 = arith.addf %88, %94 : vector<8x16x4xf32>
    %96 = vector.extract_strided_slice %1 {offsets = [0, 0, 3], sizes = [8, 16, 1], strides = [1, 1, 1]} : vector<8x16x4xf32> to vector<8x16x1xf32>
    %97 = vector.extract_strided_slice %75 {offsets = [0, 12], sizes = [8, 4], strides = [1, 1]} : vector<8x16xf32> to vector<8x4xf32>
    %98 = vector.shape_cast %97 : vector<8x4xf32> to vector<8x1x4xf32>
    %99 = vector.broadcast %96 : vector<8x16x1xf32> to vector<8x16x4xf32>
    %100 = vector.broadcast %98 : vector<8x1x4xf32> to vector<8x16x4xf32>
    %101 = arith.mulf %99, %100 : vector<8x16x4xf32>
    %102 = arith.addf %95, %101 : vector<8x16x4xf32>
    %c0_35 = arith.constant 0 : index
    %c0_36 = arith.constant 0 : index
    %103 = vector.load %arg14[%c0_35, %c0_36] : memref<4x64xf32, #tpu.memory_space<vmem>>, vector<4x64xf32>
    %c0_37 = arith.constant 0 : index
    %c0_38 = arith.constant 0 : index
    %104 = vector.load %arg15[%c0_37, %c0_38] : memref<1x64xf32, #tpu.memory_space<vmem>>, vector<1x64xf32>
    %105 = vector.extract_strided_slice %102 {offsets = [0, 0, 0], sizes = [8, 16, 1], strides = [1, 1, 1]} : vector<8x16x4xf32> to vector<8x16x1xf32>
    %106 = vector.extract_strided_slice %103 {offsets = [0, 0], sizes = [1, 64], strides = [1, 1]} : vector<4x64xf32> to vector<1x64xf32>
    %107 = vector.shape_cast %106 : vector<1x64xf32> to vector<1x1x64xf32>
    %108 = vector.broadcast %105 : vector<8x16x1xf32> to vector<8x16x64xf32>
    %109 = vector.broadcast %107 : vector<1x1x64xf32> to vector<8x16x64xf32>
    %110 = arith.mulf %108, %109 : vector<8x16x64xf32>
    %111 = vector.extract_strided_slice %102 {offsets = [0, 0, 1], sizes = [8, 16, 1], strides = [1, 1, 1]} : vector<8x16x4xf32> to vector<8x16x1xf32>
    %112 = vector.extract_strided_slice %103 {offsets = [1, 0], sizes = [1, 64], strides = [1, 1]} : vector<4x64xf32> to vector<1x64xf32>
    %113 = vector.shape_cast %112 : vector<1x64xf32> to vector<1x1x64xf32>
    %114 = vector.broadcast %111 : vector<8x16x1xf32> to vector<8x16x64xf32>
    %115 = vector.broadcast %113 : vector<1x1x64xf32> to vector<8x16x64xf32>
    %116 = arith.mulf %114, %115 : vector<8x16x64xf32>
    %117 = arith.addf %110, %116 : vector<8x16x64xf32>
    %118 = vector.extract_strided_slice %102 {offsets = [0, 0, 2], sizes = [8, 16, 1], strides = [1, 1, 1]} : vector<8x16x4xf32> to vector<8x16x1xf32>
    %119 = vector.extract_strided_slice %103 {offsets = [2, 0], sizes = [1, 64], strides = [1, 1]} : vector<4x64xf32> to vector<1x64xf32>
    %120 = vector.shape_cast %119 : vector<1x64xf32> to vector<1x1x64xf32>
    %121 = vector.broadcast %118 : vector<8x16x1xf32> to vector<8x16x64xf32>
    %122 = vector.broadcast %120 : vector<1x1x64xf32> to vector<8x16x64xf32>
    %123 = arith.mulf %121, %122 : vector<8x16x64xf32>
    %124 = arith.addf %117, %123 : vector<8x16x64xf32>
    %125 = vector.extract_strided_slice %102 {offsets = [0, 0, 3], sizes = [8, 16, 1], strides = [1, 1, 1]} : vector<8x16x4xf32> to vector<8x16x1xf32>
    %126 = vector.extract_strided_slice %103 {offsets = [3, 0], sizes = [1, 64], strides = [1, 1]} : vector<4x64xf32> to vector<1x64xf32>
    %127 = vector.shape_cast %126 : vector<1x64xf32> to vector<1x1x64xf32>
    %128 = vector.broadcast %125 : vector<8x16x1xf32> to vector<8x16x64xf32>
    %129 = vector.broadcast %127 : vector<1x1x64xf32> to vector<8x16x64xf32>
    %130 = arith.mulf %128, %129 : vector<8x16x64xf32>
    %131 = arith.addf %124, %130 : vector<8x16x64xf32>
    %132 = vector.shape_cast %104 : vector<1x64xf32> to vector<1x1x64xf32>
    %133 = vector.broadcast %132 : vector<1x1x64xf32> to vector<8x16x64xf32>
    %134 = arith.addf %131, %133 : vector<8x16x64xf32>
    %cst_39 = arith.constant 0.000000e+00 : f32
    %135 = vector.broadcast %cst_39 : f32 to vector<8x16x64xf32>
    %136 = arith.maximumf %134, %135 : vector<8x16x64xf32>
    %137 = vector.shape_cast %136 : vector<8x16x64xf32> to vector<128x64xf32>
    %c0_40 = arith.constant 0 : index
    %c0_41 = arith.constant 0 : index
    %138 = vector.load %arg16[%c0_40, %c0_41] : memref<64x128xbf16, #tpu.memory_space<vmem>>, vector<64x128xbf16>
    %139 = arith.truncf %137 : vector<128x64xf32> to vector<128x64xbf16>
    %cst_42 = arith.constant dense<0.000000e+00> : vector<128x128xf32>
    %140 = tpu.matmul %139, %138, %cst_42 {dimension_numbers = #tpu.dot_dimension_numbers<[1], [0], [0], [1], [0, 0, 1, 1], [], []>} : vector<128x64xbf16>, vector<64x128xbf16>, vector<128x128xf32> -> vector<128x128xf32>
    %c0_43 = arith.constant 0 : index
    %c0_44 = arith.constant 0 : index
    %141 = vector.load %arg17[%c0_43, %c0_44] : memref<1x128xf32, #tpu.memory_space<vmem>>, vector<1x128xf32>
    %142 = vector.broadcast %141 : vector<1x128xf32> to vector<128x128xf32>
    %143 = arith.addf %140, %142 : vector<128x128xf32>
    %cst_45 = arith.constant 0.000000e+00 : f32
    %144 = vector.broadcast %cst_45 : f32 to vector<128x128xf32>
    %145 = arith.maximumf %143, %144 : vector<128x128xf32>
    %c0_46 = arith.constant 0 : index
    %c0_47 = arith.constant 0 : index
    %146 = vector.load %arg18[%c0_46, %c0_47] : memref<128x1024xbf16, #tpu.memory_space<vmem>>, vector<128x1024xbf16>
    %147 = arith.truncf %145 : vector<128x128xf32> to vector<128x128xbf16>
    %cst_48 = arith.constant dense<0.000000e+00> : vector<128x1024xf32>
    %148 = tpu.matmul %147, %146, %cst_48 {dimension_numbers = #tpu.dot_dimension_numbers<[1], [0], [0], [1], [0, 0, 1, 1], [], []>} : vector<128x128xbf16>, vector<128x1024xbf16>, vector<128x1024xf32> -> vector<128x1024xf32>
    %c0_49 = arith.constant 0 : index
    %c0_50 = arith.constant 0 : index
    %149 = vector.load %arg19[%c0_49, %c0_50] : memref<1x1024xf32, #tpu.memory_space<vmem>>, vector<1x1024xf32>
    %150 = vector.broadcast %149 : vector<1x1024xf32> to vector<128x1024xf32>
    %151 = arith.addf %148, %150 : vector<128x1024xf32>
    %cst_51 = arith.constant 0.000000e+00 : f32
    %152 = vector.broadcast %cst_51 : f32 to vector<128x1024xf32>
    %153 = arith.maximumf %151, %152 : vector<128x1024xf32>
    %154 = vector.shape_cast %153 : vector<128x1024xf32> to vector<8x16x1024xf32>
    %cst_52 = arith.constant dense<0xFF800000> : vector<8x1024xf32>
    %155 = vector.multi_reduction <maximumf>, %154, %cst_52 [1] : vector<8x16x1024xf32> to vector<8x1024xf32>
    %c0_53 = arith.constant 0 : index
    %c0_54 = arith.constant 0 : index
    %156 = vector.load %arg20[%c0_53, %c0_54] : memref<1024x512xbf16, #tpu.memory_space<vmem>>, vector<1024x512xbf16>
    %157 = arith.truncf %155 : vector<8x1024xf32> to vector<8x1024xbf16>
    %cst_55 = arith.constant dense<0.000000e+00> : vector<8x512xf32>
    %158 = tpu.matmul %157, %156, %cst_55 {dimension_numbers = #tpu.dot_dimension_numbers<[1], [0], [0], [1], [0, 0, 1, 1], [], []>} : vector<8x1024xbf16>, vector<1024x512xbf16>, vector<8x512xf32> -> vector<8x512xf32>
    %c0_56 = arith.constant 0 : index
    %c0_57 = arith.constant 0 : index
    %159 = vector.load %arg21[%c0_56, %c0_57] : memref<1x512xf32, #tpu.memory_space<vmem>>, vector<1x512xf32>
    %160 = vector.broadcast %159 : vector<1x512xf32> to vector<8x512xf32>
    %161 = arith.addf %158, %160 : vector<8x512xf32>
    %cst_58 = arith.constant 0.000000e+00 : f32
    %162 = vector.broadcast %cst_58 : f32 to vector<8x512xf32>
    %163 = arith.maximumf %161, %162 : vector<8x512xf32>
    %c0_59 = arith.constant 0 : index
    %c0_60 = arith.constant 0 : index
    %164 = vector.load %arg22[%c0_59, %c0_60] : memref<512x256xbf16, #tpu.memory_space<vmem>>, vector<512x256xbf16>
    %165 = arith.truncf %163 : vector<8x512xf32> to vector<8x512xbf16>
    %cst_61 = arith.constant dense<0.000000e+00> : vector<8x256xf32>
    %166 = tpu.matmul %165, %164, %cst_61 {dimension_numbers = #tpu.dot_dimension_numbers<[1], [0], [0], [1], [0, 0, 1, 1], [], []>} : vector<8x512xbf16>, vector<512x256xbf16>, vector<8x256xf32> -> vector<8x256xf32>
    %c0_62 = arith.constant 0 : index
    %c0_63 = arith.constant 0 : index
    %167 = vector.load %arg23[%c0_62, %c0_63] : memref<1x256xf32, #tpu.memory_space<vmem>>, vector<1x256xf32>
    %168 = vector.broadcast %167 : vector<1x256xf32> to vector<8x256xf32>
    %169 = arith.addf %166, %168 : vector<8x256xf32>
    %cst_64 = arith.constant 0.000000e+00 : f32
    %170 = vector.broadcast %cst_64 : f32 to vector<8x256xf32>
    %171 = arith.maximumf %169, %170 : vector<8x256xf32>
    %c0_65 = arith.constant 0 : index
    %c0_66 = arith.constant 0 : index
    %172 = vector.load %arg24[%c0_65, %c0_66] : memref<256x128xf32, #tpu.memory_space<vmem>>, vector<256x128xf32>
    %cst_67 = arith.constant dense<0.000000e+00> : vector<8x128xf32>
    %173 = tpu.matmul %171, %172, %cst_67 {dimension_numbers = #tpu.dot_dimension_numbers<[1], [0], [0], [1], [0, 0, 1, 1], [], []>} : vector<8x256xf32>, vector<256x128xf32>, vector<8x128xf32> -> vector<8x128xf32>
    %c0_68 = arith.constant 0 : index
    %c0_69 = arith.constant 0 : index
    %174 = vector.load %arg25[%c0_68, %c0_69] : memref<1x128xf32, #tpu.memory_space<vmem>>, vector<1x128xf32>
    %175 = vector.broadcast %174 : vector<1x128xf32> to vector<8x128xf32>
    %176 = arith.addf %173, %175 : vector<8x128xf32>
    %c0_70 = arith.constant 0 : index
    %c0_71 = arith.constant 0 : index
    %177 = vector.load %arg26[%c0_70, %c0_71] : memref<8x128xf32, #tpu.memory_space<vmem>>, vector<8x128xf32>
    tpu.vector_store %arg26[%c0_70, %c0_71], %176 {strides = array<i32>} : memref<8x128xf32, #tpu.memory_space<vmem>>, vector<8x128xf32>,
    return
  }
  func.func @transform_0(%arg0: i32) -> (i32, i32) {
    %c0_i32 = arith.constant 0 : i32
    %c0_i32_0 = arith.constant 0 : i32
    return %arg0, %c0_i32 : i32, i32
  }
  func.func @transform_1(%arg0: i32) -> (i32, i32) {
    %c0_i32 = arith.constant 0 : i32
    %c0_i32_0 = arith.constant 0 : i32
    %c0_i32_1 = arith.constant 0 : i32
    return %c0_i32, %c0_i32_0 : i32, i32
  }
  func.func @transform_2(%arg0: i32) -> (i32, i32) {
    %c0_i32 = arith.constant 0 : i32
    %c0_i32_0 = arith.constant 0 : i32
    %c0_i32_1 = arith.constant 0 : i32
    return %c0_i32, %c0_i32_0 : i32, i32
  }
  func.func @transform_3(%arg0: i32) -> (i32, i32) {
    %c0_i32 = arith.constant 0 : i32
    %c0_i32_0 = arith.constant 0 : i32
    %c0_i32_1 = arith.constant 0 : i32
    return %c0_i32, %c0_i32_0 : i32, i32
  }
  func.func @transform_4(%arg0: i32) -> (i32, i32) {
    %c0_i32 = arith.constant 0 : i32
    %c0_i32_0 = arith.constant 0 : i32
    %c0_i32_1 = arith.constant 0 : i32
    return %c0_i32, %c0_i32_0 : i32, i32
  }
  func.func @transform_5(%arg0: i32) -> (i32, i32) {
    %c0_i32 = arith.constant 0 : i32
    %c0_i32_0 = arith.constant 0 : i32
    %c0_i32_1 = arith.constant 0 : i32
    return %c0_i32, %c0_i32_0 : i32, i32
  }
  func.func @transform_6(%arg0: i32) -> (i32, i32) {
    %c0_i32 = arith.constant 0 : i32
    %c0_i32_0 = arith.constant 0 : i32
    %c0_i32_1 = arith.constant 0 : i32
    return %c0_i32, %c0_i32_0 : i32, i32
  }
  func.func @transform_7(%arg0: i32) -> (i32, i32) {
    %c0_i32 = arith.constant 0 : i32
    %c0_i32_0 = arith.constant 0 : i32
    %c0_i32_1 = arith.constant 0 : i32
    return %c0_i32, %c0_i32_0 : i32, i32
  }
  func.func @transform_8(%arg0: i32) -> (i32, i32) {
    %c0_i32 = arith.constant 0 : i32
    %c0_i32_0 = arith.constant 0 : i32
    %c0_i32_1 = arith.constant 0 : i32
    return %c0_i32, %c0_i32_0 : i32, i32
  }
  func.func @transform_9(%arg0: i32) -> (i32, i32) {
    %c0_i32 = arith.constant 0 : i32
    %c0_i32_0 = arith.constant 0 : i32
    %c0_i32_1 = arith.constant 0 : i32
    return %c0_i32, %c0_i32_0 : i32, i32
  }
  func.func @transform_10(%arg0: i32) -> (i32, i32) {
    %c0_i32 = arith.constant 0 : i32
    %c0_i32_0 = arith.constant 0 : i32
    %c0_i32_1 = arith.constant 0 : i32
    return %c0_i32, %c0_i32_0 : i32, i32
  }
  func.func @transform_11(%arg0: i32) -> (i32, i32) {
    %c0_i32 = arith.constant 0 : i32
    %c0_i32_0 = arith.constant 0 : i32
    %c0_i32_1 = arith.constant 0 : i32
    return %c0_i32, %c0_i32_0 : i32, i32
  }
  func.func @transform_12(%arg0: i32) -> (i32, i32) {
    %c0_i32 = arith.constant 0 : i32
    %c0_i32_0 = arith.constant 0 : i32
    %c0_i32_1 = arith.constant 0 : i32
    return %c0_i32, %c0_i32_0 : i32, i32
  }
  func.func @transform_13(%arg0: i32) -> (i32, i32) {
    %c0_i32 = arith.constant 0 : i32
    %c0_i32_0 = arith.constant 0 : i32
    %c0_i32_1 = arith.constant 0 : i32
    return %c0_i32, %c0_i32_0 : i32, i32
  }
  func.func @transform_14(%arg0: i32) -> (i32, i32) {
    %c0_i32 = arith.constant 0 : i32
    %c0_i32_0 = arith.constant 0 : i32
    %c0_i32_1 = arith.constant 0 : i32
    return %c0_i32, %c0_i32_0 : i32, i32
  }
  func.func @transform_15(%arg0: i32) -> (i32, i32) {
    %c0_i32 = arith.constant 0 : i32
    %c0_i32_0 = arith.constant 0 : i32
    %c0_i32_1 = arith.constant 0 : i32
    return %c0_i32, %c0_i32_0 : i32, i32
  }
  func.func @transform_16(%arg0: i32) -> (i32, i32) {
    %c0_i32 = arith.constant 0 : i32
    %c0_i32_0 = arith.constant 0 : i32
    %c0_i32_1 = arith.constant 0 : i32
    return %c0_i32, %c0_i32_0 : i32, i32
  }
  func.func @transform_17(%arg0: i32) -> (i32, i32) {
    %c0_i32 = arith.constant 0 : i32
    %c0_i32_0 = arith.constant 0 : i32
    %c0_i32_1 = arith.constant 0 : i32
    return %c0_i32, %c0_i32_0 : i32, i32
  }
  func.func @transform_18(%arg0: i32) -> (i32, i32) {
    %c0_i32 = arith.constant 0 : i32
    %c0_i32_0 = arith.constant 0 : i32
    %c0_i32_1 = arith.constant 0 : i32
    return %c0_i32, %c0_i32_0 : i32, i32
  }
  func.func @transform_19(%arg0: i32) -> (i32, i32) {
    %c0_i32 = arith.constant 0 : i32
    %c0_i32_0 = arith.constant 0 : i32
    %c0_i32_1 = arith.constant 0 : i32
    return %c0_i32, %c0_i32_0 : i32, i32
  }
  func.func @transform_20(%arg0: i32) -> (i32, i32) {
    %c0_i32 = arith.constant 0 : i32
    %c0_i32_0 = arith.constant 0 : i32
    %c0_i32_1 = arith.constant 0 : i32
    return %c0_i32, %c0_i32_0 : i32, i32
  }
  func.func @transform_21(%arg0: i32) -> (i32, i32) {
    %c0_i32 = arith.constant 0 : i32
    %c0_i32_0 = arith.constant 0 : i32
    %c0_i32_1 = arith.constant 0 : i32
    return %c0_i32, %c0_i32_0 : i32, i32
  }
  func.func @transform_22(%arg0: i32) -> (i32, i32) {
    %c0_i32 = arith.constant 0 : i32
    %c0_i32_0 = arith.constant 0 : i32
    %c0_i32_1 = arith.constant 0 : i32
    return %c0_i32, %c0_i32_0 : i32, i32
  }
  func.func @transform_23(%arg0: i32) -> (i32, i32) {
    %c0_i32 = arith.constant 0 : i32
    %c0_i32_0 = arith.constant 0 : i32
    %c0_i32_1 = arith.constant 0 : i32
    return %c0_i32, %c0_i32_0 : i32, i32
  }
  func.func @transform_24(%arg0: i32) -> (i32, i32) {
    %c0_i32 = arith.constant 0 : i32
    %c0_i32_0 = arith.constant 0 : i32
    %c0_i32_1 = arith.constant 0 : i32
    return %c0_i32, %c0_i32_0 : i32, i32
  }
  func.func @transform_25(%arg0: i32) -> (i32, i32) {
    %c0_i32 = arith.constant 0 : i32
    %c0_i32_0 = arith.constant 0 : i32
    return %arg0, %c0_i32 : i32, i32
  }
}

</mosaic_0001>

<llo_original>
// kernel: tpu_custom_call.1
$region0: #{tpu_custom_call.1}
  #allocation0 [shape = 'u32[]', space=smem, size = 0x4, offset = 0x4, fixed_abs, tag = 'smem constant byte address 0x4 - core index']
  #allocation1 [shape = 'u32[72,128]{1,0:T(1,128)}', space=vmem, size = 0x9000, scoped, tag = 'internal scratch']
  %s0 = inlined_call_operand.vmem [shape: f32[128,4], index: 0, kind: input, shape index: {}]
  %s1 = inlined_call_operand.vmem [shape: f32[4,64], index: 1, kind: input, shape index: {}]
  %s2 = inlined_call_operand.vmem [shape: f32[1,64], index: 2, kind: input, shape index: {}]
  %s3 = inlined_call_operand.vmem [shape: bf16[64,128], index: 3, kind: input, shape index: {}]
  %s4 = inlined_call_operand.vmem [shape: f32[1,128], index: 4, kind: input, shape index: {}]
  %s5 = inlined_call_operand.hbm [shape: bf16[128,1024], index: 5, kind: input, shape index: {}]
  %s6 = inlined_call_operand.vmem [shape: f32[1,1024], index: 6, kind: input, shape index: {}]
  %s7 = inlined_call_operand.hbm [shape: bf16[1024,512], index: 7, kind: input, shape index: {}]
  %s8 = inlined_call_operand.vmem [shape: f32[1,512], index: 8, kind: input, shape index: {}]
  %s9 = inlined_call_operand.hbm [shape: bf16[512,256], index: 9, kind: input, shape index: {}]
  %s10 = inlined_call_operand.vmem [shape: f32[1,256], index: 10, kind: input, shape index: {}]
  %s11 = inlined_call_operand.vmem [shape: f32[256,16], index: 11, kind: input, shape index: {}]
  %s12 = inlined_call_operand.vmem [shape: f32[1,16], index: 12, kind: input, shape index: {}]
  %s13 = inlined_call_operand.vmem [shape: f32[4,64], index: 13, kind: input, shape index: {}]
  %s14 = inlined_call_operand.vmem [shape: f32[1,64], index: 14, kind: input, shape index: {}]
  %s15 = inlined_call_operand.vmem [shape: bf16[64,128], index: 15, kind: input, shape index: {}]
  %s16 = inlined_call_operand.vmem [shape: f32[1,128], index: 16, kind: input, shape index: {}]
  %s17 = inlined_call_operand.hbm [shape: bf16[128,1024], index: 17, kind: input, shape index: {}]
  %s18 = inlined_call_operand.vmem [shape: f32[1,1024], index: 18, kind: input, shape index: {}]
  %s19 = inlined_call_operand.hbm [shape: bf16[1024,512], index: 19, kind: input, shape index: {}]
  %s20 = inlined_call_operand.vmem [shape: f32[1,512], index: 20, kind: input, shape index: {}]
  %s21 = inlined_call_operand.hbm [shape: bf16[512,256], index: 21, kind: input, shape index: {}]
  %s22 = inlined_call_operand.vmem [shape: f32[1,256], index: 22, kind: input, shape index: {}]
  %s23 = inlined_call_operand.vmem [shape: f32[256,128], index: 23, kind: input, shape index: {}]
  %s24 = inlined_call_operand.vmem [shape: f32[1,128], index: 24, kind: input, shape index: {}]
  %s25 = inlined_call_operand.hbm [shape: f32[8,128], index: 25, kind: output, shape index: {}]
  %s26 = sld [smem:[#allocation0]]
  $region134: #{tpu_custom_call.1} parent=0
    _
  %s28 = ssub.s32 1, %s26
  %s29 = scalar_select 0, %s28, %s26
  $region1: #{tpu_custom_call.1} parent=0
    #allocation2 [shape = 'u8[262144]{0}', space=vmem, size = 0x40000, scoped, tag = 'input window, operand 5, single buffered']
    #allocation3 [shape = 's32[1]{0}', space=sflag, size = 0x4, scoped, tag = 'scoped memory for tpu_custom_call.1']
    #allocation4 [shape = 's32[1]{0}', space=sflag, size = 0x4, scoped, tag = 'scoped memory for tpu_custom_call.1']
    #allocation5 [shape = 'u8[1048576]{0}', space=vmem, size = 0x100000, scoped, tag = 'input window, operand 7, single buffered']
    #allocation6 [shape = 's32[1]{0}', space=sflag, size = 0x4, scoped, tag = 'scoped memory for tpu_custom_call.1']
    #allocation7 [shape = 'u8[262144]{0}', space=vmem, size = 0x40000, scoped, tag = 'input window, operand 9, single buffered']
    #allocation8 [shape = 'u8[262144]{0}', space=vmem, size = 0x40000, scoped, tag = 'input window, operand 17, single buffered']
    #allocation9 [shape = 's32[1]{0}', space=sflag, size = 0x4, scoped, tag = 'scoped memory for tpu_custom_call.1']
    #allocation10 [shape = 'u8[1048576]{0}', space=vmem, size = 0x100000, scoped, tag = 'input window, operand 19, single buffered']
    #allocation11 [shape = 'u8[262144]{0}', space=vmem, size = 0x40000, scoped, tag = 'input window, operand 21, single buffered']
    #allocation12 [shape = 's32[1]{0}', space=sflag, size = 0x4, scoped, tag = 'scoped memory for tpu_custom_call.1']
    #allocation13 [shape = 'u8[4096]{0}', space=vmem, size = 0x1000, scoped, tag = 'output window, operand 0, single buffered']
    %30 = vsyncpa [#allocation3], 0
    %31 = vsyncpa [#allocation6], 0
    %32 = vsyncpa [#allocation9], 0
    %33 = vsyncpa [#allocation12], 0
    %34 = vsyncpa [#allocation4], 0
    // Predicated region
    $region2: #{tpu_custom_call.1} parent=1 // pred_check
      _
    $region3: #{tpu_custom_call.1} parent=1 // pred_check_branch
      %36 = sbr.rel (0) target = $region5
    $region4: #{tpu_custom_call.1} parent=1 // pred_region
      _
    $region5: #{tpu_custom_call.1} parent=1 // pred_fallthru
      _
    // Predicated region
    $region6: #{tpu_custom_call.1} parent=1 // pred_check
      _
    $region7: #{tpu_custom_call.1} parent=1 // pred_check_branch
      %38 = sbr.rel (0) target = $region9
    $region8: #{tpu_custom_call.1} parent=1 // pred_region
      _
    $region9: #{tpu_custom_call.1} parent=1 // pred_fallthru
      _
    // Predicated region
    $region10: #{tpu_custom_call.1} parent=1 // pred_check
      _
    $region11: #{tpu_custom_call.1} parent=1 // pred_check_branch
      %40 = sbr.rel (0) target = $region13
    $region12: #{tpu_custom_call.1} parent=1 // pred_region
      _
    $region13: #{tpu_custom_call.1} parent=1 // pred_fallthru
      _
    // Predicated region
    $region14: #{tpu_custom_call.1} parent=1 // pred_check
      _
    $region15: #{tpu_custom_call.1} parent=1 // pred_check_branch
      %42 = sbr.rel (0) target = $region17
    $region16: #{tpu_custom_call.1} parent=1 // pred_region
      _
    $region17: #{tpu_custom_call.1} parent=1 // pred_fallthru
      _
    // Predicated region
    $region18: #{tpu_custom_call.1} parent=1 // pred_check
      _
    $region19: #{tpu_custom_call.1} parent=1 // pred_check_branch
      %44 = sbr.rel (0) target = $region21
    $region20: #{tpu_custom_call.1} parent=1 // pred_region
      _
    $region21: #{tpu_custom_call.1} parent=1 // pred_fallthru
      _
    // Predicated region
    $region22: #{tpu_custom_call.1} parent=1 // pred_check
      _
    $region23: #{tpu_custom_call.1} parent=1 // pred_check_branch
      %46 = sbr.rel (0) target = $region25
    $region24: #{tpu_custom_call.1} parent=1 // pred_region
      %48 = vsyncadd [#allocation3], 0
      %s49 = sshll.u32 %s5, 4
      %s50 = int_to_ptr.hbm [resolvable:$true] %s49
      %s51 = sshll.u32 [#allocation2], 4
      %s52 = int_to_ptr.vmem [resolvable:$true] %s51
      %57 = dma.hbm_to_vmem [thread:$0]  %s50, 8192, %s52, [#allocation3], 512, 512, 32
    $region25: #{tpu_custom_call.1} parent=1 // pred_fallthru
      _
    // Predicated region
    $region26: #{tpu_custom_call.1} parent=1 // pred_check
      _
    $region27: #{tpu_custom_call.1} parent=1 // pred_check_branch
      %59 = sbr.rel (0) target = $region29
    $region28: #{tpu_custom_call.1} parent=1 // pred_region
      _
    $region29: #{tpu_custom_call.1} parent=1 // pred_fallthru
      _
    // Predicated region
    $region30: #{tpu_custom_call.1} parent=1 // pred_check
      _
    $region31: #{tpu_custom_call.1} parent=1 // pred_check_branch
      %61 = sbr.rel (0) target = $region33
    $region32: #{tpu_custom_call.1} parent=1 // pred_region
      %63 = vsyncadd [#allocation6], 0
      %s64 = sshll.u32 %s7, 4
      %s65 = int_to_ptr.hbm [resolvable:$true] %s64
      %s66 = sshll.u32 [#allocation5], 4
      %s67 = int_to_ptr.vmem [resolvable:$true] %s66
      %72 = dma.hbm_to_vmem [thread:$0]  %s65, 32768, %s67, [#allocation6], 256, 256, 16
    $region33: #{tpu_custom_call.1} parent=1 // pred_fallthru
      _
    // Predicated region
    $region34: #{tpu_custom_call.1} parent=1 // pred_check
      _
    $region35: #{tpu_custom_call.1} parent=1 // pred_check_branch
      %74 = sbr.rel (0) target = $region37
    $region36: #{tpu_custom_call.1} parent=1 // pred_region
      _
    $region37: #{tpu_custom_call.1} parent=1 // pred_fallthru
      _
    // Predicated region
    $region38: #{tpu_custom_call.1} parent=1 // pred_check
      _
    $region39: #{tpu_custom_call.1} parent=1 // pred_check_branch
      %76 = sbr.rel (0) target = $region41
    $region40: #{tpu_custom_call.1} parent=1 // pred_region
      %78 = vsyncadd [#allocation6], 0
      %s79 = sshll.u32 %s9, 4
      %s80 = int_to_ptr.hbm [resolvable:$true] %s79
      %s81 = sshll.u32 [#allocation7], 4
      %s82 = int_to_ptr.vmem [resolvable:$true] %s81
      %87 = dma.hbm_to_vmem [thread:$0]  %s80, 8192, %s82, [#allocation6], 128, 128, 8
    $region41: #{tpu_custom_call.1} parent=1 // pred_fallthru
      _
    // Predicated region
    $region42: #{tpu_custom_call.1} parent=1 // pred_check
      _
    $region43: #{tpu_custom_call.1} parent=1 // pred_check_branch
      %89 = sbr.rel (0) target = $region45
    $region44: #{tpu_custom_call.1} parent=1 // pred_region
      _
    $region45: #{tpu_custom_call.1} parent=1 // pred_fallthru
      _
    // Predicated region
    $region46: #{tpu_custom_call.1} parent=1 // pred_check
      _
    $region47: #{tpu_custom_call.1} parent=1 // pred_check_branch
      %91 = sbr.rel (0) target = $region49
    $region48: #{tpu_custom_call.1} parent=1 // pred_region
      _
    $region49: #{tpu_custom_call.1} parent=1 // pred_fallthru
      _
    // Predicated region
    $region50: #{tpu_custom_call.1} parent=1 // pred_check
      _
    $region51: #{tpu_custom_call.1} parent=1 // pred_check_branch
      %93 = sbr.rel (0) target = $region53
    $region52: #{tpu_custom_call.1} parent=1 // pred_region
      _
    $region53: #{tpu_custom_call.1} parent=1 // pred_fallthru
      _
    // Predicated region
    $region54: #{tpu_custom_call.1} parent=1 // pred_check
      _
    $region55: #{tpu_custom_call.1} parent=1 // pred_check_branch
      %95 = sbr.rel (0) target = $region57
    $region56: #{tpu_custom_call.1} parent=1 // pred_region
      _
    $region57: #{tpu_custom_call.1} parent=1 // pred_fallthru
      _
    // Predicated region
    $region58: #{tpu_custom_call.1} parent=1 // pred_check
      _
    $region59: #{tpu_custom_call.1} parent=1 // pred_check_branch
      %97 = sbr.rel (0) target = $region61
    $region60: #{tpu_custom_call.1} parent=1 // pred_region
      _
    $region61: #{tpu_custom_call.1} parent=1 // pred_fallthru
      _
    // Predicated region
    $region62: #{tpu_custom_call.1} parent=1 // pred_check
      _
    $region63: #{tpu_custom_call.1} parent=1 // pred_check_branch
      %99 = sbr.rel (0) target = $region65
    $region64: #{tpu_custom_call.1} parent=1 // pred_region
      _
    $region65: #{tpu_custom_call.1} parent=1 // pred_fallthru
      _
    // Predicated region
    $region66: #{tpu_custom_call.1} parent=1 // pred_check
      _
    $region67: #{tpu_custom_call.1} parent=1 // pred_check_branch
      %101 = sbr.rel (0) target = $region69
    $region68: #{tpu_custom_call.1} parent=1 // pred_region
      _
    $region69: #{tpu_custom_call.1} parent=1 // pred_fallthru
      _
    // Predicated region
    $region70: #{tpu_custom_call.1} parent=1 // pred_check
      _
    $region71: #{tpu_custom_call.1} parent=1 // pred_check_branch
      %103 = sbr.rel (0) target = $region73
    $region72: #{tpu_custom_call.1} parent=1 // pred_region
      %105 = vsyncadd [#allocation9], 0
      %s106 = sshll.u32 %s17, 4
      %s107 = int_to_ptr.hbm [resolvable:$true] %s106
      %s108 = sshll.u32 [#allocation8], 4
      %s109 = int_to_ptr.vmem [resolvable:$true] %s108
      %114 = dma.hbm_to_vmem [thread:$0]  %s107, 8192, %s109, [#allocation9], 512, 512, 32
    $region73: #{tpu_custom_call.1} parent=1 // pred_fallthru
      _
    // Predicated region
    $region74: #{tpu_custom_call.1} parent=1 // pred_check
      _
    $region75: #{tpu_custom_call.1} parent=1 // pred_check_branch
      %116 = sbr.rel (0) target = $region77
    $region76: #{tpu_custom_call.1} parent=1 // pred_region
      _
    $region77: #{tpu_custom_call.1} parent=1 // pred_fallthru
      _
    // Predicated region
    $region78: #{tpu_custom_call.1} parent=1 // pred_check
      _
    $region79: #{tpu_custom_call.1} parent=1 // pred_check_branch
      %118 = sbr.rel (0) target = $region81
    $region80: #{tpu_custom_call.1} parent=1 // pred_region
      %120 = vsyncadd [#allocation9], 0
      %s121 = sshll.u32 %s19, 4
      %s122 = int_to_ptr.hbm [resolvable:$true] %s121
      %s123 = sshll.u32 [#allocation10], 4
      %s124 = int_to_ptr.vmem [resolvable:$true] %s123
      %129 = dma.hbm_to_vmem [thread:$0]  %s122, 32768, %s124, [#allocation9], 256, 256, 16
    $region81: #{tpu_custom_call.1} parent=1 // pred_fallthru
      _
    // Predicated region
    $region82: #{tpu_custom_call.1} parent=1 // pred_check
      _
    $region83: #{tpu_custom_call.1} parent=1 // pred_check_branch
      %131 = sbr.rel (0) target = $region85
    $region84: #{tpu_custom_call.1} parent=1 // pred_region
      _
    $region85: #{tpu_custom_call.1} parent=1 // pred_fallthru
      _
    // Predicated region
    $region86: #{tpu_custom_call.1} parent=1 // pred_check
      _
    $region87: #{tpu_custom_call.1} parent=1 // pred_check_branch
      %133 = sbr.rel (0) target = $region89
    $region88: #{tpu_custom_call.1} parent=1 // pred_region
      %135 = vsyncadd [#allocation12], 0
      %s136 = sshll.u32 %s21, 4
      %s137 = int_to_ptr.hbm [resolvable:$true] %s136
      %s138 = sshll.u32 [#allocation11], 4
      %s139 = int_to_ptr.vmem [resolvable:$true] %s138
      %144 = dma.hbm_to_vmem [thread:$0]  %s137, 8192, %s139, [#allocation12], 128, 128, 8
    $region89: #{tpu_custom_call.1} parent=1 // pred_fallthru
      _
    // Predicated region
    $region90: #{tpu_custom_call.1} parent=1 // pred_check
      _
    $region91: #{tpu_custom_call.1} parent=1 // pred_check_branch
      %146 = sbr.rel (0) target = $region93
    $region92: #{tpu_custom_call.1} parent=1 // pred_region
      _
    $region93: #{tpu_custom_call.1} parent=1 // pred_fallthru
      _
    // Predicated region
    $region94: #{tpu_custom_call.1} parent=1 // pred_check
      _
    $region95: #{tpu_custom_call.1} parent=1 // pred_check_branch
      %148 = sbr.rel (0) target = $region97
    $region96: #{tpu_custom_call.1} parent=1 // pred_region
      _
    $region97: #{tpu_custom_call.1} parent=1 // pred_fallthru
      _
    // Predicated region
    $region98: #{tpu_custom_call.1} parent=1 // pred_check
      _
    $region99: #{tpu_custom_call.1} parent=1 // pred_check_branch
      %150 = sbr.rel (0) target = $region101
    $region100: #{tpu_custom_call.1} parent=1 // pred_region
      _
    $region101: #{tpu_custom_call.1} parent=1 // pred_fallthru
      _
    // Predicated region
    $region102: #{tpu_custom_call.1} parent=1 // pred_check
      _
    $region103: #{tpu_custom_call.1} parent=1 // pred_check_branch
      %152 = sbr.rel (0) target = $region105
    $region104: #{tpu_custom_call.1} parent=1 // pred_region
      %154 = dma.done [#allocation3], 8192
    $region105: #{tpu_custom_call.1} parent=1 // pred_fallthru
      _
    // Predicated region
    $region106: #{tpu_custom_call.1} parent=1 // pred_check
      _
    $region107: #{tpu_custom_call.1} parent=1 // pred_check_branch
      %156 = sbr.rel (0) target = $region109
    $region108: #{tpu_custom_call.1} parent=1 // pred_region
      %158 = dma.done [#allocation6], 32768
    $region109: #{tpu_custom_call.1} parent=1 // pred_fallthru
      _
    // Predicated region
    $region110: #{tpu_custom_call.1} parent=1 // pred_check
      _
    $region111: #{tpu_custom_call.1} parent=1 // pred_check_branch
      %160 = sbr.rel (0) target = $region113
    $region112: #{tpu_custom_call.1} parent=1 // pred_region
      %162 = dma.done [#allocation6], 8192
    $region113: #{tpu_custom_call.1} parent=1 // pred_fallthru
      _
    // Predicated region
    $region114: #{tpu_custom_call.1} parent=1 // pred_check
      _
    $region115: #{tpu_custom_call.1} parent=1 // pred_check_branch
      %164 = sbr.rel (0) target = $region117
    $region116: #{tpu_custom_call.1} parent=1 // pred_region
      %166 = dma.done [#allocation9], 8192
    $region117: #{tpu_custom_call.1} parent=1 // pred_fallthru
      _
    // Predicated region
    $region118: #{tpu_custom_call.1} parent=1 // pred_check
      _
    $region119: #{tpu_custom_call.1} parent=1 // pred_check_branch
      %168 = sbr.rel (0) target = $region121
    $region120: #{tpu_custom_call.1} parent=1 // pred_region
      %170 = dma.done [#allocation9], 32768
    $region121: #{tpu_custom_call.1} parent=1 // pred_fallthru
      _
    // Predicated region
    $region122: #{tpu_custom_call.1} parent=1 // pred_check
      _
    $region123: #{tpu_custom_call.1} parent=1 // pred_check_branch
      %172 = sbr.rel (0) target = $region125
    $region124: #{tpu_custom_call.1} parent=1 // pred_region
      %174 = dma.done [#allocation12], 8192
    $region125: #{tpu_custom_call.1} parent=1 // pred_fallthru
      _
    %v176 = vld [vmem:[%s0] sm:$0xff]
    %v177 = vld [vmem:[%s0 + $0x8] sm:$0xff]
    %v178 = vld [vmem:[%s0 + $0x10] sm:$0xff]
    %v179 = vld [vmem:[%s0 + $0x18] sm:$0xff]
    %v180 = vld [vmem:[%s0 + $0x20] sm:$0xff]
    %v181 = vld [vmem:[%s0 + $0x28] sm:$0xff]
    %v182 = vld [vmem:[%s0 + $0x30] sm:$0xff]
    %v183 = vld [vmem:[%s0 + $0x38] sm:$0xff]
    %v184 = vld [vmem:[%s0 + $0x40] sm:$0xff]
    %v185 = vld [vmem:[%s0 + $0x48] sm:$0xff]
    %v186 = vld [vmem:[%s0 + $0x50] sm:$0xff]
    %v187 = vld [vmem:[%s0 + $0x58] sm:$0xff]
    %v188 = vld [vmem:[%s0 + $0x60] sm:$0xff]
    %v189 = vld [vmem:[%s0 + $0x68] sm:$0xff]
    %v190 = vld [vmem:[%s0 + $0x70] sm:$0xff]
    %v191 = vld [vmem:[%s0 + $0x78] sm:$0xff]
    %v192 = vld [vmem:[%s1] sm:$0xf]
    %v193 = vld [vmem:[%s2] sm:$0x1]
    %195 = vset.pattern.permute.xlu0 0
    %196 = vperm.xlu0 %195, %v176
    %v197 = vpop.permute.xlu0 %196
    %200 = vset.pattern.permute.xlu0 0
    %201 = vperm.xlu0 %200, %v177
    %v202 = vpop.permute.xlu0 %201
    %205 = vset.pattern.permute.xlu0 0
    %206 = vperm.xlu0 %205, %v178
    %v207 = vpop.permute.xlu0 %206
    %210 = vset.pattern.permute.xlu0 0
    %211 = vperm.xlu0 %210, %v179
    %v212 = vpop.permute.xlu0 %211
    %215 = vset.pattern.permute.xlu0 0
    %216 = vperm.xlu0 %215, %v180
    %v217 = vpop.permute.xlu0 %216
    %220 = vset.pattern.permute.xlu0 0
    %221 = vperm.xlu0 %220, %v181
    %v222 = vpop.permute.xlu0 %221
    %225 = vset.pattern.permute.xlu0 0
    %226 = vperm.xlu0 %225, %v182
    %v227 = vpop.permute.xlu0 %226
    %230 = vset.pattern.permute.xlu0 0
    %231 = vperm.xlu0 %230, %v183
    %v232 = vpop.permute.xlu0 %231
    %235 = vset.pattern.permute.xlu0 0
    %236 = vperm.xlu0 %235, %v184
    %v237 = vpop.permute.xlu0 %236
    %240 = vset.pattern.permute.xlu0 0
    %241 = vperm.xlu0 %240, %v185
    %v242 = vpop.permute.xlu0 %241
    %245 = vset.pattern.permute.xlu0 0
    %246 = vperm.xlu0 %245, %v186
    %v247 = vpop.permute.xlu0 %246
    %250 = vset.pattern.permute.xlu0 0
    %251 = vperm.xlu0 %250, %v187
    %v252 = vpop.permute.xlu0 %251
    %255 = vset.pattern.permute.xlu0 0
    %256 = vperm.xlu0 %255, %v188
    %v257 = vpop.permute.xlu0 %256
    %260 = vset.pattern.permute.xlu0 0
    %261 = vperm.xlu0 %260, %v189
    %v262 = vpop.permute.xlu0 %261
    %265 = vset.pattern.permute.xlu0 0
    %266 = vperm.xlu0 %265, %v190
    %v267 = vpop.permute.xlu0 %266
    %270 = vset.pattern.permute.xlu0 0
    %271 = vperm.xlu0 %270, %v191
    %v272 = vpop.permute.xlu0 %271
    %v274 = vperm.slane %v192, 0
    %v275 = vmul.f32 %v197, %v274
    %v276 = vmul.f32 %v202, %v274
    %v277 = vmul.f32 %v207, %v274
    %v278 = vmul.f32 %v212, %v274
    %v279 = vmul.f32 %v217, %v274
    %v280 = vmul.f32 %v222, %v274
    %v281 = vmul.f32 %v227, %v274
    %v282 = vmul.f32 %v232, %v274
    %v283 = vmul.f32 %v237, %v274
    %v284 = vmul.f32 %v242, %v274
    %v285 = vmul.f32 %v247, %v274
    %v286 = vmul.f32 %v252, %v274
    %v287 = vmul.f32 %v257, %v274
    %v288 = vmul.f32 %v262, %v274
    %v289 = vmul.f32 %v267, %v274
    %v290 = vmul.f32 %v272, %v274
    %291 = vset.pattern.permute.xlu0 1
    %292 = vperm.xlu0 %291, %v176
    %v293 = vpop.permute.xlu0 %292
    %295 = vset.pattern.permute.xlu0 1
    %296 = vperm.xlu0 %295, %v177
    %v297 = vpop.permute.xlu0 %296
    %299 = vset.pattern.permute.xlu0 1
    %300 = vperm.xlu0 %299, %v178
    %v301 = vpop.permute.xlu0 %300
    %303 = vset.pattern.permute.xlu0 1
    %304 = vperm.xlu0 %303, %v179
    %v305 = vpop.permute.xlu0 %304
    %307 = vset.pattern.permute.xlu0 1
    %308 = vperm.xlu0 %307, %v180
    %v309 = vpop.permute.xlu0 %308
    %311 = vset.pattern.permute.xlu0 1
    %312 = vperm.xlu0 %311, %v181
    %v313 = vpop.permute.xlu0 %312
    %315 = vset.pattern.permute.xlu0 1
    %316 = vperm.xlu0 %315, %v182
    %v317 = vpop.permute.xlu0 %316
    %319 = vset.pattern.permute.xlu0 1
    %320 = vperm.xlu0 %319, %v183
    %v321 = vpop.permute.xlu0 %320
    %323 = vset.pattern.permute.xlu0 1
    %324 = vperm.xlu0 %323, %v184
    %v325 = vpop.permute.xlu0 %324
    %327 = vset.pattern.permute.xlu0 1
    %328 = vperm.xlu0 %327, %v185
    %v329 = vpop.permute.xlu0 %328
    %331 = vset.pattern.permute.xlu0 1
    %332 = vperm.xlu0 %331, %v186
    %v333 = vpop.permute.xlu0 %332
    %335 = vset.pattern.permute.xlu0 1
    %336 = vperm.xlu0 %335, %v187
    %v337 = vpop.permute.xlu0 %336
    %339 = vset.pattern.permute.xlu0 1
    %340 = vperm.xlu0 %339, %v188
    %v341 = vpop.permute.xlu0 %340
    %343 = vset.pattern.permute.xlu0 1
    %344 = vperm.xlu0 %343, %v189
    %v345 = vpop.permute.xlu0 %344
    %347 = vset.pattern.permute.xlu0 1
    %348 = vperm.xlu0 %347, %v190
    %v349 = vpop.permute.xlu0 %348
    %351 = vset.pattern.permute.xlu0 1
    %352 = vperm.xlu0 %351, %v191
    %v353 = vpop.permute.xlu0 %352
    %v355 = vperm.slane %v192, 1
    %v356 = vmul.f32 %v293, %v355
    %v357 = vmul.f32 %v297, %v355
    %v358 = vmul.f32 %v301, %v355
    %v359 = vmul.f32 %v305, %v355
    %v360 = vmul.f32 %v309, %v355
    %v361 = vmul.f32 %v313, %v355
    %v362 = vmul.f32 %v317, %v355
    %v363 = vmul.f32 %v321, %v355
    %v364 = vmul.f32 %v325, %v355
    %v365 = vmul.f32 %v329, %v355
    %v366 = vmul.f32 %v333, %v355
    %v367 = vmul.f32 %v337, %v355
    %v368 = vmul.f32 %v341, %v355
    %v369 = vmul.f32 %v345, %v355
    %v370 = vmul.f32 %v349, %v355
    %v371 = vmul.f32 %v353, %v355
    %v372 = vadd.f32 %v275, %v356
    %v373 = vadd.f32 %v276, %v357
    %v374 = vadd.f32 %v277, %v358
    %v375 = vadd.f32 %v278, %v359
    %v376 = vadd.f32 %v279, %v360
    %v377 = vadd.f32 %v280, %v361
    %v378 = vadd.f32 %v281, %v362
    %v379 = vadd.f32 %v282, %v363
    %v380 = vadd.f32 %v283, %v364
    %v381 = vadd.f32 %v284, %v365
    %v382 = vadd.f32 %v285, %v366
    %v383 = vadd.f32 %v286, %v367
    %v384 = vadd.f32 %v287, %v368
    %v385 = vadd.f32 %v288, %v369
    %v386 = vadd.f32 %v289, %v370
    %v387 = vadd.f32 %v290, %v371
    %388 = vset.pattern.permute.xlu0 2
    %389 = vperm.xlu0 %388, %v176
    %v390 = vpop.permute.xlu0 %389
    %392 = vset.pattern.permute.xlu0 2
    %393 = vperm.xlu0 %392, %v177
    %v394 = vpop.permute.xlu0 %393
    %396 = vset.pattern.permute.xlu0 2
    %397 = vperm.xlu0 %396, %v178
    %v398 = vpop.permute.xlu0 %397
    %400 = vset.pattern.permute.xlu0 2
    %401 = vperm.xlu0 %400, %v179
    %v402 = vpop.permute.xlu0 %401
    %404 = vset.pattern.permute.xlu0 2
    %405 = vperm.xlu0 %404, %v180
    %v406 = vpop.permute.xlu0 %405
    %408 = vset.pattern.permute.xlu0 2
    %409 = vperm.xlu0 %408, %v181
    %v410 = vpop.permute.xlu0 %409
    %412 = vset.pattern.permute.xlu0 2
    %413 = vperm.xlu0 %412, %v182
    %v414 = vpop.permute.xlu0 %413
    %416 = vset.pattern.permute.xlu0 2
    %417 = vperm.xlu0 %416, %v183
    %v418 = vpop.permute.xlu0 %417
    %420 = vset.pattern.permute.xlu0 2
    %421 = vperm.xlu0 %420, %v184
    %v422 = vpop.permute.xlu0 %421
    %424 = vset.pattern.permute.xlu0 2
    %425 = vperm.xlu0 %424, %v185
    %v426 = vpop.permute.xlu0 %425
    %428 = vset.pattern.permute.xlu0 2
    %429 = vperm.xlu0 %428, %v186
    %v430 = vpop.permute.xlu0 %429
    %432 = vset.pattern.permute.xlu0 2
    %433 = vperm.xlu0 %432, %v187
    %v434 = vpop.permute.xlu0 %433
    %436 = vset.pattern.permute.xlu0 2
    %437 = vperm.xlu0 %436, %v188
    %v438 = vpop.permute.xlu0 %437
    %440 = vset.pattern.permute.xlu0 2
    %441 = vperm.xlu0 %440, %v189
    %v442 = vpop.permute.xlu0 %441
    %444 = vset.pattern.permute.xlu0 2
    %445 = vperm.xlu0 %444, %v190
    %v446 = vpop.permute.xlu0 %445
    %448 = vset.pattern.permute.xlu0 2
    %449 = vperm.xlu0 %448, %v191
    %v450 = vpop.permute.xlu0 %449
    %v452 = vperm.slane %v192, 2
    %v453 = vmul.f32 %v390, %v452
    %v454 = vmul.f32 %v394, %v452
    %v455 = vmul.f32 %v398, %v452
    %v456 = vmul.f32 %v402, %v452
    %v457 = vmul.f32 %v406, %v452
    %v458 = vmul.f32 %v410, %v452
    %v459 = vmul.f32 %v414, %v452
    %v460 = vmul.f32 %v418, %v452
    %v461 = vmul.f32 %v422, %v452
    %v462 = vmul.f32 %v426, %v452
    %v463 = vmul.f32 %v430, %v452
    %v464 = vmul.f32 %v434, %v452
    %v465 = vmul.f32 %v438, %v452
    %v466 = vmul.f32 %v442, %v452
    %v467 = vmul.f32 %v446, %v452
    %v468 = vmul.f32 %v450, %v452
    %v469 = vadd.f32 %v372, %v453
    %v470 = vadd.f32 %v373, %v454
    %v471 = vadd.f32 %v374, %v455
    %v472 = vadd.f32 %v375, %v456
    %v473 = vadd.f32 %v376, %v457
    %v474 = vadd.f32 %v377, %v458
    %v475 = vadd.f32 %v378, %v459
    %v476 = vadd.f32 %v379, %v460
    %v477 = vadd.f32 %v380, %v461
    %v478 = vadd.f32 %v381, %v462
    %v479 = vadd.f32 %v382, %v463
    %v480 = vadd.f32 %v383, %v464
    %v481 = vadd.f32 %v384, %v465
    %v482 = vadd.f32 %v385, %v466
    %v483 = vadd.f32 %v386, %v467
    %v484 = vadd.f32 %v387, %v468
    %485 = vset.pattern.permute.xlu0 3
    %486 = vperm.xlu0 %485, %v176
    %v487 = vpop.permute.xlu0 %486
    %489 = vset.pattern.permute.xlu0 3
    %490 = vperm.xlu0 %489, %v177
    %v491 = vpop.permute.xlu0 %490
    %493 = vset.pattern.permute.xlu0 3
    %494 = vperm.xlu0 %493, %v178
    %v495 = vpop.permute.xlu0 %494
    %497 = vset.pattern.permute.xlu0 3
    %498 = vperm.xlu0 %497, %v179
    %v499 = vpop.permute.xlu0 %498
    %501 = vset.pattern.permute.xlu0 3
    %502 = vperm.xlu0 %501, %v180
    %v503 = vpop.permute.xlu0 %502
    %505 = vset.pattern.permute.xlu0 3
    %506 = vperm.xlu0 %505, %v181
    %v507 = vpop.permute.xlu0 %506
    %509 = vset.pattern.permute.xlu0 3
    %510 = vperm.xlu0 %509, %v182
    %v511 = vpop.permute.xlu0 %510
    %513 = vset.pattern.permute.xlu0 3
    %514 = vperm.xlu0 %513, %v183
    %v515 = vpop.permute.xlu0 %514
    %517 = vset.pattern.permute.xlu0 3
    %518 = vperm.xlu0 %517, %v184
    %v519 = vpop.permute.xlu0 %518
    %521 = vset.pattern.permute.xlu0 3
    %522 = vperm.xlu0 %521, %v185
    %v523 = vpop.permute.xlu0 %522
    %525 = vset.pattern.permute.xlu0 3
    %526 = vperm.xlu0 %525, %v186
    %v527 = vpop.permute.xlu0 %526
    %529 = vset.pattern.permute.xlu0 3
    %530 = vperm.xlu0 %529, %v187
    %v531 = vpop.permute.xlu0 %530
    %533 = vset.pattern.permute.xlu0 3
    %534 = vperm.xlu0 %533, %v188
    %v535 = vpop.permute.xlu0 %534
    %537 = vset.pattern.permute.xlu0 3
    %538 = vperm.xlu0 %537, %v189
    %v539 = vpop.permute.xlu0 %538
    %541 = vset.pattern.permute.xlu0 3
    %542 = vperm.xlu0 %541, %v190
    %v543 = vpop.permute.xlu0 %542
    %545 = vset.pattern.permute.xlu0 3
    %546 = vperm.xlu0 %545, %v191
    %v547 = vpop.permute.xlu0 %546
    %v549 = vperm.slane %v192, 3
    %v550 = vmul.f32 %v487, %v549
    %v551 = vmul.f32 %v491, %v549
    %v552 = vmul.f32 %v495, %v549
    %v553 = vmul.f32 %v499, %v549
    %v554 = vmul.f32 %v503, %v549
    %v555 = vmul.f32 %v507, %v549
    %v556 = vmul.f32 %v511, %v549
    %v557 = vmul.f32 %v515, %v549
    %v558 = vmul.f32 %v519, %v549
    %v559 = vmul.f32 %v523, %v549
    %v560 = vmul.f32 %v527, %v549
    %v561 = vmul.f32 %v531, %v549
    %v562 = vmul.f32 %v535, %v549
    %v563 = vmul.f32 %v539, %v549
    %v564 = vmul.f32 %v543, %v549
    %v565 = vmul.f32 %v547, %v549
    %v566 = vadd.f32 %v469, %v550
    %v567 = vadd.f32 %v470, %v551
    %v568 = vadd.f32 %v471, %v552
    %v569 = vadd.f32 %v472, %v553
    %v570 = vadd.f32 %v473, %v554
    %v571 = vadd.f32 %v474, %v555
    %v572 = vadd.f32 %v475, %v556
    %v573 = vadd.f32 %v476, %v557
    %v574 = vadd.f32 %v477, %v558
    %v575 = vadd.f32 %v478, %v559
    %v576 = vadd.f32 %v479, %v560
    %v577 = vadd.f32 %v480, %v561
    %v578 = vadd.f32 %v481, %v562
    %v579 = vadd.f32 %v482, %v563
    %v580 = vadd.f32 %v483, %v564
    %v581 = vadd.f32 %v484, %v565
    %v583 = vperm.slane %v193, 0
    %v585 = vadd.f32 %v566, %v583
    %v586 = vadd.f32 %v567, %v583
    %v587 = vadd.f32 %v568, %v583
    %v588 = vadd.f32 %v569, %v583
    %v589 = vadd.f32 %v570, %v583
    %v590 = vadd.f32 %v571, %v583
    %v591 = vadd.f32 %v572, %v583
    %v592 = vadd.f32 %v573, %v583
    %v593 = vadd.f32 %v574, %v583
    %v594 = vadd.f32 %v575, %v583
    %v595 = vadd.f32 %v576, %v583
    %v596 = vadd.f32 %v577, %v583
    %v597 = vadd.f32 %v578, %v583
    %v598 = vadd.f32 %v579, %v583
    %v599 = vadd.f32 %v580, %v583
    %v600 = vadd.f32 %v581, %v583
    %v601 = vmax.f32 %v585, 0.0
    %v602 = vmax.f32 %v586, 0.0
    %v603 = vmax.f32 %v587, 0.0
    %v604 = vmax.f32 %v588, 0.0
    %v605 = vmax.f32 %v589, 0.0
    %v606 = vmax.f32 %v590, 0.0
    %v607 = vmax.f32 %v591, 0.0
    %v608 = vmax.f32 %v592, 0.0
    %v609 = vmax.f32 %v593, 0.0
    %v610 = vmax.f32 %v594, 0.0
    %v611 = vmax.f32 %v595, 0.0
    %v612 = vmax.f32 %v596, 0.0
    %v613 = vmax.f32 %v597, 0.0
    %v614 = vmax.f32 %v598, 0.0
    %v615 = vmax.f32 %v599, 0.0
    %v616 = vmax.f32 %v600, 0.0
    %v617 = vld [vmem:[%s3] sm:$0xf]
    %v618 = vld [vmem:[%s3 + $0x4] sm:$0xf]
    %v619 = vld [vmem:[%s3 + $0x8] sm:$0xf]
    %v620 = vld [vmem:[%s3 + $0xc] sm:$0xf]
    %v621 = vld [vmem:[%s3 + $0x10] sm:$0xf]
    %v622 = vld [vmem:[%s3 + $0x14] sm:$0xf]
    %v623 = vld [vmem:[%s3 + $0x18] sm:$0xf]
    %v624 = vld [vmem:[%s3 + $0x1c] sm:$0xf]
    %v625 = vpack.c.bf16 %v602, %v601
    %v626 = vpack.c.bf16 %v604, %v603
    %v627 = vpack.c.bf16 %v606, %v605
    %v628 = vpack.c.bf16 %v608, %v607
    %v629 = vpack.c.bf16 %v610, %v609
    %v630 = vpack.c.bf16 %v612, %v611
    %v631 = vpack.c.bf16 %v614, %v613
    %v632 = vpack.c.bf16 %v616, %v615
    %v633 = vld [vmem:[%s4] sm:$0x1]
    %v635 = vperm.slane %v633, 0
    %v645 = vunpack.c.l.b16 %v617
    %v646 = vunpack.c.l.b16 %v618
    %v647 = vunpack.c.l.b16 %v619
    %v648 = vunpack.c.l.b16 %v620
    %v649 = vunpack.c.l.b16 %v621
    %v650 = vunpack.c.l.b16 %v622
    %v651 = vunpack.c.l.b16 %v623
    %v652 = vunpack.c.l.b16 %v624
    %v653 = vpack.c.b16 %v646, %v645
    %v654 = vpack.c.b16 %v648, %v647
    %v655 = vpack.c.b16 %v650, %v649
    %v656 = vpack.c.b16 %v652, %v651
    %vm661 = vcmask 523264
    %v663 = vsel %vm661, %v625, 0
    %v666 = vsel %vm661, %v626, 0
    %v669 = vsel %vm661, %v627, 0
    %v672 = vsel %vm661, %v628, 0
    %v675 = vsel %vm661, %v629, 0
    %v678 = vsel %vm661, %v630, 0
    %v681 = vsel %vm661, %v631, 0
    %v684 = vsel %vm661, %v632, 0
    %686 = vmatpush.bf16.msra.mxu0 0
    %687 = vmatpush.bf16.msra.mxu0 0
    %688 = vmatpush.bf16.msra.mxu0 0
    %689 = vmatpush.bf16.msra.mxu0 0
    %690 = vmatpush.bf16.msra.mxu0 %v656
    %691 = vmatpush.bf16.msra.mxu0 %v655
    %692 = vmatpush.bf16.msra.mxu0 %v654
    %693 = vmatpush.bf16.msra.mxu0 %v653
    %694 = vmatmul.bf16.gmra.mxu0 %v663
    %v695 = vpop.f32.mrf.mxu0
    %v696 = vadd.f32 %v635, %v695
    %v697 = vpop.f32.mrf.mxu0
    %v698 = vadd.f32 %v635, %v697
    %699 = vmatmul.bf16.gmra.mxu0 %v666
    %v700 = vpop.f32.mrf.mxu0
    %v701 = vadd.f32 %v635, %v700
    %v702 = vpop.f32.mrf.mxu0
    %v703 = vadd.f32 %v635, %v702
    %704 = vmatmul.bf16.gmra.mxu0 %v669
    %v705 = vpop.f32.mrf.mxu0
    %v706 = vadd.f32 %v635, %v705
    %v707 = vpop.f32.mrf.mxu0
    %v708 = vadd.f32 %v635, %v707
    %709 = vmatmul.bf16.gmra.mxu0 %v672
    %v710 = vpop.f32.mrf.mxu0
    %v711 = vadd.f32 %v635, %v710
    %v712 = vpop.f32.mrf.mxu0
    %v713 = vadd.f32 %v635, %v712
    %714 = vmatmul.bf16.gmra.mxu0 %v675
    %v715 = vpop.f32.mrf.mxu0
    %v716 = vadd.f32 %v635, %v715
    %v717 = vpop.f32.mrf.mxu0
    %v718 = vadd.f32 %v635, %v717
    %719 = vmatmul.bf16.gmra.mxu0 %v678
    %v720 = vpop.f32.mrf.mxu0
    %v721 = vadd.f32 %v635, %v720
    %v722 = vpop.f32.mrf.mxu0
    %v723 = vadd.f32 %v635, %v722
    %724 = vmatmul.bf16.gmra.mxu0 %v681
    %v725 = vpop.f32.mrf.mxu0
    %v726 = vadd.f32 %v635, %v725
    %v727 = vpop.f32.mrf.mxu0
    %v728 = vadd.f32 %v635, %v727
    %729 = vmatmul.bf16.gmra.mxu0 %v684
    %v730 = vpop.f32.mrf.mxu0
    %v731 = vadd.f32 %v635, %v730
    %v732 = vpop.f32.mrf.mxu0
    %v733 = vadd.f32 %v635, %v732
    %734 = vdwg.mxu0
    %v735 = vmax.f32 %v696, 0.0
    %v736 = vmax.f32 %v698, 0.0
    %v737 = vmax.f32 %v701, 0.0
    %v738 = vmax.f32 %v703, 0.0
    %v739 = vmax.f32 %v706, 0.0
    %v740 = vmax.f32 %v708, 0.0
    %v741 = vmax.f32 %v711, 0.0
    %v742 = vmax.f32 %v713, 0.0
    %v743 = vmax.f32 %v716, 0.0
    %v744 = vmax.f32 %v718, 0.0
    %v745 = vmax.f32 %v721, 0.0
    %v746 = vmax.f32 %v723, 0.0
    %v747 = vmax.f32 %v726, 0.0
    %v748 = vmax.f32 %v728, 0.0
    %v749 = vmax.f32 %v731, 0.0
    %v750 = vmax.f32 %v733, 0.0
    %v751 = vld [vmem:[#allocation2] sm:$0xff]
    %v752 = vld [vmem:[#allocation2 + $0x8] sm:$0xff]
    %v753 = vld [vmem:[#allocation2 + $0x10] sm:$0xff]
    %v754 = vld [vmem:[#allocation2 + $0x18] sm:$0xff]
    %v755 = vld [vmem:[#allocation2 + $0x20] sm:$0xff]
    %v756 = vld [vmem:[#allocation2 + $0x28] sm:$0xff]
    %v757 = vld [vmem:[#allocation2 + $0x30] sm:$0xff]
    %v758 = vld [vmem:[#allocation2 + $0x38] sm:$0xff]
    %v759 = vld [vmem:[#allocation2 + $0x40] sm:$0xff]
    %v760 = vld [vmem:[#allocation2 + $0x48] sm:$0xff]
    %v761 = vld [vmem:[#allocation2 + $0x50] sm:$0xff]
    %v762 = vld [vmem:[#allocation2 + $0x58] sm:$0xff]
    %v763 = vld [vmem:[#allocation2 + $0x60] sm:$0xff]
    %v764 = vld [vmem:[#allocation2 + $0x68] sm:$0xff]
    %v765 = vld [vmem:[#allocation2 + $0x70] sm:$0xff]
    %v766 = vld [vmem:[#allocation2 + $0x78] sm:$0xff]
    %v767 = vld [vmem:[#allocation2 + $0x80] sm:$0xff]
    %v768 = vld [vmem:[#allocation2 + $0x88] sm:$0xff]
    %v769 = vld [vmem:[#allocation2 + $0x90] sm:$0xff]
    %v770 = vld [vmem:[#allocation2 + $0x98] sm:$0xff]
    %v771 = vld [vmem:[#allocation2 + $0xa0] sm:$0xff]
    %v772 = vld [vmem:[#allocation2 + $0xa8] sm:$0xff]
    %v773 = vld [vmem:[#allocation2 + $0xb0] sm:$0xff]
    %v774 = vld [vmem:[#allocation2 + $0xb8] sm:$0xff]
    %v775 = vld [vmem:[#allocation2 + $0xc0] sm:$0xff]
    %v776 = vld [vmem:[#allocation2 + $0xc8] sm:$0xff]
    %v777 = vld [vmem:[#allocation2 + $0xd0] sm:$0xff]
    %v778 = vld [vmem:[#allocation2 + $0xd8] sm:$0xff]
    %v779 = vld [vmem:[#allocation2 + $0xe0] sm:$0xff]
    %v780 = vld [vmem:[#allocation2 + $0xe8] sm:$0xff]
    %v781 = vld [vmem:[#allocation2 + $0xf0] sm:$0xff]
    %v782 = vld [vmem:[#allocation2 + $0xf8] sm:$0xff]
    %v783 = vld [vmem:[#allocation2 + $0x100] sm:$0xff]
    %v784 = vld [vmem:[#allocation2 + $0x108] sm:$0xff]
    %v785 = vld [vmem:[#allocation2 + $0x110] sm:$0xff]
    %v786 = vld [vmem:[#allocation2 + $0x118] sm:$0xff]
    %v787 = vld [vmem:[#allocation2 + $0x120] sm:$0xff]
    %v788 = vld [vmem:[#allocation2 + $0x128] sm:$0xff]
    %v789 = vld [vmem:[#allocation2 + $0x130] sm:$0xff]
    %v790 = vld [vmem:[#allocation2 + $0x138] sm:$0xff]
    %v791 = vld [vmem:[#allocation2 + $0x140] sm:$0xff]
    %v792 = vld [vmem:[#allocation2 + $0x148] sm:$0xff]
    %v793 = vld [vmem:[#allocation2 + $0x150] sm:$0xff]
    %v794 = vld [vmem:[#allocation2 + $0x158] sm:$0xff]
    %v795 = vld [vmem:[#allocation2 + $0x160] sm:$0xff]
    %v796 = vld [vmem:[#allocation2 + $0x168] sm:$0xff]
    %v797 = vld [vmem:[#allocation2 + $0x170] sm:$0xff]
    %v798 = vld [vmem:[#allocation2 + $0x178] sm:$0xff]
    %v799 = vld [vmem:[#allocation2 + $0x180] sm:$0xff]
    %v800 = vld [vmem:[#allocation2 + $0x188] sm:$0xff]
    %v801 = vld [vmem:[#allocation2 + $0x190] sm:$0xff]
    %v802 = vld [vmem:[#allocation2 + $0x198] sm:$0xff]
    %v803 = vld [vmem:[#allocation2 + $0x1a0] sm:$0xff]
    %v804 = vld [vmem:[#allocation2 + $0x1a8] sm:$0xff]
    %v805 = vld [vmem:[#allocation2 + $0x1b0] sm:$0xff]
    %v806 = vld [vmem:[#allocation2 + $0x1b8] sm:$0xff]
    %v807 = vld [vmem:[#allocation2 + $0x1c0] sm:$0xff]
    %v808 = vld [vmem:[#allocation2 + $0x1c8] sm:$0xff]
    %v809 = vld [vmem:[#allocation2 + $0x1d0] sm:$0xff]
    %v810 = vld [vmem:[#allocation2 + $0x1d8] sm:$0xff]
    %v811 = vld [vmem:[#allocation2 + $0x1e0] sm:$0xff]
    %v812 = vld [vmem:[#allocation2 + $0x1e8] sm:$0xff]
    %v813 = vld [vmem:[#allocation2 + $0x1f0] sm:$0xff]
    %v814 = vld [vmem:[#allocation2 + $0x1f8] sm:$0xff]
    %v815 = vpack.c.bf16 %v736, %v735
    %v816 = vpack.c.bf16 %v738, %v737
    %v817 = vpack.c.bf16 %v740, %v739
    %v818 = vpack.c.bf16 %v742, %v741
    %v819 = vpack.c.bf16 %v744, %v743
    %v820 = vpack.c.bf16 %v746, %v745
    %v821 = vpack.c.bf16 %v748, %v747
    %v822 = vpack.c.bf16 %v750, %v749
    %v823 = vld [vmem:[%s6] sm:$0xff]
    %v825 = vperm.slane %v823, 0
    %v826 = vperm.slane %v823, 1
    %v827 = vperm.slane %v823, 2
    %v828 = vperm.slane %v823, 3
    %v829 = vperm.slane %v823, 4
    %v830 = vperm.slane %v823, 5
    %v831 = vperm.slane %v823, 6
    %v832 = vperm.slane %v823, 7
    %v905 = vunpack.c.l.b16 %v751
    %v906 = vunpack.c.h.b16 %v751
    %v907 = vunpack.c.l.b16 %v752
    %v908 = vunpack.c.h.b16 %v752
    %v909 = vunpack.c.l.b16 %v753
    %v910 = vunpack.c.h.b16 %v753
    %v911 = vunpack.c.l.b16 %v754
    %v912 = vunpack.c.h.b16 %v754
    %v913 = vunpack.c.l.b16 %v755
    %v914 = vunpack.c.h.b16 %v755
    %v915 = vunpack.c.l.b16 %v756
    %v916 = vunpack.c.h.b16 %v756
    %v917 = vunpack.c.l.b16 %v757
    %v918 = vunpack.c.h.b16 %v757
    %v919 = vunpack.c.l.b16 %v758
    %v920 = vunpack.c.h.b16 %v758
    %v921 = vunpack.c.l.b16 %v759
    %v922 = vunpack.c.h.b16 %v759
    %v923 = vunpack.c.l.b16 %v760
    %v924 = vunpack.c.h.b16 %v760
    %v925 = vunpack.c.l.b16 %v761
    %v926 = vunpack.c.h.b16 %v761
    %v927 = vunpack.c.l.b16 %v762
    %v928 = vunpack.c.h.b16 %v762
    %v929 = vunpack.c.l.b16 %v763
    %v930 = vunpack.c.h.b16 %v763
    %v931 = vunpack.c.l.b16 %v764
    %v932 = vunpack.c.h.b16 %v764
    %v933 = vunpack.c.l.b16 %v765
    %v934 = vunpack.c.h.b16 %v765
    %v935 = vunpack.c.l.b16 %v766
    %v936 = vunpack.c.h.b16 %v766
    %v937 = vunpack.c.l.b16 %v767
    %v938 = vunpack.c.h.b16 %v767
    %v939 = vunpack.c.l.b16 %v768
    %v940 = vunpack.c.h.b16 %v768
    %v941 = vunpack.c.l.b16 %v769
    %v942 = vunpack.c.h.b16 %v769
    %v943 = vunpack.c.l.b16 %v770
    %v944 = vunpack.c.h.b16 %v770
    %v945 = vunpack.c.l.b16 %v771
    %v946 = vunpack.c.h.b16 %v771
    %v947 = vunpack.c.l.b16 %v772
    %v948 = vunpack.c.h.b16 %v772
    %v949 = vunpack.c.l.b16 %v773
    %v950 = vunpack.c.h.b16 %v773
    %v951 = vunpack.c.l.b16 %v774
    %v952 = vunpack.c.h.b16 %v774
    %v953 = vunpack.c.l.b16 %v775
    %v954 = vunpack.c.h.b16 %v775
    %v955 = vunpack.c.l.b16 %v776
    %v956 = vunpack.c.h.b16 %v776
    %v957 = vunpack.c.l.b16 %v777
    %v958 = vunpack.c.h.b16 %v777
    %v959 = vunpack.c.l.b16 %v778
    %v960 = vunpack.c.h.b16 %v778
    %v961 = vunpack.c.l.b16 %v779
    %v962 = vunpack.c.h.b16 %v779
    %v963 = vunpack.c.l.b16 %v780
    %v964 = vunpack.c.h.b16 %v780
    %v965 = vunpack.c.l.b16 %v781
    %v966 = vunpack.c.h.b16 %v781
    %v967 = vunpack.c.l.b16 %v782
    %v968 = vunpack.c.h.b16 %v782
    %v969 = vunpack.c.l.b16 %v783
    %v970 = vunpack.c.h.b16 %v783
    %v971 = vunpack.c.l.b16 %v784
    %v972 = vunpack.c.h.b16 %v784
    %v973 = vunpack.c.l.b16 %v785
    %v974 = vunpack.c.h.b16 %v785
    %v975 = vunpack.c.l.b16 %v786
    %v976 = vunpack.c.h.b16 %v786
    %v977 = vunpack.c.l.b16 %v787
    %v978 = vunpack.c.h.b16 %v787
    %v979 = vunpack.c.l.b16 %v788
    %v980 = vunpack.c.h.b16 %v788
    %v981 = vunpack.c.l.b16 %v789
    %v982 = vunpack.c.h.b16 %v789
    %v983 = vunpack.c.l.b16 %v790
    %v984 = vunpack.c.h.b16 %v790
    %v985 = vunpack.c.l.b16 %v791
    %v986 = vunpack.c.h.b16 %v791
    %v987 = vunpack.c.l.b16 %v792
    %v988 = vunpack.c.h.b16 %v792
    %v989 = vunpack.c.l.b16 %v793
    %v990 = vunpack.c.h.b16 %v793
    %v991 = vunpack.c.l.b16 %v794
    %v992 = vunpack.c.h.b16 %v794
    %v993 = vunpack.c.l.b16 %v795
    %v994 = vunpack.c.h.b16 %v795
    %v995 = vunpack.c.l.b16 %v796
    %v996 = vunpack.c.h.b16 %v796
    %v997 = vunpack.c.l.b16 %v797
    %v998 = vunpack.c.h.b16 %v797
    %v999 = vunpack.c.l.b16 %v798
    %v1000 = vunpack.c.h.b16 %v798
    %v1001 = vunpack.c.l.b16 %v799
    %v1002 = vunpack.c.h.b16 %v799
    %v1003 = vunpack.c.l.b16 %v800
    %v1004 = vunpack.c.h.b16 %v800
    %v1005 = vunpack.c.l.b16 %v801
    %v1006 = vunpack.c.h.b16 %v801
    %v1007 = vunpack.c.l.b16 %v802
    %v1008 = vunpack.c.h.b16 %v802
    %v1009 = vunpack.c.l.b16 %v803
    %v1010 = vunpack.c.h.b16 %v803
    %v1011 = vunpack.c.l.b16 %v804
    %v1012 = vunpack.c.h.b16 %v804
    %v1013 = vunpack.c.l.b16 %v805
    %v1014 = vunpack.c.h.b16 %v805
    %v1015 = vunpack.c.l.b16 %v806
    %v1016 = vunpack.c.h.b16 %v806
    %v1017 = vunpack.c.l.b16 %v807
    %v1018 = vunpack.c.h.b16 %v807
    %v1019 = vunpack.c.l.b16 %v808
    %v1020 = vunpack.c.h.b16 %v808
    %v1021 = vunpack.c.l.b16 %v809
    %v1022 = vunpack.c.h.b16 %v809
    %v1023 = vunpack.c.l.b16 %v810
    %v1024 = vunpack.c.h.b16 %v810
    %v1025 = vunpack.c.l.b16 %v811
    %v1026 = vunpack.c.h.b16 %v811
    %v1027 = vunpack.c.l.b16 %v812
    %v1028 = vunpack.c.h.b16 %v812
    %v1029 = vunpack.c.l.b16 %v813
    %v1030 = vunpack.c.h.b16 %v813
    %v1031 = vunpack.c.l.b16 %v814
    %v1032 = vunpack.c.h.b16 %v814
    %v1033 = vpack.c.b16 %v913, %v905
    %v1034 = vpack.c.b16 %v914, %v906
    %v1035 = vpack.c.b16 %v915, %v907
    %v1036 = vpack.c.b16 %v916, %v908
    %v1037 = vpack.c.b16 %v917, %v909
    %v1038 = vpack.c.b16 %v918, %v910
    %v1039 = vpack.c.b16 %v919, %v911
    %v1040 = vpack.c.b16 %v920, %v912
    %v1041 = vpack.c.b16 %v929, %v921
    %v1042 = vpack.c.b16 %v930, %v922
    %v1043 = vpack.c.b16 %v931, %v923
    %v1044 = vpack.c.b16 %v932, %v924
    %v1045 = vpack.c.b16 %v933, %v925
    %v1046 = vpack.c.b16 %v934, %v926
    %v1047 = vpack.c.b16 %v935, %v927
    %v1048 = vpack.c.b16 %v936, %v928
    %v1049 = vpack.c.b16 %v945, %v937
    %v1050 = vpack.c.b16 %v946, %v938
    %v1051 = vpack.c.b16 %v947, %v939
    %v1052 = vpack.c.b16 %v948, %v940
    %v1053 = vpack.c.b16 %v949, %v941
    %v1054 = vpack.c.b16 %v950, %v942
    %v1055 = vpack.c.b16 %v951, %v943
    %v1056 = vpack.c.b16 %v952, %v944
    %v1057 = vpack.c.b16 %v961, %v953
    %v1058 = vpack.c.b16 %v962, %v954
    %v1059 = vpack.c.b16 %v963, %v955
    %v1060 = vpack.c.b16 %v964, %v956
    %v1061 = vpack.c.b16 %v965, %v957
    %v1062 = vpack.c.b16 %v966, %v958
    %v1063 = vpack.c.b16 %v967, %v959
    %v1064 = vpack.c.b16 %v968, %v960
    %v1065 = vpack.c.b16 %v977, %v969
    %v1066 = vpack.c.b16 %v978, %v970
    %v1067 = vpack.c.b16 %v979, %v971
    %v1068 = vpack.c.b16 %v980, %v972
    %v1069 = vpack.c.b16 %v981, %v973
    %v1070 = vpack.c.b16 %v982, %v974
    %v1071 = vpack.c.b16 %v983, %v975
    %v1072 = vpack.c.b16 %v984, %v976
    %v1073 = vpack.c.b16 %v993, %v985
    %v1074 = vpack.c.b16 %v994, %v986
    %v1075 = vpack.c.b16 %v995, %v987
    %v1076 = vpack.c.b16 %v996, %v988
    %v1077 = vpack.c.b16 %v997, %v989
    %v1078 = vpack.c.b16 %v998, %v990
    %v1079 = vpack.c.b16 %v999, %v991
    %v1080 = vpack.c.b16 %v1000, %v992
    %v1081 = vpack.c.b16 %v1009, %v1001
    %v1082 = vpack.c.b16 %v1010, %v1002
    %v1083 = vpack.c.b16 %v1011, %v1003
    %v1084 = vpack.c.b16 %v1012, %v1004
    %v1085 = vpack.c.b16 %v1013, %v1005
    %v1086 = vpack.c.b16 %v1014, %v1006
    %v1087 = vpack.c.b16 %v1015, %v1007
    %v1088 = vpack.c.b16 %v1016, %v1008
    %v1089 = vpack.c.b16 %v1025, %v1017
    %v1090 = vpack.c.b16 %v1026, %v1018
    %v1091 = vpack.c.b16 %v1027, %v1019
    %v1092 = vpack.c.b16 %v1028, %v1020
    %v1093 = vpack.c.b16 %v1029, %v1021
    %v1094 = vpack.c.b16 %v1030, %v1022
    %v1095 = vpack.c.b16 %v1031, %v1023
    %v1096 = vpack.c.b16 %v1032, %v1024
    %1161 = vmatpush.bf16.msra.mxu0 %v1089
    %1162 = vmatpush.bf16.msra.mxu0 %v1081
    %1163 = vmatpush.bf16.msra.mxu0 %v1073
    %1164 = vmatpush.bf16.msra.mxu0 %v1065
    %1165 = vmatpush.bf16.msra.mxu0 %v1057
    %1166 = vmatpush.bf16.msra.mxu0 %v1049
    %1167 = vmatpush.bf16.msra.mxu0 %v1041
    %1168 = vmatpush.bf16.msra.mxu0 %v1033
    %1169 = vmatmul.bf16.gmra.mxu0 %v815
    %v1170 = vpop.f32.mrf.mxu0
    %v1171 = vadd.f32 %v825, %v1170
    %v1172 = vpop.f32.mrf.mxu0
    %v1173 = vadd.f32 %v825, %v1172
    %1174 = vmatmul.bf16.gmra.mxu0 %v816
    %v1175 = vpop.f32.mrf.mxu0
    %v1176 = vadd.f32 %v825, %v1175
    %v1177 = vpop.f32.mrf.mxu0
    %v1178 = vadd.f32 %v825, %v1177
    %1179 = vmatmul.bf16.gmra.mxu0 %v817
    %v1180 = vpop.f32.mrf.mxu0
    %v1181 = vadd.f32 %v825, %v1180
    %v1182 = vpop.f32.mrf.mxu0
    %v1183 = vadd.f32 %v825, %v1182
    %1184 = vmatmul.bf16.gmra.mxu0 %v818
    %v1185 = vpop.f32.mrf.mxu0
    %v1186 = vadd.f32 %v825, %v1185
    %v1187 = vpop.f32.mrf.mxu0
    %v1188 = vadd.f32 %v825, %v1187
    %1189 = vmatmul.bf16.gmra.mxu0 %v819
    %v1190 = vpop.f32.mrf.mxu0
    %v1191 = vadd.f32 %v825, %v1190
    %v1192 = vpop.f32.mrf.mxu0
    %v1193 = vadd.f32 %v825, %v1192
    %1194 = vmatmul.bf16.gmra.mxu0 %v820
    %v1195 = vpop.f32.mrf.mxu0
    %v1196 = vadd.f32 %v825, %v1195
    %v1197 = vpop.f32.mrf.mxu0
    %v1198 = vadd.f32 %v825, %v1197
    %1199 = vmatmul.bf16.gmra.mxu0 %v821
    %v1200 = vpop.f32.mrf.mxu0
    %v1201 = vadd.f32 %v825, %v1200
    %v1202 = vpop.f32.mrf.mxu0
    %v1203 = vadd.f32 %v825, %v1202
    %1204 = vmatmul.bf16.gmra.mxu0 %v822
    %v1205 = vpop.f32.mrf.mxu0
    %v1206 = vadd.f32 %v825, %v1205
    %v1207 = vpop.f32.mrf.mxu0
    %v1208 = vadd.f32 %v825, %v1207
    %1209 = vdwg.mxu0
    %1210 = vmatpush.bf16.msra.mxu0 %v1090
    %1211 = vmatpush.bf16.msra.mxu0 %v1082
    %1212 = vmatpush.bf16.msra.mxu0 %v1074
    %1213 = vmatpush.bf16.msra.mxu0 %v1066
    %1214 = vmatpush.bf16.msra.mxu0 %v1058
    %1215 = vmatpush.bf16.msra.mxu0 %v1050
    %1216 = vmatpush.bf16.msra.mxu0 %v1042
    %1217 = vmatpush.bf16.msra.mxu0 %v1034
    %1218 = vmatmul.bf16.gmra.mxu0 %v815
    %v1219 = vpop.f32.mrf.mxu0
    %v1220 = vadd.f32 %v826, %v1219
    %v1221 = vpop.f32.mrf.mxu0
    %v1222 = vadd.f32 %v826, %v1221
    %1223 = vmatmul.bf16.gmra.mxu0 %v816
    %v1224 = vpop.f32.mrf.mxu0
    %v1225 = vadd.f32 %v826, %v1224
    %v1226 = vpop.f32.mrf.mxu0
    %v1227 = vadd.f32 %v826, %v1226
    %1228 = vmatmul.bf16.gmra.mxu0 %v817
    %v1229 = vpop.f32.mrf.mxu0
    %v1230 = vadd.f32 %v826, %v1229
    %v1231 = vpop.f32.mrf.mxu0
    %v1232 = vadd.f32 %v826, %v1231
    %1233 = vmatmul.bf16.gmra.mxu0 %v818
    %v1234 = vpop.f32.mrf.mxu0
    %v1235 = vadd.f32 %v826, %v1234
    %v1236 = vpop.f32.mrf.mxu0
    %v1237 = vadd.f32 %v826, %v1236
    %1238 = vmatmul.bf16.gmra.mxu0 %v819
    %v1239 = vpop.f32.mrf.mxu0
    %v1240 = vadd.f32 %v826, %v1239
    %v1241 = vpop.f32.mrf.mxu0
    %v1242 = vadd.f32 %v826, %v1241
    %1243 = vmatmul.bf16.gmra.mxu0 %v820
    %v1244 = vpop.f32.mrf.mxu0
    %v1245 = vadd.f32 %v826, %v1244
    %v1246 = vpop.f32.mrf.mxu0
    %v1247 = vadd.f32 %v826, %v1246
    %1248 = vmatmul.bf16.gmra.mxu0 %v821
    %v1249 = vpop.f32.mrf.mxu0
    %v1250 = vadd.f32 %v826, %v1249
    %v1251 = vpop.f32.mrf.mxu0
    %v1252 = vadd.f32 %v826, %v1251
    %1253 = vmatmul.bf16.gmra.mxu0 %v822
    %v1254 = vpop.f32.mrf.mxu0
    %v1255 = vadd.f32 %v826, %v1254
    %v1256 = vpop.f32.mrf.mxu0
    %v1257 = vadd.f32 %v826, %v1256
    %1258 = vdwg.mxu0
    %1259 = vmatpush.bf16.msra.mxu0 %v1091
    %1260 = vmatpush.bf16.msra.mxu0 %v1083
    %1261 = vmatpush.bf16.msra.mxu0 %v1075
    %1262 = vmatpush.bf16.msra.mxu0 %v1067
    %1263 = vmatpush.bf16.msra.mxu0 %v1059
    %1264 = vmatpush.bf16.msra.mxu0 %v1051
    %1265 = vmatpush.bf16.msra.mxu0 %v1043
    %1266 = vmatpush.bf16.msra.mxu0 %v1035
    %1267 = vmatmul.bf16.gmra.mxu0 %v815
    %v1268 = vpop.f32.mrf.mxu0
    %v1269 = vadd.f32 %v827, %v1268
    %v1270 = vpop.f32.mrf.mxu0
    %v1271 = vadd.f32 %v827, %v1270
    %1272 = vmatmul.bf16.gmra.mxu0 %v816
    %v1273 = vpop.f32.mrf.mxu0
    %v1274 = vadd.f32 %v827, %v1273
    %v1275 = vpop.f32.mrf.mxu0
    %v1276 = vadd.f32 %v827, %v1275
    %1277 = vmatmul.bf16.gmra.mxu0 %v817
    %v1278 = vpop.f32.mrf.mxu0
    %v1279 = vadd.f32 %v827, %v1278
    %v1280 = vpop.f32.mrf.mxu0
    %v1281 = vadd.f32 %v827, %v1280
    %1282 = vmatmul.bf16.gmra.mxu0 %v818
    %v1283 = vpop.f32.mrf.mxu0
    %v1284 = vadd.f32 %v827, %v1283
    %v1285 = vpop.f32.mrf.mxu0
    %v1286 = vadd.f32 %v827, %v1285
    %1287 = vmatmul.bf16.gmra.mxu0 %v819
    %v1288 = vpop.f32.mrf.mxu0
    %v1289 = vadd.f32 %v827, %v1288
    %v1290 = vpop.f32.mrf.mxu0
    %v1291 = vadd.f32 %v827, %v1290
    %1292 = vmatmul.bf16.gmra.mxu0 %v820
    %v1293 = vpop.f32.mrf.mxu0
    %v1294 = vadd.f32 %v827, %v1293
    %v1295 = vpop.f32.mrf.mxu0
    %v1296 = vadd.f32 %v827, %v1295
    %1297 = vmatmul.bf16.gmra.mxu0 %v821
    %v1298 = vpop.f32.mrf.mxu0
    %v1299 = vadd.f32 %v827, %v1298
    %v1300 = vpop.f32.mrf.mxu0
    %v1301 = vadd.f32 %v827, %v1300
    %1302 = vmatmul.bf16.gmra.mxu0 %v822
    %v1303 = vpop.f32.mrf.mxu0
    %v1304 = vadd.f32 %v827, %v1303
    %v1305 = vpop.f32.mrf.mxu0
    %v1306 = vadd.f32 %v827, %v1305
    %1307 = vdwg.mxu0
    %1308 = vmatpush.bf16.msra.mxu0 %v1092
    %1309 = vmatpush.bf16.msra.mxu0 %v1084
    %1310 = vmatpush.bf16.msra.mxu0 %v1076
    %1311 = vmatpush.bf16.msra.mxu0 %v1068
    %1312 = vmatpush.bf16.msra.mxu0 %v1060
    %1313 = vmatpush.bf16.msra.mxu0 %v1052
    %1314 = vmatpush.bf16.msra.mxu0 %v1044
    %1315 = vmatpush.bf16.msra.mxu0 %v1036
    %1316 = vmatmul.bf16.gmra.mxu0 %v815
    %v1317 = vpop.f32.mrf.mxu0
    %v1318 = vadd.f32 %v828, %v1317
    %v1319 = vpop.f32.mrf.mxu0
    %v1320 = vadd.f32 %v828, %v1319
    %1321 = vmatmul.bf16.gmra.mxu0 %v816
    %v1322 = vpop.f32.mrf.mxu0
    %v1323 = vadd.f32 %v828, %v1322
    %v1324 = vpop.f32.mrf.mxu0
    %v1325 = vadd.f32 %v828, %v1324
    %1326 = vmatmul.bf16.gmra.mxu0 %v817
    %v1327 = vpop.f32.mrf.mxu0
    %v1328 = vadd.f32 %v828, %v1327
    %v1329 = vpop.f32.mrf.mxu0
    %v1330 = vadd.f32 %v828, %v1329
    %1331 = vmatmul.bf16.gmra.mxu0 %v818
    %v1332 = vpop.f32.mrf.mxu0
    %v1333 = vadd.f32 %v828, %v1332
    %v1334 = vpop.f32.mrf.mxu0
    %v1335 = vadd.f32 %v828, %v1334
    %1336 = vmatmul.bf16.gmra.mxu0 %v819
    %v1337 = vpop.f32.mrf.mxu0
    %v1338 = vadd.f32 %v828, %v1337
    %v1339 = vpop.f32.mrf.mxu0
    %v1340 = vadd.f32 %v828, %v1339
    %1341 = vmatmul.bf16.gmra.mxu0 %v820
    %v1342 = vpop.f32.mrf.mxu0
    %v1343 = vadd.f32 %v828, %v1342
    %v1344 = vpop.f32.mrf.mxu0
    %v1345 = vadd.f32 %v828, %v1344
    %1346 = vmatmul.bf16.gmra.mxu0 %v821
    %v1347 = vpop.f32.mrf.mxu0
    %v1348 = vadd.f32 %v828, %v1347
    %v1349 = vpop.f32.mrf.mxu0
    %v1350 = vadd.f32 %v828, %v1349
    %1351 = vmatmul.bf16.gmra.mxu0 %v822
    %v1352 = vpop.f32.mrf.mxu0
    %v1353 = vadd.f32 %v828, %v1352
    %v1354 = vpop.f32.mrf.mxu0
    %v1355 = vadd.f32 %v828, %v1354
    %1356 = vdwg.mxu0
    %1357 = vmatpush.bf16.msra.mxu0 %v1093
    %1358 = vmatpush.bf16.msra.mxu0 %v1085
    %1359 = vmatpush.bf16.msra.mxu0 %v1077
    %1360 = vmatpush.bf16.msra.mxu0 %v1069
    %1361 = vmatpush.bf16.msra.mxu0 %v1061
    %1362 = vmatpush.bf16.msra.mxu0 %v1053
    %1363 = vmatpush.bf16.msra.mxu0 %v1045
    %1364 = vmatpush.bf16.msra.mxu0 %v1037
    %1365 = vmatmul.bf16.gmra.mxu0 %v815
    %v1366 = vpop.f32.mrf.mxu0
    %v1367 = vadd.f32 %v829, %v1366
    %v1368 = vpop.f32.mrf.mxu0
    %v1369 = vadd.f32 %v829, %v1368
    %1370 = vmatmul.bf16.gmra.mxu0 %v816
    %v1371 = vpop.f32.mrf.mxu0
    %v1372 = vadd.f32 %v829, %v1371
    %v1373 = vpop.f32.mrf.mxu0
    %v1374 = vadd.f32 %v829, %v1373
    %1375 = vmatmul.bf16.gmra.mxu0 %v817
    %v1376 = vpop.f32.mrf.mxu0
    %v1377 = vadd.f32 %v829, %v1376
    %v1378 = vpop.f32.mrf.mxu0
    %v1379 = vadd.f32 %v829, %v1378
    %1380 = vmatmul.bf16.gmra.mxu0 %v818
    %v1381 = vpop.f32.mrf.mxu0
    %v1382 = vadd.f32 %v829, %v1381
    %v1383 = vpop.f32.mrf.mxu0
    %v1384 = vadd.f32 %v829, %v1383
    %1385 = vmatmul.bf16.gmra.mxu0 %v819
    %v1386 = vpop.f32.mrf.mxu0
    %v1387 = vadd.f32 %v829, %v1386
    %v1388 = vpop.f32.mrf.mxu0
    %v1389 = vadd.f32 %v829, %v1388
    %1390 = vmatmul.bf16.gmra.mxu0 %v820
    %v1391 = vpop.f32.mrf.mxu0
    %v1392 = vadd.f32 %v829, %v1391
    %v1393 = vpop.f32.mrf.mxu0
    %v1394 = vadd.f32 %v829, %v1393
    %1395 = vmatmul.bf16.gmra.mxu0 %v821
    %v1396 = vpop.f32.mrf.mxu0
    %v1397 = vadd.f32 %v829, %v1396
    %v1398 = vpop.f32.mrf.mxu0
    %v1399 = vadd.f32 %v829, %v1398
    %1400 = vmatmul.bf16.gmra.mxu0 %v822
    %v1401 = vpop.f32.mrf.mxu0
    %v1402 = vadd.f32 %v829, %v1401
    %v1403 = vpop.f32.mrf.mxu0
    %v1404 = vadd.f32 %v829, %v1403
    %1405 = vdwg.mxu0
    %1406 = vmatpush.bf16.msra.mxu0 %v1094
    %1407 = vmatpush.bf16.msra.mxu0 %v1086
    %1408 = vmatpush.bf16.msra.mxu0 %v1078
    %1409 = vmatpush.bf16.msra.mxu0 %v1070
    %1410 = vmatpush.bf16.msra.mxu0 %v1062
    %1411 = vmatpush.bf16.msra.mxu0 %v1054
    %1412 = vmatpush.bf16.msra.mxu0 %v1046
    %1413 = vmatpush.bf16.msra.mxu0 %v1038
    %1414 = vmatmul.bf16.gmra.mxu0 %v815
    %v1415 = vpop.f32.mrf.mxu0
    %v1416 = vadd.f32 %v830, %v1415
    %v1417 = vpop.f32.mrf.mxu0
    %v1418 = vadd.f32 %v830, %v1417
    %1419 = vmatmul.bf16.gmra.mxu0 %v816
    %v1420 = vpop.f32.mrf.mxu0
    %v1421 = vadd.f32 %v830, %v1420
    %v1422 = vpop.f32.mrf.mxu0
    %v1423 = vadd.f32 %v830, %v1422
    %1424 = vmatmul.bf16.gmra.mxu0 %v817
    %v1425 = vpop.f32.mrf.mxu0
    %v1426 = vadd.f32 %v830, %v1425
    %v1427 = vpop.f32.mrf.mxu0
    %v1428 = vadd.f32 %v830, %v1427
    %1429 = vmatmul.bf16.gmra.mxu0 %v818
    %v1430 = vpop.f32.mrf.mxu0
    %v1431 = vadd.f32 %v830, %v1430
    %v1432 = vpop.f32.mrf.mxu0
    %v1433 = vadd.f32 %v830, %v1432
    %1434 = vmatmul.bf16.gmra.mxu0 %v819
    %v1435 = vpop.f32.mrf.mxu0
    %v1436 = vadd.f32 %v830, %v1435
    %v1437 = vpop.f32.mrf.mxu0
    %v1438 = vadd.f32 %v830, %v1437
    %1439 = vmatmul.bf16.gmra.mxu0 %v820
    %v1440 = vpop.f32.mrf.mxu0
    %v1441 = vadd.f32 %v830, %v1440
    %v1442 = vpop.f32.mrf.mxu0
    %v1443 = vadd.f32 %v830, %v1442
    %1444 = vmatmul.bf16.gmra.mxu0 %v821
    %v1445 = vpop.f32.mrf.mxu0
    %v1446 = vadd.f32 %v830, %v1445
    %v1447 = vpop.f32.mrf.mxu0
    %v1448 = vadd.f32 %v830, %v1447
    %1449 = vmatmul.bf16.gmra.mxu0 %v822
    %v1450 = vpop.f32.mrf.mxu0
    %v1451 = vadd.f32 %v830, %v1450
    %v1452 = vpop.f32.mrf.mxu0
    %v1453 = vadd.f32 %v830, %v1452
    %1454 = vdwg.mxu0
    %1455 = vmatpush.bf16.msra.mxu0 %v1095
    %1456 = vmatpush.bf16.msra.mxu0 %v1087
    %1457 = vmatpush.bf16.msra.mxu0 %v1079
    %1458 = vmatpush.bf16.msra.mxu0 %v1071
    %1459 = vmatpush.bf16.msra.mxu0 %v1063
    %1460 = vmatpush.bf16.msra.mxu0 %v1055
    %1461 = vmatpush.bf16.msra.mxu0 %v1047
    %1462 = vmatpush.bf16.msra.mxu0 %v1039
    %1463 = vmatmul.bf16.gmra.mxu0 %v815
    %v1464 = vpop.f32.mrf.mxu0
    %v1465 = vadd.f32 %v831, %v1464
    %v1466 = vpop.f32.mrf.mxu0
    %v1467 = vadd.f32 %v831, %v1466
    %1468 = vmatmul.bf16.gmra.mxu0 %v816
    %v1469 = vpop.f32.mrf.mxu0
    %v1470 = vadd.f32 %v831, %v1469
    %v1471 = vpop.f32.mrf.mxu0
    %v1472 = vadd.f32 %v831, %v1471
    %1473 = vmatmul.bf16.gmra.mxu0 %v817
    %v1474 = vpop.f32.mrf.mxu0
    %v1475 = vadd.f32 %v831, %v1474
    %v1476 = vpop.f32.mrf.mxu0
    %v1477 = vadd.f32 %v831, %v1476
    %1478 = vmatmul.bf16.gmra.mxu0 %v818
    %v1479 = vpop.f32.mrf.mxu0
    %v1480 = vadd.f32 %v831, %v1479
    %v1481 = vpop.f32.mrf.mxu0
    %v1482 = vadd.f32 %v831, %v1481
    %1483 = vmatmul.bf16.gmra.mxu0 %v819
    %v1484 = vpop.f32.mrf.mxu0
    %v1485 = vadd.f32 %v831, %v1484
    %v1486 = vpop.f32.mrf.mxu0
    %v1487 = vadd.f32 %v831, %v1486
    %1488 = vmatmul.bf16.gmra.mxu0 %v820
    %v1489 = vpop.f32.mrf.mxu0
    %v1490 = vadd.f32 %v831, %v1489
    %v1491 = vpop.f32.mrf.mxu0
    %v1492 = vadd.f32 %v831, %v1491
    %1493 = vmatmul.bf16.gmra.mxu0 %v821
    %v1494 = vpop.f32.mrf.mxu0
    %v1495 = vadd.f32 %v831, %v1494
    %v1496 = vpop.f32.mrf.mxu0
    %v1497 = vadd.f32 %v831, %v1496
    %1498 = vmatmul.bf16.gmra.mxu0 %v822
    %v1499 = vpop.f32.mrf.mxu0
    %v1500 = vadd.f32 %v831, %v1499
    %v1501 = vpop.f32.mrf.mxu0
    %v1502 = vadd.f32 %v831, %v1501
    %1503 = vdwg.mxu0
    %1504 = vmatpush.bf16.msra.mxu0 %v1096
    %1505 = vmatpush.bf16.msra.mxu0 %v1088
    %1506 = vmatpush.bf16.msra.mxu0 %v1080
    %1507 = vmatpush.bf16.msra.mxu0 %v1072
    %1508 = vmatpush.bf16.msra.mxu0 %v1064
    %1509 = vmatpush.bf16.msra.mxu0 %v1056
    %1510 = vmatpush.bf16.msra.mxu0 %v1048
    %1511 = vmatpush.bf16.msra.mxu0 %v1040
    %1512 = vmatmul.bf16.gmra.mxu0 %v815
    %v1513 = vpop.f32.mrf.mxu0
    %v1514 = vadd.f32 %v832, %v1513
    %v1515 = vpop.f32.mrf.mxu0
    %v1516 = vadd.f32 %v832, %v1515
    %1517 = vmatmul.bf16.gmra.mxu0 %v816
    %v1518 = vpop.f32.mrf.mxu0
    %v1519 = vadd.f32 %v832, %v1518
    %v1520 = vpop.f32.mrf.mxu0
    %v1521 = vadd.f32 %v832, %v1520
    %1522 = vmatmul.bf16.gmra.mxu0 %v817
    %v1523 = vpop.f32.mrf.mxu0
    %v1524 = vadd.f32 %v832, %v1523
    %v1525 = vpop.f32.mrf.mxu0
    %v1526 = vadd.f32 %v832, %v1525
    %1527 = vmatmul.bf16.gmra.mxu0 %v818
    %v1528 = vpop.f32.mrf.mxu0
    %v1529 = vadd.f32 %v832, %v1528
    %v1530 = vpop.f32.mrf.mxu0
    %v1531 = vadd.f32 %v832, %v1530
    %1532 = vmatmul.bf16.gmra.mxu0 %v819
    %v1533 = vpop.f32.mrf.mxu0
    %v1534 = vadd.f32 %v832, %v1533
    %v1535 = vpop.f32.mrf.mxu0
    %v1536 = vadd.f32 %v832, %v1535
    %1537 = vmatmul.bf16.gmra.mxu0 %v820
    %v1538 = vpop.f32.mrf.mxu0
    %v1539 = vadd.f32 %v832, %v1538
    %v1540 = vpop.f32.mrf.mxu0
    %v1541 = vadd.f32 %v832, %v1540
    %1542 = vmatmul.bf16.gmra.mxu0 %v821
    %v1543 = vpop.f32.mrf.mxu0
    %v1544 = vadd.f32 %v832, %v1543
    %v1545 = vpop.f32.mrf.mxu0
    %v1546 = vadd.f32 %v832, %v1545
    %1547 = vmatmul.bf16.gmra.mxu0 %v822
    %v1548 = vpop.f32.mrf.mxu0
    %v1549 = vadd.f32 %v832, %v1548
    %v1550 = vpop.f32.mrf.mxu0
    %v1551 = vadd.f32 %v832, %v1550
    %1552 = vdwg.mxu0
    %v1553 = vmax.f32 %v1171, 0.0
    %v1554 = vmax.f32 %v1220, 0.0
    %v1555 = vmax.f32 %v1269, 0.0
    %v1556 = vmax.f32 %v1318, 0.0
    %v1557 = vmax.f32 %v1367, 0.0
    %v1558 = vmax.f32 %v1416, 0.0
    %v1559 = vmax.f32 %v1465, 0.0
    %v1560 = vmax.f32 %v1514, 0.0
    %v1561 = vmax.f32 %v1173, 0.0
    %v1562 = vmax.f32 %v1222, 0.0
    %v1563 = vmax.f32 %v1271, 0.0
    %v1564 = vmax.f32 %v1320, 0.0
    %v1565 = vmax.f32 %v1369, 0.0
    %v1566 = vmax.f32 %v1418, 0.0
    %v1567 = vmax.f32 %v1467, 0.0
    %v1568 = vmax.f32 %v1516, 0.0
    %v1569 = vmax.f32 %v1176, 0.0
    %v1570 = vmax.f32 %v1225, 0.0
    %v1571 = vmax.f32 %v1274, 0.0
    %v1572 = vmax.f32 %v1323, 0.0
    %v1573 = vmax.f32 %v1372, 0.0
    %v1574 = vmax.f32 %v1421, 0.0
    %v1575 = vmax.f32 %v1470, 0.0
    %v1576 = vmax.f32 %v1519, 0.0
    %v1577 = vmax.f32 %v1178, 0.0
    %v1578 = vmax.f32 %v1227, 0.0
    %v1579 = vmax.f32 %v1276, 0.0
    %v1580 = vmax.f32 %v1325, 0.0
    %v1581 = vmax.f32 %v1374, 0.0
    %v1582 = vmax.f32 %v1423, 0.0
    %v1583 = vmax.f32 %v1472, 0.0
    %v1584 = vmax.f32 %v1521, 0.0
    %v1585 = vmax.f32 %v1181, 0.0
    %v1586 = vmax.f32 %v1230, 0.0
    %v1587 = vmax.f32 %v1279, 0.0
    %v1588 = vmax.f32 %v1328, 0.0
    %v1589 = vmax.f32 %v1377, 0.0
    %v1590 = vmax.f32 %v1426, 0.0
    %v1591 = vmax.f32 %v1475, 0.0
    %v1592 = vmax.f32 %v1524, 0.0
    %v1593 = vmax.f32 %v1183, 0.0
    %v1594 = vmax.f32 %v1232, 0.0
    %v1595 = vmax.f32 %v1281, 0.0
    %v1596 = vmax.f32 %v1330, 0.0
    %v1597 = vmax.f32 %v1379, 0.0
    %v1598 = vmax.f32 %v1428, 0.0
    %v1599 = vmax.f32 %v1477, 0.0
    %v1600 = vmax.f32 %v1526, 0.0
    %v1601 = vmax.f32 %v1186, 0.0
    %v1602 = vmax.f32 %v1235, 0.0
    %v1603 = vmax.f32 %v1284, 0.0
    %v1604 = vmax.f32 %v1333, 0.0
    %v1605 = vmax.f32 %v1382, 0.0
    %v1606 = vmax.f32 %v1431, 0.0
    %v1607 = vmax.f32 %v1480, 0.0
    %v1608 = vmax.f32 %v1529, 0.0
    %v1609 = vmax.f32 %v1188, 0.0
    %v1610 = vmax.f32 %v1237, 0.0
    %v1611 = vmax.f32 %v1286, 0.0
    %v1612 = vmax.f32 %v1335, 0.0
    %v1613 = vmax.f32 %v1384, 0.0
    %v1614 = vmax.f32 %v1433, 0.0
    %v1615 = vmax.f32 %v1482, 0.0
    %v1616 = vmax.f32 %v1531, 0.0
    %v1617 = vmax.f32 %v1191, 0.0
    %v1618 = vmax.f32 %v1240, 0.0
    %v1619 = vmax.f32 %v1289, 0.0
    %v1620 = vmax.f32 %v1338, 0.0
    %v1621 = vmax.f32 %v1387, 0.0
    %v1622 = vmax.f32 %v1436, 0.0
    %v1623 = vmax.f32 %v1485, 0.0
    %v1624 = vmax.f32 %v1534, 0.0
    %v1625 = vmax.f32 %v1193, 0.0
    %v1626 = vmax.f32 %v1242, 0.0
    %v1627 = vmax.f32 %v1291, 0.0
    %v1628 = vmax.f32 %v1340, 0.0
    %v1629 = vmax.f32 %v1389, 0.0
    %v1630 = vmax.f32 %v1438, 0.0
    %v1631 = vmax.f32 %v1487, 0.0
    %v1632 = vmax.f32 %v1536, 0.0
    %v1633 = vmax.f32 %v1196, 0.0
    %v1634 = vmax.f32 %v1245, 0.0
    %v1635 = vmax.f32 %v1294, 0.0
    %v1636 = vmax.f32 %v1343, 0.0
    %v1637 = vmax.f32 %v1392, 0.0
    %v1638 = vmax.f32 %v1441, 0.0
    %v1639 = vmax.f32 %v1490, 0.0
    %v1640 = vmax.f32 %v1539, 0.0
    %v1641 = vmax.f32 %v1198, 0.0
    %v1642 = vmax.f32 %v1247, 0.0
    %v1643 = vmax.f32 %v1296, 0.0
    %v1644 = vmax.f32 %v1345, 0.0
    %v1645 = vmax.f32 %v1394, 0.0
    %v1646 = vmax.f32 %v1443, 0.0
    %v1647 = vmax.f32 %v1492, 0.0
    %v1648 = vmax.f32 %v1541, 0.0
    %v1649 = vmax.f32 %v1201, 0.0
    %v1650 = vmax.f32 %v1250, 0.0
    %v1651 = vmax.f32 %v1299, 0.0
    %v1652 = vmax.f32 %v1348, 0.0
    %v1653 = vmax.f32 %v1397, 0.0
    %v1654 = vmax.f32 %v1446, 0.0
    %v1655 = vmax.f32 %v1495, 0.0
    %v1656 = vmax.f32 %v1544, 0.0
    %v1657 = vmax.f32 %v1203, 0.0
    %v1658 = vmax.f32 %v1252, 0.0
    %v1659 = vmax.f32 %v1301, 0.0
    %v1660 = vmax.f32 %v1350, 0.0
    %v1661 = vmax.f32 %v1399, 0.0
    %v1662 = vmax.f32 %v1448, 0.0
    %v1663 = vmax.f32 %v1497, 0.0
    %v1664 = vmax.f32 %v1546, 0.0
    %v1665 = vmax.f32 %v1206, 0.0
    %v1666 = vmax.f32 %v1255, 0.0
    %v1667 = vmax.f32 %v1304, 0.0
    %v1668 = vmax.f32 %v1353, 0.0
    %v1669 = vmax.f32 %v1402, 0.0
    %v1670 = vmax.f32 %v1451, 0.0
    %v1671 = vmax.f32 %v1500, 0.0
    %v1672 = vmax.f32 %v1549, 0.0
    %v1673 = vmax.f32 %v1208, 0.0
    %v1674 = vmax.f32 %v1257, 0.0
    %v1675 = vmax.f32 %v1306, 0.0
    %v1676 = vmax.f32 %v1355, 0.0
    %v1677 = vmax.f32 %v1404, 0.0
    %v1678 = vmax.f32 %v1453, 0.0
    %v1679 = vmax.f32 %v1502, 0.0
    %v1680 = vmax.f32 %v1551, 0.0
    %v1681 = vmax.f32 %v1553, %v1561
    %v1682 = vrot.slane %v1681, 4
    %v1683 = vmax.f32 %v1681, %v1682
    %v1684 = vrot.slane %v1683, 2
    %v1685 = vmax.f32 %v1683, %v1684
    %v1686 = vrot.slane %v1685, 1
    %v1687 = vmax.f32 %v1685, %v1686
    %v1688 = vmax.f32 %v1554, %v1562
    %v1689 = vrot.slane %v1688, 4
    %v1690 = vmax.f32 %v1688, %v1689
    %v1691 = vrot.slane %v1690, 2
    %v1692 = vmax.f32 %v1690, %v1691
    %v1693 = vrot.slane %v1692, 1
    %v1694 = vmax.f32 %v1692, %v1693
    %v1695 = vmax.f32 %v1555, %v1563
    %v1696 = vrot.slane %v1695, 4
    %v1697 = vmax.f32 %v1695, %v1696
    %v1698 = vrot.slane %v1697, 2
    %v1699 = vmax.f32 %v1697, %v1698
    %v1700 = vrot.slane %v1699, 1
    %v1701 = vmax.f32 %v1699, %v1700
    %v1702 = vmax.f32 %v1556, %v1564
    %v1703 = vrot.slane %v1702, 4
    %v1704 = vmax.f32 %v1702, %v1703
    %v1705 = vrot.slane %v1704, 2
    %v1706 = vmax.f32 %v1704, %v1705
    %v1707 = vrot.slane %v1706, 1
    %v1708 = vmax.f32 %v1706, %v1707
    %v1709 = vmax.f32 %v1557, %v1565
    %v1710 = vrot.slane %v1709, 4
    %v1711 = vmax.f32 %v1709, %v1710
    %v1712 = vrot.slane %v1711, 2
    %v1713 = vmax.f32 %v1711, %v1712
    %v1714 = vrot.slane %v1713, 1
    %v1715 = vmax.f32 %v1713, %v1714
    %v1716 = vmax.f32 %v1558, %v1566
    %v1717 = vrot.slane %v1716, 4
    %v1718 = vmax.f32 %v1716, %v1717
    %v1719 = vrot.slane %v1718, 2
    %v1720 = vmax.f32 %v1718, %v1719
    %v1721 = vrot.slane %v1720, 1
    %v1722 = vmax.f32 %v1720, %v1721
    %v1723 = vmax.f32 %v1559, %v1567
    %v1724 = vrot.slane %v1723, 4
    %v1725 = vmax.f32 %v1723, %v1724
    %v1726 = vrot.slane %v1725, 2
    %v1727 = vmax.f32 %v1725, %v1726
    %v1728 = vrot.slane %v1727, 1
    %v1729 = vmax.f32 %v1727, %v1728
    %v1730 = vmax.f32 %v1560, %v1568
    %v1731 = vrot.slane %v1730, 4
    %v1732 = vmax.f32 %v1730, %v1731
    %v1733 = vrot.slane %v1732, 2
    %v1734 = vmax.f32 %v1732, %v1733
    %v1735 = vrot.slane %v1734, 1
    %v1736 = vmax.f32 %v1734, %v1735
    %v1737 = vmax.f32 %v1569, %v1577
    %v1738 = vrot.slane %v1737, 4
    %v1739 = vmax.f32 %v1737, %v1738
    %v1740 = vrot.slane %v1739, 2
    %v1741 = vmax.f32 %v1739, %v1740
    %v1742 = vrot.slane %v1741, 1
    %v1743 = vmax.f32 %v1741, %v1742
    %v1744 = vmax.f32 %v1570, %v1578
    %v1745 = vrot.slane %v1744, 4
    %v1746 = vmax.f32 %v1744, %v1745
    %v1747 = vrot.slane %v1746, 2
    %v1748 = vmax.f32 %v1746, %v1747
    %v1749 = vrot.slane %v1748, 1
    %v1750 = vmax.f32 %v1748, %v1749
    %v1751 = vmax.f32 %v1571, %v1579
    %v1752 = vrot.slane %v1751, 4
    %v1753 = vmax.f32 %v1751, %v1752
    %v1754 = vrot.slane %v1753, 2
    %v1755 = vmax.f32 %v1753, %v1754
    %v1756 = vrot.slane %v1755, 1
    %v1757 = vmax.f32 %v1755, %v1756
    %v1758 = vmax.f32 %v1572, %v1580
    %v1759 = vrot.slane %v1758, 4
    %v1760 = vmax.f32 %v1758, %v1759
    %v1761 = vrot.slane %v1760, 2
    %v1762 = vmax.f32 %v1760, %v1761
    %v1763 = vrot.slane %v1762, 1
    %v1764 = vmax.f32 %v1762, %v1763
    %v1765 = vmax.f32 %v1573, %v1581
    %v1766 = vrot.slane %v1765, 4
    %v1767 = vmax.f32 %v1765, %v1766
    %v1768 = vrot.slane %v1767, 2
    %v1769 = vmax.f32 %v1767, %v1768
    %v1770 = vrot.slane %v1769, 1
    %v1771 = vmax.f32 %v1769, %v1770
    %v1772 = vmax.f32 %v1574, %v1582
    %v1773 = vrot.slane %v1772, 4
    %v1774 = vmax.f32 %v1772, %v1773
    %v1775 = vrot.slane %v1774, 2
    %v1776 = vmax.f32 %v1774, %v1775
    %v1777 = vrot.slane %v1776, 1
    %v1778 = vmax.f32 %v1776, %v1777
    %v1779 = vmax.f32 %v1575, %v1583
    %v1780 = vrot.slane %v1779, 4
    %v1781 = vmax.f32 %v1779, %v1780
    %v1782 = vrot.slane %v1781, 2
    %v1783 = vmax.f32 %v1781, %v1782
    %v1784 = vrot.slane %v1783, 1
    %v1785 = vmax.f32 %v1783, %v1784
    %v1786 = vmax.f32 %v1576, %v1584
    %v1787 = vrot.slane %v1786, 4
    %v1788 = vmax.f32 %v1786, %v1787
    %v1789 = vrot.slane %v1788, 2
    %v1790 = vmax.f32 %v1788, %v1789
    %v1791 = vrot.slane %v1790, 1
    %v1792 = vmax.f32 %v1790, %v1791
    %v1793 = vmax.f32 %v1585, %v1593
    %v1794 = vrot.slane %v1793, 4
    %v1795 = vmax.f32 %v1793, %v1794
    %v1796 = vrot.slane %v1795, 2
    %v1797 = vmax.f32 %v1795, %v1796
    %v1798 = vrot.slane %v1797, 1
    %v1799 = vmax.f32 %v1797, %v1798
    %v1800 = vmax.f32 %v1586, %v1594
    %v1801 = vrot.slane %v1800, 4
    %v1802 = vmax.f32 %v1800, %v1801
    %v1803 = vrot.slane %v1802, 2
    %v1804 = vmax.f32 %v1802, %v1803
    %v1805 = vrot.slane %v1804, 1
    %v1806 = vmax.f32 %v1804, %v1805
    %v1807 = vmax.f32 %v1587, %v1595
    %v1808 = vrot.slane %v1807, 4
    %v1809 = vmax.f32 %v1807, %v1808
    %v1810 = vrot.slane %v1809, 2
    %v1811 = vmax.f32 %v1809, %v1810
    %v1812 = vrot.slane %v1811, 1
    %v1813 = vmax.f32 %v1811, %v1812
    %v1814 = vmax.f32 %v1588, %v1596
    %v1815 = vrot.slane %v1814, 4
    %v1816 = vmax.f32 %v1814, %v1815
    %v1817 = vrot.slane %v1816, 2
    %v1818 = vmax.f32 %v1816, %v1817
    %v1819 = vrot.slane %v1818, 1
    %v1820 = vmax.f32 %v1818, %v1819
    %v1821 = vmax.f32 %v1589, %v1597
    %v1822 = vrot.slane %v1821, 4
    %v1823 = vmax.f32 %v1821, %v1822
    %v1824 = vrot.slane %v1823, 2
    %v1825 = vmax.f32 %v1823, %v1824
    %v1826 = vrot.slane %v1825, 1
    %v1827 = vmax.f32 %v1825, %v1826
    %v1828 = vmax.f32 %v1590, %v1598
    %v1829 = vrot.slane %v1828, 4
    %v1830 = vmax.f32 %v1828, %v1829
    %v1831 = vrot.slane %v1830, 2
    %v1832 = vmax.f32 %v1830, %v1831
    %v1833 = vrot.slane %v1832, 1
    %v1834 = vmax.f32 %v1832, %v1833
    %v1835 = vmax.f32 %v1591, %v1599
    %v1836 = vrot.slane %v1835, 4
    %v1837 = vmax.f32 %v1835, %v1836
    %v1838 = vrot.slane %v1837, 2
    %v1839 = vmax.f32 %v1837, %v1838
    %v1840 = vrot.slane %v1839, 1
    %v1841 = vmax.f32 %v1839, %v1840
    %v1842 = vmax.f32 %v1592, %v1600
    %v1843 = vrot.slane %v1842, 4
    %v1844 = vmax.f32 %v1842, %v1843
    %v1845 = vrot.slane %v1844, 2
    %v1846 = vmax.f32 %v1844, %v1845
    %v1847 = vrot.slane %v1846, 1
    %v1848 = vmax.f32 %v1846, %v1847
    %v1849 = vmax.f32 %v1601, %v1609
    %v1850 = vrot.slane %v1849, 4
    %v1851 = vmax.f32 %v1849, %v1850
    %v1852 = vrot.slane %v1851, 2
    %v1853 = vmax.f32 %v1851, %v1852
    %v1854 = vrot.slane %v1853, 1
    %v1855 = vmax.f32 %v1853, %v1854
    %v1856 = vmax.f32 %v1602, %v1610
    %v1857 = vrot.slane %v1856, 4
    %v1858 = vmax.f32 %v1856, %v1857
    %v1859 = vrot.slane %v1858, 2
    %v1860 = vmax.f32 %v1858, %v1859
    %v1861 = vrot.slane %v1860, 1
    %v1862 = vmax.f32 %v1860, %v1861
    %v1863 = vmax.f32 %v1603, %v1611
    %v1864 = vrot.slane %v1863, 4
    %v1865 = vmax.f32 %v1863, %v1864
    %v1866 = vrot.slane %v1865, 2
    %v1867 = vmax.f32 %v1865, %v1866
    %v1868 = vrot.slane %v1867, 1
    %v1869 = vmax.f32 %v1867, %v1868
    %v1870 = vmax.f32 %v1604, %v1612
    %v1871 = vrot.slane %v1870, 4
    %v1872 = vmax.f32 %v1870, %v1871
    %v1873 = vrot.slane %v1872, 2
    %v1874 = vmax.f32 %v1872, %v1873
    %v1875 = vrot.slane %v1874, 1
    %v1876 = vmax.f32 %v1874, %v1875
    %v1877 = vmax.f32 %v1605, %v1613
    %v1878 = vrot.slane %v1877, 4
    %v1879 = vmax.f32 %v1877, %v1878
    %v1880 = vrot.slane %v1879, 2
    %v1881 = vmax.f32 %v1879, %v1880
    %v1882 = vrot.slane %v1881, 1
    %v1883 = vmax.f32 %v1881, %v1882
    %v1884 = vmax.f32 %v1606, %v1614
    %v1885 = vrot.slane %v1884, 4
    %v1886 = vmax.f32 %v1884, %v1885
    %v1887 = vrot.slane %v1886, 2
    %v1888 = vmax.f32 %v1886, %v1887
    %v1889 = vrot.slane %v1888, 1
    %v1890 = vmax.f32 %v1888, %v1889
    %v1891 = vmax.f32 %v1607, %v1615
    %v1892 = vrot.slane %v1891, 4
    %v1893 = vmax.f32 %v1891, %v1892
    %v1894 = vrot.slane %v1893, 2
    %v1895 = vmax.f32 %v1893, %v1894
    %v1896 = vrot.slane %v1895, 1
    %v1897 = vmax.f32 %v1895, %v1896
    %v1898 = vmax.f32 %v1608, %v1616
    %v1899 = vrot.slane %v1898, 4
    %v1900 = vmax.f32 %v1898, %v1899
    %v1901 = vrot.slane %v1900, 2
    %v1902 = vmax.f32 %v1900, %v1901
    %v1903 = vrot.slane %v1902, 1
    %v1904 = vmax.f32 %v1902, %v1903
    %v1905 = vmax.f32 %v1617, %v1625
    %v1906 = vrot.slane %v1905, 4
    %v1907 = vmax.f32 %v1905, %v1906
    %v1908 = vrot.slane %v1907, 2
    %v1909 = vmax.f32 %v1907, %v1908
    %v1910 = vrot.slane %v1909, 1
    %v1911 = vmax.f32 %v1909, %v1910
    %v1912 = vmax.f32 %v1618, %v1626
    %v1913 = vrot.slane %v1912, 4
    %v1914 = vmax.f32 %v1912, %v1913
    %v1915 = vrot.slane %v1914, 2
    %v1916 = vmax.f32 %v1914, %v1915
    %v1917 = vrot.slane %v1916, 1
    %v1918 = vmax.f32 %v1916, %v1917
    %v1919 = vmax.f32 %v1619, %v1627
    %v1920 = vrot.slane %v1919, 4
    %v1921 = vmax.f32 %v1919, %v1920
    %v1922 = vrot.slane %v1921, 2
    %v1923 = vmax.f32 %v1921, %v1922
    %v1924 = vrot.slane %v1923, 1
    %v1925 = vmax.f32 %v1923, %v1924
    %v1926 = vmax.f32 %v1620, %v1628
    %v1927 = vrot.slane %v1926, 4
    %v1928 = vmax.f32 %v1926, %v1927
    %v1929 = vrot.slane %v1928, 2
    %v1930 = vmax.f32 %v1928, %v1929
    %v1931 = vrot.slane %v1930, 1
    %v1932 = vmax.f32 %v1930, %v1931
    %v1933 = vmax.f32 %v1621, %v1629
    %v1934 = vrot.slane %v1933, 4
    %v1935 = vmax.f32 %v1933, %v1934
    %v1936 = vrot.slane %v1935, 2
    %v1937 = vmax.f32 %v1935, %v1936
    %v1938 = vrot.slane %v1937, 1
    %v1939 = vmax.f32 %v1937, %v1938
    %v1940 = vmax.f32 %v1622, %v1630
    %v1941 = vrot.slane %v1940, 4
    %v1942 = vmax.f32 %v1940, %v1941
    %v1943 = vrot.slane %v1942, 2
    %v1944 = vmax.f32 %v1942, %v1943
    %v1945 = vrot.slane %v1944, 1
    %v1946 = vmax.f32 %v1944, %v1945
    %v1947 = vmax.f32 %v1623, %v1631
    %v1948 = vrot.slane %v1947, 4
    %v1949 = vmax.f32 %v1947, %v1948
    %v1950 = vrot.slane %v1949, 2
    %v1951 = vmax.f32 %v1949, %v1950
    %v1952 = vrot.slane %v1951, 1
    %v1953 = vmax.f32 %v1951, %v1952
    %v1954 = vmax.f32 %v1624, %v1632
    %v1955 = vrot.slane %v1954, 4
    %v1956 = vmax.f32 %v1954, %v1955
    %v1957 = vrot.slane %v1956, 2
    %v1958 = vmax.f32 %v1956, %v1957
    %v1959 = vrot.slane %v1958, 1
    %v1960 = vmax.f32 %v1958, %v1959
    %v1961 = vmax.f32 %v1633, %v1641
    %v1962 = vrot.slane %v1961, 4
    %v1963 = vmax.f32 %v1961, %v1962
    %v1964 = vrot.slane %v1963, 2
    %v1965 = vmax.f32 %v1963, %v1964
    %v1966 = vrot.slane %v1965, 1
    %v1967 = vmax.f32 %v1965, %v1966
    %v1968 = vmax.f32 %v1634, %v1642
    %v1969 = vrot.slane %v1968, 4
    %v1970 = vmax.f32 %v1968, %v1969
    %v1971 = vrot.slane %v1970, 2
    %v1972 = vmax.f32 %v1970, %v1971
    %v1973 = vrot.slane %v1972, 1
    %v1974 = vmax.f32 %v1972, %v1973
    %v1975 = vmax.f32 %v1635, %v1643
    %v1976 = vrot.slane %v1975, 4
    %v1977 = vmax.f32 %v1975, %v1976
    %v1978 = vrot.slane %v1977, 2
    %v1979 = vmax.f32 %v1977, %v1978
    %v1980 = vrot.slane %v1979, 1
    %v1981 = vmax.f32 %v1979, %v1980
    %v1982 = vmax.f32 %v1636, %v1644
    %v1983 = vrot.slane %v1982, 4
    %v1984 = vmax.f32 %v1982, %v1983
    %v1985 = vrot.slane %v1984, 2
    %v1986 = vmax.f32 %v1984, %v1985
    %v1987 = vrot.slane %v1986, 1
    %v1988 = vmax.f32 %v1986, %v1987
    %v1989 = vmax.f32 %v1637, %v1645
    %v1990 = vrot.slane %v1989, 4
    %v1991 = vmax.f32 %v1989, %v1990
    %v1992 = vrot.slane %v1991, 2
    %v1993 = vmax.f32 %v1991, %v1992
    %v1994 = vrot.slane %v1993, 1
    %v1995 = vmax.f32 %v1993, %v1994
    %v1996 = vmax.f32 %v1638, %v1646
    %v1997 = vrot.slane %v1996, 4
    %v1998 = vmax.f32 %v1996, %v1997
    %v1999 = vrot.slane %v1998, 2
    %v2000 = vmax.f32 %v1998, %v1999
    %v2001 = vrot.slane %v2000, 1
    %v2002 = vmax.f32 %v2000, %v2001
    %v2003 = vmax.f32 %v1639, %v1647
    %v2004 = vrot.slane %v2003, 4
    %v2005 = vmax.f32 %v2003, %v2004
    %v2006 = vrot.slane %v2005, 2
    %v2007 = vmax.f32 %v2005, %v2006
    %v2008 = vrot.slane %v2007, 1
    %v2009 = vmax.f32 %v2007, %v2008
    %v2010 = vmax.f32 %v1640, %v1648
    %v2011 = vrot.slane %v2010, 4
    %v2012 = vmax.f32 %v2010, %v2011
    %v2013 = vrot.slane %v2012, 2
    %v2014 = vmax.f32 %v2012, %v2013
    %v2015 = vrot.slane %v2014, 1
    %v2016 = vmax.f32 %v2014, %v2015
    %v2017 = vmax.f32 %v1649, %v1657
    %v2018 = vrot.slane %v2017, 4
    %v2019 = vmax.f32 %v2017, %v2018
    %v2020 = vrot.slane %v2019, 2
    %v2021 = vmax.f32 %v2019, %v2020
    %v2022 = vrot.slane %v2021, 1
    %v2023 = vmax.f32 %v2021, %v2022
    %v2024 = vmax.f32 %v1650, %v1658
    %v2025 = vrot.slane %v2024, 4
    %v2026 = vmax.f32 %v2024, %v2025
    %v2027 = vrot.slane %v2026, 2
    %v2028 = vmax.f32 %v2026, %v2027
    %v2029 = vrot.slane %v2028, 1
    %v2030 = vmax.f32 %v2028, %v2029
    %v2031 = vmax.f32 %v1651, %v1659
    %v2032 = vrot.slane %v2031, 4
    %v2033 = vmax.f32 %v2031, %v2032
    %v2034 = vrot.slane %v2033, 2
    %v2035 = vmax.f32 %v2033, %v2034
    %v2036 = vrot.slane %v2035, 1
    %v2037 = vmax.f32 %v2035, %v2036
    %v2038 = vmax.f32 %v1652, %v1660
    %v2039 = vrot.slane %v2038, 4
    %v2040 = vmax.f32 %v2038, %v2039
    %v2041 = vrot.slane %v2040, 2
    %v2042 = vmax.f32 %v2040, %v2041
    %v2043 = vrot.slane %v2042, 1
    %v2044 = vmax.f32 %v2042, %v2043
    %v2045 = vmax.f32 %v1653, %v1661
    %v2046 = vrot.slane %v2045, 4
    %v2047 = vmax.f32 %v2045, %v2046
    %v2048 = vrot.slane %v2047, 2
    %v2049 = vmax.f32 %v2047, %v2048
    %v2050 = vrot.slane %v2049, 1
    %v2051 = vmax.f32 %v2049, %v2050
    %v2052 = vmax.f32 %v1654, %v1662
    %v2053 = vrot.slane %v2052, 4
    %v2054 = vmax.f32 %v2052, %v2053
    %v2055 = vrot.slane %v2054, 2
    %v2056 = vmax.f32 %v2054, %v2055
    %v2057 = vrot.slane %v2056, 1
    %v2058 = vmax.f32 %v2056, %v2057
    %v2059 = vmax.f32 %v1655, %v1663
    %v2060 = vrot.slane %v2059, 4
    %v2061 = vmax.f32 %v2059, %v2060
    %v2062 = vrot.slane %v2061, 2
    %v2063 = vmax.f32 %v2061, %v2062
    %v2064 = vrot.slane %v2063, 1
    %v2065 = vmax.f32 %v2063, %v2064
    %v2066 = vmax.f32 %v1656, %v1664
    %v2067 = vrot.slane %v2066, 4
    %v2068 = vmax.f32 %v2066, %v2067
    %v2069 = vrot.slane %v2068, 2
    %v2070 = vmax.f32 %v2068, %v2069
    %v2071 = vrot.slane %v2070, 1
    %v2072 = vmax.f32 %v2070, %v2071
    %v2073 = vmax.f32 %v1665, %v1673
    %v2074 = vrot.slane %v2073, 4
    %v2075 = vmax.f32 %v2073, %v2074
    %v2076 = vrot.slane %v2075, 2
    %v2077 = vmax.f32 %v2075, %v2076
    %v2078 = vrot.slane %v2077, 1
    %v2079 = vmax.f32 %v2077, %v2078
    %v2080 = vmax.f32 %v1666, %v1674
    %v2081 = vrot.slane %v2080, 4
    %v2082 = vmax.f32 %v2080, %v2081
    %v2083 = vrot.slane %v2082, 2
    %v2084 = vmax.f32 %v2082, %v2083
    %v2085 = vrot.slane %v2084, 1
    %v2086 = vmax.f32 %v2084, %v2085
    %v2087 = vmax.f32 %v1667, %v1675
    %v2088 = vrot.slane %v2087, 4
    %v2089 = vmax.f32 %v2087, %v2088
    %v2090 = vrot.slane %v2089, 2
    %v2091 = vmax.f32 %v2089, %v2090
    %v2092 = vrot.slane %v2091, 1
    %v2093 = vmax.f32 %v2091, %v2092
    %v2094 = vmax.f32 %v1668, %v1676
    %v2095 = vrot.slane %v2094, 4
    %v2096 = vmax.f32 %v2094, %v2095
    %v2097 = vrot.slane %v2096, 2
    %v2098 = vmax.f32 %v2096, %v2097
    %v2099 = vrot.slane %v2098, 1
    %v2100 = vmax.f32 %v2098, %v2099
    %v2101 = vmax.f32 %v1669, %v1677
    %v2102 = vrot.slane %v2101, 4
    %v2103 = vmax.f32 %v2101, %v2102
    %v2104 = vrot.slane %v2103, 2
    %v2105 = vmax.f32 %v2103, %v2104
    %v2106 = vrot.slane %v2105, 1
    %v2107 = vmax.f32 %v2105, %v2106
    %v2108 = vmax.f32 %v1670, %v1678
    %v2109 = vrot.slane %v2108, 4
    %v2110 = vmax.f32 %v2108, %v2109
    %v2111 = vrot.slane %v2110, 2
    %v2112 = vmax.f32 %v2110, %v2111
    %v2113 = vrot.slane %v2112, 1
    %v2114 = vmax.f32 %v2112, %v2113
    %v2115 = vmax.f32 %v1671, %v1679
    %v2116 = vrot.slane %v2115, 4
    %v2117 = vmax.f32 %v2115, %v2116
    %v2118 = vrot.slane %v2117, 2
    %v2119 = vmax.f32 %v2117, %v2118
    %v2120 = vrot.slane %v2119, 1
    %v2121 = vmax.f32 %v2119, %v2120
    %v2122 = vmax.f32 %v1672, %v1680
    %v2123 = vrot.slane %v2122, 4
    %v2124 = vmax.f32 %v2122, %v2123
    %v2125 = vrot.slane %v2124, 2
    %v2126 = vmax.f32 %v2124, %v2125
    %v2127 = vrot.slane %v2126, 1
    %v2128 = vmax.f32 %v2126, %v2127
    %v2129 = vld [vmem:[#allocation5] sm:$0xff]
    %v2130 = vld [vmem:[#allocation5 + $0x8] sm:$0xff]
    %v2131 = vld [vmem:[#allocation5 + $0x10] sm:$0xff]
    %v2132 = vld [vmem:[#allocation5 + $0x18] sm:$0xff]
    %v2133 = vld [vmem:[#allocation5 + $0x20] sm:$0xff]
    %v2134 = vld [vmem:[#allocation5 + $0x28] sm:$0xff]
    %v2135 = vld [vmem:[#allocation5 + $0x30] sm:$0xff]
    %v2136 = vld [vmem:[#allocation5 + $0x38] sm:$0xff]
    %v2137 = vld [vmem:[#allocation5 + $0x40] sm:$0xff]
    %v2138 = vld [vmem:[#allocation5 + $0x48] sm:$0xff]
    %v2139 = vld [vmem:[#allocation5 + $0x50] sm:$0xff]
    %v2140 = vld [vmem:[#allocation5 + $0x58] sm:$0xff]
    %v2141 = vld [vmem:[#allocation5 + $0x60] sm:$0xff]
    %v2142 = vld [vmem:[#allocation5 + $0x68] sm:$0xff]
    %v2143 = vld [vmem:[#allocation5 + $0x70] sm:$0xff]
    %v2144 = vld [vmem:[#allocation5 + $0x78] sm:$0xff]
    %v2145 = vld [vmem:[#allocation5 + $0x80] sm:$0xff]
    %v2146 = vld [vmem:[#allocation5 + $0x88] sm:$0xff]
    %v2147 = vld [vmem:[#allocation5 + $0x90] sm:$0xff]
    %v2148 = vld [vmem:[#allocation5 + $0x98] sm:$0xff]
    %v2149 = vld [vmem:[#allocation5 + $0xa0] sm:$0xff]
    %v2150 = vld [vmem:[#allocation5 + $0xa8] sm:$0xff]
    %v2151 = vld [vmem:[#allocation5 + $0xb0] sm:$0xff]
    %v2152 = vld [vmem:[#allocation5 + $0xb8] sm:$0xff]
    %v2153 = vld [vmem:[#allocation5 + $0xc0] sm:$0xff]
    %v2154 = vld [vmem:[#allocation5 + $0xc8] sm:$0xff]
    %v2155 = vld [vmem:[#allocation5 + $0xd0] sm:$0xff]
    %v2156 = vld [vmem:[#allocation5 + $0xd8] sm:$0xff]
    %v2157 = vld [vmem:[#allocation5 + $0xe0] sm:$0xff]
    %v2158 = vld [vmem:[#allocation5 + $0xe8] sm:$0xff]
    %v2159 = vld [vmem:[#allocation5 + $0xf0] sm:$0xff]
    %v2160 = vld [vmem:[#allocation5 + $0xf8] sm:$0xff]
    %v2161 = vld [vmem:[#allocation5 + $0x100] sm:$0xff]
    %v2162 = vld [vmem:[#allocation5 + $0x108] sm:$0xff]
    %v2163 = vld [vmem:[#allocation5 + $0x110] sm:$0xff]
    %v2164 = vld [vmem:[#allocation5 + $0x118] sm:$0xff]
    %v2165 = vld [vmem:[#allocation5 + $0x120] sm:$0xff]
    %v2166 = vld [vmem:[#allocation5 + $0x128] sm:$0xff]
    %v2167 = vld [vmem:[#allocation5 + $0x130] sm:$0xff]
    %v2168 = vld [vmem:[#allocation5 + $0x138] sm:$0xff]
    %v2169 = vld [vmem:[#allocation5 + $0x140] sm:$0xff]
    %v2170 = vld [vmem:[#allocation5 + $0x148] sm:$0xff]
    %v2171 = vld [vmem:[#allocation5 + $0x150] sm:$0xff]
    %v2172 = vld [vmem:[#allocation5 + $0x158] sm:$0xff]
    %v2173 = vld [vmem:[#allocation5 + $0x160] sm:$0xff]
    %v2174 = vld [vmem:[#allocation5 + $0x168] sm:$0xff]
    %v2175 = vld [vmem:[#allocation5 + $0x170] sm:$0xff]
    %v2176 = vld [vmem:[#allocation5 + $0x178] sm:$0xff]
    %v2177 = vld [vmem:[#allocation5 + $0x180] sm:$0xff]
    %v2178 = vld [vmem:[#allocation5 + $0x188] sm:$0xff]
    %v2179 = vld [vmem:[#allocation5 + $0x190] sm:$0xff]
    %v2180 = vld [vmem:[#allocation5 + $0x198] sm:$0xff]
    %v2181 = vld [vmem:[#allocation5 + $0x1a0] sm:$0xff]
    %v2182 = vld [vmem:[#allocation5 + $0x1a8] sm:$0xff]
    %v2183 = vld [vmem:[#allocation5 + $0x1b0] sm:$0xff]
    %v2184 = vld [vmem:[#allocation5 + $0x1b8] sm:$0xff]
    %v2185 = vld [vmem:[#allocation5 + $0x1c0] sm:$0xff]
    %v2186 = vld [vmem:[#allocation5 + $0x1c8] sm:$0xff]
    %v2187 = vld [vmem:[#allocation5 + $0x1d0] sm:$0xff]
    %v2188 = vld [vmem:[#allocation5 + $0x1d8] sm:$0xff]
    %v2189 = vld [vmem:[#allocation5 + $0x1e0] sm:$0xff]
    %v2190 = vld [vmem:[#allocation5 + $0x1e8] sm:$0xff]
    %v2191 = vld [vmem:[#allocation5 + $0x1f0] sm:$0xff]
    %v2192 = vld [vmem:[#allocation5 + $0x1f8] sm:$0xff]
    %v2193 = vld [vmem:[#allocation5 + $0x200] sm:$0xff]
    %v2194 = vld [vmem:[#allocation5 + $0x208] sm:$0xff]
    %v2195 = vld [vmem:[#allocation5 + $0x210] sm:$0xff]
    %v2196 = vld [vmem:[#allocation5 + $0x218] sm:$0xff]
    %v2197 = vld [vmem:[#allocation5 + $0x220] sm:$0xff]
    %v2198 = vld [vmem:[#allocation5 + $0x228] sm:$0xff]
    %v2199 = vld [vmem:[#allocation5 + $0x230] sm:$0xff]
    %v2200 = vld [vmem:[#allocation5 + $0x238] sm:$0xff]
    %v2201 = vld [vmem:[#allocation5 + $0x240] sm:$0xff]
    %v2202 = vld [vmem:[#allocation5 + $0x248] sm:$0xff]
    %v2203 = vld [vmem:[#allocation5 + $0x250] sm:$0xff]
    %v2204 = vld [vmem:[#allocation5 + $0x258] sm:$0xff]
    %v2205 = vld [vmem:[#allocation5 + $0x260] sm:$0xff]
    %v2206 = vld [vmem:[#allocation5 + $0x268] sm:$0xff]
    %v2207 = vld [vmem:[#allocation5 + $0x270] sm:$0xff]
    %v2208 = vld [vmem:[#allocation5 + $0x278] sm:$0xff]
    %v2209 = vld [vmem:[#allocation5 + $0x280] sm:$0xff]
    %v2210 = vld [vmem:[#allocation5 + $0x288] sm:$0xff]
    %v2211 = vld [vmem:[#allocation5 + $0x290] sm:$0xff]
    %v2212 = vld [vmem:[#allocation5 + $0x298] sm:$0xff]
    %v2213 = vld [vmem:[#allocation5 + $0x2a0] sm:$0xff]
    %v2214 = vld [vmem:[#allocation5 + $0x2a8] sm:$0xff]
    %v2215 = vld [vmem:[#allocation5 + $0x2b0] sm:$0xff]
    %v2216 = vld [vmem:[#allocation5 + $0x2b8] sm:$0xff]
    %v2217 = vld [vmem:[#allocation5 + $0x2c0] sm:$0xff]
    %v2218 = vld [vmem:[#allocation5 + $0x2c8] sm:$0xff]
    %v2219 = vld [vmem:[#allocation5 + $0x2d0] sm:$0xff]
    %v2220 = vld [vmem:[#allocation5 + $0x2d8] sm:$0xff]
    %v2221 = vld [vmem:[#allocation5 + $0x2e0] sm:$0xff]
    %v2222 = vld [vmem:[#allocation5 + $0x2e8] sm:$0xff]
    %v2223 = vld [vmem:[#allocation5 + $0x2f0] sm:$0xff]
    %v2224 = vld [vmem:[#allocation5 + $0x2f8] sm:$0xff]
    %v2225 = vld [vmem:[#allocation5 + $0x300] sm:$0xff]
    %v2226 = vld [vmem:[#allocation5 + $0x308] sm:$0xff]
    %v2227 = vld [vmem:[#allocation5 + $0x310] sm:$0xff]
    %v2228 = vld [vmem:[#allocation5 + $0x318] sm:$0xff]
    %v2229 = vld [vmem:[#allocation5 + $0x320] sm:$0xff]
    %v2230 = vld [vmem:[#allocation5 + $0x328] sm:$0xff]
    %v2231 = vld [vmem:[#allocation5 + $0x330] sm:$0xff]
    %v2232 = vld [vmem:[#allocation5 + $0x338] sm:$0xff]
    %v2233 = vld [vmem:[#allocation5 + $0x340] sm:$0xff]
    %v2234 = vld [vmem:[#allocation5 + $0x348] sm:$0xff]
    %v2235 = vld [vmem:[#allocation5 + $0x350] sm:$0xff]
    %v2236 = vld [vmem:[#allocation5 + $0x358] sm:$0xff]
    %v2237 = vld [vmem:[#allocation5 + $0x360] sm:$0xff]
    %v2238 = vld [vmem:[#allocation5 + $0x368] sm:$0xff]
    %v2239 = vld [vmem:[#allocation5 + $0x370] sm:$0xff]
    %v2240 = vld [vmem:[#allocation5 + $0x378] sm:$0xff]
    %v2241 = vld [vmem:[#allocation5 + $0x380] sm:$0xff]
    %v2242 = vld [vmem:[#allocation5 + $0x388] sm:$0xff]
    %v2243 = vld [vmem:[#allocation5 + $0x390] sm:$0xff]
    %v2244 = vld [vmem:[#allocation5 + $0x398] sm:$0xff]
    %v2245 = vld [vmem:[#allocation5 + $0x3a0] sm:$0xff]
    %v2246 = vld [vmem:[#allocation5 + $0x3a8] sm:$0xff]
    %v2247 = vld [vmem:[#allocation5 + $0x3b0] sm:$0xff]
    %v2248 = vld [vmem:[#allocation5 + $0x3b8] sm:$0xff]
    %v2249 = vld [vmem:[#allocation5 + $0x3c0] sm:$0xff]
    %v2250 = vld [vmem:[#allocation5 + $0x3c8] sm:$0xff]
    %v2251 = vld [vmem:[#allocation5 + $0x3d0] sm:$0xff]
    %v2252 = vld [vmem:[#allocation5 + $0x3d8] sm:$0xff]
    %v2253 = vld [vmem:[#allocation5 + $0x3e0] sm:$0xff]
    %v2254 = vld [vmem:[#allocation5 + $0x3e8] sm:$0xff]
    %v2255 = vld [vmem:[#allocation5 + $0x3f0] sm:$0xff]
    %v2256 = vld [vmem:[#allocation5 + $0x3f8] sm:$0xff]
    %v2257 = vld [vmem:[#allocation5 + $0x400] sm:$0xff]
    %v2258 = vld [vmem:[#allocation5 + $0x408] sm:$0xff]
    %v2259 = vld [vmem:[#allocation5 + $0x410] sm:$0xff]
    %v2260 = vld [vmem:[#allocation5 + $0x418] sm:$0xff]
    %v2261 = vld [vmem:[#allocation5 + $0x420] sm:$0xff]
    %v2262 = vld [vmem:[#allocation5 + $0x428] sm:$0xff]
    %v2263 = vld [vmem:[#allocation5 + $0x430] sm:$0xff]
    %v2264 = vld [vmem:[#allocation5 + $0x438] sm:$0xff]
    %v2265 = vld [vmem:[#allocation5 + $0x440] sm:$0xff]
    %v2266 = vld [vmem:[#allocation5 + $0x448] sm:$0xff]
    %v2267 = vld [vmem:[#allocation5 + $0x450] sm:$0xff]
    %v2268 = vld [vmem:[#allocation5 + $0x458] sm:$0xff]
    %v2269 = vld [vmem:[#allocation5 + $0x460] sm:$0xff]
    %v2270 = vld [vmem:[#allocation5 + $0x468] sm:$0xff]
    %v2271 = vld [vmem:[#allocation5 + $0x470] sm:$0xff]
    %v2272 = vld [vmem:[#allocation5 + $0x478] sm:$0xff]
    %v2273 = vld [vmem:[#allocation5 + $0x480] sm:$0xff]
    %v2274 = vld [vmem:[#allocation5 + $0x488] sm:$0xff]
    %v2275 = vld [vmem:[#allocation5 + $0x490] sm:$0xff]
    %v2276 = vld [vmem:[#allocation5 + $0x498] sm:$0xff]
    %v2277 = vld [vmem:[#allocation5 + $0x4a0] sm:$0xff]
    %v2278 = vld [vmem:[#allocation5 + $0x4a8] sm:$0xff]
    %v2279 = vld [vmem:[#allocation5 + $0x4b0] sm:$0xff]
    %v2280 = vld [vmem:[#allocation5 + $0x4b8] sm:$0xff]
    %v2281 = vld [vmem:[#allocation5 + $0x4c0] sm:$0xff]
    %v2282 = vld [vmem:[#allocation5 + $0x4c8] sm:$0xff]
    %v2283 = vld [vmem:[#allocation5 + $0x4d0] sm:$0xff]
    %v2284 = vld [vmem:[#allocation5 + $0x4d8] sm:$0xff]
    %v2285 = vld [vmem:[#allocation5 + $0x4e0] sm:$0xff]
    %v2286 = vld [vmem:[#allocation5 + $0x4e8] sm:$0xff]
    %v2287 = vld [vmem:[#allocation5 + $0x4f0] sm:$0xff]
    %v2288 = vld [vmem:[#allocation5 + $0x4f8] sm:$0xff]
    %v2289 = vld [vmem:[#allocation5 + $0x500] sm:$0xff]
    %v2290 = vld [vmem:[#allocation5 + $0x508] sm:$0xff]
    %v2291 = vld [vmem:[#allocation5 + $0x510] sm:$0xff]
    %v2292 = vld [vmem:[#allocation5 + $0x518] sm:$0xff]
    %v2293 = vld [vmem:[#allocation5 + $0x520] sm:$0xff]
    %v2294 = vld [vmem:[#allocation5 + $0x528] sm:$0xff]
    %v2295 = vld [vmem:[#allocation5 + $0x530] sm:$0xff]
    %v2296 = vld [vmem:[#allocation5 + $0x538] sm:$0xff]
    %v2297 = vld [vmem:[#allocation5 + $0x540] sm:$0xff]
    %v2298 = vld [vmem:[#allocation5 + $0x548] sm:$0xff]
    %v2299 = vld [vmem:[#allocation5 + $0x550] sm:$0xff]
    %v2300 = vld [vmem:[#allocation5 + $0x558] sm:$0xff]
    %v2301 = vld [vmem:[#allocation5 + $0x560] sm:$0xff]
    %v2302 = vld [vmem:[#allocation5 + $0x568] sm:$0xff]
    %v2303 = vld [vmem:[#allocation5 + $0x570] sm:$0xff]
    %v2304 = vld [vmem:[#allocation5 + $0x578] sm:$0xff]
    %v2305 = vld [vmem:[#allocation5 + $0x580] sm:$0xff]
    %v2306 = vld [vmem:[#allocation5 + $0x588] sm:$0xff]
    %v2307 = vld [vmem:[#allocation5 + $0x590] sm:$0xff]
    %v2308 = vld [vmem:[#allocation5 + $0x598] sm:$0xff]
    %v2309 = vld [vmem:[#allocation5 + $0x5a0] sm:$0xff]
    %v2310 = vld [vmem:[#allocation5 + $0x5a8] sm:$0xff]
    %v2311 = vld [vmem:[#allocation5 + $0x5b0] sm:$0xff]
    %v2312 = vld [vmem:[#allocation5 + $0x5b8] sm:$0xff]
    %v2313 = vld [vmem:[#allocation5 + $0x5c0] sm:$0xff]
    %v2314 = vld [vmem:[#allocation5 + $0x5c8] sm:$0xff]
    %v2315 = vld [vmem:[#allocation5 + $0x5d0] sm:$0xff]
    %v2316 = vld [vmem:[#allocation5 + $0x5d8] sm:$0xff]
    %v2317 = vld [vmem:[#allocation5 + $0x5e0] sm:$0xff]
    %v2318 = vld [vmem:[#allocation5 + $0x5e8] sm:$0xff]
    %v2319 = vld [vmem:[#allocation5 + $0x5f0] sm:$0xff]
    %v2320 = vld [vmem:[#allocation5 + $0x5f8] sm:$0xff]
    %v2321 = vld [vmem:[#allocation5 + $0x600] sm:$0xff]
    %v2322 = vld [vmem:[#allocation5 + $0x608] sm:$0xff]
    %v2323 = vld [vmem:[#allocation5 + $0x610] sm:$0xff]
    %v2324 = vld [vmem:[#allocation5 + $0x618] sm:$0xff]
    %v2325 = vld [vmem:[#allocation5 + $0x620] sm:$0xff]
    %v2326 = vld [vmem:[#allocation5 + $0x628] sm:$0xff]
    %v2327 = vld [vmem:[#allocation5 + $0x630] sm:$0xff]
    %v2328 = vld [vmem:[#allocation5 + $0x638] sm:$0xff]
    %v2329 = vld [vmem:[#allocation5 + $0x640] sm:$0xff]
    %v2330 = vld [vmem:[#allocation5 + $0x648] sm:$0xff]
    %v2331 = vld [vmem:[#allocation5 + $0x650] sm:$0xff]
    %v2332 = vld [vmem:[#allocation5 + $0x658] sm:$0xff]
    %v2333 = vld [vmem:[#allocation5 + $0x660] sm:$0xff]
    %v2334 = vld [vmem:[#allocation5 + $0x668] sm:$0xff]
    %v2335 = vld [vmem:[#allocation5 + $0x670] sm:$0xff]
    %v2336 = vld [vmem:[#allocation5 + $0x678] sm:$0xff]
    %v2337 = vld [vmem:[#allocation5 + $0x680] sm:$0xff]
    %v2338 = vld [vmem:[#allocation5 + $0x688] sm:$0xff]
    %v2339 = vld [vmem:[#allocation5 + $0x690] sm:$0xff]
    %v2340 = vld [vmem:[#allocation5 + $0x698] sm:$0xff]
    %v2341 = vld [vmem:[#allocation5 + $0x6a0] sm:$0xff]
    %v2342 = vld [vmem:[#allocation5 + $0x6a8] sm:$0xff]
    %v2343 = vld [vmem:[#allocation5 + $0x6b0] sm:$0xff]
    %v2344 = vld [vmem:[#allocation5 + $0x6b8] sm:$0xff]
    %v2345 = vld [vmem:[#allocation5 + $0x6c0] sm:$0xff]
    %v2346 = vld [vmem:[#allocation5 + $0x6c8] sm:$0xff]
    %v2347 = vld [vmem:[#allocation5 + $0x6d0] sm:$0xff]
    %v2348 = vld [vmem:[#allocation5 + $0x6d8] sm:$0xff]
    %v2349 = vld [vmem:[#allocation5 + $0x6e0] sm:$0xff]
    %v2350 = vld [vmem:[#allocation5 + $0x6e8] sm:$0xff]
    %v2351 = vld [vmem:[#allocation5 + $0x6f0] sm:$0xff]
    %v2352 = vld [vmem:[#allocation5 + $0x6f8] sm:$0xff]
    %v2353 = vld [vmem:[#allocation5 + $0x700] sm:$0xff]
    %v2354 = vld [vmem:[#allocation5 + $0x708] sm:$0xff]
    %v2355 = vld [vmem:[#allocation5 + $0x710] sm:$0xff]
    %v2356 = vld [vmem:[#allocation5 + $0x718] sm:$0xff]
    %v2357 = vld [vmem:[#allocation5 + $0x720] sm:$0xff]
    %v2358 = vld [vmem:[#allocation5 + $0x728] sm:$0xff]
    %v2359 = vld [vmem:[#allocation5 + $0x730] sm:$0xff]
    %v2360 = vld [vmem:[#allocation5 + $0x738] sm:$0xff]
    %v2361 = vld [vmem:[#allocation5 + $0x740] sm:$0xff]
    %v2362 = vld [vmem:[#allocation5 + $0x748] sm:$0xff]
    %v2363 = vld [vmem:[#allocation5 + $0x750] sm:$0xff]
    %v2364 = vld [vmem:[#allocation5 + $0x758] sm:$0xff]
    %v2365 = vld [vmem:[#allocation5 + $0x760] sm:$0xff]
    %v2366 = vld [vmem:[#allocation5 + $0x768] sm:$0xff]
    %v2367 = vld [vmem:[#allocation5 + $0x770] sm:$0xff]
    %v2368 = vld [vmem:[#allocation5 + $0x778] sm:$0xff]
    %v2369 = vld [vmem:[#allocation5 + $0x780] sm:$0xff]
    %v2370 = vld [vmem:[#allocation5 + $0x788] sm:$0xff]
    %v2371 = vld [vmem:[#allocation5 + $0x790] sm:$0xff]
    %v2372 = vld [vmem:[#allocation5 + $0x798] sm:$0xff]
    %v2373 = vld [vmem:[#allocation5 + $0x7a0] sm:$0xff]
    %v2374 = vld [vmem:[#allocation5 + $0x7a8] sm:$0xff]
    %v2375 = vld [vmem:[#allocation5 + $0x7b0] sm:$0xff]
    %v2376 = vld [vmem:[#allocation5 + $0x7b8] sm:$0xff]
    %v2377 = vld [vmem:[#allocation5 + $0x7c0] sm:$0xff]
    %v2378 = vld [vmem:[#allocation5 + $0x7c8] sm:$0xff]
    %v2379 = vld [vmem:[#allocation5 + $0x7d0] sm:$0xff]
    %v2380 = vld [vmem:[#allocation5 + $0x7d8] sm:$0xff]
    %v2381 = vld [vmem:[#allocation5 + $0x7e0] sm:$0xff]
    %v2382 = vld [vmem:[#allocation5 + $0x7e8] sm:$0xff]
    %v2383 = vld [vmem:[#allocation5 + $0x7f0] sm:$0xff]
    %v2384 = vld [vmem:[#allocation5 + $0x7f8] sm:$0xff]
    %v2385 = vpack.c.bf16 %v1687, %v1687
    %v2386 = vpack.c.bf16 %v1694, %v1694
    %v2387 = vpack.c.bf16 %v1701, %v1701
    %v2388 = vpack.c.bf16 %v1708, %v1708
    %v2389 = vpack.c.bf16 %v1715, %v1715
    %v2390 = vpack.c.bf16 %v1722, %v1722
    %v2391 = vpack.c.bf16 %v1729, %v1729
    %v2392 = vpack.c.bf16 %v1736, %v1736
    %v2393 = vpack.c.bf16 %v1743, %v1743
    %v2394 = vpack.c.bf16 %v1750, %v1750
    %v2395 = vpack.c.bf16 %v1757, %v1757
    %v2396 = vpack.c.bf16 %v1764, %v1764
    %v2397 = vpack.c.bf16 %v1771, %v1771
    %v2398 = vpack.c.bf16 %v1778, %v1778
    %v2399 = vpack.c.bf16 %v1785, %v1785
    %v2400 = vpack.c.bf16 %v1792, %v1792
    %v2401 = vpack.c.bf16 %v1799, %v1799
    %v2402 = vpack.c.bf16 %v1806, %v1806
    %v2403 = vpack.c.bf16 %v1813, %v1813
    %v2404 = vpack.c.bf16 %v1820, %v1820
    %v2405 = vpack.c.bf16 %v1827, %v1827
    %v2406 = vpack.c.bf16 %v1834, %v1834
    %v2407 = vpack.c.bf16 %v1841, %v1841
    %v2408 = vpack.c.bf16 %v1848, %v1848
    %v2409 = vpack.c.bf16 %v1855, %v1855
    %v2410 = vpack.c.bf16 %v1862, %v1862
    %v2411 = vpack.c.bf16 %v1869, %v1869
    %v2412 = vpack.c.bf16 %v1876, %v1876
    %v2413 = vpack.c.bf16 %v1883, %v1883
    %v2414 = vpack.c.bf16 %v1890, %v1890
    %v2415 = vpack.c.bf16 %v1897, %v1897
    %v2416 = vpack.c.bf16 %v1904, %v1904
    %v2417 = vpack.c.bf16 %v1911, %v1911
    %v2418 = vpack.c.bf16 %v1918, %v1918
    %v2419 = vpack.c.bf16 %v1925, %v1925
    %v2420 = vpack.c.bf16 %v1932, %v1932
    %v2421 = vpack.c.bf16 %v1939, %v1939
    %v2422 = vpack.c.bf16 %v1946, %v1946
    %v2423 = vpack.c.bf16 %v1953, %v1953
    %v2424 = vpack.c.bf16 %v1960, %v1960
    %v2425 = vpack.c.bf16 %v1967, %v1967
    %v2426 = vpack.c.bf16 %v1974, %v1974
    %v2427 = vpack.c.bf16 %v1981, %v1981
    %v2428 = vpack.c.bf16 %v1988, %v1988
    %v2429 = vpack.c.bf16 %v1995, %v1995
    %v2430 = vpack.c.bf16 %v2002, %v2002
    %v2431 = vpack.c.bf16 %v2009, %v2009
    %v2432 = vpack.c.bf16 %v2016, %v2016
    %v2433 = vpack.c.bf16 %v2023, %v2023
    %v2434 = vpack.c.bf16 %v2030, %v2030
    %v2435 = vpack.c.bf16 %v2037, %v2037
    %v2436 = vpack.c.bf16 %v2044, %v2044
    %v2437 = vpack.c.bf16 %v2051, %v2051
    %v2438 = vpack.c.bf16 %v2058, %v2058
    %v2439 = vpack.c.bf16 %v2065, %v2065
    %v2440 = vpack.c.bf16 %v2072, %v2072
    %v2441 = vpack.c.bf16 %v2079, %v2079
    %v2442 = vpack.c.bf16 %v2086, %v2086
    %v2443 = vpack.c.bf16 %v2093, %v2093
    %v2444 = vpack.c.bf16 %v2100, %v2100
    %v2445 = vpack.c.bf16 %v2107, %v2107
    %v2446 = vpack.c.bf16 %v2114, %v2114
    %v2447 = vpack.c.bf16 %v2121, %v2121
    %v2448 = vpack.c.bf16 %v2128, %v2128
    %v2449 = vld [vmem:[%s8] sm:$0xf]
    %v2451 = vperm.slane %v2449, 0
    %v2452 = vperm.slane %v2449, 1
    %v2453 = vperm.slane %v2449, 2
    %v2454 = vperm.slane %v2449, 3
    %v2523 = vunpack.c.l.b16 %v2385
    %v2524 = vunpack.c.l.b16 %v2386
    %v2525 = vunpack.c.l.b16 %v2387
    %v2526 = vunpack.c.l.b16 %v2388
    %v2527 = vunpack.c.l.b16 %v2389
    %v2528 = vunpack.c.l.b16 %v2390
    %v2529 = vunpack.c.l.b16 %v2391
    %v2530 = vunpack.c.l.b16 %v2392
    %v2531 = vunpack.c.l.b16 %v2393
    %v2532 = vunpack.c.l.b16 %v2394
    %v2533 = vunpack.c.l.b16 %v2395
    %v2534 = vunpack.c.l.b16 %v2396
    %v2535 = vunpack.c.l.b16 %v2397
    %v2536 = vunpack.c.l.b16 %v2398
    %v2537 = vunpack.c.l.b16 %v2399
    %v2538 = vunpack.c.l.b16 %v2400
    %v2539 = vunpack.c.l.b16 %v2401
    %v2540 = vunpack.c.l.b16 %v2402
    %v2541 = vunpack.c.l.b16 %v2403
    %v2542 = vunpack.c.l.b16 %v2404
    %v2543 = vunpack.c.l.b16 %v2405
    %v2544 = vunpack.c.l.b16 %v2406
    %v2545 = vunpack.c.l.b16 %v2407
    %v2546 = vunpack.c.l.b16 %v2408
    %v2547 = vunpack.c.l.b16 %v2409
    %v2548 = vunpack.c.l.b16 %v2410
    %v2549 = vunpack.c.l.b16 %v2411
    %v2550 = vunpack.c.l.b16 %v2412
    %v2551 = vunpack.c.l.b16 %v2413
    %v2552 = vunpack.c.l.b16 %v2414
    %v2553 = vunpack.c.l.b16 %v2415
    %v2554 = vunpack.c.l.b16 %v2416
    %v2555 = vunpack.c.l.b16 %v2417
    %v2556 = vunpack.c.l.b16 %v2418
    %v2557 = vunpack.c.l.b16 %v2419
    %v2558 = vunpack.c.l.b16 %v2420
    %v2559 = vunpack.c.l.b16 %v2421
    %v2560 = vunpack.c.l.b16 %v2422
    %v2561 = vunpack.c.l.b16 %v2423
    %v2562 = vunpack.c.l.b16 %v2424
    %v2563 = vunpack.c.l.b16 %v2425
    %v2564 = vunpack.c.l.b16 %v2426
    %v2565 = vunpack.c.l.b16 %v2427
    %v2566 = vunpack.c.l.b16 %v2428
    %v2567 = vunpack.c.l.b16 %v2429
    %v2568 = vunpack.c.l.b16 %v2430
    %v2569 = vunpack.c.l.b16 %v2431
    %v2570 = vunpack.c.l.b16 %v2432
    %v2571 = vunpack.c.l.b16 %v2433
    %v2572 = vunpack.c.l.b16 %v2434
    %v2573 = vunpack.c.l.b16 %v2435
    %v2574 = vunpack.c.l.b16 %v2436
    %v2575 = vunpack.c.l.b16 %v2437
    %v2576 = vunpack.c.l.b16 %v2438
    %v2577 = vunpack.c.l.b16 %v2439
    %v2578 = vunpack.c.l.b16 %v2440
    %v2579 = vunpack.c.l.b16 %v2441
    %v2580 = vunpack.c.l.b16 %v2442
    %v2581 = vunpack.c.l.b16 %v2443
    %v2582 = vunpack.c.l.b16 %v2444
    %v2583 = vunpack.c.l.b16 %v2445
    %v2584 = vunpack.c.l.b16 %v2446
    %v2585 = vunpack.c.l.b16 %v2447
    %v2586 = vunpack.c.l.b16 %v2448
    %vm2587 = vcmask 1041409
    %v2588 = vsel %vm2587, %v2531, %v2523
    %vm2589 = vcmask 1042434
    %v2590 = vsel %vm2589, %v2539, %v2588
    %vm2591 = vcmask 1043459
    %v2592 = vsel %vm2591, %v2547, %v2590
    %vm2593 = vcmask 1044484
    %v2594 = vsel %vm2593, %v2555, %v2592
    %vm2595 = vcmask 1045509
    %v2596 = vsel %vm2595, %v2563, %v2594
    %vm2597 = vcmask 1046534
    %v2598 = vsel %vm2597, %v2571, %v2596
    %vm2599 = vcmask 1047559
    %v2600 = vsel %vm2599, %v2579, %v2598
    %v2601 = vsel %vm2587, %v2532, %v2524
    %v2602 = vsel %vm2589, %v2540, %v2601
    %v2603 = vsel %vm2591, %v2548, %v2602
    %v2604 = vsel %vm2593, %v2556, %v2603
    %v2605 = vsel %vm2595, %v2564, %v2604
    %v2606 = vsel %vm2597, %v2572, %v2605
    %v2607 = vsel %vm2599, %v2580, %v2606
    %v2608 = vsel %vm2587, %v2533, %v2525
    %v2609 = vsel %vm2589, %v2541, %v2608
    %v2610 = vsel %vm2591, %v2549, %v2609
    %v2611 = vsel %vm2593, %v2557, %v2610
    %v2612 = vsel %vm2595, %v2565, %v2611
    %v2613 = vsel %vm2597, %v2573, %v2612
    %v2614 = vsel %vm2599, %v2581, %v2613
    %v2615 = vsel %vm2587, %v2534, %v2526
    %v2616 = vsel %vm2589, %v2542, %v2615
    %v2617 = vsel %vm2591, %v2550, %v2616
    %v2618 = vsel %vm2593, %v2558, %v2617
    %v2619 = vsel %vm2595, %v2566, %v2618
    %v2620 = vsel %vm2597, %v2574, %v2619
    %v2621 = vsel %vm2599, %v2582, %v2620
    %v2622 = vsel %vm2587, %v2535, %v2527
    %v2623 = vsel %vm2589, %v2543, %v2622
    %v2624 = vsel %vm2591, %v2551, %v2623
    %v2625 = vsel %vm2593, %v2559, %v2624
    %v2626 = vsel %vm2595, %v2567, %v2625
    %v2627 = vsel %vm2597, %v2575, %v2626
    %v2628 = vsel %vm2599, %v2583, %v2627
    %v2629 = vsel %vm2587, %v2536, %v2528
    %v2630 = vsel %vm2589, %v2544, %v2629
    %v2631 = vsel %vm2591, %v2552, %v2630
    %v2632 = vsel %vm2593, %v2560, %v2631
    %v2633 = vsel %vm2595, %v2568, %v2632
    %v2634 = vsel %vm2597, %v2576, %v2633
    %v2635 = vsel %vm2599, %v2584, %v2634
    %v2636 = vsel %vm2587, %v2537, %v2529
    %v2637 = vsel %vm2589, %v2545, %v2636
    %v2638 = vsel %vm2591, %v2553, %v2637
    %v2639 = vsel %vm2593, %v2561, %v2638
    %v2640 = vsel %vm2595, %v2569, %v2639
    %v2641 = vsel %vm2597, %v2577, %v2640
    %v2642 = vsel %vm2599, %v2585, %v2641
    %v2643 = vsel %vm2587, %v2538, %v2530
    %v2644 = vsel %vm2589, %v2546, %v2643
    %v2645 = vsel %vm2591, %v2554, %v2644
    %v2646 = vsel %vm2593, %v2562, %v2645
    %v2647 = vsel %vm2595, %v2570, %v2646
    %v2648 = vsel %vm2597, %v2578, %v2647
    %v2649 = vsel %vm2599, %v2586, %v2648
    %v2650 = vpack.c.b16 %v2600, %v2600
    %v2651 = vpack.c.b16 %v2607, %v2607
    %v2652 = vpack.c.b16 %v2614, %v2614
    %v2653 = vpack.c.b16 %v2621, %v2621
    %v2654 = vpack.c.b16 %v2628, %v2628
    %v2655 = vpack.c.b16 %v2635, %v2635
    %v2656 = vpack.c.b16 %v2642, %v2642
    %v2657 = vpack.c.b16 %v2649, %v2649
    %v2922 = vunpack.c.l.b16 %v2129
    %v2923 = vunpack.c.h.b16 %v2129
    %v2924 = vunpack.c.l.b16 %v2130
    %v2925 = vunpack.c.h.b16 %v2130
    %v2926 = vunpack.c.l.b16 %v2131
    %v2927 = vunpack.c.h.b16 %v2131
    %v2928 = vunpack.c.l.b16 %v2132
    %v2929 = vunpack.c.h.b16 %v2132
    %v2930 = vunpack.c.l.b16 %v2133
    %v2931 = vunpack.c.h.b16 %v2133
    %v2932 = vunpack.c.l.b16 %v2134
    %v2933 = vunpack.c.h.b16 %v2134
    %v2934 = vunpack.c.l.b16 %v2135
    %v2935 = vunpack.c.h.b16 %v2135
    %v2936 = vunpack.c.l.b16 %v2136
    %v2937 = vunpack.c.h.b16 %v2136
    %v2938 = vunpack.c.l.b16 %v2137
    %v2939 = vunpack.c.h.b16 %v2137
    %v2940 = vunpack.c.l.b16 %v2138
    %v2941 = vunpack.c.h.b16 %v2138
    %v2942 = vunpack.c.l.b16 %v2139
    %v2943 = vunpack.c.h.b16 %v2139
    %v2944 = vunpack.c.l.b16 %v2140
    %v2945 = vunpack.c.h.b16 %v2140
    %v2946 = vunpack.c.l.b16 %v2141
    %v2947 = vunpack.c.h.b16 %v2141
    %v2948 = vunpack.c.l.b16 %v2142
    %v2949 = vunpack.c.h.b16 %v2142
    %v2950 = vunpack.c.l.b16 %v2143
    %v2951 = vunpack.c.h.b16 %v2143
    %v2952 = vunpack.c.l.b16 %v2144
    %v2953 = vunpack.c.h.b16 %v2144
    %v2954 = vunpack.c.l.b16 %v2145
    %v2955 = vunpack.c.h.b16 %v2145
    %v2956 = vunpack.c.l.b16 %v2146
    %v2957 = vunpack.c.h.b16 %v2146
    %v2958 = vunpack.c.l.b16 %v2147
    %v2959 = vunpack.c.h.b16 %v2147
    %v2960 = vunpack.c.l.b16 %v2148
    %v2961 = vunpack.c.h.b16 %v2148
    %v2962 = vunpack.c.l.b16 %v2149
    %v2963 = vunpack.c.h.b16 %v2149
    %v2964 = vunpack.c.l.b16 %v2150
    %v2965 = vunpack.c.h.b16 %v2150
    %v2966 = vunpack.c.l.b16 %v2151
    %v2967 = vunpack.c.h.b16 %v2151
    %v2968 = vunpack.c.l.b16 %v2152
    %v2969 = vunpack.c.h.b16 %v2152
    %v2970 = vunpack.c.l.b16 %v2153
    %v2971 = vunpack.c.h.b16 %v2153
    %v2972 = vunpack.c.l.b16 %v2154
    %v2973 = vunpack.c.h.b16 %v2154
    %v2974 = vunpack.c.l.b16 %v2155
    %v2975 = vunpack.c.h.b16 %v2155
    %v2976 = vunpack.c.l.b16 %v2156
    %v2977 = vunpack.c.h.b16 %v2156
    %v2978 = vunpack.c.l.b16 %v2157
    %v2979 = vunpack.c.h.b16 %v2157
    %v2980 = vunpack.c.l.b16 %v2158
    %v2981 = vunpack.c.h.b16 %v2158
    %v2982 = vunpack.c.l.b16 %v2159
    %v2983 = vunpack.c.h.b16 %v2159
    %v2984 = vunpack.c.l.b16 %v2160
    %v2985 = vunpack.c.h.b16 %v2160
    %v2986 = vunpack.c.l.b16 %v2161
    %v2987 = vunpack.c.h.b16 %v2161
    %v2988 = vunpack.c.l.b16 %v2162
    %v2989 = vunpack.c.h.b16 %v2162
    %v2990 = vunpack.c.l.b16 %v2163
    %v2991 = vunpack.c.h.b16 %v2163
    %v2992 = vunpack.c.l.b16 %v2164
    %v2993 = vunpack.c.h.b16 %v2164
    %v2994 = vunpack.c.l.b16 %v2165
    %v2995 = vunpack.c.h.b16 %v2165
    %v2996 = vunpack.c.l.b16 %v2166
    %v2997 = vunpack.c.h.b16 %v2166
    %v2998 = vunpack.c.l.b16 %v2167
    %v2999 = vunpack.c.h.b16 %v2167
    %v3000 = vunpack.c.l.b16 %v2168
    %v3001 = vunpack.c.h.b16 %v2168
    %v3002 = vunpack.c.l.b16 %v2169
    %v3003 = vunpack.c.h.b16 %v2169
    %v3004 = vunpack.c.l.b16 %v2170
    %v3005 = vunpack.c.h.b16 %v2170
    %v3006 = vunpack.c.l.b16 %v2171
    %v3007 = vunpack.c.h.b16 %v2171
    %v3008 = vunpack.c.l.b16 %v2172
    %v3009 = vunpack.c.h.b16 %v2172
    %v3010 = vunpack.c.l.b16 %v2173
    %v3011 = vunpack.c.h.b16 %v2173
    %v3012 = vunpack.c.l.b16 %v2174
    %v3013 = vunpack.c.h.b16 %v2174
    %v3014 = vunpack.c.l.b16 %v2175
    %v3015 = vunpack.c.h.b16 %v2175
    %v3016 = vunpack.c.l.b16 %v2176
    %v3017 = vunpack.c.h.b16 %v2176
    %v3018 = vunpack.c.l.b16 %v2177
    %v3019 = vunpack.c.h.b16 %v2177
    %v3020 = vunpack.c.l.b16 %v2178
    %v3021 = vunpack.c.h.b16 %v2178
    %v3022 = vunpack.c.l.b16 %v2179
    %v3023 = vunpack.c.h.b16 %v2179
    %v3024 = vunpack.c.l.b16 %v2180
    %v3025 = vunpack.c.h.b16 %v2180
    %v3026 = vunpack.c.l.b16 %v2181
    %v3027 = vunpack.c.h.b16 %v2181
    %v3028 = vunpack.c.l.b16 %v2182
    %v3029 = vunpack.c.h.b16 %v2182
    %v3030 = vunpack.c.l.b16 %v2183
    %v3031 = vunpack.c.h.b16 %v2183
    %v3032 = vunpack.c.l.b16 %v2184
    %v3033 = vunpack.c.h.b16 %v2184
    %v3034 = vunpack.c.l.b16 %v2185
    %v3035 = vunpack.c.h.b16 %v2185
    %v3036 = vunpack.c.l.b16 %v2186
    %v3037 = vunpack.c.h.b16 %v2186
    %v3038 = vunpack.c.l.b16 %v2187
    %v3039 = vunpack.c.h.b16 %v2187
    %v3040 = vunpack.c.l.b16 %v2188
    %v3041 = vunpack.c.h.b16 %v2188
    %v3042 = vunpack.c.l.b16 %v2189
    %v3043 = vunpack.c.h.b16 %v2189
    %v3044 = vunpack.c.l.b16 %v2190
    %v3045 = vunpack.c.h.b16 %v2190
    %v3046 = vunpack.c.l.b16 %v2191
    %v3047 = vunpack.c.h.b16 %v2191
    %v3048 = vunpack.c.l.b16 %v2192
    %v3049 = vunpack.c.h.b16 %v2192
    %v3050 = vunpack.c.l.b16 %v2193
    %v3051 = vunpack.c.h.b16 %v2193
    %v3052 = vunpack.c.l.b16 %v2194
    %v3053 = vunpack.c.h.b16 %v2194
    %v3054 = vunpack.c.l.b16 %v2195
    %v3055 = vunpack.c.h.b16 %v2195
    %v3056 = vunpack.c.l.b16 %v2196
    %v3057 = vunpack.c.h.b16 %v2196
    %v3058 = vunpack.c.l.b16 %v2197
    %v3059 = vunpack.c.h.b16 %v2197
    %v3060 = vunpack.c.l.b16 %v2198
    %v3061 = vunpack.c.h.b16 %v2198
    %v3062 = vunpack.c.l.b16 %v2199
    %v3063 = vunpack.c.h.b16 %v2199
    %v3064 = vunpack.c.l.b16 %v2200
    %v3065 = vunpack.c.h.b16 %v2200
    %v3066 = vunpack.c.l.b16 %v2201
    %v3067 = vunpack.c.h.b16 %v2201
    %v3068 = vunpack.c.l.b16 %v2202
    %v3069 = vunpack.c.h.b16 %v2202
    %v3070 = vunpack.c.l.b16 %v2203
    %v3071 = vunpack.c.h.b16 %v2203
    %v3072 = vunpack.c.l.b16 %v2204
    %v3073 = vunpack.c.h.b16 %v2204
    %v3074 = vunpack.c.l.b16 %v2205
    %v3075 = vunpack.c.h.b16 %v2205
    %v3076 = vunpack.c.l.b16 %v2206
    %v3077 = vunpack.c.h.b16 %v2206
    %v3078 = vunpack.c.l.b16 %v2207
    %v3079 = vunpack.c.h.b16 %v2207
    %v3080 = vunpack.c.l.b16 %v2208
    %v3081 = vunpack.c.h.b16 %v2208
    %v3082 = vunpack.c.l.b16 %v2209
    %v3083 = vunpack.c.h.b16 %v2209
    %v3084 = vunpack.c.l.b16 %v2210
    %v3085 = vunpack.c.h.b16 %v2210
    %v3086 = vunpack.c.l.b16 %v2211
    %v3087 = vunpack.c.h.b16 %v2211
    %v3088 = vunpack.c.l.b16 %v2212
    %v3089 = vunpack.c.h.b16 %v2212
    %v3090 = vunpack.c.l.b16 %v2213
    %v3091 = vunpack.c.h.b16 %v2213
    %v3092 = vunpack.c.l.b16 %v2214
    %v3093 = vunpack.c.h.b16 %v2214
    %v3094 = vunpack.c.l.b16 %v2215
    %v3095 = vunpack.c.h.b16 %v2215
    %v3096 = vunpack.c.l.b16 %v2216
    %v3097 = vunpack.c.h.b16 %v2216
    %v3098 = vunpack.c.l.b16 %v2217
    %v3099 = vunpack.c.h.b16 %v2217
    %v3100 = vunpack.c.l.b16 %v2218
    %v3101 = vunpack.c.h.b16 %v2218
    %v3102 = vunpack.c.l.b16 %v2219
    %v3103 = vunpack.c.h.b16 %v2219
    %v3104 = vunpack.c.l.b16 %v2220
    %v3105 = vunpack.c.h.b16 %v2220
    %v3106 = vunpack.c.l.b16 %v2221
    %v3107 = vunpack.c.h.b16 %v2221
    %v3108 = vunpack.c.l.b16 %v2222
    %v3109 = vunpack.c.h.b16 %v2222
    %v3110 = vunpack.c.l.b16 %v2223
    %v3111 = vunpack.c.h.b16 %v2223
    %v3112 = vunpack.c.l.b16 %v2224
    %v3113 = vunpack.c.h.b16 %v2224
    %v3114 = vunpack.c.l.b16 %v2225
    %v3115 = vunpack.c.h.b16 %v2225
    %v3116 = vunpack.c.l.b16 %v2226
    %v3117 = vunpack.c.h.b16 %v2226
    %v3118 = vunpack.c.l.b16 %v2227
    %v3119 = vunpack.c.h.b16 %v2227
    %v3120 = vunpack.c.l.b16 %v2228
    %v3121 = vunpack.c.h.b16 %v2228
    %v3122 = vunpack.c.l.b16 %v2229
    %v3123 = vunpack.c.h.b16 %v2229
    %v3124 = vunpack.c.l.b16 %v2230
    %v3125 = vunpack.c.h.b16 %v2230
    %v3126 = vunpack.c.l.b16 %v2231
    %v3127 = vunpack.c.h.b16 %v2231
    %v3128 = vunpack.c.l.b16 %v2232
    %v3129 = vunpack.c.h.b16 %v2232
    %v3130 = vunpack.c.l.b16 %v2233
    %v3131 = vunpack.c.h.b16 %v2233
    %v3132 = vunpack.c.l.b16 %v2234
    %v3133 = vunpack.c.h.b16 %v2234
    %v3134 = vunpack.c.l.b16 %v2235
    %v3135 = vunpack.c.h.b16 %v2235
    %v3136 = vunpack.c.l.b16 %v2236
    %v3137 = vunpack.c.h.b16 %v2236
    %v3138 = vunpack.c.l.b16 %v2237
    %v3139 = vunpack.c.h.b16 %v2237
    %v3140 = vunpack.c.l.b16 %v2238
    %v3141 = vunpack.c.h.b16 %v2238
    %v3142 = vunpack.c.l.b16 %v2239
    %v3143 = vunpack.c.h.b16 %v2239
    %v3144 = vunpack.c.l.b16 %v2240
    %v3145 = vunpack.c.h.b16 %v2240
    %v3146 = vunpack.c.l.b16 %v2241
    %v3147 = vunpack.c.h.b16 %v2241
    %v3148 = vunpack.c.l.b16 %v2242
    %v3149 = vunpack.c.h.b16 %v2242
    %v3150 = vunpack.c.l.b16 %v2243
    %v3151 = vunpack.c.h.b16 %v2243
    %v3152 = vunpack.c.l.b16 %v2244
    %v3153 = vunpack.c.h.b16 %v2244
    %v3154 = vunpack.c.l.b16 %v2245
    %v3155 = vunpack.c.h.b16 %v2245
    %v3156 = vunpack.c.l.b16 %v2246
    %v3157 = vunpack.c.h.b16 %v2246
    %v3158 = vunpack.c.l.b16 %v2247
    %v3159 = vunpack.c.h.b16 %v2247
    %v3160 = vunpack.c.l.b16 %v2248
    %v3161 = vunpack.c.h.b16 %v2248
    %v3162 = vunpack.c.l.b16 %v2249
    %v3163 = vunpack.c.h.b16 %v2249
    %v3164 = vunpack.c.l.b16 %v2250
    %v3165 = vunpack.c.h.b16 %v2250
    %v3166 = vunpack.c.l.b16 %v2251
    %v3167 = vunpack.c.h.b16 %v2251
    %v3168 = vunpack.c.l.b16 %v2252
    %v3169 = vunpack.c.h.b16 %v2252
    %v3170 = vunpack.c.l.b16 %v2253
    %v3171 = vunpack.c.h.b16 %v2253
    %v3172 = vunpack.c.l.b16 %v2254
    %v3173 = vunpack.c.h.b16 %v2254
    %v3174 = vunpack.c.l.b16 %v2255
    %v3175 = vunpack.c.h.b16 %v2255
    %v3176 = vunpack.c.l.b16 %v2256
    %v3177 = vunpack.c.h.b16 %v2256
    %v3178 = vunpack.c.l.b16 %v2257
    %v3179 = vunpack.c.h.b16 %v2257
    %v3180 = vunpack.c.l.b16 %v2258
    %v3181 = vunpack.c.h.b16 %v2258
    %v3182 = vunpack.c.l.b16 %v2259
    %v3183 = vunpack.c.h.b16 %v2259
    %v3184 = vunpack.c.l.b16 %v2260
    %v3185 = vunpack.c.h.b16 %v2260
    %v3186 = vunpack.c.l.b16 %v2261
    %v3187 = vunpack.c.h.b16 %v2261
    %v3188 = vunpack.c.l.b16 %v2262
    %v3189 = vunpack.c.h.b16 %v2262
    %v3190 = vunpack.c.l.b16 %v2263
    %v3191 = vunpack.c.h.b16 %v2263
    %v3192 = vunpack.c.l.b16 %v2264
    %v3193 = vunpack.c.h.b16 %v2264
    %v3194 = vunpack.c.l.b16 %v2265
    %v3195 = vunpack.c.h.b16 %v2265
    %v3196 = vunpack.c.l.b16 %v2266
    %v3197 = vunpack.c.h.b16 %v2266
    %v3198 = vunpack.c.l.b16 %v2267
    %v3199 = vunpack.c.h.b16 %v2267
    %v3200 = vunpack.c.l.b16 %v2268
    %v3201 = vunpack.c.h.b16 %v2268
    %v3202 = vunpack.c.l.b16 %v2269
    %v3203 = vunpack.c.h.b16 %v2269
    %v3204 = vunpack.c.l.b16 %v2270
    %v3205 = vunpack.c.h.b16 %v2270
    %v3206 = vunpack.c.l.b16 %v2271
    %v3207 = vunpack.c.h.b16 %v2271
    %v3208 = vunpack.c.l.b16 %v2272
    %v3209 = vunpack.c.h.b16 %v2272
    %v3210 = vunpack.c.l.b16 %v2273
    %v3211 = vunpack.c.h.b16 %v2273
    %v3212 = vunpack.c.l.b16 %v2274
    %v3213 = vunpack.c.h.b16 %v2274
    %v3214 = vunpack.c.l.b16 %v2275
    %v3215 = vunpack.c.h.b16 %v2275
    %v3216 = vunpack.c.l.b16 %v2276
    %v3217 = vunpack.c.h.b16 %v2276
    %v3218 = vunpack.c.l.b16 %v2277
    %v3219 = vunpack.c.h.b16 %v2277
    %v3220 = vunpack.c.l.b16 %v2278
    %v3221 = vunpack.c.h.b16 %v2278
    %v3222 = vunpack.c.l.b16 %v2279
    %v3223 = vunpack.c.h.b16 %v2279
    %v3224 = vunpack.c.l.b16 %v2280
    %v3225 = vunpack.c.h.b16 %v2280
    %v3226 = vunpack.c.l.b16 %v2281
    %v3227 = vunpack.c.h.b16 %v2281
    %v3228 = vunpack.c.l.b16 %v2282
    %v3229 = vunpack.c.h.b16 %v2282
    %v3230 = vunpack.c.l.b16 %v2283
    %v3231 = vunpack.c.h.b16 %v2283
    %v3232 = vunpack.c.l.b16 %v2284
    %v3233 = vunpack.c.h.b16 %v2284
    %v3234 = vunpack.c.l.b16 %v2285
    %v3235 = vunpack.c.h.b16 %v2285
    %v3236 = vunpack.c.l.b16 %v2286
    %v3237 = vunpack.c.h.b16 %v2286
    %v3238 = vunpack.c.l.b16 %v2287
    %v3239 = vunpack.c.h.b16 %v2287
    %v3240 = vunpack.c.l.b16 %v2288
    %v3241 = vunpack.c.h.b16 %v2288
    %v3242 = vunpack.c.l.b16 %v2289
    %v3243 = vunpack.c.h.b16 %v2289
    %v3244 = vunpack.c.l.b16 %v2290
    %v3245 = vunpack.c.h.b16 %v2290
    %v3246 = vunpack.c.l.b16 %v2291
    %v3247 = vunpack.c.h.b16 %v2291
    %v3248 = vunpack.c.l.b16 %v2292
    %v3249 = vunpack.c.h.b16 %v2292
    %v3250 = vunpack.c.l.b16 %v2293
    %v3251 = vunpack.c.h.b16 %v2293
    %v3252 = vunpack.c.l.b16 %v2294
    %v3253 = vunpack.c.h.b16 %v2294
    %v3254 = vunpack.c.l.b16 %v2295
    %v3255 = vunpack.c.h.b16 %v2295
    %v3256 = vunpack.c.l.b16 %v2296
    %v3257 = vunpack.c.h.b16 %v2296
    %v3258 = vunpack.c.l.b16 %v2297
    %v3259 = vunpack.c.h.b16 %v2297
    %v3260 = vunpack.c.l.b16 %v2298
    %v3261 = vunpack.c.h.b16 %v2298
    %v3262 = vunpack.c.l.b16 %v2299
    %v3263 = vunpack.c.h.b16 %v2299
    %v3264 = vunpack.c.l.b16 %v2300
    %v3265 = vunpack.c.h.b16 %v2300
    %v3266 = vunpack.c.l.b16 %v2301
    %v3267 = vunpack.c.h.b16 %v2301
    %v3268 = vunpack.c.l.b16 %v2302
    %v3269 = vunpack.c.h.b16 %v2302
    %v3270 = vunpack.c.l.b16 %v2303
    %v3271 = vunpack.c.h.b16 %v2303
    %v3272 = vunpack.c.l.b16 %v2304
    %v3273 = vunpack.c.h.b16 %v2304
    %v3274 = vunpack.c.l.b16 %v2305
    %v3275 = vunpack.c.h.b16 %v2305
    %v3276 = vunpack.c.l.b16 %v2306
    %v3277 = vunpack.c.h.b16 %v2306
    %v3278 = vunpack.c.l.b16 %v2307
    %v3279 = vunpack.c.h.b16 %v2307
    %v3280 = vunpack.c.l.b16 %v2308
    %v3281 = vunpack.c.h.b16 %v2308
    %v3282 = vunpack.c.l.b16 %v2309
    %v3283 = vunpack.c.h.b16 %v2309
    %v3284 = vunpack.c.l.b16 %v2310
    %v3285 = vunpack.c.h.b16 %v2310
    %v3286 = vunpack.c.l.b16 %v2311
    %v3287 = vunpack.c.h.b16 %v2311
    %v3288 = vunpack.c.l.b16 %v2312
    %v3289 = vunpack.c.h.b16 %v2312
    %v3290 = vunpack.c.l.b16 %v2313
    %v3291 = vunpack.c.h.b16 %v2313
    %v3292 = vunpack.c.l.b16 %v2314
    %v3293 = vunpack.c.h.b16 %v2314
    %v3294 = vunpack.c.l.b16 %v2315
    %v3295 = vunpack.c.h.b16 %v2315
    %v3296 = vunpack.c.l.b16 %v2316
    %v3297 = vunpack.c.h.b16 %v2316
    %v3298 = vunpack.c.l.b16 %v2317
    %v3299 = vunpack.c.h.b16 %v2317
    %v3300 = vunpack.c.l.b16 %v2318
    %v3301 = vunpack.c.h.b16 %v2318
    %v3302 = vunpack.c.l.b16 %v2319
    %v3303 = vunpack.c.h.b16 %v2319
    %v3304 = vunpack.c.l.b16 %v2320
    %v3305 = vunpack.c.h.b16 %v2320
    %v3306 = vunpack.c.l.b16 %v2321
    %v3307 = vunpack.c.h.b16 %v2321
    %v3308 = vunpack.c.l.b16 %v2322
    %v3309 = vunpack.c.h.b16 %v2322
    %v3310 = vunpack.c.l.b16 %v2323
    %v3311 = vunpack.c.h.b16 %v2323
    %v3312 = vunpack.c.l.b16 %v2324
    %v3313 = vunpack.c.h.b16 %v2324
    %v3314 = vunpack.c.l.b16 %v2325
    %v3315 = vunpack.c.h.b16 %v2325
    %v3316 = vunpack.c.l.b16 %v2326
    %v3317 = vunpack.c.h.b16 %v2326
    %v3318 = vunpack.c.l.b16 %v2327
    %v3319 = vunpack.c.h.b16 %v2327
    %v3320 = vunpack.c.l.b16 %v2328
    %v3321 = vunpack.c.h.b16 %v2328
    %v3322 = vunpack.c.l.b16 %v2329
    %v3323 = vunpack.c.h.b16 %v2329
    %v3324 = vunpack.c.l.b16 %v2330
    %v3325 = vunpack.c.h.b16 %v2330
    %v3326 = vunpack.c.l.b16 %v2331
    %v3327 = vunpack.c.h.b16 %v2331
    %v3328 = vunpack.c.l.b16 %v2332
    %v3329 = vunpack.c.h.b16 %v2332
    %v3330 = vunpack.c.l.b16 %v2333
    %v3331 = vunpack.c.h.b16 %v2333
    %v3332 = vunpack.c.l.b16 %v2334
    %v3333 = vunpack.c.h.b16 %v2334
    %v3334 = vunpack.c.l.b16 %v2335
    %v3335 = vunpack.c.h.b16 %v2335
    %v3336 = vunpack.c.l.b16 %v2336
    %v3337 = vunpack.c.h.b16 %v2336
    %v3338 = vunpack.c.l.b16 %v2337
    %v3339 = vunpack.c.h.b16 %v2337
    %v3340 = vunpack.c.l.b16 %v2338
    %v3341 = vunpack.c.h.b16 %v2338
    %v3342 = vunpack.c.l.b16 %v2339
    %v3343 = vunpack.c.h.b16 %v2339
    %v3344 = vunpack.c.l.b16 %v2340
    %v3345 = vunpack.c.h.b16 %v2340
    %v3346 = vunpack.c.l.b16 %v2341
    %v3347 = vunpack.c.h.b16 %v2341
    %v3348 = vunpack.c.l.b16 %v2342
    %v3349 = vunpack.c.h.b16 %v2342
    %v3350 = vunpack.c.l.b16 %v2343
    %v3351 = vunpack.c.h.b16 %v2343
    %v3352 = vunpack.c.l.b16 %v2344
    %v3353 = vunpack.c.h.b16 %v2344
    %v3354 = vunpack.c.l.b16 %v2345
    %v3355 = vunpack.c.h.b16 %v2345
    %v3356 = vunpack.c.l.b16 %v2346
    %v3357 = vunpack.c.h.b16 %v2346
    %v3358 = vunpack.c.l.b16 %v2347
    %v3359 = vunpack.c.h.b16 %v2347
    %v3360 = vunpack.c.l.b16 %v2348
    %v3361 = vunpack.c.h.b16 %v2348
    %v3362 = vunpack.c.l.b16 %v2349
    %v3363 = vunpack.c.h.b16 %v2349
    %v3364 = vunpack.c.l.b16 %v2350
    %v3365 = vunpack.c.h.b16 %v2350
    %v3366 = vunpack.c.l.b16 %v2351
    %v3367 = vunpack.c.h.b16 %v2351
    %v3368 = vunpack.c.l.b16 %v2352
    %v3369 = vunpack.c.h.b16 %v2352
    %v3370 = vunpack.c.l.b16 %v2353
    %v3371 = vunpack.c.h.b16 %v2353
    %v3372 = vunpack.c.l.b16 %v2354
    %v3373 = vunpack.c.h.b16 %v2354
    %v3374 = vunpack.c.l.b16 %v2355
    %v3375 = vunpack.c.h.b16 %v2355
    %v3376 = vunpack.c.l.b16 %v2356
    %v3377 = vunpack.c.h.b16 %v2356
    %v3378 = vunpack.c.l.b16 %v2357
    %v3379 = vunpack.c.h.b16 %v2357
    %v3380 = vunpack.c.l.b16 %v2358
    %v3381 = vunpack.c.h.b16 %v2358
    %v3382 = vunpack.c.l.b16 %v2359
    %v3383 = vunpack.c.h.b16 %v2359
    %v3384 = vunpack.c.l.b16 %v2360
    %v3385 = vunpack.c.h.b16 %v2360
    %v3386 = vunpack.c.l.b16 %v2361
    %v3387 = vunpack.c.h.b16 %v2361
    %v3388 = vunpack.c.l.b16 %v2362
    %v3389 = vunpack.c.h.b16 %v2362
    %v3390 = vunpack.c.l.b16 %v2363
    %v3391 = vunpack.c.h.b16 %v2363
    %v3392 = vunpack.c.l.b16 %v2364
    %v3393 = vunpack.c.h.b16 %v2364
    %v3394 = vunpack.c.l.b16 %v2365
    %v3395 = vunpack.c.h.b16 %v2365
    %v3396 = vunpack.c.l.b16 %v2366
    %v3397 = vunpack.c.h.b16 %v2366
    %v3398 = vunpack.c.l.b16 %v2367
    %v3399 = vunpack.c.h.b16 %v2367
    %v3400 = vunpack.c.l.b16 %v2368
    %v3401 = vunpack.c.h.b16 %v2368
    %v3402 = vunpack.c.l.b16 %v2369
    %v3403 = vunpack.c.h.b16 %v2369
    %v3404 = vunpack.c.l.b16 %v2370
    %v3405 = vunpack.c.h.b16 %v2370
    %v3406 = vunpack.c.l.b16 %v2371
    %v3407 = vunpack.c.h.b16 %v2371
    %v3408 = vunpack.c.l.b16 %v2372
    %v3409 = vunpack.c.h.b16 %v2372
    %v3410 = vunpack.c.l.b16 %v2373
    %v3411 = vunpack.c.h.b16 %v2373
    %v3412 = vunpack.c.l.b16 %v2374
    %v3413 = vunpack.c.h.b16 %v2374
    %v3414 = vunpack.c.l.b16 %v2375
    %v3415 = vunpack.c.h.b16 %v2375
    %v3416 = vunpack.c.l.b16 %v2376
    %v3417 = vunpack.c.h.b16 %v2376
    %v3418 = vunpack.c.l.b16 %v2377
    %v3419 = vunpack.c.h.b16 %v2377
    %v3420 = vunpack.c.l.b16 %v2378
    %v3421 = vunpack.c.h.b16 %v2378
    %v3422 = vunpack.c.l.b16 %v2379
    %v3423 = vunpack.c.h.b16 %v2379
    %v3424 = vunpack.c.l.b16 %v2380
    %v3425 = vunpack.c.h.b16 %v2380
    %v3426 = vunpack.c.l.b16 %v2381
    %v3427 = vunpack.c.h.b16 %v2381
    %v3428 = vunpack.c.l.b16 %v2382
    %v3429 = vunpack.c.h.b16 %v2382
    %v3430 = vunpack.c.l.b16 %v2383
    %v3431 = vunpack.c.h.b16 %v2383
    %v3432 = vunpack.c.l.b16 %v2384
    %v3433 = vunpack.c.h.b16 %v2384
    %v3434 = vpack.c.b16 %v2926, %v2922
    %v3435 = vpack.c.b16 %v2927, %v2923
    %v3436 = vpack.c.b16 %v2928, %v2924
    %v3437 = vpack.c.b16 %v2929, %v2925
    %v3438 = vpack.c.b16 %v2934, %v2930
    %v3439 = vpack.c.b16 %v2935, %v2931
    %v3440 = vpack.c.b16 %v2936, %v2932
    %v3441 = vpack.c.b16 %v2937, %v2933
    %v3442 = vpack.c.b16 %v2942, %v2938
    %v3443 = vpack.c.b16 %v2943, %v2939
    %v3444 = vpack.c.b16 %v2944, %v2940
    %v3445 = vpack.c.b16 %v2945, %v2941
    %v3446 = vpack.c.b16 %v2950, %v2946
    %v3447 = vpack.c.b16 %v2951, %v2947
    %v3448 = vpack.c.b16 %v2952, %v2948
    %v3449 = vpack.c.b16 %v2953, %v2949
    %v3450 = vpack.c.b16 %v2958, %v2954
    %v3451 = vpack.c.b16 %v2959, %v2955
    %v3452 = vpack.c.b16 %v2960, %v2956
    %v3453 = vpack.c.b16 %v2961, %v2957
    %v3454 = vpack.c.b16 %v2966, %v2962
    %v3455 = vpack.c.b16 %v2967, %v2963
    %v3456 = vpack.c.b16 %v2968, %v2964
    %v3457 = vpack.c.b16 %v2969, %v2965
    %v3458 = vpack.c.b16 %v2974, %v2970
    %v3459 = vpack.c.b16 %v2975, %v2971
    %v3460 = vpack.c.b16 %v2976, %v2972
    %v3461 = vpack.c.b16 %v2977, %v2973
    %v3462 = vpack.c.b16 %v2982, %v2978
    %v3463 = vpack.c.b16 %v2983, %v2979
    %v3464 = vpack.c.b16 %v2984, %v2980
    %v3465 = vpack.c.b16 %v2985, %v2981
    %v3466 = vpack.c.b16 %v2990, %v2986
    %v3467 = vpack.c.b16 %v2991, %v2987
    %v3468 = vpack.c.b16 %v2992, %v2988
    %v3469 = vpack.c.b16 %v2993, %v2989
    %v3470 = vpack.c.b16 %v2998, %v2994
    %v3471 = vpack.c.b16 %v2999, %v2995
    %v3472 = vpack.c.b16 %v3000, %v2996
    %v3473 = vpack.c.b16 %v3001, %v2997
    %v3474 = vpack.c.b16 %v3006, %v3002
    %v3475 = vpack.c.b16 %v3007, %v3003
    %v3476 = vpack.c.b16 %v3008, %v3004
    %v3477 = vpack.c.b16 %v3009, %v3005
    %v3478 = vpack.c.b16 %v3014, %v3010
    %v3479 = vpack.c.b16 %v3015, %v3011
    %v3480 = vpack.c.b16 %v3016, %v3012
    %v3481 = vpack.c.b16 %v3017, %v3013
    %v3482 = vpack.c.b16 %v3022, %v3018
    %v3483 = vpack.c.b16 %v3023, %v3019
    %v3484 = vpack.c.b16 %v3024, %v3020
    %v3485 = vpack.c.b16 %v3025, %v3021
    %v3486 = vpack.c.b16 %v3030, %v3026
    %v3487 = vpack.c.b16 %v3031, %v3027
    %v3488 = vpack.c.b16 %v3032, %v3028
    %v3489 = vpack.c.b16 %v3033, %v3029
    %v3490 = vpack.c.b16 %v3038, %v3034
    %v3491 = vpack.c.b16 %v3039, %v3035
    %v3492 = vpack.c.b16 %v3040, %v3036
    %v3493 = vpack.c.b16 %v3041, %v3037
    %v3494 = vpack.c.b16 %v3046, %v3042
    %v3495 = vpack.c.b16 %v3047, %v3043
    %v3496 = vpack.c.b16 %v3048, %v3044
    %v3497 = vpack.c.b16 %v3049, %v3045
    %v3498 = vpack.c.b16 %v3054, %v3050
    %v3499 = vpack.c.b16 %v3055, %v3051
    %v3500 = vpack.c.b16 %v3056, %v3052
    %v3501 = vpack.c.b16 %v3057, %v3053
    %v3502 = vpack.c.b16 %v3062, %v3058
    %v3503 = vpack.c.b16 %v3063, %v3059
    %v3504 = vpack.c.b16 %v3064, %v3060
    %v3505 = vpack.c.b16 %v3065, %v3061
    %v3506 = vpack.c.b16 %v3070, %v3066
    %v3507 = vpack.c.b16 %v3071, %v3067
    %v3508 = vpack.c.b16 %v3072, %v3068
    %v3509 = vpack.c.b16 %v3073, %v3069
    %v3510 = vpack.c.b16 %v3078, %v3074
    %v3511 = vpack.c.b16 %v3079, %v3075
    %v3512 = vpack.c.b16 %v3080, %v3076
    %v3513 = vpack.c.b16 %v3081, %v3077
    %v3514 = vpack.c.b16 %v3086, %v3082
    %v3515 = vpack.c.b16 %v3087, %v3083
    %v3516 = vpack.c.b16 %v3088, %v3084
    %v3517 = vpack.c.b16 %v3089, %v3085
    %v3518 = vpack.c.b16 %v3094, %v3090
    %v3519 = vpack.c.b16 %v3095, %v3091
    %v3520 = vpack.c.b16 %v3096, %v3092
    %v3521 = vpack.c.b16 %v3097, %v3093
    %v3522 = vpack.c.b16 %v3102, %v3098
    %v3523 = vpack.c.b16 %v3103, %v3099
    %v3524 = vpack.c.b16 %v3104, %v3100
    %v3525 = vpack.c.b16 %v3105, %v3101
    %v3526 = vpack.c.b16 %v3110, %v3106
    %v3527 = vpack.c.b16 %v3111, %v3107
    %v3528 = vpack.c.b16 %v3112, %v3108
    %v3529 = vpack.c.b16 %v3113, %v3109
    %v3530 = vpack.c.b16 %v3118, %v3114
    %v3531 = vpack.c.b16 %v3119, %v3115
    %v3532 = vpack.c.b16 %v3120, %v3116
    %v3533 = vpack.c.b16 %v3121, %v3117
    %v3534 = vpack.c.b16 %v3126, %v3122
    %v3535 = vpack.c.b16 %v3127, %v3123
    %v3536 = vpack.c.b16 %v3128, %v3124
    %v3537 = vpack.c.b16 %v3129, %v3125
    %v3538 = vpack.c.b16 %v3134, %v3130
    %v3539 = vpack.c.b16 %v3135, %v3131
    %v3540 = vpack.c.b16 %v3136, %v3132
    %v3541 = vpack.c.b16 %v3137, %v3133
    %v3542 = vpack.c.b16 %v3142, %v3138
    %v3543 = vpack.c.b16 %v3143, %v3139
    %v3544 = vpack.c.b16 %v3144, %v3140
    %v3545 = vpack.c.b16 %v3145, %v3141
    %v3546 = vpack.c.b16 %v3150, %v3146
    %v3547 = vpack.c.b16 %v3151, %v3147
    %v3548 = vpack.c.b16 %v3152, %v3148
    %v3549 = vpack.c.b16 %v3153, %v3149
    %v3550 = vpack.c.b16 %v3158, %v3154
    %v3551 = vpack.c.b16 %v3159, %v3155
    %v3552 = vpack.c.b16 %v3160, %v3156
    %v3553 = vpack.c.b16 %v3161, %v3157
    %v3554 = vpack.c.b16 %v3166, %v3162
    %v3555 = vpack.c.b16 %v3167, %v3163
    %v3556 = vpack.c.b16 %v3168, %v3164
    %v3557 = vpack.c.b16 %v3169, %v3165
    %v3558 = vpack.c.b16 %v3174, %v3170
    %v3559 = vpack.c.b16 %v3175, %v3171
    %v3560 = vpack.c.b16 %v3176, %v3172
    %v3561 = vpack.c.b16 %v3177, %v3173
    %v3562 = vpack.c.b16 %v3182, %v3178
    %v3563 = vpack.c.b16 %v3183, %v3179
    %v3564 = vpack.c.b16 %v3184, %v3180
    %v3565 = vpack.c.b16 %v3185, %v3181
    %v3566 = vpack.c.b16 %v3190, %v3186
    %v3567 = vpack.c.b16 %v3191, %v3187
    %v3568 = vpack.c.b16 %v3192, %v3188
    %v3569 = vpack.c.b16 %v3193, %v3189
    %v3570 = vpack.c.b16 %v3198, %v3194
    %v3571 = vpack.c.b16 %v3199, %v3195
    %v3572 = vpack.c.b16 %v3200, %v3196
    %v3573 = vpack.c.b16 %v3201, %v3197
    %v3574 = vpack.c.b16 %v3206, %v3202
    %v3575 = vpack.c.b16 %v3207, %v3203
    %v3576 = vpack.c.b16 %v3208, %v3204
    %v3577 = vpack.c.b16 %v3209, %v3205
    %v3578 = vpack.c.b16 %v3214, %v3210
    %v3579 = vpack.c.b16 %v3215, %v3211
    %v3580 = vpack.c.b16 %v3216, %v3212
    %v3581 = vpack.c.b16 %v3217, %v3213
    %v3582 = vpack.c.b16 %v3222, %v3218
    %v3583 = vpack.c.b16 %v3223, %v3219
    %v3584 = vpack.c.b16 %v3224, %v3220
    %v3585 = vpack.c.b16 %v3225, %v3221
    %v3586 = vpack.c.b16 %v3230, %v3226
    %v3587 = vpack.c.b16 %v3231, %v3227
    %v3588 = vpack.c.b16 %v3232, %v3228
    %v3589 = vpack.c.b16 %v3233, %v3229
    %v3590 = vpack.c.b16 %v3238, %v3234
    %v3591 = vpack.c.b16 %v3239, %v3235
    %v3592 = vpack.c.b16 %v3240, %v3236
    %v3593 = vpack.c.b16 %v3241, %v3237
    %v3594 = vpack.c.b16 %v3246, %v3242
    %v3595 = vpack.c.b16 %v3247, %v3243
    %v3596 = vpack.c.b16 %v3248, %v3244
    %v3597 = vpack.c.b16 %v3249, %v3245
    %v3598 = vpack.c.b16 %v3254, %v3250
    %v3599 = vpack.c.b16 %v3255, %v3251
    %v3600 = vpack.c.b16 %v3256, %v3252
    %v3601 = vpack.c.b16 %v3257, %v3253
    %v3602 = vpack.c.b16 %v3262, %v3258
    %v3603 = vpack.c.b16 %v3263, %v3259
    %v3604 = vpack.c.b16 %v3264, %v3260
    %v3605 = vpack.c.b16 %v3265, %v3261
    %v3606 = vpack.c.b16 %v3270, %v3266
    %v3607 = vpack.c.b16 %v3271, %v3267
    %v3608 = vpack.c.b16 %v3272, %v3268
    %v3609 = vpack.c.b16 %v3273, %v3269
    %v3610 = vpack.c.b16 %v3278, %v3274
    %v3611 = vpack.c.b16 %v3279, %v3275
    %v3612 = vpack.c.b16 %v3280, %v3276
    %v3613 = vpack.c.b16 %v3281, %v3277
    %v3614 = vpack.c.b16 %v3286, %v3282
    %v3615 = vpack.c.b16 %v3287, %v3283
    %v3616 = vpack.c.b16 %v3288, %v3284
    %v3617 = vpack.c.b16 %v3289, %v3285
    %v3618 = vpack.c.b16 %v3294, %v3290
    %v3619 = vpack.c.b16 %v3295, %v3291
    %v3620 = vpack.c.b16 %v3296, %v3292
    %v3621 = vpack.c.b16 %v3297, %v3293
    %v3622 = vpack.c.b16 %v3302, %v3298
    %v3623 = vpack.c.b16 %v3303, %v3299
    %v3624 = vpack.c.b16 %v3304, %v3300
    %v3625 = vpack.c.b16 %v3305, %v3301
    %v3626 = vpack.c.b16 %v3310, %v3306
    %v3627 = vpack.c.b16 %v3311, %v3307
    %v3628 = vpack.c.b16 %v3312, %v3308
    %v3629 = vpack.c.b16 %v3313, %v3309
    %v3630 = vpack.c.b16 %v3318, %v3314
    %v3631 = vpack.c.b16 %v3319, %v3315
    %v3632 = vpack.c.b16 %v3320, %v3316
    %v3633 = vpack.c.b16 %v3321, %v3317
    %v3634 = vpack.c.b16 %v3326, %v3322
    %v3635 = vpack.c.b16 %v3327, %v3323
    %v3636 = vpack.c.b16 %v3328, %v3324
    %v3637 = vpack.c.b16 %v3329, %v3325
    %v3638 = vpack.c.b16 %v3334, %v3330
    %v3639 = vpack.c.b16 %v3335, %v3331
    %v3640 = vpack.c.b16 %v3336, %v3332
    %v3641 = vpack.c.b16 %v3337, %v3333
    %v3642 = vpack.c.b16 %v3342, %v3338
    %v3643 = vpack.c.b16 %v3343, %v3339
    %v3644 = vpack.c.b16 %v3344, %v3340
    %v3645 = vpack.c.b16 %v3345, %v3341
    %v3646 = vpack.c.b16 %v3350, %v3346
    %v3647 = vpack.c.b16 %v3351, %v3347
    %v3648 = vpack.c.b16 %v3352, %v3348
    %v3649 = vpack.c.b16 %v3353, %v3349
    %v3650 = vpack.c.b16 %v3358, %v3354
    %v3651 = vpack.c.b16 %v3359, %v3355
    %v3652 = vpack.c.b16 %v3360, %v3356
    %v3653 = vpack.c.b16 %v3361, %v3357
    %v3654 = vpack.c.b16 %v3366, %v3362
    %v3655 = vpack.c.b16 %v3367, %v3363
    %v3656 = vpack.c.b16 %v3368, %v3364
    %v3657 = vpack.c.b16 %v3369, %v3365
    %v3658 = vpack.c.b16 %v3374, %v3370
    %v3659 = vpack.c.b16 %v3375, %v3371
    %v3660 = vpack.c.b16 %v3376, %v3372
    %v3661 = vpack.c.b16 %v3377, %v3373
    %v3662 = vpack.c.b16 %v3382, %v3378
    %v3663 = vpack.c.b16 %v3383, %v3379
    %v3664 = vpack.c.b16 %v3384, %v3380
    %v3665 = vpack.c.b16 %v3385, %v3381
    %v3666 = vpack.c.b16 %v3390, %v3386
    %v3667 = vpack.c.b16 %v3391, %v3387
    %v3668 = vpack.c.b16 %v3392, %v3388
    %v3669 = vpack.c.b16 %v3393, %v3389
    %v3670 = vpack.c.b16 %v3398, %v3394
    %v3671 = vpack.c.b16 %v3399, %v3395
    %v3672 = vpack.c.b16 %v3400, %v3396
    %v3673 = vpack.c.b16 %v3401, %v3397
    %v3674 = vpack.c.b16 %v3406, %v3402
    %v3675 = vpack.c.b16 %v3407, %v3403
    %v3676 = vpack.c.b16 %v3408, %v3404
    %v3677 = vpack.c.b16 %v3409, %v3405
    %v3678 = vpack.c.b16 %v3414, %v3410
    %v3679 = vpack.c.b16 %v3415, %v3411
    %v3680 = vpack.c.b16 %v3416, %v3412
    %v3681 = vpack.c.b16 %v3417, %v3413
    %v3682 = vpack.c.b16 %v3422, %v3418
    %v3683 = vpack.c.b16 %v3423, %v3419
    %v3684 = vpack.c.b16 %v3424, %v3420
    %v3685 = vpack.c.b16 %v3425, %v3421
    %v3686 = vpack.c.b16 %v3430, %v3426
    %v3687 = vpack.c.b16 %v3431, %v3427
    %v3688 = vpack.c.b16 %v3432, %v3428
    %v3689 = vpack.c.b16 %v3433, %v3429
    %3946 = vmatpush.bf16.msra.mxu0 %v3462
    %3947 = vmatpush.bf16.msra.mxu0 %v3458
    %3948 = vmatpush.bf16.msra.mxu0 %v3454
    %3949 = vmatpush.bf16.msra.mxu0 %v3450
    %3950 = vmatpush.bf16.msra.mxu0 %v3446
    %3951 = vmatpush.bf16.msra.mxu0 %v3442
    %3952 = vmatpush.bf16.msra.mxu0 %v3438
    %3953 = vmatpush.bf16.msra.mxu0 %v3434
    %3954 = vmatmul.bf16.gmra.mxu0 %v2650
    %v3955 = vpop.f32.mrf.mxu0
    %v3956 = vadd.f32 %v2451, %v3955
    %v3957 = vpop.f32.mrf.mxu0
    %3958 = vdwg.mxu0
    %3959 = vmatpush.bf16.msra.mxu0 %v3494
    %3960 = vmatpush.bf16.msra.mxu0 %v3490
    %3961 = vmatpush.bf16.msra.mxu0 %v3486
    %3962 = vmatpush.bf16.msra.mxu0 %v3482
    %3963 = vmatpush.bf16.msra.mxu0 %v3478
    %3964 = vmatpush.bf16.msra.mxu0 %v3474
    %3965 = vmatpush.bf16.msra.mxu0 %v3470
    %3966 = vmatpush.bf16.msra.mxu0 %v3466
    %3967 = vmatmul.bf16.gmra.mxu0 %v2651
    %v3968 = vpop.f32.mrf.mxu0
    %v3969 = vadd.f32 %v3956, %v3968
    %v3970 = vpop.f32.mrf.mxu0
    %3971 = vdwg.mxu0
    %3972 = vmatpush.bf16.msra.mxu0 %v3526
    %3973 = vmatpush.bf16.msra.mxu0 %v3522
    %3974 = vmatpush.bf16.msra.mxu0 %v3518
    %3975 = vmatpush.bf16.msra.mxu0 %v3514
    %3976 = vmatpush.bf16.msra.mxu0 %v3510
    %3977 = vmatpush.bf16.msra.mxu0 %v3506
    %3978 = vmatpush.bf16.msra.mxu0 %v3502
    %3979 = vmatpush.bf16.msra.mxu0 %v3498
    %3980 = vmatmul.bf16.gmra.mxu0 %v2652
    %v3981 = vpop.f32.mrf.mxu0
    %v3982 = vadd.f32 %v3969, %v3981
    %v3983 = vpop.f32.mrf.mxu0
    %3984 = vdwg.mxu0
    %3985 = vmatpush.bf16.msra.mxu0 %v3558
    %3986 = vmatpush.bf16.msra.mxu0 %v3554
    %3987 = vmatpush.bf16.msra.mxu0 %v3550
    %3988 = vmatpush.bf16.msra.mxu0 %v3546
    %3989 = vmatpush.bf16.msra.mxu0 %v3542
    %3990 = vmatpush.bf16.msra.mxu0 %v3538
    %3991 = vmatpush.bf16.msra.mxu0 %v3534
    %3992 = vmatpush.bf16.msra.mxu0 %v3530
    %3993 = vmatmul.bf16.gmra.mxu0 %v2653
    %v3994 = vpop.f32.mrf.mxu0
    %v3995 = vadd.f32 %v3982, %v3994
    %v3996 = vpop.f32.mrf.mxu0
    %3997 = vdwg.mxu0
    %3998 = vmatpush.bf16.msra.mxu0 %v3590
    %3999 = vmatpush.bf16.msra.mxu0 %v3586
    %4000 = vmatpush.bf16.msra.mxu0 %v3582
    %4001 = vmatpush.bf16.msra.mxu0 %v3578
    %4002 = vmatpush.bf16.msra.mxu0 %v3574
    %4003 = vmatpush.bf16.msra.mxu0 %v3570
    %4004 = vmatpush.bf16.msra.mxu0 %v3566
    %4005 = vmatpush.bf16.msra.mxu0 %v3562
    %4006 = vmatmul.bf16.gmra.mxu0 %v2654
    %v4007 = vpop.f32.mrf.mxu0
    %v4008 = vadd.f32 %v3995, %v4007
    %v4009 = vpop.f32.mrf.mxu0
    %4010 = vdwg.mxu0
    %4011 = vmatpush.bf16.msra.mxu0 %v3622
    %4012 = vmatpush.bf16.msra.mxu0 %v3618
    %4013 = vmatpush.bf16.msra.mxu0 %v3614
    %4014 = vmatpush.bf16.msra.mxu0 %v3610
    %4015 = vmatpush.bf16.msra.mxu0 %v3606
    %4016 = vmatpush.bf16.msra.mxu0 %v3602
    %4017 = vmatpush.bf16.msra.mxu0 %v3598
    %4018 = vmatpush.bf16.msra.mxu0 %v3594
    %4019 = vmatmul.bf16.gmra.mxu0 %v2655
    %v4020 = vpop.f32.mrf.mxu0
    %v4021 = vadd.f32 %v4008, %v4020
    %v4022 = vpop.f32.mrf.mxu0
    %4023 = vdwg.mxu0
    %4024 = vmatpush.bf16.msra.mxu0 %v3654
    %4025 = vmatpush.bf16.msra.mxu0 %v3650
    %4026 = vmatpush.bf16.msra.mxu0 %v3646
    %4027 = vmatpush.bf16.msra.mxu0 %v3642
    %4028 = vmatpush.bf16.msra.mxu0 %v3638
    %4029 = vmatpush.bf16.msra.mxu0 %v3634
    %4030 = vmatpush.bf16.msra.mxu0 %v3630
    %4031 = vmatpush.bf16.msra.mxu0 %v3626
    %4032 = vmatmul.bf16.gmra.mxu0 %v2656
    %v4033 = vpop.f32.mrf.mxu0
    %v4034 = vadd.f32 %v4021, %v4033
    %v4035 = vpop.f32.mrf.mxu0
    %4036 = vdwg.mxu0
    %4037 = vmatpush.bf16.msra.mxu0 %v3686
    %4038 = vmatpush.bf16.msra.mxu0 %v3682
    %4039 = vmatpush.bf16.msra.mxu0 %v3678
    %4040 = vmatpush.bf16.msra.mxu0 %v3674
    %4041 = vmatpush.bf16.msra.mxu0 %v3670
    %4042 = vmatpush.bf16.msra.mxu0 %v3666
    %4043 = vmatpush.bf16.msra.mxu0 %v3662
    %4044 = vmatpush.bf16.msra.mxu0 %v3658
    %4045 = vmatmul.bf16.gmra.mxu0 %v2657
    %v4046 = vpop.f32.mrf.mxu0
    %v4047 = vadd.f32 %v4034, %v4046
    %v4048 = vpop.f32.mrf.mxu0
    %4049 = vdwg.mxu0
    %4050 = vmatpush.bf16.msra.mxu0 %v3463
    %4051 = vmatpush.bf16.msra.mxu0 %v3459
    %4052 = vmatpush.bf16.msra.mxu0 %v3455
    %4053 = vmatpush.bf16.msra.mxu0 %v3451
    %4054 = vmatpush.bf16.msra.mxu0 %v3447
    %4055 = vmatpush.bf16.msra.mxu0 %v3443
    %4056 = vmatpush.bf16.msra.mxu0 %v3439
    %4057 = vmatpush.bf16.msra.mxu0 %v3435
    %4058 = vmatmul.bf16.gmra.mxu0 %v2650
    %v4059 = vpop.f32.mrf.mxu0
    %v4060 = vadd.f32 %v2452, %v4059
    %v4061 = vpop.f32.mrf.mxu0
    %4062 = vdwg.mxu0
    %4063 = vmatpush.bf16.msra.mxu0 %v3495
    %4064 = vmatpush.bf16.msra.mxu0 %v3491
    %4065 = vmatpush.bf16.msra.mxu0 %v3487
    %4066 = vmatpush.bf16.msra.mxu0 %v3483
    %4067 = vmatpush.bf16.msra.mxu0 %v3479
    %4068 = vmatpush.bf16.msra.mxu0 %v3475
    %4069 = vmatpush.bf16.msra.mxu0 %v3471
    %4070 = vmatpush.bf16.msra.mxu0 %v3467
    %4071 = vmatmul.bf16.gmra.mxu0 %v2651
    %v4072 = vpop.f32.mrf.mxu0
    %v4073 = vadd.f32 %v4060, %v4072
    %v4074 = vpop.f32.mrf.mxu0
    %4075 = vdwg.mxu0
    %4076 = vmatpush.bf16.msra.mxu0 %v3527
    %4077 = vmatpush.bf16.msra.mxu0 %v3523
    %4078 = vmatpush.bf16.msra.mxu0 %v3519
    %4079 = vmatpush.bf16.msra.mxu0 %v3515
    %4080 = vmatpush.bf16.msra.mxu0 %v3511
    %4081 = vmatpush.bf16.msra.mxu0 %v3507
    %4082 = vmatpush.bf16.msra.mxu0 %v3503
    %4083 = vmatpush.bf16.msra.mxu0 %v3499
    %4084 = vmatmul.bf16.gmra.mxu0 %v2652
    %v4085 = vpop.f32.mrf.mxu0
    %v4086 = vadd.f32 %v4073, %v4085
    %v4087 = vpop.f32.mrf.mxu0
    %4088 = vdwg.mxu0
    %4089 = vmatpush.bf16.msra.mxu0 %v3559
    %4090 = vmatpush.bf16.msra.mxu0 %v3555
    %4091 = vmatpush.bf16.msra.mxu0 %v3551
    %4092 = vmatpush.bf16.msra.mxu0 %v3547
    %4093 = vmatpush.bf16.msra.mxu0 %v3543
    %4094 = vmatpush.bf16.msra.mxu0 %v3539
    %4095 = vmatpush.bf16.msra.mxu0 %v3535
    %4096 = vmatpush.bf16.msra.mxu0 %v3531
    %4097 = vmatmul.bf16.gmra.mxu0 %v2653
    %v4098 = vpop.f32.mrf.mxu0
    %v4099 = vadd.f32 %v4086, %v4098
    %v4100 = vpop.f32.mrf.mxu0
    %4101 = vdwg.mxu0
    %4102 = vmatpush.bf16.msra.mxu0 %v3591
    %4103 = vmatpush.bf16.msra.mxu0 %v3587
    %4104 = vmatpush.bf16.msra.mxu0 %v3583
    %4105 = vmatpush.bf16.msra.mxu0 %v3579
    %4106 = vmatpush.bf16.msra.mxu0 %v3575
    %4107 = vmatpush.bf16.msra.mxu0 %v3571
    %4108 = vmatpush.bf16.msra.mxu0 %v3567
    %4109 = vmatpush.bf16.msra.mxu0 %v3563
    %4110 = vmatmul.bf16.gmra.mxu0 %v2654
    %v4111 = vpop.f32.mrf.mxu0
    %v4112 = vadd.f32 %v4099, %v4111
    %v4113 = vpop.f32.mrf.mxu0
    %4114 = vdwg.mxu0
    %4115 = vmatpush.bf16.msra.mxu0 %v3623
    %4116 = vmatpush.bf16.msra.mxu0 %v3619
    %4117 = vmatpush.bf16.msra.mxu0 %v3615
    %4118 = vmatpush.bf16.msra.mxu0 %v3611
    %4119 = vmatpush.bf16.msra.mxu0 %v3607
    %4120 = vmatpush.bf16.msra.mxu0 %v3603
    %4121 = vmatpush.bf16.msra.mxu0 %v3599
    %4122 = vmatpush.bf16.msra.mxu0 %v3595
    %4123 = vmatmul.bf16.gmra.mxu0 %v2655
    %v4124 = vpop.f32.mrf.mxu0
    %v4125 = vadd.f32 %v4112, %v4124
    %v4126 = vpop.f32.mrf.mxu0
    %4127 = vdwg.mxu0
    %4128 = vmatpush.bf16.msra.mxu0 %v3655
    %4129 = vmatpush.bf16.msra.mxu0 %v3651
    %4130 = vmatpush.bf16.msra.mxu0 %v3647
    %4131 = vmatpush.bf16.msra.mxu0 %v3643
    %4132 = vmatpush.bf16.msra.mxu0 %v3639
    %4133 = vmatpush.bf16.msra.mxu0 %v3635
    %4134 = vmatpush.bf16.msra.mxu0 %v3631
    %4135 = vmatpush.bf16.msra.mxu0 %v3627
    %4136 = vmatmul.bf16.gmra.mxu0 %v2656
    %v4137 = vpop.f32.mrf.mxu0
    %v4138 = vadd.f32 %v4125, %v4137
    %v4139 = vpop.f32.mrf.mxu0
    %4140 = vdwg.mxu0
    %4141 = vmatpush.bf16.msra.mxu0 %v3687
    %4142 = vmatpush.bf16.msra.mxu0 %v3683
    %4143 = vmatpush.bf16.msra.mxu0 %v3679
    %4144 = vmatpush.bf16.msra.mxu0 %v3675
    %4145 = vmatpush.bf16.msra.mxu0 %v3671
    %4146 = vmatpush.bf16.msra.mxu0 %v3667
    %4147 = vmatpush.bf16.msra.mxu0 %v3663
    %4148 = vmatpush.bf16.msra.mxu0 %v3659
    %4149 = vmatmul.bf16.gmra.mxu0 %v2657
    %v4150 = vpop.f32.mrf.mxu0
    %v4151 = vadd.f32 %v4138, %v4150
    %v4152 = vpop.f32.mrf.mxu0
    %4153 = vdwg.mxu0
    %4154 = vmatpush.bf16.msra.mxu0 %v3464
    %4155 = vmatpush.bf16.msra.mxu0 %v3460
    %4156 = vmatpush.bf16.msra.mxu0 %v3456
    %4157 = vmatpush.bf16.msra.mxu0 %v3452
    %4158 = vmatpush.bf16.msra.mxu0 %v3448
    %4159 = vmatpush.bf16.msra.mxu0 %v3444
    %4160 = vmatpush.bf16.msra.mxu0 %v3440
    %4161 = vmatpush.bf16.msra.mxu0 %v3436
    %4162 = vmatmul.bf16.gmra.mxu0 %v2650
    %v4163 = vpop.f32.mrf.mxu0
    %v4164 = vadd.f32 %v2453, %v4163
    %v4165 = vpop.f32.mrf.mxu0
    %4166 = vdwg.mxu0
    %4167 = vmatpush.bf16.msra.mxu0 %v3496
    %4168 = vmatpush.bf16.msra.mxu0 %v3492
    %4169 = vmatpush.bf16.msra.mxu0 %v3488
    %4170 = vmatpush.bf16.msra.mxu0 %v3484
    %4171 = vmatpush.bf16.msra.mxu0 %v3480
    %4172 = vmatpush.bf16.msra.mxu0 %v3476
    %4173 = vmatpush.bf16.msra.mxu0 %v3472
    %4174 = vmatpush.bf16.msra.mxu0 %v3468
    %4175 = vmatmul.bf16.gmra.mxu0 %v2651
    %v4176 = vpop.f32.mrf.mxu0
    %v4177 = vadd.f32 %v4164, %v4176
    %v4178 = vpop.f32.mrf.mxu0
    %4179 = vdwg.mxu0
    %4180 = vmatpush.bf16.msra.mxu0 %v3528
    %4181 = vmatpush.bf16.msra.mxu0 %v3524
    %4182 = vmatpush.bf16.msra.mxu0 %v3520
    %4183 = vmatpush.bf16.msra.mxu0 %v3516
    %4184 = vmatpush.bf16.msra.mxu0 %v3512
    %4185 = vmatpush.bf16.msra.mxu0 %v3508
    %4186 = vmatpush.bf16.msra.mxu0 %v3504
    %4187 = vmatpush.bf16.msra.mxu0 %v3500
    %4188 = vmatmul.bf16.gmra.mxu0 %v2652
    %v4189 = vpop.f32.mrf.mxu0
    %v4190 = vadd.f32 %v4177, %v4189
    %v4191 = vpop.f32.mrf.mxu0
    %4192 = vdwg.mxu0
    %4193 = vmatpush.bf16.msra.mxu0 %v3560
    %4194 = vmatpush.bf16.msra.mxu0 %v3556
    %4195 = vmatpush.bf16.msra.mxu0 %v3552
    %4196 = vmatpush.bf16.msra.mxu0 %v3548
    %4197 = vmatpush.bf16.msra.mxu0 %v3544
    %4198 = vmatpush.bf16.msra.mxu0 %v3540
    %4199 = vmatpush.bf16.msra.mxu0 %v3536
    %4200 = vmatpush.bf16.msra.mxu0 %v3532
    %4201 = vmatmul.bf16.gmra.mxu0 %v2653
    %v4202 = vpop.f32.mrf.mxu0
    %v4203 = vadd.f32 %v4190, %v4202
    %v4204 = vpop.f32.mrf.mxu0
    %4205 = vdwg.mxu0
    %4206 = vmatpush.bf16.msra.mxu0 %v3592
    %4207 = vmatpush.bf16.msra.mxu0 %v3588
    %4208 = vmatpush.bf16.msra.mxu0 %v3584
    %4209 = vmatpush.bf16.msra.mxu0 %v3580
    %4210 = vmatpush.bf16.msra.mxu0 %v3576
    %4211 = vmatpush.bf16.msra.mxu0 %v3572
    %4212 = vmatpush.bf16.msra.mxu0 %v3568
    %4213 = vmatpush.bf16.msra.mxu0 %v3564
    %4214 = vmatmul.bf16.gmra.mxu0 %v2654
    %v4215 = vpop.f32.mrf.mxu0
    %v4216 = vadd.f32 %v4203, %v4215
    %v4217 = vpop.f32.mrf.mxu0
    %4218 = vdwg.mxu0
    %4219 = vmatpush.bf16.msra.mxu0 %v3624
    %4220 = vmatpush.bf16.msra.mxu0 %v3620
    %4221 = vmatpush.bf16.msra.mxu0 %v3616
    %4222 = vmatpush.bf16.msra.mxu0 %v3612
    %4223 = vmatpush.bf16.msra.mxu0 %v3608
    %4224 = vmatpush.bf16.msra.mxu0 %v3604
    %4225 = vmatpush.bf16.msra.mxu0 %v3600
    %4226 = vmatpush.bf16.msra.mxu0 %v3596
    %4227 = vmatmul.bf16.gmra.mxu0 %v2655
    %v4228 = vpop.f32.mrf.mxu0
    %v4229 = vadd.f32 %v4216, %v4228
    %v4230 = vpop.f32.mrf.mxu0
    %4231 = vdwg.mxu0
    %4232 = vmatpush.bf16.msra.mxu0 %v3656
    %4233 = vmatpush.bf16.msra.mxu0 %v3652
    %4234 = vmatpush.bf16.msra.mxu0 %v3648
    %4235 = vmatpush.bf16.msra.mxu0 %v3644
    %4236 = vmatpush.bf16.msra.mxu0 %v3640
    %4237 = vmatpush.bf16.msra.mxu0 %v3636
    %4238 = vmatpush.bf16.msra.mxu0 %v3632
    %4239 = vmatpush.bf16.msra.mxu0 %v3628
    %4240 = vmatmul.bf16.gmra.mxu0 %v2656
    %v4241 = vpop.f32.mrf.mxu0
    %v4242 = vadd.f32 %v4229, %v4241
    %v4243 = vpop.f32.mrf.mxu0
    %4244 = vdwg.mxu0
    %4245 = vmatpush.bf16.msra.mxu0 %v3688
    %4246 = vmatpush.bf16.msra.mxu0 %v3684
    %4247 = vmatpush.bf16.msra.mxu0 %v3680
    %4248 = vmatpush.bf16.msra.mxu0 %v3676
    %4249 = vmatpush.bf16.msra.mxu0 %v3672
    %4250 = vmatpush.bf16.msra.mxu0 %v3668
    %4251 = vmatpush.bf16.msra.mxu0 %v3664
    %4252 = vmatpush.bf16.msra.mxu0 %v3660
    %4253 = vmatmul.bf16.gmra.mxu0 %v2657
    %v4254 = vpop.f32.mrf.mxu0
    %v4255 = vadd.f32 %v4242, %v4254
    %v4256 = vpop.f32.mrf.mxu0
    %4257 = vdwg.mxu0
    %4258 = vmatpush.bf16.msra.mxu0 %v3465
    %4259 = vmatpush.bf16.msra.mxu0 %v3461
    %4260 = vmatpush.bf16.msra.mxu0 %v3457
    %4261 = vmatpush.bf16.msra.mxu0 %v3453
    %4262 = vmatpush.bf16.msra.mxu0 %v3449
    %4263 = vmatpush.bf16.msra.mxu0 %v3445
    %4264 = vmatpush.bf16.msra.mxu0 %v3441
    %4265 = vmatpush.bf16.msra.mxu0 %v3437
    %4266 = vmatmul.bf16.gmra.mxu0 %v2650
    %v4267 = vpop.f32.mrf.mxu0
    %v4268 = vadd.f32 %v2454, %v4267
    %v4269 = vpop.f32.mrf.mxu0
    %4270 = vdwg.mxu0
    %4271 = vmatpush.bf16.msra.mxu0 %v3497
    %4272 = vmatpush.bf16.msra.mxu0 %v3493
    %4273 = vmatpush.bf16.msra.mxu0 %v3489
    %4274 = vmatpush.bf16.msra.mxu0 %v3485
    %4275 = vmatpush.bf16.msra.mxu0 %v3481
    %4276 = vmatpush.bf16.msra.mxu0 %v3477
    %4277 = vmatpush.bf16.msra.mxu0 %v3473
    %4278 = vmatpush.bf16.msra.mxu0 %v3469
    %4279 = vmatmul.bf16.gmra.mxu0 %v2651
    %v4280 = vpop.f32.mrf.mxu0
    %v4281 = vadd.f32 %v4268, %v4280
    %v4282 = vpop.f32.mrf.mxu0
    %4283 = vdwg.mxu0
    %4284 = vmatpush.bf16.msra.mxu0 %v3529
    %4285 = vmatpush.bf16.msra.mxu0 %v3525
    %4286 = vmatpush.bf16.msra.mxu0 %v3521
    %4287 = vmatpush.bf16.msra.mxu0 %v3517
    %4288 = vmatpush.bf16.msra.mxu0 %v3513
    %4289 = vmatpush.bf16.msra.mxu0 %v3509
    %4290 = vmatpush.bf16.msra.mxu0 %v3505
    %4291 = vmatpush.bf16.msra.mxu0 %v3501
    %4292 = vmatmul.bf16.gmra.mxu0 %v2652
    %v4293 = vpop.f32.mrf.mxu0
    %v4294 = vadd.f32 %v4281, %v4293
    %v4295 = vpop.f32.mrf.mxu0
    %4296 = vdwg.mxu0
    %4297 = vmatpush.bf16.msra.mxu0 %v3561
    %4298 = vmatpush.bf16.msra.mxu0 %v3557
    %4299 = vmatpush.bf16.msra.mxu0 %v3553
    %4300 = vmatpush.bf16.msra.mxu0 %v3549
    %4301 = vmatpush.bf16.msra.mxu0 %v3545
    %4302 = vmatpush.bf16.msra.mxu0 %v3541
    %4303 = vmatpush.bf16.msra.mxu0 %v3537
    %4304 = vmatpush.bf16.msra.mxu0 %v3533
    %4305 = vmatmul.bf16.gmra.mxu0 %v2653
    %v4306 = vpop.f32.mrf.mxu0
    %v4307 = vadd.f32 %v4294, %v4306
    %v4308 = vpop.f32.mrf.mxu0
    %4309 = vdwg.mxu0
    %4310 = vmatpush.bf16.msra.mxu0 %v3593
    %4311 = vmatpush.bf16.msra.mxu0 %v3589
    %4312 = vmatpush.bf16.msra.mxu0 %v3585
    %4313 = vmatpush.bf16.msra.mxu0 %v3581
    %4314 = vmatpush.bf16.msra.mxu0 %v3577
    %4315 = vmatpush.bf16.msra.mxu0 %v3573
    %4316 = vmatpush.bf16.msra.mxu0 %v3569
    %4317 = vmatpush.bf16.msra.mxu0 %v3565
    %4318 = vmatmul.bf16.gmra.mxu0 %v2654
    %v4319 = vpop.f32.mrf.mxu0
    %v4320 = vadd.f32 %v4307, %v4319
    %v4321 = vpop.f32.mrf.mxu0
    %4322 = vdwg.mxu0
    %4323 = vmatpush.bf16.msra.mxu0 %v3625
    %4324 = vmatpush.bf16.msra.mxu0 %v3621
    %4325 = vmatpush.bf16.msra.mxu0 %v3617
    %4326 = vmatpush.bf16.msra.mxu0 %v3613
    %4327 = vmatpush.bf16.msra.mxu0 %v3609
    %4328 = vmatpush.bf16.msra.mxu0 %v3605
    %4329 = vmatpush.bf16.msra.mxu0 %v3601
    %4330 = vmatpush.bf16.msra.mxu0 %v3597
    %4331 = vmatmul.bf16.gmra.mxu0 %v2655
    %v4332 = vpop.f32.mrf.mxu0
    %v4333 = vadd.f32 %v4320, %v4332
    %v4334 = vpop.f32.mrf.mxu0
    %4335 = vdwg.mxu0
    %4336 = vmatpush.bf16.msra.mxu0 %v3657
    %4337 = vmatpush.bf16.msra.mxu0 %v3653
    %4338 = vmatpush.bf16.msra.mxu0 %v3649
    %4339 = vmatpush.bf16.msra.mxu0 %v3645
    %4340 = vmatpush.bf16.msra.mxu0 %v3641
    %4341 = vmatpush.bf16.msra.mxu0 %v3637
    %4342 = vmatpush.bf16.msra.mxu0 %v3633
    %4343 = vmatpush.bf16.msra.mxu0 %v3629
    %4344 = vmatmul.bf16.gmra.mxu0 %v2656
    %v4345 = vpop.f32.mrf.mxu0
    %v4346 = vadd.f32 %v4333, %v4345
    %v4347 = vpop.f32.mrf.mxu0
    %4348 = vdwg.mxu0
    %4349 = vmatpush.bf16.msra.mxu0 %v3689
    %4350 = vmatpush.bf16.msra.mxu0 %v3685
    %4351 = vmatpush.bf16.msra.mxu0 %v3681
    %4352 = vmatpush.bf16.msra.mxu0 %v3677
    %4353 = vmatpush.bf16.msra.mxu0 %v3673
    %4354 = vmatpush.bf16.msra.mxu0 %v3669
    %4355 = vmatpush.bf16.msra.mxu0 %v3665
    %4356 = vmatpush.bf16.msra.mxu0 %v3661
    %4357 = vmatmul.bf16.gmra.mxu0 %v2657
    %v4358 = vpop.f32.mrf.mxu0
    %v4359 = vadd.f32 %v4346, %v4358
    %v4360 = vpop.f32.mrf.mxu0
    %4361 = vdwg.mxu0
    %v4362 = vmax.f32 %v4047, 0.0
    %v4363 = vmax.f32 %v4151, 0.0
    %v4364 = vmax.f32 %v4255, 0.0
    %v4365 = vmax.f32 %v4359, 0.0
    %v4366 = vld [vmem:[#allocation7] sm:$0xff]
    %v4367 = vld [vmem:[#allocation7 + $0x8] sm:$0xff]
    %v4368 = vld [vmem:[#allocation7 + $0x10] sm:$0xff]
    %v4369 = vld [vmem:[#allocation7 + $0x18] sm:$0xff]
    %v4370 = vld [vmem:[#allocation7 + $0x20] sm:$0xff]
    %v4371 = vld [vmem:[#allocation7 + $0x28] sm:$0xff]
    %v4372 = vld [vmem:[#allocation7 + $0x30] sm:$0xff]
    %v4373 = vld [vmem:[#allocation7 + $0x38] sm:$0xff]
    %v4374 = vld [vmem:[#allocation7 + $0x40] sm:$0xff]
    %v4375 = vld [vmem:[#allocation7 + $0x48] sm:$0xff]
    %v4376 = vld [vmem:[#allocation7 + $0x50] sm:$0xff]
    %v4377 = vld [vmem:[#allocation7 + $0x58] sm:$0xff]
    %v4378 = vld [vmem:[#allocation7 + $0x60] sm:$0xff]
    %v4379 = vld [vmem:[#allocation7 + $0x68] sm:$0xff]
    %v4380 = vld [vmem:[#allocation7 + $0x70] sm:$0xff]
    %v4381 = vld [vmem:[#allocation7 + $0x78] sm:$0xff]
    %v4382 = vld [vmem:[#allocation7 + $0x80] sm:$0xff]
    %v4383 = vld [vmem:[#allocation7 + $0x88] sm:$0xff]
    %v4384 = vld [vmem:[#allocation7 + $0x90] sm:$0xff]
    %v4385 = vld [vmem:[#allocation7 + $0x98] sm:$0xff]
    %v4386 = vld [vmem:[#allocation7 + $0xa0] sm:$0xff]
    %v4387 = vld [vmem:[#allocation7 + $0xa8] sm:$0xff]
    %v4388 = vld [vmem:[#allocation7 + $0xb0] sm:$0xff]
    %v4389 = vld [vmem:[#allocation7 + $0xb8] sm:$0xff]
    %v4390 = vld [vmem:[#allocation7 + $0xc0] sm:$0xff]
    %v4391 = vld [vmem:[#allocation7 + $0xc8] sm:$0xff]
    %v4392 = vld [vmem:[#allocation7 + $0xd0] sm:$0xff]
    %v4393 = vld [vmem:[#allocation7 + $0xd8] sm:$0xff]
    %v4394 = vld [vmem:[#allocation7 + $0xe0] sm:$0xff]
    %v4395 = vld [vmem:[#allocation7 + $0xe8] sm:$0xff]
    %v4396 = vld [vmem:[#allocation7 + $0xf0] sm:$0xff]
    %v4397 = vld [vmem:[#allocation7 + $0xf8] sm:$0xff]
    %v4398 = vld [vmem:[#allocation7 + $0x100] sm:$0xff]
    %v4399 = vld [vmem:[#allocation7 + $0x108] sm:$0xff]
    %v4400 = vld [vmem:[#allocation7 + $0x110] sm:$0xff]
    %v4401 = vld [vmem:[#allocation7 + $0x118] sm:$0xff]
    %v4402 = vld [vmem:[#allocation7 + $0x120] sm:$0xff]
    %v4403 = vld [vmem:[#allocation7 + $0x128] sm:$0xff]
    %v4404 = vld [vmem:[#allocation7 + $0x130] sm:$0xff]
    %v4405 = vld [vmem:[#allocation7 + $0x138] sm:$0xff]
    %v4406 = vld [vmem:[#allocation7 + $0x140] sm:$0xff]
    %v4407 = vld [vmem:[#allocation7 + $0x148] sm:$0xff]
    %v4408 = vld [vmem:[#allocation7 + $0x150] sm:$0xff]
    %v4409 = vld [vmem:[#allocation7 + $0x158] sm:$0xff]
    %v4410 = vld [vmem:[#allocation7 + $0x160] sm:$0xff]
    %v4411 = vld [vmem:[#allocation7 + $0x168] sm:$0xff]
    %v4412 = vld [vmem:[#allocation7 + $0x170] sm:$0xff]
    %v4413 = vld [vmem:[#allocation7 + $0x178] sm:$0xff]
    %v4414 = vld [vmem:[#allocation7 + $0x180] sm:$0xff]
    %v4415 = vld [vmem:[#allocation7 + $0x188] sm:$0xff]
    %v4416 = vld [vmem:[#allocation7 + $0x190] sm:$0xff]
    %v4417 = vld [vmem:[#allocation7 + $0x198] sm:$0xff]
    %v4418 = vld [vmem:[#allocation7 + $0x1a0] sm:$0xff]
    %v4419 = vld [vmem:[#allocation7 + $0x1a8] sm:$0xff]
    %v4420 = vld [vmem:[#allocation7 + $0x1b0] sm:$0xff]
    %v4421 = vld [vmem:[#allocation7 + $0x1b8] sm:$0xff]
    %v4422 = vld [vmem:[#allocation7 + $0x1c0] sm:$0xff]
    %v4423 = vld [vmem:[#allocation7 + $0x1c8] sm:$0xff]
    %v4424 = vld [vmem:[#allocation7 + $0x1d0] sm:$0xff]
    %v4425 = vld [vmem:[#allocation7 + $0x1d8] sm:$0xff]
    %v4426 = vld [vmem:[#allocation7 + $0x1e0] sm:$0xff]
    %v4427 = vld [vmem:[#allocation7 + $0x1e8] sm:$0xff]
    %v4428 = vld [vmem:[#allocation7 + $0x1f0] sm:$0xff]
    %v4429 = vld [vmem:[#allocation7 + $0x1f8] sm:$0xff]
    %v4430 = vpack.c.bf16 %v4362, %v4362
    %v4431 = vpack.c.bf16 %v4363, %v4363
    %v4432 = vpack.c.bf16 %v4364, %v4364
    %v4433 = vpack.c.bf16 %v4365, %v4365
    %v4434 = vld [vmem:[%s10] sm:$0x3]
    %v4436 = vperm.slane %v4434, 0
    %v4437 = vperm.slane %v4434, 1
    %v4504 = vunpack.c.l.b16 %v4366
    %v4505 = vunpack.c.h.b16 %v4366
    %v4506 = vunpack.c.l.b16 %v4367
    %v4507 = vunpack.c.h.b16 %v4367
    %v4508 = vunpack.c.l.b16 %v4368
    %v4509 = vunpack.c.h.b16 %v4368
    %v4510 = vunpack.c.l.b16 %v4369
    %v4511 = vunpack.c.h.b16 %v4369
    %v4512 = vunpack.c.l.b16 %v4370
    %v4513 = vunpack.c.h.b16 %v4370
    %v4514 = vunpack.c.l.b16 %v4371
    %v4515 = vunpack.c.h.b16 %v4371
    %v4516 = vunpack.c.l.b16 %v4372
    %v4517 = vunpack.c.h.b16 %v4372
    %v4518 = vunpack.c.l.b16 %v4373
    %v4519 = vunpack.c.h.b16 %v4373
    %v4520 = vunpack.c.l.b16 %v4374
    %v4521 = vunpack.c.h.b16 %v4374
    %v4522 = vunpack.c.l.b16 %v4375
    %v4523 = vunpack.c.h.b16 %v4375
    %v4524 = vunpack.c.l.b16 %v4376
    %v4525 = vunpack.c.h.b16 %v4376
    %v4526 = vunpack.c.l.b16 %v4377
    %v4527 = vunpack.c.h.b16 %v4377
    %v4528 = vunpack.c.l.b16 %v4378
    %v4529 = vunpack.c.h.b16 %v4378
    %v4530 = vunpack.c.l.b16 %v4379
    %v4531 = vunpack.c.h.b16 %v4379
    %v4532 = vunpack.c.l.b16 %v4380
    %v4533 = vunpack.c.h.b16 %v4380
    %v4534 = vunpack.c.l.b16 %v4381
    %v4535 = vunpack.c.h.b16 %v4381
    %v4536 = vunpack.c.l.b16 %v4382
    %v4537 = vunpack.c.h.b16 %v4382
    %v4538 = vunpack.c.l.b16 %v4383
    %v4539 = vunpack.c.h.b16 %v4383
    %v4540 = vunpack.c.l.b16 %v4384
    %v4541 = vunpack.c.h.b16 %v4384
    %v4542 = vunpack.c.l.b16 %v4385
    %v4543 = vunpack.c.h.b16 %v4385
    %v4544 = vunpack.c.l.b16 %v4386
    %v4545 = vunpack.c.h.b16 %v4386
    %v4546 = vunpack.c.l.b16 %v4387
    %v4547 = vunpack.c.h.b16 %v4387
    %v4548 = vunpack.c.l.b16 %v4388
    %v4549 = vunpack.c.h.b16 %v4388
    %v4550 = vunpack.c.l.b16 %v4389
    %v4551 = vunpack.c.h.b16 %v4389
    %v4552 = vunpack.c.l.b16 %v4390
    %v4553 = vunpack.c.h.b16 %v4390
    %v4554 = vunpack.c.l.b16 %v4391
    %v4555 = vunpack.c.h.b16 %v4391
    %v4556 = vunpack.c.l.b16 %v4392
    %v4557 = vunpack.c.h.b16 %v4392
    %v4558 = vunpack.c.l.b16 %v4393
    %v4559 = vunpack.c.h.b16 %v4393
    %v4560 = vunpack.c.l.b16 %v4394
    %v4561 = vunpack.c.h.b16 %v4394
    %v4562 = vunpack.c.l.b16 %v4395
    %v4563 = vunpack.c.h.b16 %v4395
    %v4564 = vunpack.c.l.b16 %v4396
    %v4565 = vunpack.c.h.b16 %v4396
    %v4566 = vunpack.c.l.b16 %v4397
    %v4567 = vunpack.c.h.b16 %v4397
    %v4568 = vunpack.c.l.b16 %v4398
    %v4569 = vunpack.c.h.b16 %v4398
    %v4570 = vunpack.c.l.b16 %v4399
    %v4571 = vunpack.c.h.b16 %v4399
    %v4572 = vunpack.c.l.b16 %v4400
    %v4573 = vunpack.c.h.b16 %v4400
    %v4574 = vunpack.c.l.b16 %v4401
    %v4575 = vunpack.c.h.b16 %v4401
    %v4576 = vunpack.c.l.b16 %v4402
    %v4577 = vunpack.c.h.b16 %v4402
    %v4578 = vunpack.c.l.b16 %v4403
    %v4579 = vunpack.c.h.b16 %v4403
    %v4580 = vunpack.c.l.b16 %v4404
    %v4581 = vunpack.c.h.b16 %v4404
    %v4582 = vunpack.c.l.b16 %v4405
    %v4583 = vunpack.c.h.b16 %v4405
    %v4584 = vunpack.c.l.b16 %v4406
    %v4585 = vunpack.c.h.b16 %v4406
    %v4586 = vunpack.c.l.b16 %v4407
    %v4587 = vunpack.c.h.b16 %v4407
    %v4588 = vunpack.c.l.b16 %v4408
    %v4589 = vunpack.c.h.b16 %v4408
    %v4590 = vunpack.c.l.b16 %v4409
    %v4591 = vunpack.c.h.b16 %v4409
    %v4592 = vunpack.c.l.b16 %v4410
    %v4593 = vunpack.c.h.b16 %v4410
    %v4594 = vunpack.c.l.b16 %v4411
    %v4595 = vunpack.c.h.b16 %v4411
    %v4596 = vunpack.c.l.b16 %v4412
    %v4597 = vunpack.c.h.b16 %v4412
    %v4598 = vunpack.c.l.b16 %v4413
    %v4599 = vunpack.c.h.b16 %v4413
    %v4600 = vunpack.c.l.b16 %v4414
    %v4601 = vunpack.c.h.b16 %v4414
    %v4602 = vunpack.c.l.b16 %v4415
    %v4603 = vunpack.c.h.b16 %v4415
    %v4604 = vunpack.c.l.b16 %v4416
    %v4605 = vunpack.c.h.b16 %v4416
    %v4606 = vunpack.c.l.b16 %v4417
    %v4607 = vunpack.c.h.b16 %v4417
    %v4608 = vunpack.c.l.b16 %v4418
    %v4609 = vunpack.c.h.b16 %v4418
    %v4610 = vunpack.c.l.b16 %v4419
    %v4611 = vunpack.c.h.b16 %v4419
    %v4612 = vunpack.c.l.b16 %v4420
    %v4613 = vunpack.c.h.b16 %v4420
    %v4614 = vunpack.c.l.b16 %v4421
    %v4615 = vunpack.c.h.b16 %v4421
    %v4616 = vunpack.c.l.b16 %v4422
    %v4617 = vunpack.c.h.b16 %v4422
    %v4618 = vunpack.c.l.b16 %v4423
    %v4619 = vunpack.c.h.b16 %v4423
    %v4620 = vunpack.c.l.b16 %v4424
    %v4621 = vunpack.c.h.b16 %v4424
    %v4622 = vunpack.c.l.b16 %v4425
    %v4623 = vunpack.c.h.b16 %v4425
    %v4624 = vunpack.c.l.b16 %v4426
    %v4625 = vunpack.c.h.b16 %v4426
    %v4626 = vunpack.c.l.b16 %v4427
    %v4627 = vunpack.c.h.b16 %v4427
    %v4628 = vunpack.c.l.b16 %v4428
    %v4629 = vunpack.c.h.b16 %v4428
    %v4630 = vunpack.c.l.b16 %v4429
    %v4631 = vunpack.c.h.b16 %v4429
    %v4632 = vpack.c.b16 %v4506, %v4504
    %v4633 = vpack.c.b16 %v4507, %v4505
    %v4634 = vpack.c.b16 %v4510, %v4508
    %v4635 = vpack.c.b16 %v4511, %v4509
    %v4636 = vpack.c.b16 %v4514, %v4512
    %v4637 = vpack.c.b16 %v4515, %v4513
    %v4638 = vpack.c.b16 %v4518, %v4516
    %v4639 = vpack.c.b16 %v4519, %v4517
    %v4640 = vpack.c.b16 %v4522, %v4520
    %v4641 = vpack.c.b16 %v4523, %v4521
    %v4642 = vpack.c.b16 %v4526, %v4524
    %v4643 = vpack.c.b16 %v4527, %v4525
    %v4644 = vpack.c.b16 %v4530, %v4528
    %v4645 = vpack.c.b16 %v4531, %v4529
    %v4646 = vpack.c.b16 %v4534, %v4532
    %v4647 = vpack.c.b16 %v4535, %v4533
    %v4648 = vpack.c.b16 %v4538, %v4536
    %v4649 = vpack.c.b16 %v4539, %v4537
    %v4650 = vpack.c.b16 %v4542, %v4540
    %v4651 = vpack.c.b16 %v4543, %v4541
    %v4652 = vpack.c.b16 %v4546, %v4544
    %v4653 = vpack.c.b16 %v4547, %v4545
    %v4654 = vpack.c.b16 %v4550, %v4548
    %v4655 = vpack.c.b16 %v4551, %v4549
    %v4656 = vpack.c.b16 %v4554, %v4552
    %v4657 = vpack.c.b16 %v4555, %v4553
    %v4658 = vpack.c.b16 %v4558, %v4556
    %v4659 = vpack.c.b16 %v4559, %v4557
    %v4660 = vpack.c.b16 %v4562, %v4560
    %v4661 = vpack.c.b16 %v4563, %v4561
    %v4662 = vpack.c.b16 %v4566, %v4564
    %v4663 = vpack.c.b16 %v4567, %v4565
    %v4664 = vpack.c.b16 %v4570, %v4568
    %v4665 = vpack.c.b16 %v4571, %v4569
    %v4666 = vpack.c.b16 %v4574, %v4572
    %v4667 = vpack.c.b16 %v4575, %v4573
    %v4668 = vpack.c.b16 %v4578, %v4576
    %v4669 = vpack.c.b16 %v4579, %v4577
    %v4670 = vpack.c.b16 %v4582, %v4580
    %v4671 = vpack.c.b16 %v4583, %v4581
    %v4672 = vpack.c.b16 %v4586, %v4584
    %v4673 = vpack.c.b16 %v4587, %v4585
    %v4674 = vpack.c.b16 %v4590, %v4588
    %v4675 = vpack.c.b16 %v4591, %v4589
    %v4676 = vpack.c.b16 %v4594, %v4592
    %v4677 = vpack.c.b16 %v4595, %v4593
    %v4678 = vpack.c.b16 %v4598, %v4596
    %v4679 = vpack.c.b16 %v4599, %v4597
    %v4680 = vpack.c.b16 %v4602, %v4600
    %v4681 = vpack.c.b16 %v4603, %v4601
    %v4682 = vpack.c.b16 %v4606, %v4604
    %v4683 = vpack.c.b16 %v4607, %v4605
    %v4684 = vpack.c.b16 %v4610, %v4608
    %v4685 = vpack.c.b16 %v4611, %v4609
    %v4686 = vpack.c.b16 %v4614, %v4612
    %v4687 = vpack.c.b16 %v4615, %v4613
    %v4688 = vpack.c.b16 %v4618, %v4616
    %v4689 = vpack.c.b16 %v4619, %v4617
    %v4690 = vpack.c.b16 %v4622, %v4620
    %v4691 = vpack.c.b16 %v4623, %v4621
    %v4692 = vpack.c.b16 %v4626, %v4624
    %v4693 = vpack.c.b16 %v4627, %v4625
    %v4694 = vpack.c.b16 %v4630, %v4628
    %v4695 = vpack.c.b16 %v4631, %v4629
    %4760 = vmatpush.bf16.msra.mxu0 %v4646
    %4761 = vmatpush.bf16.msra.mxu0 %v4644
    %4762 = vmatpush.bf16.msra.mxu0 %v4642
    %4763 = vmatpush.bf16.msra.mxu0 %v4640
    %4764 = vmatpush.bf16.msra.mxu0 %v4638
    %4765 = vmatpush.bf16.msra.mxu0 %v4636
    %4766 = vmatpush.bf16.msra.mxu0 %v4634
    %4767 = vmatpush.bf16.msra.mxu0 %v4632
    %4768 = vmatmul.bf16.gmra.mxu0 %v4430
    %v4769 = vpop.f32.mrf.mxu0
    %v4770 = vadd.f32 %v4436, %v4769
    %v4771 = vpop.f32.mrf.mxu0
    %4772 = vdwg.mxu0
    %4773 = vmatpush.bf16.msra.mxu0 %v4662
    %4774 = vmatpush.bf16.msra.mxu0 %v4660
    %4775 = vmatpush.bf16.msra.mxu0 %v4658
    %4776 = vmatpush.bf16.msra.mxu0 %v4656
    %4777 = vmatpush.bf16.msra.mxu0 %v4654
    %4778 = vmatpush.bf16.msra.mxu0 %v4652
    %4779 = vmatpush.bf16.msra.mxu0 %v4650
    %4780 = vmatpush.bf16.msra.mxu0 %v4648
    %4781 = vmatmul.bf16.gmra.mxu0 %v4431
    %v4782 = vpop.f32.mrf.mxu0
    %v4783 = vadd.f32 %v4770, %v4782
    %v4784 = vpop.f32.mrf.mxu0
    %4785 = vdwg.mxu0
    %4786 = vmatpush.bf16.msra.mxu0 %v4678
    %4787 = vmatpush.bf16.msra.mxu0 %v4676
    %4788 = vmatpush.bf16.msra.mxu0 %v4674
    %4789 = vmatpush.bf16.msra.mxu0 %v4672
    %4790 = vmatpush.bf16.msra.mxu0 %v4670
    %4791 = vmatpush.bf16.msra.mxu0 %v4668
    %4792 = vmatpush.bf16.msra.mxu0 %v4666
    %4793 = vmatpush.bf16.msra.mxu0 %v4664
    %4794 = vmatmul.bf16.gmra.mxu0 %v4432
    %v4795 = vpop.f32.mrf.mxu0
    %v4796 = vadd.f32 %v4783, %v4795
    %v4797 = vpop.f32.mrf.mxu0
    %4798 = vdwg.mxu0
    %4799 = vmatpush.bf16.msra.mxu0 %v4694
    %4800 = vmatpush.bf16.msra.mxu0 %v4692
    %4801 = vmatpush.bf16.msra.mxu0 %v4690
    %4802 = vmatpush.bf16.msra.mxu0 %v4688
    %4803 = vmatpush.bf16.msra.mxu0 %v4686
    %4804 = vmatpush.bf16.msra.mxu0 %v4684
    %4805 = vmatpush.bf16.msra.mxu0 %v4682
    %4806 = vmatpush.bf16.msra.mxu0 %v4680
    %4807 = vmatmul.bf16.gmra.mxu0 %v4433
    %v4808 = vpop.f32.mrf.mxu0
    %v4809 = vadd.f32 %v4796, %v4808
    %v4810 = vpop.f32.mrf.mxu0
    %4811 = vdwg.mxu0
    %4812 = vmatpush.bf16.msra.mxu0 %v4647
    %4813 = vmatpush.bf16.msra.mxu0 %v4645
    %4814 = vmatpush.bf16.msra.mxu0 %v4643
    %4815 = vmatpush.bf16.msra.mxu0 %v4641
    %4816 = vmatpush.bf16.msra.mxu0 %v4639
    %4817 = vmatpush.bf16.msra.mxu0 %v4637
    %4818 = vmatpush.bf16.msra.mxu0 %v4635
    %4819 = vmatpush.bf16.msra.mxu0 %v4633
    %4820 = vmatmul.bf16.gmra.mxu0 %v4430
    %v4821 = vpop.f32.mrf.mxu0
    %v4822 = vadd.f32 %v4437, %v4821
    %v4823 = vpop.f32.mrf.mxu0
    %4824 = vdwg.mxu0
    %4825 = vmatpush.bf16.msra.mxu0 %v4663
    %4826 = vmatpush.bf16.msra.mxu0 %v4661
    %4827 = vmatpush.bf16.msra.mxu0 %v4659
    %4828 = vmatpush.bf16.msra.mxu0 %v4657
    %4829 = vmatpush.bf16.msra.mxu0 %v4655
    %4830 = vmatpush.bf16.msra.mxu0 %v4653
    %4831 = vmatpush.bf16.msra.mxu0 %v4651
    %4832 = vmatpush.bf16.msra.mxu0 %v4649
    %4833 = vmatmul.bf16.gmra.mxu0 %v4431
    %v4834 = vpop.f32.mrf.mxu0
    %v4835 = vadd.f32 %v4822, %v4834
    %v4836 = vpop.f32.mrf.mxu0
    %4837 = vdwg.mxu0
    %4838 = vmatpush.bf16.msra.mxu0 %v4679
    %4839 = vmatpush.bf16.msra.mxu0 %v4677
    %4840 = vmatpush.bf16.msra.mxu0 %v4675
    %4841 = vmatpush.bf16.msra.mxu0 %v4673
    %4842 = vmatpush.bf16.msra.mxu0 %v4671
    %4843 = vmatpush.bf16.msra.mxu0 %v4669
    %4844 = vmatpush.bf16.msra.mxu0 %v4667
    %4845 = vmatpush.bf16.msra.mxu0 %v4665
    %4846 = vmatmul.bf16.gmra.mxu0 %v4432
    %v4847 = vpop.f32.mrf.mxu0
    %v4848 = vadd.f32 %v4835, %v4847
    %v4849 = vpop.f32.mrf.mxu0
    %4850 = vdwg.mxu0
    %4851 = vmatpush.bf16.msra.mxu0 %v4695
    %4852 = vmatpush.bf16.msra.mxu0 %v4693
    %4853 = vmatpush.bf16.msra.mxu0 %v4691
    %4854 = vmatpush.bf16.msra.mxu0 %v4689
    %4855 = vmatpush.bf16.msra.mxu0 %v4687
    %4856 = vmatpush.bf16.msra.mxu0 %v4685
    %4857 = vmatpush.bf16.msra.mxu0 %v4683
    %4858 = vmatpush.bf16.msra.mxu0 %v4681
    %4859 = vmatmul.bf16.gmra.mxu0 %v4433
    %v4860 = vpop.f32.mrf.mxu0
    %v4861 = vadd.f32 %v4848, %v4860
    %v4862 = vpop.f32.mrf.mxu0
    %4863 = vdwg.mxu0
    %v4864 = vmax.f32 %v4809, 0.0
    %v4865 = vmax.f32 %v4861, 0.0
    %v4866 = vld [vmem:[%s11] sm:$0xff]
    %v4867 = vld [vmem:[%s11 + $0x8] sm:$0xff]
    %v4868 = vld [vmem:[%s11 + $0x10] sm:$0xff]
    %v4869 = vld [vmem:[%s11 + $0x18] sm:$0xff]
    %v4870 = vld [vmem:[%s11 + $0x20] sm:$0xff]
    %v4871 = vld [vmem:[%s11 + $0x28] sm:$0xff]
    %v4872 = vld [vmem:[%s11 + $0x30] sm:$0xff]
    %v4873 = vld [vmem:[%s11 + $0x38] sm:$0xff]
    %v4874 = vld [vmem:[%s11 + $0x40] sm:$0xff]
    %v4875 = vld [vmem:[%s11 + $0x48] sm:$0xff]
    %v4876 = vld [vmem:[%s11 + $0x50] sm:$0xff]
    %v4877 = vld [vmem:[%s11 + $0x58] sm:$0xff]
    %v4878 = vld [vmem:[%s11 + $0x60] sm:$0xff]
    %v4879 = vld [vmem:[%s11 + $0x68] sm:$0xff]
    %v4880 = vld [vmem:[%s11 + $0x70] sm:$0xff]
    %v4881 = vld [vmem:[%s11 + $0x78] sm:$0xff]
    %v4882 = vld [vmem:[%s11 + $0x80] sm:$0xff]
    %v4883 = vld [vmem:[%s11 + $0x88] sm:$0xff]
    %v4884 = vld [vmem:[%s11 + $0x90] sm:$0xff]
    %v4885 = vld [vmem:[%s11 + $0x98] sm:$0xff]
    %v4886 = vld [vmem:[%s11 + $0xa0] sm:$0xff]
    %v4887 = vld [vmem:[%s11 + $0xa8] sm:$0xff]
    %v4888 = vld [vmem:[%s11 + $0xb0] sm:$0xff]
    %v4889 = vld [vmem:[%s11 + $0xb8] sm:$0xff]
    %v4890 = vld [vmem:[%s11 + $0xc0] sm:$0xff]
    %v4891 = vld [vmem:[%s11 + $0xc8] sm:$0xff]
    %v4892 = vld [vmem:[%s11 + $0xd0] sm:$0xff]
    %v4893 = vld [vmem:[%s11 + $0xd8] sm:$0xff]
    %v4894 = vld [vmem:[%s11 + $0xe0] sm:$0xff]
    %v4895 = vld [vmem:[%s11 + $0xe8] sm:$0xff]
    %v4896 = vld [vmem:[%s11 + $0xf0] sm:$0xff]
    %v4897 = vld [vmem:[%s11 + $0xf8] sm:$0xff]
    %v4898 = vld [vmem:[%s12] sm:$0x1]
    %v4900 = vperm.slane %v4898, 0
    %4902 = vmatpush.msra.mxu0 %v4881
    %4903 = vmatpush.msra.mxu0 %v4880
    %4904 = vmatpush.msra.mxu0 %v4879
    %4905 = vmatpush.msra.mxu0 %v4878
    %4906 = vmatpush.msra.mxu0 %v4877
    %4907 = vmatpush.msra.mxu0 %v4876
    %4908 = vmatpush.msra.mxu0 %v4875
    %4909 = vmatpush.msra.mxu0 %v4874
    %4910 = vmatpush.msra.mxu0 %v4873
    %4911 = vmatpush.msra.mxu0 %v4872
    %4912 = vmatpush.msra.mxu0 %v4871
    %4913 = vmatpush.msra.mxu0 %v4870
    %4914 = vmatpush.msra.mxu0 %v4869
    %4915 = vmatpush.msra.mxu0 %v4868
    %4916 = vmatpush.msra.mxu0 %v4867
    %4917 = vmatpush.msra.mxu0 %v4866
    %4918 = vmatmul.f32.gmra.mxu0 %v4864
    %v4919 = vpop.f32.mrf.mxu0
    %v4920 = vadd.f32 %v4900, %v4919
    %4921 = vdwg.mxu0
    %4922 = vmatpush.msra.mxu0 %v4897
    %4923 = vmatpush.msra.mxu0 %v4896
    %4924 = vmatpush.msra.mxu0 %v4895
    %4925 = vmatpush.msra.mxu0 %v4894
    %4926 = vmatpush.msra.mxu0 %v4893
    %4927 = vmatpush.msra.mxu0 %v4892
    %4928 = vmatpush.msra.mxu0 %v4891
    %4929 = vmatpush.msra.mxu0 %v4890
    %4930 = vmatpush.msra.mxu0 %v4889
    %4931 = vmatpush.msra.mxu0 %v4888
    %4932 = vmatpush.msra.mxu0 %v4887
    %4933 = vmatpush.msra.mxu0 %v4886
    %4934 = vmatpush.msra.mxu0 %v4885
    %4935 = vmatpush.msra.mxu0 %v4884
    %4936 = vmatpush.msra.mxu0 %v4883
    %4937 = vmatpush.msra.mxu0 %v4882
    %4938 = vmatmul.f32.gmra.mxu0 %v4865
    %v4939 = vpop.f32.mrf.mxu0
    %v4940 = vadd.f32 %v4920, %v4939
    %4941 = vdwg.mxu0
    %v4943 = vrot.slane %v4940, 1
    %v4944 = vrot.slane %v4940, 2
    %v4945 = vrot.slane %v4940, 3
    %v4946 = vrot.slane %v4940, 4
    %v4947 = vrot.slane %v4940, 5
    %v4948 = vrot.slane %v4940, 6
    %v4949 = vrot.slane %v4940, 7
    %v4950 = vperm.slane %v4940, 0
    %v4951 = vperm.slane %v4943, 0
    %v4952 = vperm.slane %v4944, 0
    %v4953 = vperm.slane %v4945, 0
    %v4954 = vperm.slane %v4946, 0
    %v4955 = vperm.slane %v4947, 0
    %v4956 = vperm.slane %v4948, 0
    %v4957 = vperm.slane %v4949, 0
    %v4966 = vmul.f32 %v197, %v4950
    %v4967 = vmul.f32 %v202, %v4950
    %v4968 = vmul.f32 %v207, %v4951
    %v4969 = vmul.f32 %v212, %v4951
    %v4970 = vmul.f32 %v217, %v4952
    %v4971 = vmul.f32 %v222, %v4952
    %v4972 = vmul.f32 %v227, %v4953
    %v4973 = vmul.f32 %v232, %v4953
    %v4974 = vmul.f32 %v237, %v4954
    %v4975 = vmul.f32 %v242, %v4954
    %v4976 = vmul.f32 %v247, %v4955
    %v4977 = vmul.f32 %v252, %v4955
    %v4978 = vmul.f32 %v257, %v4956
    %v4979 = vmul.f32 %v262, %v4956
    %v4980 = vmul.f32 %v267, %v4957
    %v4981 = vmul.f32 %v272, %v4957
    %v4982 = vmul.f32 %v293, %v4950
    %v4983 = vmul.f32 %v297, %v4950
    %v4984 = vmul.f32 %v301, %v4951
    %v4985 = vmul.f32 %v305, %v4951
    %v4986 = vmul.f32 %v309, %v4952
    %v4987 = vmul.f32 %v313, %v4952
    %v4988 = vmul.f32 %v317, %v4953
    %v4989 = vmul.f32 %v321, %v4953
    %v4990 = vmul.f32 %v325, %v4954
    %v4991 = vmul.f32 %v329, %v4954
    %v4992 = vmul.f32 %v333, %v4955
    %v4993 = vmul.f32 %v337, %v4955
    %v4994 = vmul.f32 %v341, %v4956
    %v4995 = vmul.f32 %v345, %v4956
    %v4996 = vmul.f32 %v349, %v4957
    %v4997 = vmul.f32 %v353, %v4957
    %5014 = vrot.lane.b32.xlu0 %v4982, 124
    %v5015 = vpop.permute.xlu0 %5014
    %5016 = vrot.lane.b32.xlu0 %v4983, 124
    %v5017 = vpop.permute.xlu0 %5016
    %5018 = vrot.lane.b32.xlu0 %v4984, 124
    %v5019 = vpop.permute.xlu0 %5018
    %5020 = vrot.lane.b32.xlu0 %v4985, 124
    %v5021 = vpop.permute.xlu0 %5020
    %5022 = vrot.lane.b32.xlu0 %v4986, 124
    %v5023 = vpop.permute.xlu0 %5022
    %5024 = vrot.lane.b32.xlu0 %v4987, 124
    %v5025 = vpop.permute.xlu0 %5024
    %5026 = vrot.lane.b32.xlu0 %v4988, 124
    %v5027 = vpop.permute.xlu0 %5026
    %5028 = vrot.lane.b32.xlu0 %v4989, 124
    %v5029 = vpop.permute.xlu0 %5028
    %5030 = vrot.lane.b32.xlu0 %v4990, 124
    %v5031 = vpop.permute.xlu0 %5030
    %5032 = vrot.lane.b32.xlu0 %v4991, 124
    %v5033 = vpop.permute.xlu0 %5032
    %5034 = vrot.lane.b32.xlu0 %v4992, 124
    %v5035 = vpop.permute.xlu0 %5034
    %5036 = vrot.lane.b32.xlu0 %v4993, 124
    %v5037 = vpop.permute.xlu0 %5036
    %5038 = vrot.lane.b32.xlu0 %v4994, 124
    %v5039 = vpop.permute.xlu0 %5038
    %5040 = vrot.lane.b32.xlu0 %v4995, 124
    %v5041 = vpop.permute.xlu0 %5040
    %5042 = vrot.lane.b32.xlu0 %v4996, 124
    %v5043 = vpop.permute.xlu0 %5042
    %5044 = vrot.lane.b32.xlu0 %v4997, 124
    %v5045 = vpop.permute.xlu0 %5044
    %v5062 = vadd.f32 %v4966, %v5015
    %v5063 = vadd.f32 %v4967, %v5017
    %v5064 = vadd.f32 %v4968, %v5019
    %v5065 = vadd.f32 %v4969, %v5021
    %v5066 = vadd.f32 %v4970, %v5023
    %v5067 = vadd.f32 %v4971, %v5025
    %v5068 = vadd.f32 %v4972, %v5027
    %v5069 = vadd.f32 %v4973, %v5029
    %v5070 = vadd.f32 %v4974, %v5031
    %v5071 = vadd.f32 %v4975, %v5033
    %v5072 = vadd.f32 %v4976, %v5035
    %v5073 = vadd.f32 %v4977, %v5037
    %v5074 = vadd.f32 %v4978, %v5039
    %v5075 = vadd.f32 %v4979, %v5041
    %v5076 = vadd.f32 %v4980, %v5043
    %v5077 = vadd.f32 %v4981, %v5045
    %v5078 = vmul.f32 %v390, %v4950
    %v5079 = vmul.f32 %v394, %v4950
    %v5080 = vmul.f32 %v398, %v4951
    %v5081 = vmul.f32 %v402, %v4951
    %v5082 = vmul.f32 %v406, %v4952
    %v5083 = vmul.f32 %v410, %v4952
    %v5084 = vmul.f32 %v414, %v4953
    %v5085 = vmul.f32 %v418, %v4953
    %v5086 = vmul.f32 %v422, %v4954
    %v5087 = vmul.f32 %v426, %v4954
    %v5088 = vmul.f32 %v430, %v4955
    %v5089 = vmul.f32 %v434, %v4955
    %v5090 = vmul.f32 %v438, %v4956
    %v5091 = vmul.f32 %v442, %v4956
    %v5092 = vmul.f32 %v446, %v4957
    %v5093 = vmul.f32 %v450, %v4957
    %5110 = vrot.lane.b32.xlu0 %v5078, 120
    %v5111 = vpop.permute.xlu0 %5110
    %5112 = vrot.lane.b32.xlu0 %v5079, 120
    %v5113 = vpop.permute.xlu0 %5112
    %5114 = vrot.lane.b32.xlu0 %v5080, 120
    %v5115 = vpop.permute.xlu0 %5114
    %5116 = vrot.lane.b32.xlu0 %v5081, 120
    %v5117 = vpop.permute.xlu0 %5116
    %5118 = vrot.lane.b32.xlu0 %v5082, 120
    %v5119 = vpop.permute.xlu0 %5118
    %5120 = vrot.lane.b32.xlu0 %v5083, 120
    %v5121 = vpop.permute.xlu0 %5120
    %5122 = vrot.lane.b32.xlu0 %v5084, 120
    %v5123 = vpop.permute.xlu0 %5122
    %5124 = vrot.lane.b32.xlu0 %v5085, 120
    %v5125 = vpop.permute.xlu0 %5124
    %5126 = vrot.lane.b32.xlu0 %v5086, 120
    %v5127 = vpop.permute.xlu0 %5126
    %5128 = vrot.lane.b32.xlu0 %v5087, 120
    %v5129 = vpop.permute.xlu0 %5128
    %5130 = vrot.lane.b32.xlu0 %v5088, 120
    %v5131 = vpop.permute.xlu0 %5130
    %5132 = vrot.lane.b32.xlu0 %v5089, 120
    %v5133 = vpop.permute.xlu0 %5132
    %5134 = vrot.lane.b32.xlu0 %v5090, 120
    %v5135 = vpop.permute.xlu0 %5134
    %5136 = vrot.lane.b32.xlu0 %v5091, 120
    %v5137 = vpop.permute.xlu0 %5136
    %5138 = vrot.lane.b32.xlu0 %v5092, 120
    %v5139 = vpop.permute.xlu0 %5138
    %5140 = vrot.lane.b32.xlu0 %v5093, 120
    %v5141 = vpop.permute.xlu0 %5140
    %v5158 = vadd.f32 %v5062, %v5111
    %v5159 = vadd.f32 %v5063, %v5113
    %v5160 = vadd.f32 %v5064, %v5115
    %v5161 = vadd.f32 %v5065, %v5117
    %v5162 = vadd.f32 %v5066, %v5119
    %v5163 = vadd.f32 %v5067, %v5121
    %v5164 = vadd.f32 %v5068, %v5123
    %v5165 = vadd.f32 %v5069, %v5125
    %v5166 = vadd.f32 %v5070, %v5127
    %v5167 = vadd.f32 %v5071, %v5129
    %v5168 = vadd.f32 %v5072, %v5131
    %v5169 = vadd.f32 %v5073, %v5133
    %v5170 = vadd.f32 %v5074, %v5135
    %v5171 = vadd.f32 %v5075, %v5137
    %v5172 = vadd.f32 %v5076, %v5139
    %v5173 = vadd.f32 %v5077, %v5141
    %v5174 = vmul.f32 %v487, %v4950
    %v5175 = vmul.f32 %v491, %v4950
    %v5176 = vmul.f32 %v495, %v4951
    %v5177 = vmul.f32 %v499, %v4951
    %v5178 = vmul.f32 %v503, %v4952
    %v5179 = vmul.f32 %v507, %v4952
    %v5180 = vmul.f32 %v511, %v4953
    %v5181 = vmul.f32 %v515, %v4953
    %v5182 = vmul.f32 %v519, %v4954
    %v5183 = vmul.f32 %v523, %v4954
    %v5184 = vmul.f32 %v527, %v4955
    %v5185 = vmul.f32 %v531, %v4955
    %v5186 = vmul.f32 %v535, %v4956
    %v5187 = vmul.f32 %v539, %v4956
    %v5188 = vmul.f32 %v543, %v4957
    %v5189 = vmul.f32 %v547, %v4957
    %5206 = vrot.lane.b32.xlu0 %v5174, 116
    %v5207 = vpop.permute.xlu0 %5206
    %5208 = vrot.lane.b32.xlu0 %v5175, 116
    %v5209 = vpop.permute.xlu0 %5208
    %5210 = vrot.lane.b32.xlu0 %v5176, 116
    %v5211 = vpop.permute.xlu0 %5210
    %5212 = vrot.lane.b32.xlu0 %v5177, 116
    %v5213 = vpop.permute.xlu0 %5212
    %5214 = vrot.lane.b32.xlu0 %v5178, 116
    %v5215 = vpop.permute.xlu0 %5214
    %5216 = vrot.lane.b32.xlu0 %v5179, 116
    %v5217 = vpop.permute.xlu0 %5216
    %5218 = vrot.lane.b32.xlu0 %v5180, 116
    %v5219 = vpop.permute.xlu0 %5218
    %5220 = vrot.lane.b32.xlu0 %v5181, 116
    %v5221 = vpop.permute.xlu0 %5220
    %5222 = vrot.lane.b32.xlu0 %v5182, 116
    %v5223 = vpop.permute.xlu0 %5222
    %5224 = vrot.lane.b32.xlu0 %v5183, 116
    %v5225 = vpop.permute.xlu0 %5224
    %5226 = vrot.lane.b32.xlu0 %v5184, 116
    %v5227 = vpop.permute.xlu0 %5226
    %5228 = vrot.lane.b32.xlu0 %v5185, 116
    %v5229 = vpop.permute.xlu0 %5228
    %5230 = vrot.lane.b32.xlu0 %v5186, 116
    %v5231 = vpop.permute.xlu0 %5230
    %5232 = vrot.lane.b32.xlu0 %v5187, 116
    %v5233 = vpop.permute.xlu0 %5232
    %5234 = vrot.lane.b32.xlu0 %v5188, 116
    %v5235 = vpop.permute.xlu0 %5234
    %5236 = vrot.lane.b32.xlu0 %v5189, 116
    %v5237 = vpop.permute.xlu0 %5236
    %v5254 = vadd.f32 %v5158, %v5207
    %v5255 = vadd.f32 %v5159, %v5209
    %v5256 = vadd.f32 %v5160, %v5211
    %v5257 = vadd.f32 %v5161, %v5213
    %v5258 = vadd.f32 %v5162, %v5215
    %v5259 = vadd.f32 %v5163, %v5217
    %v5260 = vadd.f32 %v5164, %v5219
    %v5261 = vadd.f32 %v5165, %v5221
    %v5262 = vadd.f32 %v5166, %v5223
    %v5263 = vadd.f32 %v5167, %v5225
    %v5264 = vadd.f32 %v5168, %v5227
    %v5265 = vadd.f32 %v5169, %v5229
    %v5266 = vadd.f32 %v5170, %v5231
    %v5267 = vadd.f32 %v5171, %v5233
    %v5268 = vadd.f32 %v5172, %v5235
    %v5269 = vadd.f32 %v5173, %v5237
    %v5270 = vld [vmem:[%s13] sm:$0xf]
    %v5271 = vld [vmem:[%s14] sm:$0x1]
    %5273 = vset.pattern.permute.xlu0 0
    %5274 = vperm.xlu0 %5273, %v5254
    %v5275 = vpop.permute.xlu0 %5274
    %5278 = vset.pattern.permute.xlu0 0
    %5279 = vperm.xlu0 %5278, %v5255
    %v5280 = vpop.permute.xlu0 %5279
    %5283 = vset.pattern.permute.xlu0 0
    %5284 = vperm.xlu0 %5283, %v5256
    %v5285 = vpop.permute.xlu0 %5284
    %5288 = vset.pattern.permute.xlu0 0
    %5289 = vperm.xlu0 %5288, %v5257
    %v5290 = vpop.permute.xlu0 %5289
    %5293 = vset.pattern.permute.xlu0 0
    %5294 = vperm.xlu0 %5293, %v5258
    %v5295 = vpop.permute.xlu0 %5294
    %5298 = vset.pattern.permute.xlu0 0
    %5299 = vperm.xlu0 %5298, %v5259
    %v5300 = vpop.permute.xlu0 %5299
    %5303 = vset.pattern.permute.xlu0 0
    %5304 = vperm.xlu0 %5303, %v5260
    %v5305 = vpop.permute.xlu0 %5304
    %5308 = vset.pattern.permute.xlu0 0
    %5309 = vperm.xlu0 %5308, %v5261
    %v5310 = vpop.permute.xlu0 %5309
    %5313 = vset.pattern.permute.xlu0 0
    %5314 = vperm.xlu0 %5313, %v5262
    %v5315 = vpop.permute.xlu0 %5314
    %5318 = vset.pattern.permute.xlu0 0
    %5319 = vperm.xlu0 %5318, %v5263
    %v5320 = vpop.permute.xlu0 %5319
    %5323 = vset.pattern.permute.xlu0 0
    %5324 = vperm.xlu0 %5323, %v5264
    %v5325 = vpop.permute.xlu0 %5324
    %5328 = vset.pattern.permute.xlu0 0
    %5329 = vperm.xlu0 %5328, %v5265
    %v5330 = vpop.permute.xlu0 %5329
    %5333 = vset.pattern.permute.xlu0 0
    %5334 = vperm.xlu0 %5333, %v5266
    %v5335 = vpop.permute.xlu0 %5334
    %5338 = vset.pattern.permute.xlu0 0
    %5339 = vperm.xlu0 %5338, %v5267
    %v5340 = vpop.permute.xlu0 %5339
    %5343 = vset.pattern.permute.xlu0 0
    %5344 = vperm.xlu0 %5343, %v5268
    %v5345 = vpop.permute.xlu0 %5344
    %5348 = vset.pattern.permute.xlu0 0
    %5349 = vperm.xlu0 %5348, %v5269
    %v5350 = vpop.permute.xlu0 %5349
    %v5352 = vperm.slane %v5270, 0
    %v5353 = vmul.f32 %v5275, %v5352
    %v5354 = vmul.f32 %v5280, %v5352
    %v5355 = vmul.f32 %v5285, %v5352
    %v5356 = vmul.f32 %v5290, %v5352
    %v5357 = vmul.f32 %v5295, %v5352
    %v5358 = vmul.f32 %v5300, %v5352
    %v5359 = vmul.f32 %v5305, %v5352
    %v5360 = vmul.f32 %v5310, %v5352
    %v5361 = vmul.f32 %v5315, %v5352
    %v5362 = vmul.f32 %v5320, %v5352
    %v5363 = vmul.f32 %v5325, %v5352
    %v5364 = vmul.f32 %v5330, %v5352
    %v5365 = vmul.f32 %v5335, %v5352
    %v5366 = vmul.f32 %v5340, %v5352
    %v5367 = vmul.f32 %v5345, %v5352
    %v5368 = vmul.f32 %v5350, %v5352
    %5369 = vset.pattern.permute.xlu0 1
    %5370 = vperm.xlu0 %5369, %v5254
    %v5371 = vpop.permute.xlu0 %5370
    %5373 = vset.pattern.permute.xlu0 1
    %5374 = vperm.xlu0 %5373, %v5255
    %v5375 = vpop.permute.xlu0 %5374
    %5377 = vset.pattern.permute.xlu0 1
    %5378 = vperm.xlu0 %5377, %v5256
    %v5379 = vpop.permute.xlu0 %5378
    %5381 = vset.pattern.permute.xlu0 1
    %5382 = vperm.xlu0 %5381, %v5257
    %v5383 = vpop.permute.xlu0 %5382
    %5385 = vset.pattern.permute.xlu0 1
    %5386 = vperm.xlu0 %5385, %v5258
    %v5387 = vpop.permute.xlu0 %5386
    %5389 = vset.pattern.permute.xlu0 1
    %5390 = vperm.xlu0 %5389, %v5259
    %v5391 = vpop.permute.xlu0 %5390
    %5393 = vset.pattern.permute.xlu0 1
    %5394 = vperm.xlu0 %5393, %v5260
    %v5395 = vpop.permute.xlu0 %5394
    %5397 = vset.pattern.permute.xlu0 1
    %5398 = vperm.xlu0 %5397, %v5261
    %v5399 = vpop.permute.xlu0 %5398
    %5401 = vset.pattern.permute.xlu0 1
    %5402 = vperm.xlu0 %5401, %v5262
    %v5403 = vpop.permute.xlu0 %5402
    %5405 = vset.pattern.permute.xlu0 1
    %5406 = vperm.xlu0 %5405, %v5263
    %v5407 = vpop.permute.xlu0 %5406
    %5409 = vset.pattern.permute.xlu0 1
    %5410 = vperm.xlu0 %5409, %v5264
    %v5411 = vpop.permute.xlu0 %5410
    %5413 = vset.pattern.permute.xlu0 1
    %5414 = vperm.xlu0 %5413, %v5265
    %v5415 = vpop.permute.xlu0 %5414
    %5417 = vset.pattern.permute.xlu0 1
    %5418 = vperm.xlu0 %5417, %v5266
    %v5419 = vpop.permute.xlu0 %5418
    %5421 = vset.pattern.permute.xlu0 1
    %5422 = vperm.xlu0 %5421, %v5267
    %v5423 = vpop.permute.xlu0 %5422
    %5425 = vset.pattern.permute.xlu0 1
    %5426 = vperm.xlu0 %5425, %v5268
    %v5427 = vpop.permute.xlu0 %5426
    %5429 = vset.pattern.permute.xlu0 1
    %5430 = vperm.xlu0 %5429, %v5269
    %v5431 = vpop.permute.xlu0 %5430
    %v5433 = vperm.slane %v5270, 1
    %v5434 = vmul.f32 %v5371, %v5433
    %v5435 = vmul.f32 %v5375, %v5433
    %v5436 = vmul.f32 %v5379, %v5433
    %v5437 = vmul.f32 %v5383, %v5433
    %v5438 = vmul.f32 %v5387, %v5433
    %v5439 = vmul.f32 %v5391, %v5433
    %v5440 = vmul.f32 %v5395, %v5433
    %v5441 = vmul.f32 %v5399, %v5433
    %v5442 = vmul.f32 %v5403, %v5433
    %v5443 = vmul.f32 %v5407, %v5433
    %v5444 = vmul.f32 %v5411, %v5433
    %v5445 = vmul.f32 %v5415, %v5433
    %v5446 = vmul.f32 %v5419, %v5433
    %v5447 = vmul.f32 %v5423, %v5433
    %v5448 = vmul.f32 %v5427, %v5433
    %v5449 = vmul.f32 %v5431, %v5433
    %v5450 = vadd.f32 %v5353, %v5434
    %v5451 = vadd.f32 %v5354, %v5435
    %v5452 = vadd.f32 %v5355, %v5436
    %v5453 = vadd.f32 %v5356, %v5437
    %v5454 = vadd.f32 %v5357, %v5438
    %v5455 = vadd.f32 %v5358, %v5439
    %v5456 = vadd.f32 %v5359, %v5440
    %v5457 = vadd.f32 %v5360, %v5441
    %v5458 = vadd.f32 %v5361, %v5442
    %v5459 = vadd.f32 %v5362, %v5443
    %v5460 = vadd.f32 %v5363, %v5444
    %v5461 = vadd.f32 %v5364, %v5445
    %v5462 = vadd.f32 %v5365, %v5446
    %v5463 = vadd.f32 %v5366, %v5447
    %v5464 = vadd.f32 %v5367, %v5448
    %v5465 = vadd.f32 %v5368, %v5449
    %5466 = vset.pattern.permute.xlu0 2
    %5467 = vperm.xlu0 %5466, %v5254
    %v5468 = vpop.permute.xlu0 %5467
    %5470 = vset.pattern.permute.xlu0 2
    %5471 = vperm.xlu0 %5470, %v5255
    %v5472 = vpop.permute.xlu0 %5471
    %5474 = vset.pattern.permute.xlu0 2
    %5475 = vperm.xlu0 %5474, %v5256
    %v5476 = vpop.permute.xlu0 %5475
    %5478 = vset.pattern.permute.xlu0 2
    %5479 = vperm.xlu0 %5478, %v5257
    %v5480 = vpop.permute.xlu0 %5479
    %5482 = vset.pattern.permute.xlu0 2
    %5483 = vperm.xlu0 %5482, %v5258
    %v5484 = vpop.permute.xlu0 %5483
    %5486 = vset.pattern.permute.xlu0 2
    %5487 = vperm.xlu0 %5486, %v5259
    %v5488 = vpop.permute.xlu0 %5487
    %5490 = vset.pattern.permute.xlu0 2
    %5491 = vperm.xlu0 %5490, %v5260
    %v5492 = vpop.permute.xlu0 %5491
    %5494 = vset.pattern.permute.xlu0 2
    %5495 = vperm.xlu0 %5494, %v5261
    %v5496 = vpop.permute.xlu0 %5495
    %5498 = vset.pattern.permute.xlu0 2
    %5499 = vperm.xlu0 %5498, %v5262
    %v5500 = vpop.permute.xlu0 %5499
    %5502 = vset.pattern.permute.xlu0 2
    %5503 = vperm.xlu0 %5502, %v5263
    %v5504 = vpop.permute.xlu0 %5503
    %5506 = vset.pattern.permute.xlu0 2
    %5507 = vperm.xlu0 %5506, %v5264
    %v5508 = vpop.permute.xlu0 %5507
    %5510 = vset.pattern.permute.xlu0 2
    %5511 = vperm.xlu0 %5510, %v5265
    %v5512 = vpop.permute.xlu0 %5511
    %5514 = vset.pattern.permute.xlu0 2
    %5515 = vperm.xlu0 %5514, %v5266
    %v5516 = vpop.permute.xlu0 %5515
    %5518 = vset.pattern.permute.xlu0 2
    %5519 = vperm.xlu0 %5518, %v5267
    %v5520 = vpop.permute.xlu0 %5519
    %5522 = vset.pattern.permute.xlu0 2
    %5523 = vperm.xlu0 %5522, %v5268
    %v5524 = vpop.permute.xlu0 %5523
    %5526 = vset.pattern.permute.xlu0 2
    %5527 = vperm.xlu0 %5526, %v5269
    %v5528 = vpop.permute.xlu0 %5527
    %v5530 = vperm.slane %v5270, 2
    %v5531 = vmul.f32 %v5468, %v5530
    %v5532 = vmul.f32 %v5472, %v5530
    %v5533 = vmul.f32 %v5476, %v5530
    %v5534 = vmul.f32 %v5480, %v5530
    %v5535 = vmul.f32 %v5484, %v5530
    %v5536 = vmul.f32 %v5488, %v5530
    %v5537 = vmul.f32 %v5492, %v5530
    %v5538 = vmul.f32 %v5496, %v5530
    %v5539 = vmul.f32 %v5500, %v5530
    %v5540 = vmul.f32 %v5504, %v5530
    %v5541 = vmul.f32 %v5508, %v5530
    %v5542 = vmul.f32 %v5512, %v5530
    %v5543 = vmul.f32 %v5516, %v5530
    %v5544 = vmul.f32 %v5520, %v5530
    %v5545 = vmul.f32 %v5524, %v5530
    %v5546 = vmul.f32 %v5528, %v5530
    %v5547 = vadd.f32 %v5450, %v5531
    %v5548 = vadd.f32 %v5451, %v5532
    %v5549 = vadd.f32 %v5452, %v5533
    %v5550 = vadd.f32 %v5453, %v5534
    %v5551 = vadd.f32 %v5454, %v5535
    %v5552 = vadd.f32 %v5455, %v5536
    %v5553 = vadd.f32 %v5456, %v5537
    %v5554 = vadd.f32 %v5457, %v5538
    %v5555 = vadd.f32 %v5458, %v5539
    %v5556 = vadd.f32 %v5459, %v5540
    %v5557 = vadd.f32 %v5460, %v5541
    %v5558 = vadd.f32 %v5461, %v5542
    %v5559 = vadd.f32 %v5462, %v5543
    %v5560 = vadd.f32 %v5463, %v5544
    %v5561 = vadd.f32 %v5464, %v5545
    %v5562 = vadd.f32 %v5465, %v5546
    %5563 = vset.pattern.permute.xlu0 3
    %5564 = vperm.xlu0 %5563, %v5254
    %v5565 = vpop.permute.xlu0 %5564
    %5567 = vset.pattern.permute.xlu0 3
    %5568 = vperm.xlu0 %5567, %v5255
    %v5569 = vpop.permute.xlu0 %5568
    %5571 = vset.pattern.permute.xlu0 3
    %5572 = vperm.xlu0 %5571, %v5256
    %v5573 = vpop.permute.xlu0 %5572
    %5575 = vset.pattern.permute.xlu0 3
    %5576 = vperm.xlu0 %5575, %v5257
    %v5577 = vpop.permute.xlu0 %5576
    %5579 = vset.pattern.permute.xlu0 3
    %5580 = vperm.xlu0 %5579, %v5258
    %v5581 = vpop.permute.xlu0 %5580
    %5583 = vset.pattern.permute.xlu0 3
    %5584 = vperm.xlu0 %5583, %v5259
    %v5585 = vpop.permute.xlu0 %5584
    %5587 = vset.pattern.permute.xlu0 3
    %5588 = vperm.xlu0 %5587, %v5260
    %v5589 = vpop.permute.xlu0 %5588
    %5591 = vset.pattern.permute.xlu0 3
    %5592 = vperm.xlu0 %5591, %v5261
    %v5593 = vpop.permute.xlu0 %5592
    %5595 = vset.pattern.permute.xlu0 3
    %5596 = vperm.xlu0 %5595, %v5262
    %v5597 = vpop.permute.xlu0 %5596
    %5599 = vset.pattern.permute.xlu0 3
    %5600 = vperm.xlu0 %5599, %v5263
    %v5601 = vpop.permute.xlu0 %5600
    %5603 = vset.pattern.permute.xlu0 3
    %5604 = vperm.xlu0 %5603, %v5264
    %v5605 = vpop.permute.xlu0 %5604
    %5607 = vset.pattern.permute.xlu0 3
    %5608 = vperm.xlu0 %5607, %v5265
    %v5609 = vpop.permute.xlu0 %5608
    %5611 = vset.pattern.permute.xlu0 3
    %5612 = vperm.xlu0 %5611, %v5266
    %v5613 = vpop.permute.xlu0 %5612
    %5615 = vset.pattern.permute.xlu0 3
    %5616 = vperm.xlu0 %5615, %v5267
    %v5617 = vpop.permute.xlu0 %5616
    %5619 = vset.pattern.permute.xlu0 3
    %5620 = vperm.xlu0 %5619, %v5268
    %v5621 = vpop.permute.xlu0 %5620
    %5623 = vset.pattern.permute.xlu0 3
    %5624 = vperm.xlu0 %5623, %v5269
    %v5625 = vpop.permute.xlu0 %5624
    %v5627 = vperm.slane %v5270, 3
    %v5628 = vmul.f32 %v5565, %v5627
    %v5629 = vmul.f32 %v5569, %v5627
    %v5630 = vmul.f32 %v5573, %v5627
    %v5631 = vmul.f32 %v5577, %v5627
    %v5632 = vmul.f32 %v5581, %v5627
    %v5633 = vmul.f32 %v5585, %v5627
    %v5634 = vmul.f32 %v5589, %v5627
    %v5635 = vmul.f32 %v5593, %v5627
    %v5636 = vmul.f32 %v5597, %v5627
    %v5637 = vmul.f32 %v5601, %v5627
    %v5638 = vmul.f32 %v5605, %v5627
    %v5639 = vmul.f32 %v5609, %v5627
    %v5640 = vmul.f32 %v5613, %v5627
    %v5641 = vmul.f32 %v5617, %v5627
    %v5642 = vmul.f32 %v5621, %v5627
    %v5643 = vmul.f32 %v5625, %v5627
    %v5644 = vadd.f32 %v5547, %v5628
    %v5645 = vadd.f32 %v5548, %v5629
    %v5646 = vadd.f32 %v5549, %v5630
    %v5647 = vadd.f32 %v5550, %v5631
    %v5648 = vadd.f32 %v5551, %v5632
    %v5649 = vadd.f32 %v5552, %v5633
    %v5650 = vadd.f32 %v5553, %v5634
    %v5651 = vadd.f32 %v5554, %v5635
    %v5652 = vadd.f32 %v5555, %v5636
    %v5653 = vadd.f32 %v5556, %v5637
    %v5654 = vadd.f32 %v5557, %v5638
    %v5655 = vadd.f32 %v5558, %v5639
    %v5656 = vadd.f32 %v5559, %v5640
    %v5657 = vadd.f32 %v5560, %v5641
    %v5658 = vadd.f32 %v5561, %v5642
    %v5659 = vadd.f32 %v5562, %v5643
    %v5661 = vperm.slane %v5271, 0
    %v5663 = vadd.f32 %v5644, %v5661
    %v5664 = vadd.f32 %v5645, %v5661
    %v5665 = vadd.f32 %v5646, %v5661
    %v5666 = vadd.f32 %v5647, %v5661
    %v5667 = vadd.f32 %v5648, %v5661
    %v5668 = vadd.f32 %v5649, %v5661
    %v5669 = vadd.f32 %v5650, %v5661
    %v5670 = vadd.f32 %v5651, %v5661
    %v5671 = vadd.f32 %v5652, %v5661
    %v5672 = vadd.f32 %v5653, %v5661
    %v5673 = vadd.f32 %v5654, %v5661
    %v5674 = vadd.f32 %v5655, %v5661
    %v5675 = vadd.f32 %v5656, %v5661
    %v5676 = vadd.f32 %v5657, %v5661
    %v5677 = vadd.f32 %v5658, %v5661
    %v5678 = vadd.f32 %v5659, %v5661
    %v5679 = vmax.f32 %v5663, 0.0
    %v5680 = vmax.f32 %v5664, 0.0
    %v5681 = vmax.f32 %v5665, 0.0
    %v5682 = vmax.f32 %v5666, 0.0
    %v5683 = vmax.f32 %v5667, 0.0
    %v5684 = vmax.f32 %v5668, 0.0
    %v5685 = vmax.f32 %v5669, 0.0
    %v5686 = vmax.f32 %v5670, 0.0
    %v5687 = vmax.f32 %v5671, 0.0
    %v5688 = vmax.f32 %v5672, 0.0
    %v5689 = vmax.f32 %v5673, 0.0
    %v5690 = vmax.f32 %v5674, 0.0
    %v5691 = vmax.f32 %v5675, 0.0
    %v5692 = vmax.f32 %v5676, 0.0
    %v5693 = vmax.f32 %v5677, 0.0
    %v5694 = vmax.f32 %v5678, 0.0
    %v5695 = vld [vmem:[%s15] sm:$0xf]
    %v5696 = vld [vmem:[%s15 + $0x4] sm:$0xf]
    %v5697 = vld [vmem:[%s15 + $0x8] sm:$0xf]
    %v5698 = vld [vmem:[%s15 + $0xc] sm:$0xf]
    %v5699 = vld [vmem:[%s15 + $0x10] sm:$0xf]
    %v5700 = vld [vmem:[%s15 + $0x14] sm:$0xf]
    %v5701 = vld [vmem:[%s15 + $0x18] sm:$0xf]
    %v5702 = vld [vmem:[%s15 + $0x1c] sm:$0xf]
    %v5703 = vpack.c.bf16 %v5680, %v5679
    %v5704 = vpack.c.bf16 %v5682, %v5681
    %v5705 = vpack.c.bf16 %v5684, %v5683
    %v5706 = vpack.c.bf16 %v5686, %v5685
    %v5707 = vpack.c.bf16 %v5688, %v5687
    %v5708 = vpack.c.bf16 %v5690, %v5689
    %v5709 = vpack.c.bf16 %v5692, %v5691
    %v5710 = vpack.c.bf16 %v5694, %v5693
    %v5711 = vld [vmem:[%s16] sm:$0x1]
    %v5713 = vperm.slane %v5711, 0
    %v5723 = vunpack.c.l.b16 %v5695
    %v5724 = vunpack.c.l.b16 %v5696
    %v5725 = vunpack.c.l.b16 %v5697
    %v5726 = vunpack.c.l.b16 %v5698
    %v5727 = vunpack.c.l.b16 %v5699
    %v5728 = vunpack.c.l.b16 %v5700
    %v5729 = vunpack.c.l.b16 %v5701
    %v5730 = vunpack.c.l.b16 %v5702
    %v5731 = vpack.c.b16 %v5724, %v5723
    %v5732 = vpack.c.b16 %v5726, %v5725
    %v5733 = vpack.c.b16 %v5728, %v5727
    %v5734 = vpack.c.b16 %v5730, %v5729
    %v5740 = vsel %vm661, %v5703, 0
    %v5743 = vsel %vm661, %v5704, 0
    %v5746 = vsel %vm661, %v5705, 0
    %v5749 = vsel %vm661, %v5706, 0
    %v5752 = vsel %vm661, %v5707, 0
    %v5755 = vsel %vm661, %v5708, 0
    %v5758 = vsel %vm661, %v5709, 0
    %v5761 = vsel %vm661, %v5710, 0
    %5763 = vmatpush.bf16.msra.mxu0 0
    %5764 = vmatpush.bf16.msra.mxu0 0
    %5765 = vmatpush.bf16.msra.mxu0 0
    %5766 = vmatpush.bf16.msra.mxu0 0
    %5767 = vmatpush.bf16.msra.mxu0 %v5734
    %5768 = vmatpush.bf16.msra.mxu0 %v5733
    %5769 = vmatpush.bf16.msra.mxu0 %v5732
    %5770 = vmatpush.bf16.msra.mxu0 %v5731
    %5771 = vmatmul.bf16.gmra.mxu0 %v5740
    %v5772 = vpop.f32.mrf.mxu0
    %v5773 = vadd.f32 %v5713, %v5772
    %v5774 = vpop.f32.mrf.mxu0
    %v5775 = vadd.f32 %v5713, %v5774
    %5776 = vmatmul.bf16.gmra.mxu0 %v5743
    %v5777 = vpop.f32.mrf.mxu0
    %v5778 = vadd.f32 %v5713, %v5777
    %v5779 = vpop.f32.mrf.mxu0
    %v5780 = vadd.f32 %v5713, %v5779
    %5781 = vmatmul.bf16.gmra.mxu0 %v5746
    %v5782 = vpop.f32.mrf.mxu0
    %v5783 = vadd.f32 %v5713, %v5782
    %v5784 = vpop.f32.mrf.mxu0
    %v5785 = vadd.f32 %v5713, %v5784
    %5786 = vmatmul.bf16.gmra.mxu0 %v5749
    %v5787 = vpop.f32.mrf.mxu0
    %v5788 = vadd.f32 %v5713, %v5787
    %v5789 = vpop.f32.mrf.mxu0
    %v5790 = vadd.f32 %v5713, %v5789
    %5791 = vmatmul.bf16.gmra.mxu0 %v5752
    %v5792 = vpop.f32.mrf.mxu0
    %v5793 = vadd.f32 %v5713, %v5792
    %v5794 = vpop.f32.mrf.mxu0
    %v5795 = vadd.f32 %v5713, %v5794
    %5796 = vmatmul.bf16.gmra.mxu0 %v5755
    %v5797 = vpop.f32.mrf.mxu0
    %v5798 = vadd.f32 %v5713, %v5797
    %v5799 = vpop.f32.mrf.mxu0
    %v5800 = vadd.f32 %v5713, %v5799
    %5801 = vmatmul.bf16.gmra.mxu0 %v5758
    %v5802 = vpop.f32.mrf.mxu0
    %v5803 = vadd.f32 %v5713, %v5802
    %v5804 = vpop.f32.mrf.mxu0
    %v5805 = vadd.f32 %v5713, %v5804
    %5806 = vmatmul.bf16.gmra.mxu0 %v5761
    %v5807 = vpop.f32.mrf.mxu0
    %v5808 = vadd.f32 %v5713, %v5807
    %v5809 = vpop.f32.mrf.mxu0
    %v5810 = vadd.f32 %v5713, %v5809
    %5811 = vdwg.mxu0
    %v5812 = vmax.f32 %v5773, 0.0
    %v5813 = vmax.f32 %v5775, 0.0
    %v5814 = vmax.f32 %v5778, 0.0
    %v5815 = vmax.f32 %v5780, 0.0
    %v5816 = vmax.f32 %v5783, 0.0
    %v5817 = vmax.f32 %v5785, 0.0
    %v5818 = vmax.f32 %v5788, 0.0
    %v5819 = vmax.f32 %v5790, 0.0
    %v5820 = vmax.f32 %v5793, 0.0
    %v5821 = vmax.f32 %v5795, 0.0
    %v5822 = vmax.f32 %v5798, 0.0
    %v5823 = vmax.f32 %v5800, 0.0
    %v5824 = vmax.f32 %v5803, 0.0
    %v5825 = vmax.f32 %v5805, 0.0
    %v5826 = vmax.f32 %v5808, 0.0
    %v5827 = vmax.f32 %v5810, 0.0
    %v5828 = vld [vmem:[#allocation8] sm:$0xff]
    %v5829 = vld [vmem:[#allocation8 + $0x8] sm:$0xff]
    %v5830 = vld [vmem:[#allocation8 + $0x10] sm:$0xff]
    %v5831 = vld [vmem:[#allocation8 + $0x18] sm:$0xff]
    %v5832 = vld [vmem:[#allocation8 + $0x20] sm:$0xff]
    %v5833 = vld [vmem:[#allocation8 + $0x28] sm:$0xff]
    %v5834 = vld [vmem:[#allocation8 + $0x30] sm:$0xff]
    %v5835 = vld [vmem:[#allocation8 + $0x38] sm:$0xff]
    %v5836 = vld [vmem:[#allocation8 + $0x40] sm:$0xff]
    %v5837 = vld [vmem:[#allocation8 + $0x48] sm:$0xff]
    %v5838 = vld [vmem:[#allocation8 + $0x50] sm:$0xff]
    %v5839 = vld [vmem:[#allocation8 + $0x58] sm:$0xff]
    %v5840 = vld [vmem:[#allocation8 + $0x60] sm:$0xff]
    %v5841 = vld [vmem:[#allocation8 + $0x68] sm:$0xff]
    %v5842 = vld [vmem:[#allocation8 + $0x70] sm:$0xff]
    %v5843 = vld [vmem:[#allocation8 + $0x78] sm:$0xff]
    %v5844 = vld [vmem:[#allocation8 + $0x80] sm:$0xff]
    %v5845 = vld [vmem:[#allocation8 + $0x88] sm:$0xff]
    %v5846 = vld [vmem:[#allocation8 + $0x90] sm:$0xff]
    %v5847 = vld [vmem:[#allocation8 + $0x98] sm:$0xff]
    %v5848 = vld [vmem:[#allocation8 + $0xa0] sm:$0xff]
    %v5849 = vld [vmem:[#allocation8 + $0xa8] sm:$0xff]
    %v5850 = vld [vmem:[#allocation8 + $0xb0] sm:$0xff]
    %v5851 = vld [vmem:[#allocation8 + $0xb8] sm:$0xff]
    %v5852 = vld [vmem:[#allocation8 + $0xc0] sm:$0xff]
    %v5853 = vld [vmem:[#allocation8 + $0xc8] sm:$0xff]
    %v5854 = vld [vmem:[#allocation8 + $0xd0] sm:$0xff]
    %v5855 = vld [vmem:[#allocation8 + $0xd8] sm:$0xff]
    %v5856 = vld [vmem:[#allocation8 + $0xe0] sm:$0xff]
    %v5857 = vld [vmem:[#allocation8 + $0xe8] sm:$0xff]
    %v5858 = vld [vmem:[#allocation8 + $0xf0] sm:$0xff]
    %v5859 = vld [vmem:[#allocation8 + $0xf8] sm:$0xff]
    %v5860 = vld [vmem:[#allocation8 + $0x100] sm:$0xff]
    %v5861 = vld [vmem:[#allocation8 + $0x108] sm:$0xff]
    %v5862 = vld [vmem:[#allocation8 + $0x110] sm:$0xff]
    %v5863 = vld [vmem:[#allocation8 + $0x118] sm:$0xff]
    %v5864 = vld [vmem:[#allocation8 + $0x120] sm:$0xff]
    %v5865 = vld [vmem:[#allocation8 + $0x128] sm:$0xff]
    %v5866 = vld [vmem:[#allocation8 + $0x130] sm:$0xff]
    %v5867 = vld [vmem:[#allocation8 + $0x138] sm:$0xff]
    %v5868 = vld [vmem:[#allocation8 + $0x140] sm:$0xff]
    %v5869 = vld [vmem:[#allocation8 + $0x148] sm:$0xff]
    %v5870 = vld [vmem:[#allocation8 + $0x150] sm:$0xff]
    %v5871 = vld [vmem:[#allocation8 + $0x158] sm:$0xff]
    %v5872 = vld [vmem:[#allocation8 + $0x160] sm:$0xff]
    %v5873 = vld [vmem:[#allocation8 + $0x168] sm:$0xff]
    %v5874 = vld [vmem:[#allocation8 + $0x170] sm:$0xff]
    %v5875 = vld [vmem:[#allocation8 + $0x178] sm:$0xff]
    %v5876 = vld [vmem:[#allocation8 + $0x180] sm:$0xff]
    %v5877 = vld [vmem:[#allocation8 + $0x188] sm:$0xff]
    %v5878 = vld [vmem:[#allocation8 + $0x190] sm:$0xff]
    %v5879 = vld [vmem:[#allocation8 + $0x198] sm:$0xff]
    %v5880 = vld [vmem:[#allocation8 + $0x1a0] sm:$0xff]
    %v5881 = vld [vmem:[#allocation8 + $0x1a8] sm:$0xff]
    %v5882 = vld [vmem:[#allocation8 + $0x1b0] sm:$0xff]
    %v5883 = vld [vmem:[#allocation8 + $0x1b8] sm:$0xff]
    %v5884 = vld [vmem:[#allocation8 + $0x1c0] sm:$0xff]
    %v5885 = vld [vmem:[#allocation8 + $0x1c8] sm:$0xff]
    %v5886 = vld [vmem:[#allocation8 + $0x1d0] sm:$0xff]
    %v5887 = vld [vmem:[#allocation8 + $0x1d8] sm:$0xff]
    %v5888 = vld [vmem:[#allocation8 + $0x1e0] sm:$0xff]
    %v5889 = vld [vmem:[#allocation8 + $0x1e8] sm:$0xff]
    %v5890 = vld [vmem:[#allocation8 + $0x1f0] sm:$0xff]
    %v5891 = vld [vmem:[#allocation8 + $0x1f8] sm:$0xff]
    %v5892 = vpack.c.bf16 %v5813, %v5812
    %v5893 = vpack.c.bf16 %v5815, %v5814
    %v5894 = vpack.c.bf16 %v5817, %v5816
    %v5895 = vpack.c.bf16 %v5819, %v5818
    %v5896 = vpack.c.bf16 %v5821, %v5820
    %v5897 = vpack.c.bf16 %v5823, %v5822
    %v5898 = vpack.c.bf16 %v5825, %v5824
    %v5899 = vpack.c.bf16 %v5827, %v5826
    %v5900 = vld [vmem:[%s18] sm:$0xff]
    %v5902 = vperm.slane %v5900, 0
    %v5903 = vperm.slane %v5900, 1
    %v5904 = vperm.slane %v5900, 2
    %v5905 = vperm.slane %v5900, 3
    %v5906 = vperm.slane %v5900, 4
    %v5907 = vperm.slane %v5900, 5
    %v5908 = vperm.slane %v5900, 6
    %v5909 = vperm.slane %v5900, 7
    %v5982 = vunpack.c.l.b16 %v5828
    %v5983 = vunpack.c.h.b16 %v5828
    %v5984 = vunpack.c.l.b16 %v5829
    %v5985 = vunpack.c.h.b16 %v5829
    %v5986 = vunpack.c.l.b16 %v5830
    %v5987 = vunpack.c.h.b16 %v5830
    %v5988 = vunpack.c.l.b16 %v5831
    %v5989 = vunpack.c.h.b16 %v5831
    %v5990 = vunpack.c.l.b16 %v5832
    %v5991 = vunpack.c.h.b16 %v5832
    %v5992 = vunpack.c.l.b16 %v5833
    %v5993 = vunpack.c.h.b16 %v5833
    %v5994 = vunpack.c.l.b16 %v5834
    %v5995 = vunpack.c.h.b16 %v5834
    %v5996 = vunpack.c.l.b16 %v5835
    %v5997 = vunpack.c.h.b16 %v5835
    %v5998 = vunpack.c.l.b16 %v5836
    %v5999 = vunpack.c.h.b16 %v5836
    %v6000 = vunpack.c.l.b16 %v5837
    %v6001 = vunpack.c.h.b16 %v5837
    %v6002 = vunpack.c.l.b16 %v5838
    %v6003 = vunpack.c.h.b16 %v5838
    %v6004 = vunpack.c.l.b16 %v5839
    %v6005 = vunpack.c.h.b16 %v5839
    %v6006 = vunpack.c.l.b16 %v5840
    %v6007 = vunpack.c.h.b16 %v5840
    %v6008 = vunpack.c.l.b16 %v5841
    %v6009 = vunpack.c.h.b16 %v5841
    %v6010 = vunpack.c.l.b16 %v5842
    %v6011 = vunpack.c.h.b16 %v5842
    %v6012 = vunpack.c.l.b16 %v5843
    %v6013 = vunpack.c.h.b16 %v5843
    %v6014 = vunpack.c.l.b16 %v5844
    %v6015 = vunpack.c.h.b16 %v5844
    %v6016 = vunpack.c.l.b16 %v5845
    %v6017 = vunpack.c.h.b16 %v5845
    %v6018 = vunpack.c.l.b16 %v5846
    %v6019 = vunpack.c.h.b16 %v5846
    %v6020 = vunpack.c.l.b16 %v5847
    %v6021 = vunpack.c.h.b16 %v5847
    %v6022 = vunpack.c.l.b16 %v5848
    %v6023 = vunpack.c.h.b16 %v5848
    %v6024 = vunpack.c.l.b16 %v5849
    %v6025 = vunpack.c.h.b16 %v5849
    %v6026 = vunpack.c.l.b16 %v5850
    %v6027 = vunpack.c.h.b16 %v5850
    %v6028 = vunpack.c.l.b16 %v5851
    %v6029 = vunpack.c.h.b16 %v5851
    %v6030 = vunpack.c.l.b16 %v5852
    %v6031 = vunpack.c.h.b16 %v5852
    %v6032 = vunpack.c.l.b16 %v5853
    %v6033 = vunpack.c.h.b16 %v5853
    %v6034 = vunpack.c.l.b16 %v5854
    %v6035 = vunpack.c.h.b16 %v5854
    %v6036 = vunpack.c.l.b16 %v5855
    %v6037 = vunpack.c.h.b16 %v5855
    %v6038 = vunpack.c.l.b16 %v5856
    %v6039 = vunpack.c.h.b16 %v5856
    %v6040 = vunpack.c.l.b16 %v5857
    %v6041 = vunpack.c.h.b16 %v5857
    %v6042 = vunpack.c.l.b16 %v5858
    %v6043 = vunpack.c.h.b16 %v5858
    %v6044 = vunpack.c.l.b16 %v5859
    %v6045 = vunpack.c.h.b16 %v5859
    %v6046 = vunpack.c.l.b16 %v5860
    %v6047 = vunpack.c.h.b16 %v5860
    %v6048 = vunpack.c.l.b16 %v5861
    %v6049 = vunpack.c.h.b16 %v5861
    %v6050 = vunpack.c.l.b16 %v5862
    %v6051 = vunpack.c.h.b16 %v5862
    %v6052 = vunpack.c.l.b16 %v5863
    %v6053 = vunpack.c.h.b16 %v5863
    %v6054 = vunpack.c.l.b16 %v5864
    %v6055 = vunpack.c.h.b16 %v5864
    %v6056 = vunpack.c.l.b16 %v5865
    %v6057 = vunpack.c.h.b16 %v5865
    %v6058 = vunpack.c.l.b16 %v5866
    %v6059 = vunpack.c.h.b16 %v5866
    %v6060 = vunpack.c.l.b16 %v5867
    %v6061 = vunpack.c.h.b16 %v5867
    %v6062 = vunpack.c.l.b16 %v5868
    %v6063 = vunpack.c.h.b16 %v5868
    %v6064 = vunpack.c.l.b16 %v5869
    %v6065 = vunpack.c.h.b16 %v5869
    %v6066 = vunpack.c.l.b16 %v5870
    %v6067 = vunpack.c.h.b16 %v5870
    %v6068 = vunpack.c.l.b16 %v5871
    %v6069 = vunpack.c.h.b16 %v5871
    %v6070 = vunpack.c.l.b16 %v5872
    %v6071 = vunpack.c.h.b16 %v5872
    %v6072 = vunpack.c.l.b16 %v5873
    %v6073 = vunpack.c.h.b16 %v5873
    %v6074 = vunpack.c.l.b16 %v5874
    %v6075 = vunpack.c.h.b16 %v5874
    %v6076 = vunpack.c.l.b16 %v5875
    %v6077 = vunpack.c.h.b16 %v5875
    %v6078 = vunpack.c.l.b16 %v5876
    %v6079 = vunpack.c.h.b16 %v5876
    %v6080 = vunpack.c.l.b16 %v5877
    %v6081 = vunpack.c.h.b16 %v5877
    %v6082 = vunpack.c.l.b16 %v5878
    %v6083 = vunpack.c.h.b16 %v5878
    %v6084 = vunpack.c.l.b16 %v5879
    %v6085 = vunpack.c.h.b16 %v5879
    %v6086 = vunpack.c.l.b16 %v5880
    %v6087 = vunpack.c.h.b16 %v5880
    %v6088 = vunpack.c.l.b16 %v5881
    %v6089 = vunpack.c.h.b16 %v5881
    %v6090 = vunpack.c.l.b16 %v5882
    %v6091 = vunpack.c.h.b16 %v5882
    %v6092 = vunpack.c.l.b16 %v5883
    %v6093 = vunpack.c.h.b16 %v5883
    %v6094 = vunpack.c.l.b16 %v5884
    %v6095 = vunpack.c.h.b16 %v5884
    %v6096 = vunpack.c.l.b16 %v5885
    %v6097 = vunpack.c.h.b16 %v5885
    %v6098 = vunpack.c.l.b16 %v5886
    %v6099 = vunpack.c.h.b16 %v5886
    %v6100 = vunpack.c.l.b16 %v5887
    %v6101 = vunpack.c.h.b16 %v5887
    %v6102 = vunpack.c.l.b16 %v5888
    %v6103 = vunpack.c.h.b16 %v5888
    %v6104 = vunpack.c.l.b16 %v5889
    %v6105 = vunpack.c.h.b16 %v5889
    %v6106 = vunpack.c.l.b16 %v5890
    %v6107 = vunpack.c.h.b16 %v5890
    %v6108 = vunpack.c.l.b16 %v5891
    %v6109 = vunpack.c.h.b16 %v5891
    %v6110 = vpack.c.b16 %v5990, %v5982
    %v6111 = vpack.c.b16 %v5991, %v5983
    %v6112 = vpack.c.b16 %v5992, %v5984
    %v6113 = vpack.c.b16 %v5993, %v5985
    %v6114 = vpack.c.b16 %v5994, %v5986
    %v6115 = vpack.c.b16 %v5995, %v5987
    %v6116 = vpack.c.b16 %v5996, %v5988
    %v6117 = vpack.c.b16 %v5997, %v5989
    %v6118 = vpack.c.b16 %v6006, %v5998
    %v6119 = vpack.c.b16 %v6007, %v5999
    %v6120 = vpack.c.b16 %v6008, %v6000
    %v6121 = vpack.c.b16 %v6009, %v6001
    %v6122 = vpack.c.b16 %v6010, %v6002
    %v6123 = vpack.c.b16 %v6011, %v6003
    %v6124 = vpack.c.b16 %v6012, %v6004
    %v6125 = vpack.c.b16 %v6013, %v6005
    %v6126 = vpack.c.b16 %v6022, %v6014
    %v6127 = vpack.c.b16 %v6023, %v6015
    %v6128 = vpack.c.b16 %v6024, %v6016
    %v6129 = vpack.c.b16 %v6025, %v6017
    %v6130 = vpack.c.b16 %v6026, %v6018
    %v6131 = vpack.c.b16 %v6027, %v6019
    %v6132 = vpack.c.b16 %v6028, %v6020
    %v6133 = vpack.c.b16 %v6029, %v6021
    %v6134 = vpack.c.b16 %v6038, %v6030
    %v6135 = vpack.c.b16 %v6039, %v6031
    %v6136 = vpack.c.b16 %v6040, %v6032
    %v6137 = vpack.c.b16 %v6041, %v6033
    %v6138 = vpack.c.b16 %v6042, %v6034
    %v6139 = vpack.c.b16 %v6043, %v6035
    %v6140 = vpack.c.b16 %v6044, %v6036
    %v6141 = vpack.c.b16 %v6045, %v6037
    %v6142 = vpack.c.b16 %v6054, %v6046
    %v6143 = vpack.c.b16 %v6055, %v6047
    %v6144 = vpack.c.b16 %v6056, %v6048
    %v6145 = vpack.c.b16 %v6057, %v6049
    %v6146 = vpack.c.b16 %v6058, %v6050
    %v6147 = vpack.c.b16 %v6059, %v6051
    %v6148 = vpack.c.b16 %v6060, %v6052
    %v6149 = vpack.c.b16 %v6061, %v6053
    %v6150 = vpack.c.b16 %v6070, %v6062
    %v6151 = vpack.c.b16 %v6071, %v6063
    %v6152 = vpack.c.b16 %v6072, %v6064
    %v6153 = vpack.c.b16 %v6073, %v6065
    %v6154 = vpack.c.b16 %v6074, %v6066
    %v6155 = vpack.c.b16 %v6075, %v6067
    %v6156 = vpack.c.b16 %v6076, %v6068
    %v6157 = vpack.c.b16 %v6077, %v6069
    %v6158 = vpack.c.b16 %v6086, %v6078
    %v6159 = vpack.c.b16 %v6087, %v6079
    %v6160 = vpack.c.b16 %v6088, %v6080
    %v6161 = vpack.c.b16 %v6089, %v6081
    %v6162 = vpack.c.b16 %v6090, %v6082
    %v6163 = vpack.c.b16 %v6091, %v6083
    %v6164 = vpack.c.b16 %v6092, %v6084
    %v6165 = vpack.c.b16 %v6093, %v6085
    %v6166 = vpack.c.b16 %v6102, %v6094
    %v6167 = vpack.c.b16 %v6103, %v6095
    %v6168 = vpack.c.b16 %v6104, %v6096
    %v6169 = vpack.c.b16 %v6105, %v6097
    %v6170 = vpack.c.b16 %v6106, %v6098
    %v6171 = vpack.c.b16 %v6107, %v6099
    %v6172 = vpack.c.b16 %v6108, %v6100
    %v6173 = vpack.c.b16 %v6109, %v6101
    %6238 = vmatpush.bf16.msra.mxu0 %v6166
    %6239 = vmatpush.bf16.msra.mxu0 %v6158
    %6240 = vmatpush.bf16.msra.mxu0 %v6150
    %6241 = vmatpush.bf16.msra.mxu0 %v6142
    %6242 = vmatpush.bf16.msra.mxu0 %v6134
    %6243 = vmatpush.bf16.msra.mxu0 %v6126
    %6244 = vmatpush.bf16.msra.mxu0 %v6118
    %6245 = vmatpush.bf16.msra.mxu0 %v6110
    %6246 = vmatmul.bf16.gmra.mxu0 %v5892
    %v6247 = vpop.f32.mrf.mxu0
    %v6248 = vadd.f32 %v5902, %v6247
    %v6249 = vpop.f32.mrf.mxu0
    %v6250 = vadd.f32 %v5902, %v6249
    %6251 = vmatmul.bf16.gmra.mxu0 %v5893
    %v6252 = vpop.f32.mrf.mxu0
    %v6253 = vadd.f32 %v5902, %v6252
    %v6254 = vpop.f32.mrf.mxu0
    %v6255 = vadd.f32 %v5902, %v6254
    %6256 = vmatmul.bf16.gmra.mxu0 %v5894
    %v6257 = vpop.f32.mrf.mxu0
    %v6258 = vadd.f32 %v5902, %v6257
    %v6259 = vpop.f32.mrf.mxu0
    %v6260 = vadd.f32 %v5902, %v6259
    %6261 = vmatmul.bf16.gmra.mxu0 %v5895
    %v6262 = vpop.f32.mrf.mxu0
    %v6263 = vadd.f32 %v5902, %v6262
    %v6264 = vpop.f32.mrf.mxu0
    %v6265 = vadd.f32 %v5902, %v6264
    %6266 = vmatmul.bf16.gmra.mxu0 %v5896
    %v6267 = vpop.f32.mrf.mxu0
    %v6268 = vadd.f32 %v5902, %v6267
    %v6269 = vpop.f32.mrf.mxu0
    %v6270 = vadd.f32 %v5902, %v6269
    %6271 = vmatmul.bf16.gmra.mxu0 %v5897
    %v6272 = vpop.f32.mrf.mxu0
    %v6273 = vadd.f32 %v5902, %v6272
    %v6274 = vpop.f32.mrf.mxu0
    %v6275 = vadd.f32 %v5902, %v6274
    %6276 = vmatmul.bf16.gmra.mxu0 %v5898
    %v6277 = vpop.f32.mrf.mxu0
    %v6278 = vadd.f32 %v5902, %v6277
    %v6279 = vpop.f32.mrf.mxu0
    %v6280 = vadd.f32 %v5902, %v6279
    %6281 = vmatmul.bf16.gmra.mxu0 %v5899
    %v6282 = vpop.f32.mrf.mxu0
    %v6283 = vadd.f32 %v5902, %v6282
    %v6284 = vpop.f32.mrf.mxu0
    %v6285 = vadd.f32 %v5902, %v6284
    %6286 = vdwg.mxu0
    %6287 = vmatpush.bf16.msra.mxu0 %v6167
    %6288 = vmatpush.bf16.msra.mxu0 %v6159
    %6289 = vmatpush.bf16.msra.mxu0 %v6151
    %6290 = vmatpush.bf16.msra.mxu0 %v6143
    %6291 = vmatpush.bf16.msra.mxu0 %v6135
    %6292 = vmatpush.bf16.msra.mxu0 %v6127
    %6293 = vmatpush.bf16.msra.mxu0 %v6119
    %6294 = vmatpush.bf16.msra.mxu0 %v6111
    %6295 = vmatmul.bf16.gmra.mxu0 %v5892
    %v6296 = vpop.f32.mrf.mxu0
    %v6297 = vadd.f32 %v5903, %v6296
    %v6298 = vpop.f32.mrf.mxu0
    %v6299 = vadd.f32 %v5903, %v6298
    %6300 = vmatmul.bf16.gmra.mxu0 %v5893
    %v6301 = vpop.f32.mrf.mxu0
    %v6302 = vadd.f32 %v5903, %v6301
    %v6303 = vpop.f32.mrf.mxu0
    %v6304 = vadd.f32 %v5903, %v6303
    %6305 = vmatmul.bf16.gmra.mxu0 %v5894
    %v6306 = vpop.f32.mrf.mxu0
    %v6307 = vadd.f32 %v5903, %v6306
    %v6308 = vpop.f32.mrf.mxu0
    %v6309 = vadd.f32 %v5903, %v6308
    %6310 = vmatmul.bf16.gmra.mxu0 %v5895
    %v6311 = vpop.f32.mrf.mxu0
    %v6312 = vadd.f32 %v5903, %v6311
    %v6313 = vpop.f32.mrf.mxu0
    %v6314 = vadd.f32 %v5903, %v6313
    %6315 = vmatmul.bf16.gmra.mxu0 %v5896
    %v6316 = vpop.f32.mrf.mxu0
    %v6317 = vadd.f32 %v5903, %v6316
    %v6318 = vpop.f32.mrf.mxu0
    %v6319 = vadd.f32 %v5903, %v6318
    %6320 = vmatmul.bf16.gmra.mxu0 %v5897
    %v6321 = vpop.f32.mrf.mxu0
    %v6322 = vadd.f32 %v5903, %v6321
    %v6323 = vpop.f32.mrf.mxu0
    %v6324 = vadd.f32 %v5903, %v6323
    %6325 = vmatmul.bf16.gmra.mxu0 %v5898
    %v6326 = vpop.f32.mrf.mxu0
    %v6327 = vadd.f32 %v5903, %v6326
    %v6328 = vpop.f32.mrf.mxu0
    %v6329 = vadd.f32 %v5903, %v6328
    %6330 = vmatmul.bf16.gmra.mxu0 %v5899
    %v6331 = vpop.f32.mrf.mxu0
    %v6332 = vadd.f32 %v5903, %v6331
    %v6333 = vpop.f32.mrf.mxu0
    %v6334 = vadd.f32 %v5903, %v6333
    %6335 = vdwg.mxu0
    %6336 = vmatpush.bf16.msra.mxu0 %v6168
    %6337 = vmatpush.bf16.msra.mxu0 %v6160
    %6338 = vmatpush.bf16.msra.mxu0 %v6152
    %6339 = vmatpush.bf16.msra.mxu0 %v6144
    %6340 = vmatpush.bf16.msra.mxu0 %v6136
    %6341 = vmatpush.bf16.msra.mxu0 %v6128
    %6342 = vmatpush.bf16.msra.mxu0 %v6120
    %6343 = vmatpush.bf16.msra.mxu0 %v6112
    %6344 = vmatmul.bf16.gmra.mxu0 %v5892
    %v6345 = vpop.f32.mrf.mxu0
    %v6346 = vadd.f32 %v5904, %v6345
    %v6347 = vpop.f32.mrf.mxu0
    %v6348 = vadd.f32 %v5904, %v6347
    %6349 = vmatmul.bf16.gmra.mxu0 %v5893
    %v6350 = vpop.f32.mrf.mxu0
    %v6351 = vadd.f32 %v5904, %v6350
    %v6352 = vpop.f32.mrf.mxu0
    %v6353 = vadd.f32 %v5904, %v6352
    %6354 = vmatmul.bf16.gmra.mxu0 %v5894
    %v6355 = vpop.f32.mrf.mxu0
    %v6356 = vadd.f32 %v5904, %v6355
    %v6357 = vpop.f32.mrf.mxu0
    %v6358 = vadd.f32 %v5904, %v6357
    %6359 = vmatmul.bf16.gmra.mxu0 %v5895
    %v6360 = vpop.f32.mrf.mxu0
    %v6361 = vadd.f32 %v5904, %v6360
    %v6362 = vpop.f32.mrf.mxu0
    %v6363 = vadd.f32 %v5904, %v6362
    %6364 = vmatmul.bf16.gmra.mxu0 %v5896
    %v6365 = vpop.f32.mrf.mxu0
    %v6366 = vadd.f32 %v5904, %v6365
    %v6367 = vpop.f32.mrf.mxu0
    %v6368 = vadd.f32 %v5904, %v6367
    %6369 = vmatmul.bf16.gmra.mxu0 %v5897
    %v6370 = vpop.f32.mrf.mxu0
    %v6371 = vadd.f32 %v5904, %v6370
    %v6372 = vpop.f32.mrf.mxu0
    %v6373 = vadd.f32 %v5904, %v6372
    %6374 = vmatmul.bf16.gmra.mxu0 %v5898
    %v6375 = vpop.f32.mrf.mxu0
    %v6376 = vadd.f32 %v5904, %v6375
    %v6377 = vpop.f32.mrf.mxu0
    %v6378 = vadd.f32 %v5904, %v6377
    %6379 = vmatmul.bf16.gmra.mxu0 %v5899
    %v6380 = vpop.f32.mrf.mxu0
    %v6381 = vadd.f32 %v5904, %v6380
    %v6382 = vpop.f32.mrf.mxu0
    %v6383 = vadd.f32 %v5904, %v6382
    %6384 = vdwg.mxu0
    %6385 = vmatpush.bf16.msra.mxu0 %v6169
    %6386 = vmatpush.bf16.msra.mxu0 %v6161
    %6387 = vmatpush.bf16.msra.mxu0 %v6153
    %6388 = vmatpush.bf16.msra.mxu0 %v6145
    %6389 = vmatpush.bf16.msra.mxu0 %v6137
    %6390 = vmatpush.bf16.msra.mxu0 %v6129
    %6391 = vmatpush.bf16.msra.mxu0 %v6121
    %6392 = vmatpush.bf16.msra.mxu0 %v6113
    %6393 = vmatmul.bf16.gmra.mxu0 %v5892
    %v6394 = vpop.f32.mrf.mxu0
    %v6395 = vadd.f32 %v5905, %v6394
    %v6396 = vpop.f32.mrf.mxu0
    %v6397 = vadd.f32 %v5905, %v6396
    %6398 = vmatmul.bf16.gmra.mxu0 %v5893
    %v6399 = vpop.f32.mrf.mxu0
    %v6400 = vadd.f32 %v5905, %v6399
    %v6401 = vpop.f32.mrf.mxu0
    %v6402 = vadd.f32 %v5905, %v6401
    %6403 = vmatmul.bf16.gmra.mxu0 %v5894
    %v6404 = vpop.f32.mrf.mxu0
    %v6405 = vadd.f32 %v5905, %v6404
    %v6406 = vpop.f32.mrf.mxu0
    %v6407 = vadd.f32 %v5905, %v6406
    %6408 = vmatmul.bf16.gmra.mxu0 %v5895
    %v6409 = vpop.f32.mrf.mxu0
    %v6410 = vadd.f32 %v5905, %v6409
    %v6411 = vpop.f32.mrf.mxu0
    %v6412 = vadd.f32 %v5905, %v6411
    %6413 = vmatmul.bf16.gmra.mxu0 %v5896
    %v6414 = vpop.f32.mrf.mxu0
    %v6415 = vadd.f32 %v5905, %v6414
    %v6416 = vpop.f32.mrf.mxu0
    %v6417 = vadd.f32 %v5905, %v6416
    %6418 = vmatmul.bf16.gmra.mxu0 %v5897
    %v6419 = vpop.f32.mrf.mxu0
    %v6420 = vadd.f32 %v5905, %v6419
    %v6421 = vpop.f32.mrf.mxu0
    %v6422 = vadd.f32 %v5905, %v6421
    %6423 = vmatmul.bf16.gmra.mxu0 %v5898
    %v6424 = vpop.f32.mrf.mxu0
    %v6425 = vadd.f32 %v5905, %v6424
    %v6426 = vpop.f32.mrf.mxu0
    %v6427 = vadd.f32 %v5905, %v6426
    %6428 = vmatmul.bf16.gmra.mxu0 %v5899
    %v6429 = vpop.f32.mrf.mxu0
    %v6430 = vadd.f32 %v5905, %v6429
    %v6431 = vpop.f32.mrf.mxu0
    %v6432 = vadd.f32 %v5905, %v6431
    %6433 = vdwg.mxu0
    %6434 = vmatpush.bf16.msra.mxu0 %v6170
    %6435 = vmatpush.bf16.msra.mxu0 %v6162
    %6436 = vmatpush.bf16.msra.mxu0 %v6154
    %6437 = vmatpush.bf16.msra.mxu0 %v6146
    %6438 = vmatpush.bf16.msra.mxu0 %v6138
    %6439 = vmatpush.bf16.msra.mxu0 %v6130
    %6440 = vmatpush.bf16.msra.mxu0 %v6122
    %6441 = vmatpush.bf16.msra.mxu0 %v6114
    %6442 = vmatmul.bf16.gmra.mxu0 %v5892
    %v6443 = vpop.f32.mrf.mxu0
    %v6444 = vadd.f32 %v5906, %v6443
    %v6445 = vpop.f32.mrf.mxu0
    %v6446 = vadd.f32 %v5906, %v6445
    %6447 = vmatmul.bf16.gmra.mxu0 %v5893
    %v6448 = vpop.f32.mrf.mxu0
    %v6449 = vadd.f32 %v5906, %v6448
    %v6450 = vpop.f32.mrf.mxu0
    %v6451 = vadd.f32 %v5906, %v6450
    %6452 = vmatmul.bf16.gmra.mxu0 %v5894
    %v6453 = vpop.f32.mrf.mxu0
    %v6454 = vadd.f32 %v5906, %v6453
    %v6455 = vpop.f32.mrf.mxu0
    %v6456 = vadd.f32 %v5906, %v6455
    %6457 = vmatmul.bf16.gmra.mxu0 %v5895
    %v6458 = vpop.f32.mrf.mxu0
    %v6459 = vadd.f32 %v5906, %v6458
    %v6460 = vpop.f32.mrf.mxu0
    %v6461 = vadd.f32 %v5906, %v6460
    %6462 = vmatmul.bf16.gmra.mxu0 %v5896
    %v6463 = vpop.f32.mrf.mxu0
    %v6464 = vadd.f32 %v5906, %v6463
    %v6465 = vpop.f32.mrf.mxu0
    %v6466 = vadd.f32 %v5906, %v6465
    %6467 = vmatmul.bf16.gmra.mxu0 %v5897
    %v6468 = vpop.f32.mrf.mxu0
    %v6469 = vadd.f32 %v5906, %v6468
    %v6470 = vpop.f32.mrf.mxu0
    %v6471 = vadd.f32 %v5906, %v6470
    %6472 = vmatmul.bf16.gmra.mxu0 %v5898
    %v6473 = vpop.f32.mrf.mxu0
    %v6474 = vadd.f32 %v5906, %v6473
    %v6475 = vpop.f32.mrf.mxu0
    %v6476 = vadd.f32 %v5906, %v6475
    %6477 = vmatmul.bf16.gmra.mxu0 %v5899
    %v6478 = vpop.f32.mrf.mxu0
    %v6479 = vadd.f32 %v5906, %v6478
    %v6480 = vpop.f32.mrf.mxu0
    %v6481 = vadd.f32 %v5906, %v6480
    %6482 = vdwg.mxu0
    %6483 = vmatpush.bf16.msra.mxu0 %v6171
    %6484 = vmatpush.bf16.msra.mxu0 %v6163
    %6485 = vmatpush.bf16.msra.mxu0 %v6155
    %6486 = vmatpush.bf16.msra.mxu0 %v6147
    %6487 = vmatpush.bf16.msra.mxu0 %v6139
    %6488 = vmatpush.bf16.msra.mxu0 %v6131
    %6489 = vmatpush.bf16.msra.mxu0 %v6123
    %6490 = vmatpush.bf16.msra.mxu0 %v6115
    %6491 = vmatmul.bf16.gmra.mxu0 %v5892
    %v6492 = vpop.f32.mrf.mxu0
    %v6493 = vadd.f32 %v5907, %v6492
    %v6494 = vpop.f32.mrf.mxu0
    %v6495 = vadd.f32 %v5907, %v6494
    %6496 = vmatmul.bf16.gmra.mxu0 %v5893
    %v6497 = vpop.f32.mrf.mxu0
    %v6498 = vadd.f32 %v5907, %v6497
    %v6499 = vpop.f32.mrf.mxu0
    %v6500 = vadd.f32 %v5907, %v6499
    %6501 = vmatmul.bf16.gmra.mxu0 %v5894
    %v6502 = vpop.f32.mrf.mxu0
    %v6503 = vadd.f32 %v5907, %v6502
    %v6504 = vpop.f32.mrf.mxu0
    %v6505 = vadd.f32 %v5907, %v6504
    %6506 = vmatmul.bf16.gmra.mxu0 %v5895
    %v6507 = vpop.f32.mrf.mxu0
    %v6508 = vadd.f32 %v5907, %v6507
    %v6509 = vpop.f32.mrf.mxu0
    %v6510 = vadd.f32 %v5907, %v6509
    %6511 = vmatmul.bf16.gmra.mxu0 %v5896
    %v6512 = vpop.f32.mrf.mxu0
    %v6513 = vadd.f32 %v5907, %v6512
    %v6514 = vpop.f32.mrf.mxu0
    %v6515 = vadd.f32 %v5907, %v6514
    %6516 = vmatmul.bf16.gmra.mxu0 %v5897
    %v6517 = vpop.f32.mrf.mxu0
    %v6518 = vadd.f32 %v5907, %v6517
    %v6519 = vpop.f32.mrf.mxu0
    %v6520 = vadd.f32 %v5907, %v6519
    %6521 = vmatmul.bf16.gmra.mxu0 %v5898
    %v6522 = vpop.f32.mrf.mxu0
    %v6523 = vadd.f32 %v5907, %v6522
    %v6524 = vpop.f32.mrf.mxu0
    %v6525 = vadd.f32 %v5907, %v6524
    %6526 = vmatmul.bf16.gmra.mxu0 %v5899
    %v6527 = vpop.f32.mrf.mxu0
    %v6528 = vadd.f32 %v5907, %v6527
    %v6529 = vpop.f32.mrf.mxu0
    %v6530 = vadd.f32 %v5907, %v6529
    %6531 = vdwg.mxu0
    %6532 = vmatpush.bf16.msra.mxu0 %v6172
    %6533 = vmatpush.bf16.msra.mxu0 %v6164
    %6534 = vmatpush.bf16.msra.mxu0 %v6156
    %6535 = vmatpush.bf16.msra.mxu0 %v6148
    %6536 = vmatpush.bf16.msra.mxu0 %v6140
    %6537 = vmatpush.bf16.msra.mxu0 %v6132
    %6538 = vmatpush.bf16.msra.mxu0 %v6124
    %6539 = vmatpush.bf16.msra.mxu0 %v6116
    %6540 = vmatmul.bf16.gmra.mxu0 %v5892
    %v6541 = vpop.f32.mrf.mxu0
    %v6542 = vadd.f32 %v5908, %v6541
    %v6543 = vpop.f32.mrf.mxu0
    %v6544 = vadd.f32 %v5908, %v6543
    %6545 = vmatmul.bf16.gmra.mxu0 %v5893
    %v6546 = vpop.f32.mrf.mxu0
    %v6547 = vadd.f32 %v5908, %v6546
    %v6548 = vpop.f32.mrf.mxu0
    %v6549 = vadd.f32 %v5908, %v6548
    %6550 = vmatmul.bf16.gmra.mxu0 %v5894
    %v6551 = vpop.f32.mrf.mxu0
    %v6552 = vadd.f32 %v5908, %v6551
    %v6553 = vpop.f32.mrf.mxu0
    %v6554 = vadd.f32 %v5908, %v6553
    %6555 = vmatmul.bf16.gmra.mxu0 %v5895
    %v6556 = vpop.f32.mrf.mxu0
    %v6557 = vadd.f32 %v5908, %v6556
    %v6558 = vpop.f32.mrf.mxu0
    %v6559 = vadd.f32 %v5908, %v6558
    %6560 = vmatmul.bf16.gmra.mxu0 %v5896
    %v6561 = vpop.f32.mrf.mxu0
    %v6562 = vadd.f32 %v5908, %v6561
    %v6563 = vpop.f32.mrf.mxu0
    %v6564 = vadd.f32 %v5908, %v6563
    %6565 = vmatmul.bf16.gmra.mxu0 %v5897
    %v6566 = vpop.f32.mrf.mxu0
    %v6567 = vadd.f32 %v5908, %v6566
    %v6568 = vpop.f32.mrf.mxu0
    %v6569 = vadd.f32 %v5908, %v6568
    %6570 = vmatmul.bf16.gmra.mxu0 %v5898
    %v6571 = vpop.f32.mrf.mxu0
    %v6572 = vadd.f32 %v5908, %v6571
    %v6573 = vpop.f32.mrf.mxu0
    %v6574 = vadd.f32 %v5908, %v6573
    %6575 = vmatmul.bf16.gmra.mxu0 %v5899
    %v6576 = vpop.f32.mrf.mxu0
    %v6577 = vadd.f32 %v5908, %v6576
    %v6578 = vpop.f32.mrf.mxu0
    %v6579 = vadd.f32 %v5908, %v6578
    %6580 = vdwg.mxu0
    %6581 = vmatpush.bf16.msra.mxu0 %v6173
    %6582 = vmatpush.bf16.msra.mxu0 %v6165
    %6583 = vmatpush.bf16.msra.mxu0 %v6157
    %6584 = vmatpush.bf16.msra.mxu0 %v6149
    %6585 = vmatpush.bf16.msra.mxu0 %v6141
    %6586 = vmatpush.bf16.msra.mxu0 %v6133
    %6587 = vmatpush.bf16.msra.mxu0 %v6125
    %6588 = vmatpush.bf16.msra.mxu0 %v6117
    %6589 = vmatmul.bf16.gmra.mxu0 %v5892
    %v6590 = vpop.f32.mrf.mxu0
    %v6591 = vadd.f32 %v5909, %v6590
    %v6592 = vpop.f32.mrf.mxu0
    %v6593 = vadd.f32 %v5909, %v6592
    %6594 = vmatmul.bf16.gmra.mxu0 %v5893
    %v6595 = vpop.f32.mrf.mxu0
    %v6596 = vadd.f32 %v5909, %v6595
    %v6597 = vpop.f32.mrf.mxu0
    %v6598 = vadd.f32 %v5909, %v6597
    %6599 = vmatmul.bf16.gmra.mxu0 %v5894
    %v6600 = vpop.f32.mrf.mxu0
    %v6601 = vadd.f32 %v5909, %v6600
    %v6602 = vpop.f32.mrf.mxu0
    %v6603 = vadd.f32 %v5909, %v6602
    %6604 = vmatmul.bf16.gmra.mxu0 %v5895
    %v6605 = vpop.f32.mrf.mxu0
    %v6606 = vadd.f32 %v5909, %v6605
    %v6607 = vpop.f32.mrf.mxu0
    %v6608 = vadd.f32 %v5909, %v6607
    %6609 = vmatmul.bf16.gmra.mxu0 %v5896
    %v6610 = vpop.f32.mrf.mxu0
    %v6611 = vadd.f32 %v5909, %v6610
    %v6612 = vpop.f32.mrf.mxu0
    %v6613 = vadd.f32 %v5909, %v6612
    %6614 = vmatmul.bf16.gmra.mxu0 %v5897
    %v6615 = vpop.f32.mrf.mxu0
    %v6616 = vadd.f32 %v5909, %v6615
    %v6617 = vpop.f32.mrf.mxu0
    %v6618 = vadd.f32 %v5909, %v6617
    %6619 = vmatmul.bf16.gmra.mxu0 %v5898
    %v6620 = vpop.f32.mrf.mxu0
    %v6621 = vadd.f32 %v5909, %v6620
    %v6622 = vpop.f32.mrf.mxu0
    %v6623 = vadd.f32 %v5909, %v6622
    %6624 = vmatmul.bf16.gmra.mxu0 %v5899
    %v6625 = vpop.f32.mrf.mxu0
    %v6626 = vadd.f32 %v5909, %v6625
    %v6627 = vpop.f32.mrf.mxu0
    %v6628 = vadd.f32 %v5909, %v6627
    %6629 = vdwg.mxu0
    %v6630 = vmax.f32 %v6248, 0.0
    %v6631 = vmax.f32 %v6297, 0.0
    %v6632 = vmax.f32 %v6346, 0.0
    %v6633 = vmax.f32 %v6395, 0.0
    %v6634 = vmax.f32 %v6444, 0.0
    %v6635 = vmax.f32 %v6493, 0.0
    %v6636 = vmax.f32 %v6542, 0.0
    %v6637 = vmax.f32 %v6591, 0.0
    %v6638 = vmax.f32 %v6250, 0.0
    %v6639 = vmax.f32 %v6299, 0.0
    %v6640 = vmax.f32 %v6348, 0.0
    %v6641 = vmax.f32 %v6397, 0.0
    %v6642 = vmax.f32 %v6446, 0.0
    %v6643 = vmax.f32 %v6495, 0.0
    %v6644 = vmax.f32 %v6544, 0.0
    %v6645 = vmax.f32 %v6593, 0.0
    %v6646 = vmax.f32 %v6253, 0.0
    %v6647 = vmax.f32 %v6302, 0.0
    %v6648 = vmax.f32 %v6351, 0.0
    %v6649 = vmax.f32 %v6400, 0.0
    %v6650 = vmax.f32 %v6449, 0.0
    %v6651 = vmax.f32 %v6498, 0.0
    %v6652 = vmax.f32 %v6547, 0.0
    %v6653 = vmax.f32 %v6596, 0.0
    %v6654 = vmax.f32 %v6255, 0.0
    %v6655 = vmax.f32 %v6304, 0.0
    %v6656 = vmax.f32 %v6353, 0.0
    %v6657 = vmax.f32 %v6402, 0.0
    %v6658 = vmax.f32 %v6451, 0.0
    %v6659 = vmax.f32 %v6500, 0.0
    %v6660 = vmax.f32 %v6549, 0.0
    %v6661 = vmax.f32 %v6598, 0.0
    %v6662 = vmax.f32 %v6258, 0.0
    %v6663 = vmax.f32 %v6307, 0.0
    %v6664 = vmax.f32 %v6356, 0.0
    %v6665 = vmax.f32 %v6405, 0.0
    %v6666 = vmax.f32 %v6454, 0.0
    %v6667 = vmax.f32 %v6503, 0.0
    %v6668 = vmax.f32 %v6552, 0.0
    %v6669 = vmax.f32 %v6601, 0.0
    %v6670 = vmax.f32 %v6260, 0.0
    %v6671 = vmax.f32 %v6309, 0.0
    %v6672 = vmax.f32 %v6358, 0.0
    %v6673 = vmax.f32 %v6407, 0.0
    %v6674 = vmax.f32 %v6456, 0.0
    %v6675 = vmax.f32 %v6505, 0.0
    %v6676 = vmax.f32 %v6554, 0.0
    %v6677 = vmax.f32 %v6603, 0.0
    %v6678 = vmax.f32 %v6263, 0.0
    %v6679 = vmax.f32 %v6312, 0.0
    %v6680 = vmax.f32 %v6361, 0.0
    %v6681 = vmax.f32 %v6410, 0.0
    %v6682 = vmax.f32 %v6459, 0.0
    %v6683 = vmax.f32 %v6508, 0.0
    %v6684 = vmax.f32 %v6557, 0.0
    %v6685 = vmax.f32 %v6606, 0.0
    %v6686 = vmax.f32 %v6265, 0.0
    %v6687 = vmax.f32 %v6314, 0.0
    %v6688 = vmax.f32 %v6363, 0.0
    %v6689 = vmax.f32 %v6412, 0.0
    %v6690 = vmax.f32 %v6461, 0.0
    %v6691 = vmax.f32 %v6510, 0.0
    %v6692 = vmax.f32 %v6559, 0.0
    %v6693 = vmax.f32 %v6608, 0.0
    %v6694 = vmax.f32 %v6268, 0.0
    %v6695 = vmax.f32 %v6317, 0.0
    %v6696 = vmax.f32 %v6366, 0.0
    %v6697 = vmax.f32 %v6415, 0.0
    %v6698 = vmax.f32 %v6464, 0.0
    %v6699 = vmax.f32 %v6513, 0.0
    %v6700 = vmax.f32 %v6562, 0.0
    %v6701 = vmax.f32 %v6611, 0.0
    %v6702 = vmax.f32 %v6270, 0.0
    %v6703 = vmax.f32 %v6319, 0.0
    %v6704 = vmax.f32 %v6368, 0.0
    %v6705 = vmax.f32 %v6417, 0.0
    %v6706 = vmax.f32 %v6466, 0.0
    %v6707 = vmax.f32 %v6515, 0.0
    %v6708 = vmax.f32 %v6564, 0.0
    %v6709 = vmax.f32 %v6613, 0.0
    %v6710 = vmax.f32 %v6273, 0.0
    %v6711 = vmax.f32 %v6322, 0.0
    %v6712 = vmax.f32 %v6371, 0.0
    %v6713 = vmax.f32 %v6420, 0.0
    %v6714 = vmax.f32 %v6469, 0.0
    %v6715 = vmax.f32 %v6518, 0.0
    %v6716 = vmax.f32 %v6567, 0.0
    %v6717 = vmax.f32 %v6616, 0.0
    %v6718 = vmax.f32 %v6275, 0.0
    %v6719 = vmax.f32 %v6324, 0.0
    %v6720 = vmax.f32 %v6373, 0.0
    %v6721 = vmax.f32 %v6422, 0.0
    %v6722 = vmax.f32 %v6471, 0.0
    %v6723 = vmax.f32 %v6520, 0.0
    %v6724 = vmax.f32 %v6569, 0.0
    %v6725 = vmax.f32 %v6618, 0.0
    %v6726 = vmax.f32 %v6278, 0.0
    %v6727 = vmax.f32 %v6327, 0.0
    %v6728 = vmax.f32 %v6376, 0.0
    %v6729 = vmax.f32 %v6425, 0.0
    %v6730 = vmax.f32 %v6474, 0.0
    %v6731 = vmax.f32 %v6523, 0.0
    %v6732 = vmax.f32 %v6572, 0.0
    %v6733 = vmax.f32 %v6621, 0.0
    %v6734 = vmax.f32 %v6280, 0.0
    %v6735 = vmax.f32 %v6329, 0.0
    %v6736 = vmax.f32 %v6378, 0.0
    %v6737 = vmax.f32 %v6427, 0.0
    %v6738 = vmax.f32 %v6476, 0.0
    %v6739 = vmax.f32 %v6525, 0.0
    %v6740 = vmax.f32 %v6574, 0.0
    %v6741 = vmax.f32 %v6623, 0.0
    %v6742 = vmax.f32 %v6283, 0.0
    %v6743 = vmax.f32 %v6332, 0.0
    %v6744 = vmax.f32 %v6381, 0.0
    %v6745 = vmax.f32 %v6430, 0.0
    %v6746 = vmax.f32 %v6479, 0.0
    %v6747 = vmax.f32 %v6528, 0.0
    %v6748 = vmax.f32 %v6577, 0.0
    %v6749 = vmax.f32 %v6626, 0.0
    %v6750 = vmax.f32 %v6285, 0.0
    %v6751 = vmax.f32 %v6334, 0.0
    %v6752 = vmax.f32 %v6383, 0.0
    %v6753 = vmax.f32 %v6432, 0.0
    %v6754 = vmax.f32 %v6481, 0.0
    %v6755 = vmax.f32 %v6530, 0.0
    %v6756 = vmax.f32 %v6579, 0.0
    %v6757 = vmax.f32 %v6628, 0.0
    %v6758 = vmax.f32 %v6630, %v6638
    %v6759 = vrot.slane %v6758, 4
    %v6760 = vmax.f32 %v6758, %v6759
    %v6761 = vrot.slane %v6760, 2
    %v6762 = vmax.f32 %v6760, %v6761
    %v6763 = vrot.slane %v6762, 1
    %v6764 = vmax.f32 %v6762, %v6763
    %v6765 = vmax.f32 %v6631, %v6639
    %v6766 = vrot.slane %v6765, 4
    %v6767 = vmax.f32 %v6765, %v6766
    %v6768 = vrot.slane %v6767, 2
    %v6769 = vmax.f32 %v6767, %v6768
    %v6770 = vrot.slane %v6769, 1
    %v6771 = vmax.f32 %v6769, %v6770
    %v6772 = vmax.f32 %v6632, %v6640
    %v6773 = vrot.slane %v6772, 4
    %v6774 = vmax.f32 %v6772, %v6773
    %v6775 = vrot.slane %v6774, 2
    %v6776 = vmax.f32 %v6774, %v6775
    %v6777 = vrot.slane %v6776, 1
    %v6778 = vmax.f32 %v6776, %v6777
    %v6779 = vmax.f32 %v6633, %v6641
    %v6780 = vrot.slane %v6779, 4
    %v6781 = vmax.f32 %v6779, %v6780
    %v6782 = vrot.slane %v6781, 2
    %v6783 = vmax.f32 %v6781, %v6782
    %v6784 = vrot.slane %v6783, 1
    %v6785 = vmax.f32 %v6783, %v6784
    %v6786 = vmax.f32 %v6634, %v6642
    %v6787 = vrot.slane %v6786, 4
    %v6788 = vmax.f32 %v6786, %v6787
    %v6789 = vrot.slane %v6788, 2
    %v6790 = vmax.f32 %v6788, %v6789
    %v6791 = vrot.slane %v6790, 1
    %v6792 = vmax.f32 %v6790, %v6791
    %v6793 = vmax.f32 %v6635, %v6643
    %v6794 = vrot.slane %v6793, 4
    %v6795 = vmax.f32 %v6793, %v6794
    %v6796 = vrot.slane %v6795, 2
    %v6797 = vmax.f32 %v6795, %v6796
    %v6798 = vrot.slane %v6797, 1
    %v6799 = vmax.f32 %v6797, %v6798
    %v6800 = vmax.f32 %v6636, %v6644
    %v6801 = vrot.slane %v6800, 4
    %v6802 = vmax.f32 %v6800, %v6801
    %v6803 = vrot.slane %v6802, 2
    %v6804 = vmax.f32 %v6802, %v6803
    %v6805 = vrot.slane %v6804, 1
    %v6806 = vmax.f32 %v6804, %v6805
    %v6807 = vmax.f32 %v6637, %v6645
    %v6808 = vrot.slane %v6807, 4
    %v6809 = vmax.f32 %v6807, %v6808
    %v6810 = vrot.slane %v6809, 2
    %v6811 = vmax.f32 %v6809, %v6810
    %v6812 = vrot.slane %v6811, 1
    %v6813 = vmax.f32 %v6811, %v6812
    %v6814 = vmax.f32 %v6646, %v6654
    %v6815 = vrot.slane %v6814, 4
    %v6816 = vmax.f32 %v6814, %v6815
    %v6817 = vrot.slane %v6816, 2
    %v6818 = vmax.f32 %v6816, %v6817
    %v6819 = vrot.slane %v6818, 1
    %v6820 = vmax.f32 %v6818, %v6819
    %v6821 = vmax.f32 %v6647, %v6655
    %v6822 = vrot.slane %v6821, 4
    %v6823 = vmax.f32 %v6821, %v6822
    %v6824 = vrot.slane %v6823, 2
    %v6825 = vmax.f32 %v6823, %v6824
    %v6826 = vrot.slane %v6825, 1
    %v6827 = vmax.f32 %v6825, %v6826
    %v6828 = vmax.f32 %v6648, %v6656
    %v6829 = vrot.slane %v6828, 4
    %v6830 = vmax.f32 %v6828, %v6829
    %v6831 = vrot.slane %v6830, 2
    %v6832 = vmax.f32 %v6830, %v6831
    %v6833 = vrot.slane %v6832, 1
    %v6834 = vmax.f32 %v6832, %v6833
    %v6835 = vmax.f32 %v6649, %v6657
    %v6836 = vrot.slane %v6835, 4
    %v6837 = vmax.f32 %v6835, %v6836
    %v6838 = vrot.slane %v6837, 2
    %v6839 = vmax.f32 %v6837, %v6838
    %v6840 = vrot.slane %v6839, 1
    %v6841 = vmax.f32 %v6839, %v6840
    %v6842 = vmax.f32 %v6650, %v6658
    %v6843 = vrot.slane %v6842, 4
    %v6844 = vmax.f32 %v6842, %v6843
    %v6845 = vrot.slane %v6844, 2
    %v6846 = vmax.f32 %v6844, %v6845
    %v6847 = vrot.slane %v6846, 1
    %v6848 = vmax.f32 %v6846, %v6847
    %v6849 = vmax.f32 %v6651, %v6659
    %v6850 = vrot.slane %v6849, 4
    %v6851 = vmax.f32 %v6849, %v6850
    %v6852 = vrot.slane %v6851, 2
    %v6853 = vmax.f32 %v6851, %v6852
    %v6854 = vrot.slane %v6853, 1
    %v6855 = vmax.f32 %v6853, %v6854
    %v6856 = vmax.f32 %v6652, %v6660
    %v6857 = vrot.slane %v6856, 4
    %v6858 = vmax.f32 %v6856, %v6857
    %v6859 = vrot.slane %v6858, 2
    %v6860 = vmax.f32 %v6858, %v6859
    %v6861 = vrot.slane %v6860, 1
    %v6862 = vmax.f32 %v6860, %v6861
    %v6863 = vmax.f32 %v6653, %v6661
    %v6864 = vrot.slane %v6863, 4
    %v6865 = vmax.f32 %v6863, %v6864
    %v6866 = vrot.slane %v6865, 2
    %v6867 = vmax.f32 %v6865, %v6866
    %v6868 = vrot.slane %v6867, 1
    %v6869 = vmax.f32 %v6867, %v6868
    %v6870 = vmax.f32 %v6662, %v6670
    %v6871 = vrot.slane %v6870, 4
    %v6872 = vmax.f32 %v6870, %v6871
    %v6873 = vrot.slane %v6872, 2
    %v6874 = vmax.f32 %v6872, %v6873
    %v6875 = vrot.slane %v6874, 1
    %v6876 = vmax.f32 %v6874, %v6875
    %v6877 = vmax.f32 %v6663, %v6671
    %v6878 = vrot.slane %v6877, 4
    %v6879 = vmax.f32 %v6877, %v6878
    %v6880 = vrot.slane %v6879, 2
    %v6881 = vmax.f32 %v6879, %v6880
    %v6882 = vrot.slane %v6881, 1
    %v6883 = vmax.f32 %v6881, %v6882
    %v6884 = vmax.f32 %v6664, %v6672
    %v6885 = vrot.slane %v6884, 4
    %v6886 = vmax.f32 %v6884, %v6885
    %v6887 = vrot.slane %v6886, 2
    %v6888 = vmax.f32 %v6886, %v6887
    %v6889 = vrot.slane %v6888, 1
    %v6890 = vmax.f32 %v6888, %v6889
    %v6891 = vmax.f32 %v6665, %v6673
    %v6892 = vrot.slane %v6891, 4
    %v6893 = vmax.f32 %v6891, %v6892
    %v6894 = vrot.slane %v6893, 2
    %v6895 = vmax.f32 %v6893, %v6894
    %v6896 = vrot.slane %v6895, 1
    %v6897 = vmax.f32 %v6895, %v6896
    %v6898 = vmax.f32 %v6666, %v6674
    %v6899 = vrot.slane %v6898, 4
    %v6900 = vmax.f32 %v6898, %v6899
    %v6901 = vrot.slane %v6900, 2
    %v6902 = vmax.f32 %v6900, %v6901
    %v6903 = vrot.slane %v6902, 1
    %v6904 = vmax.f32 %v6902, %v6903
    %v6905 = vmax.f32 %v6667, %v6675
    %v6906 = vrot.slane %v6905, 4
    %v6907 = vmax.f32 %v6905, %v6906
    %v6908 = vrot.slane %v6907, 2
    %v6909 = vmax.f32 %v6907, %v6908
    %v6910 = vrot.slane %v6909, 1
    %v6911 = vmax.f32 %v6909, %v6910
    %v6912 = vmax.f32 %v6668, %v6676
    %v6913 = vrot.slane %v6912, 4
    %v6914 = vmax.f32 %v6912, %v6913
    %v6915 = vrot.slane %v6914, 2
    %v6916 = vmax.f32 %v6914, %v6915
    %v6917 = vrot.slane %v6916, 1
    %v6918 = vmax.f32 %v6916, %v6917
    %v6919 = vmax.f32 %v6669, %v6677
    %v6920 = vrot.slane %v6919, 4
    %v6921 = vmax.f32 %v6919, %v6920
    %v6922 = vrot.slane %v6921, 2
    %v6923 = vmax.f32 %v6921, %v6922
    %v6924 = vrot.slane %v6923, 1
    %v6925 = vmax.f32 %v6923, %v6924
    %v6926 = vmax.f32 %v6678, %v6686
    %v6927 = vrot.slane %v6926, 4
    %v6928 = vmax.f32 %v6926, %v6927
    %v6929 = vrot.slane %v6928, 2
    %v6930 = vmax.f32 %v6928, %v6929
    %v6931 = vrot.slane %v6930, 1
    %v6932 = vmax.f32 %v6930, %v6931
    %v6933 = vmax.f32 %v6679, %v6687
    %v6934 = vrot.slane %v6933, 4
    %v6935 = vmax.f32 %v6933, %v6934
    %v6936 = vrot.slane %v6935, 2
    %v6937 = vmax.f32 %v6935, %v6936
    %v6938 = vrot.slane %v6937, 1
    %v6939 = vmax.f32 %v6937, %v6938
    %v6940 = vmax.f32 %v6680, %v6688
    %v6941 = vrot.slane %v6940, 4
    %v6942 = vmax.f32 %v6940, %v6941
    %v6943 = vrot.slane %v6942, 2
    %v6944 = vmax.f32 %v6942, %v6943
    %v6945 = vrot.slane %v6944, 1
    %v6946 = vmax.f32 %v6944, %v6945
    %v6947 = vmax.f32 %v6681, %v6689
    %v6948 = vrot.slane %v6947, 4
    %v6949 = vmax.f32 %v6947, %v6948
    %v6950 = vrot.slane %v6949, 2
    %v6951 = vmax.f32 %v6949, %v6950
    %v6952 = vrot.slane %v6951, 1
    %v6953 = vmax.f32 %v6951, %v6952
    %v6954 = vmax.f32 %v6682, %v6690
    %v6955 = vrot.slane %v6954, 4
    %v6956 = vmax.f32 %v6954, %v6955
    %v6957 = vrot.slane %v6956, 2
    %v6958 = vmax.f32 %v6956, %v6957
    %v6959 = vrot.slane %v6958, 1
    %v6960 = vmax.f32 %v6958, %v6959
    %v6961 = vmax.f32 %v6683, %v6691
    %v6962 = vrot.slane %v6961, 4
    %v6963 = vmax.f32 %v6961, %v6962
    %v6964 = vrot.slane %v6963, 2
    %v6965 = vmax.f32 %v6963, %v6964
    %v6966 = vrot.slane %v6965, 1
    %v6967 = vmax.f32 %v6965, %v6966
    %v6968 = vmax.f32 %v6684, %v6692
    %v6969 = vrot.slane %v6968, 4
    %v6970 = vmax.f32 %v6968, %v6969
    %v6971 = vrot.slane %v6970, 2
    %v6972 = vmax.f32 %v6970, %v6971
    %v6973 = vrot.slane %v6972, 1
    %v6974 = vmax.f32 %v6972, %v6973
    %v6975 = vmax.f32 %v6685, %v6693
    %v6976 = vrot.slane %v6975, 4
    %v6977 = vmax.f32 %v6975, %v6976
    %v6978 = vrot.slane %v6977, 2
    %v6979 = vmax.f32 %v6977, %v6978
    %v6980 = vrot.slane %v6979, 1
    %v6981 = vmax.f32 %v6979, %v6980
    %v6982 = vmax.f32 %v6694, %v6702
    %v6983 = vrot.slane %v6982, 4
    %v6984 = vmax.f32 %v6982, %v6983
    %v6985 = vrot.slane %v6984, 2
    %v6986 = vmax.f32 %v6984, %v6985
    %v6987 = vrot.slane %v6986, 1
    %v6988 = vmax.f32 %v6986, %v6987
    %v6989 = vmax.f32 %v6695, %v6703
    %v6990 = vrot.slane %v6989, 4
    %v6991 = vmax.f32 %v6989, %v6990
    %v6992 = vrot.slane %v6991, 2
    %v6993 = vmax.f32 %v6991, %v6992
    %v6994 = vrot.slane %v6993, 1
    %v6995 = vmax.f32 %v6993, %v6994
    %v6996 = vmax.f32 %v6696, %v6704
    %v6997 = vrot.slane %v6996, 4
    %v6998 = vmax.f32 %v6996, %v6997
    %v6999 = vrot.slane %v6998, 2
    %v7000 = vmax.f32 %v6998, %v6999
    %v7001 = vrot.slane %v7000, 1
    %v7002 = vmax.f32 %v7000, %v7001
    %v7003 = vmax.f32 %v6697, %v6705
    %v7004 = vrot.slane %v7003, 4
    %v7005 = vmax.f32 %v7003, %v7004
    %v7006 = vrot.slane %v7005, 2
    %v7007 = vmax.f32 %v7005, %v7006
    %v7008 = vrot.slane %v7007, 1
    %v7009 = vmax.f32 %v7007, %v7008
    %v7010 = vmax.f32 %v6698, %v6706
    %v7011 = vrot.slane %v7010, 4
    %v7012 = vmax.f32 %v7010, %v7011
    %v7013 = vrot.slane %v7012, 2
    %v7014 = vmax.f32 %v7012, %v7013
    %v7015 = vrot.slane %v7014, 1
    %v7016 = vmax.f32 %v7014, %v7015
    %v7017 = vmax.f32 %v6699, %v6707
    %v7018 = vrot.slane %v7017, 4
    %v7019 = vmax.f32 %v7017, %v7018
    %v7020 = vrot.slane %v7019, 2
    %v7021 = vmax.f32 %v7019, %v7020
    %v7022 = vrot.slane %v7021, 1
    %v7023 = vmax.f32 %v7021, %v7022
    %v7024 = vmax.f32 %v6700, %v6708
    %v7025 = vrot.slane %v7024, 4
    %v7026 = vmax.f32 %v7024, %v7025
    %v7027 = vrot.slane %v7026, 2
    %v7028 = vmax.f32 %v7026, %v7027
    %v7029 = vrot.slane %v7028, 1
    %v7030 = vmax.f32 %v7028, %v7029
    %v7031 = vmax.f32 %v6701, %v6709
    %v7032 = vrot.slane %v7031, 4
    %v7033 = vmax.f32 %v7031, %v7032
    %v7034 = vrot.slane %v7033, 2
    %v7035 = vmax.f32 %v7033, %v7034
    %v7036 = vrot.slane %v7035, 1
    %v7037 = vmax.f32 %v7035, %v7036
    %v7038 = vmax.f32 %v6710, %v6718
    %v7039 = vrot.slane %v7038, 4
    %v7040 = vmax.f32 %v7038, %v7039
    %v7041 = vrot.slane %v7040, 2
    %v7042 = vmax.f32 %v7040, %v7041
    %v7043 = vrot.slane %v7042, 1
    %v7044 = vmax.f32 %v7042, %v7043
    %v7045 = vmax.f32 %v6711, %v6719
    %v7046 = vrot.slane %v7045, 4
    %v7047 = vmax.f32 %v7045, %v7046
    %v7048 = vrot.slane %v7047, 2
    %v7049 = vmax.f32 %v7047, %v7048
    %v7050 = vrot.slane %v7049, 1
    %v7051 = vmax.f32 %v7049, %v7050
    %v7052 = vmax.f32 %v6712, %v6720
    %v7053 = vrot.slane %v7052, 4
    %v7054 = vmax.f32 %v7052, %v7053
    %v7055 = vrot.slane %v7054, 2
    %v7056 = vmax.f32 %v7054, %v7055
    %v7057 = vrot.slane %v7056, 1
    %v7058 = vmax.f32 %v7056, %v7057
    %v7059 = vmax.f32 %v6713, %v6721
    %v7060 = vrot.slane %v7059, 4
    %v7061 = vmax.f32 %v7059, %v7060
    %v7062 = vrot.slane %v7061, 2
    %v7063 = vmax.f32 %v7061, %v7062
    %v7064 = vrot.slane %v7063, 1
    %v7065 = vmax.f32 %v7063, %v7064
    %v7066 = vmax.f32 %v6714, %v6722
    %v7067 = vrot.slane %v7066, 4
    %v7068 = vmax.f32 %v7066, %v7067
    %v7069 = vrot.slane %v7068, 2
    %v7070 = vmax.f32 %v7068, %v7069
    %v7071 = vrot.slane %v7070, 1
    %v7072 = vmax.f32 %v7070, %v7071
    %v7073 = vmax.f32 %v6715, %v6723
    %v7074 = vrot.slane %v7073, 4
    %v7075 = vmax.f32 %v7073, %v7074
    %v7076 = vrot.slane %v7075, 2
    %v7077 = vmax.f32 %v7075, %v7076
    %v7078 = vrot.slane %v7077, 1
    %v7079 = vmax.f32 %v7077, %v7078
    %v7080 = vmax.f32 %v6716, %v6724
    %v7081 = vrot.slane %v7080, 4
    %v7082 = vmax.f32 %v7080, %v7081
    %v7083 = vrot.slane %v7082, 2
    %v7084 = vmax.f32 %v7082, %v7083
    %v7085 = vrot.slane %v7084, 1
    %v7086 = vmax.f32 %v7084, %v7085
    %v7087 = vmax.f32 %v6717, %v6725
    %v7088 = vrot.slane %v7087, 4
    %v7089 = vmax.f32 %v7087, %v7088
    %v7090 = vrot.slane %v7089, 2
    %v7091 = vmax.f32 %v7089, %v7090
    %v7092 = vrot.slane %v7091, 1
    %v7093 = vmax.f32 %v7091, %v7092
    %v7094 = vmax.f32 %v6726, %v6734
    %v7095 = vrot.slane %v7094, 4
    %v7096 = vmax.f32 %v7094, %v7095
    %v7097 = vrot.slane %v7096, 2
    %v7098 = vmax.f32 %v7096, %v7097
    %v7099 = vrot.slane %v7098, 1
    %v7100 = vmax.f32 %v7098, %v7099
    %v7101 = vmax.f32 %v6727, %v6735
    %v7102 = vrot.slane %v7101, 4
    %v7103 = vmax.f32 %v7101, %v7102
    %v7104 = vrot.slane %v7103, 2
    %v7105 = vmax.f32 %v7103, %v7104
    %v7106 = vrot.slane %v7105, 1
    %v7107 = vmax.f32 %v7105, %v7106
    %v7108 = vmax.f32 %v6728, %v6736
    %v7109 = vrot.slane %v7108, 4
    %v7110 = vmax.f32 %v7108, %v7109
    %v7111 = vrot.slane %v7110, 2
    %v7112 = vmax.f32 %v7110, %v7111
    %v7113 = vrot.slane %v7112, 1
    %v7114 = vmax.f32 %v7112, %v7113
    %v7115 = vmax.f32 %v6729, %v6737
    %v7116 = vrot.slane %v7115, 4
    %v7117 = vmax.f32 %v7115, %v7116
    %v7118 = vrot.slane %v7117, 2
    %v7119 = vmax.f32 %v7117, %v7118
    %v7120 = vrot.slane %v7119, 1
    %v7121 = vmax.f32 %v7119, %v7120
    %v7122 = vmax.f32 %v6730, %v6738
    %v7123 = vrot.slane %v7122, 4
    %v7124 = vmax.f32 %v7122, %v7123
    %v7125 = vrot.slane %v7124, 2
    %v7126 = vmax.f32 %v7124, %v7125
    %v7127 = vrot.slane %v7126, 1
    %v7128 = vmax.f32 %v7126, %v7127
    %v7129 = vmax.f32 %v6731, %v6739
    %v7130 = vrot.slane %v7129, 4
    %v7131 = vmax.f32 %v7129, %v7130
    %v7132 = vrot.slane %v7131, 2
    %v7133 = vmax.f32 %v7131, %v7132
    %v7134 = vrot.slane %v7133, 1
    %v7135 = vmax.f32 %v7133, %v7134
    %v7136 = vmax.f32 %v6732, %v6740
    %v7137 = vrot.slane %v7136, 4
    %v7138 = vmax.f32 %v7136, %v7137
    %v7139 = vrot.slane %v7138, 2
    %v7140 = vmax.f32 %v7138, %v7139
    %v7141 = vrot.slane %v7140, 1
    %v7142 = vmax.f32 %v7140, %v7141
    %v7143 = vmax.f32 %v6733, %v6741
    %v7144 = vrot.slane %v7143, 4
    %v7145 = vmax.f32 %v7143, %v7144
    %v7146 = vrot.slane %v7145, 2
    %v7147 = vmax.f32 %v7145, %v7146
    %v7148 = vrot.slane %v7147, 1
    %v7149 = vmax.f32 %v7147, %v7148
    %v7150 = vmax.f32 %v6742, %v6750
    %v7151 = vrot.slane %v7150, 4
    %v7152 = vmax.f32 %v7150, %v7151
    %v7153 = vrot.slane %v7152, 2
    %v7154 = vmax.f32 %v7152, %v7153
    %v7155 = vrot.slane %v7154, 1
    %v7156 = vmax.f32 %v7154, %v7155
    %v7157 = vmax.f32 %v6743, %v6751
    %v7158 = vrot.slane %v7157, 4
    %v7159 = vmax.f32 %v7157, %v7158
    %v7160 = vrot.slane %v7159, 2
    %v7161 = vmax.f32 %v7159, %v7160
    %v7162 = vrot.slane %v7161, 1
    %v7163 = vmax.f32 %v7161, %v7162
    %v7164 = vmax.f32 %v6744, %v6752
    %v7165 = vrot.slane %v7164, 4
    %v7166 = vmax.f32 %v7164, %v7165
    %v7167 = vrot.slane %v7166, 2
    %v7168 = vmax.f32 %v7166, %v7167
    %v7169 = vrot.slane %v7168, 1
    %v7170 = vmax.f32 %v7168, %v7169
    %v7171 = vmax.f32 %v6745, %v6753
    %v7172 = vrot.slane %v7171, 4
    %v7173 = vmax.f32 %v7171, %v7172
    %v7174 = vrot.slane %v7173, 2
    %v7175 = vmax.f32 %v7173, %v7174
    %v7176 = vrot.slane %v7175, 1
    %v7177 = vmax.f32 %v7175, %v7176
    %v7178 = vmax.f32 %v6746, %v6754
    %v7179 = vrot.slane %v7178, 4
    %v7180 = vmax.f32 %v7178, %v7179
    %v7181 = vrot.slane %v7180, 2
    %v7182 = vmax.f32 %v7180, %v7181
    %v7183 = vrot.slane %v7182, 1
    %v7184 = vmax.f32 %v7182, %v7183
    %v7185 = vmax.f32 %v6747, %v6755
    %v7186 = vrot.slane %v7185, 4
    %v7187 = vmax.f32 %v7185, %v7186
    %v7188 = vrot.slane %v7187, 2
    %v7189 = vmax.f32 %v7187, %v7188
    %v7190 = vrot.slane %v7189, 1
    %v7191 = vmax.f32 %v7189, %v7190
    %v7192 = vmax.f32 %v6748, %v6756
    %v7193 = vrot.slane %v7192, 4
    %v7194 = vmax.f32 %v7192, %v7193
    %v7195 = vrot.slane %v7194, 2
    %v7196 = vmax.f32 %v7194, %v7195
    %v7197 = vrot.slane %v7196, 1
    %v7198 = vmax.f32 %v7196, %v7197
    %v7199 = vmax.f32 %v6749, %v6757
    %v7200 = vrot.slane %v7199, 4
    %v7201 = vmax.f32 %v7199, %v7200
    %v7202 = vrot.slane %v7201, 2
    %v7203 = vmax.f32 %v7201, %v7202
    %v7204 = vrot.slane %v7203, 1
    %v7205 = vmax.f32 %v7203, %v7204
    %v7206 = vld [vmem:[#allocation10] sm:$0xff]
    %v7207 = vld [vmem:[#allocation10 + $0x8] sm:$0xff]
    %v7208 = vld [vmem:[#allocation10 + $0x10] sm:$0xff]
    %v7209 = vld [vmem:[#allocation10 + $0x18] sm:$0xff]
    %v7210 = vld [vmem:[#allocation10 + $0x20] sm:$0xff]
    %v7211 = vld [vmem:[#allocation10 + $0x28] sm:$0xff]
    %v7212 = vld [vmem:[#allocation10 + $0x30] sm:$0xff]
    %v7213 = vld [vmem:[#allocation10 + $0x38] sm:$0xff]
    %v7214 = vld [vmem:[#allocation10 + $0x40] sm:$0xff]
    %v7215 = vld [vmem:[#allocation10 + $0x48] sm:$0xff]
    %v7216 = vld [vmem:[#allocation10 + $0x50] sm:$0xff]
    %v7217 = vld [vmem:[#allocation10 + $0x58] sm:$0xff]
    %v7218 = vld [vmem:[#allocation10 + $0x60] sm:$0xff]
    %v7219 = vld [vmem:[#allocation10 + $0x68] sm:$0xff]
    %v7220 = vld [vmem:[#allocation10 + $0x70] sm:$0xff]
    %v7221 = vld [vmem:[#allocation10 + $0x78] sm:$0xff]
    %v7222 = vld [vmem:[#allocation10 + $0x80] sm:$0xff]
    %v7223 = vld [vmem:[#allocation10 + $0x88] sm:$0xff]
    %v7224 = vld [vmem:[#allocation10 + $0x90] sm:$0xff]
    %v7225 = vld [vmem:[#allocation10 + $0x98] sm:$0xff]
    %v7226 = vld [vmem:[#allocation10 + $0xa0] sm:$0xff]
    %v7227 = vld [vmem:[#allocation10 + $0xa8] sm:$0xff]
    %v7228 = vld [vmem:[#allocation10 + $0xb0] sm:$0xff]
    %v7229 = vld [vmem:[#allocation10 + $0xb8] sm:$0xff]
    %v7230 = vld [vmem:[#allocation10 + $0xc0] sm:$0xff]
    %v7231 = vld [vmem:[#allocation10 + $0xc8] sm:$0xff]
    %v7232 = vld [vmem:[#allocation10 + $0xd0] sm:$0xff]
    %v7233 = vld [vmem:[#allocation10 + $0xd8] sm:$0xff]
    %v7234 = vld [vmem:[#allocation10 + $0xe0] sm:$0xff]
    %v7235 = vld [vmem:[#allocation10 + $0xe8] sm:$0xff]
    %v7236 = vld [vmem:[#allocation10 + $0xf0] sm:$0xff]
    %v7237 = vld [vmem:[#allocation10 + $0xf8] sm:$0xff]
    %v7238 = vld [vmem:[#allocation10 + $0x100] sm:$0xff]
    %v7239 = vld [vmem:[#allocation10 + $0x108] sm:$0xff]
    %v7240 = vld [vmem:[#allocation10 + $0x110] sm:$0xff]
    %v7241 = vld [vmem:[#allocation10 + $0x118] sm:$0xff]
    %v7242 = vld [vmem:[#allocation10 + $0x120] sm:$0xff]
    %v7243 = vld [vmem:[#allocation10 + $0x128] sm:$0xff]
    %v7244 = vld [vmem:[#allocation10 + $0x130] sm:$0xff]
    %v7245 = vld [vmem:[#allocation10 + $0x138] sm:$0xff]
    %v7246 = vld [vmem:[#allocation10 + $0x140] sm:$0xff]
    %v7247 = vld [vmem:[#allocation10 + $0x148] sm:$0xff]
    %v7248 = vld [vmem:[#allocation10 + $0x150] sm:$0xff]
    %v7249 = vld [vmem:[#allocation10 + $0x158] sm:$0xff]
    %v7250 = vld [vmem:[#allocation10 + $0x160] sm:$0xff]
    %v7251 = vld [vmem:[#allocation10 + $0x168] sm:$0xff]
    %v7252 = vld [vmem:[#allocation10 + $0x170] sm:$0xff]
    %v7253 = vld [vmem:[#allocation10 + $0x178] sm:$0xff]
    %v7254 = vld [vmem:[#allocation10 + $0x180] sm:$0xff]
    %v7255 = vld [vmem:[#allocation10 + $0x188] sm:$0xff]
    %v7256 = vld [vmem:[#allocation10 + $0x190] sm:$0xff]
    %v7257 = vld [vmem:[#allocation10 + $0x198] sm:$0xff]
    %v7258 = vld [vmem:[#allocation10 + $0x1a0] sm:$0xff]
    %v7259 = vld [vmem:[#allocation10 + $0x1a8] sm:$0xff]
    %v7260 = vld [vmem:[#allocation10 + $0x1b0] sm:$0xff]
    %v7261 = vld [vmem:[#allocation10 + $0x1b8] sm:$0xff]
    %v7262 = vld [vmem:[#allocation10 + $0x1c0] sm:$0xff]
    %v7263 = vld [vmem:[#allocation10 + $0x1c8] sm:$0xff]
    %v7264 = vld [vmem:[#allocation10 + $0x1d0] sm:$0xff]
    %v7265 = vld [vmem:[#allocation10 + $0x1d8] sm:$0xff]
    %v7266 = vld [vmem:[#allocation10 + $0x1e0] sm:$0xff]
    %v7267 = vld [vmem:[#allocation10 + $0x1e8] sm:$0xff]
    %v7268 = vld [vmem:[#allocation10 + $0x1f0] sm:$0xff]
    %v7269 = vld [vmem:[#allocation10 + $0x1f8] sm:$0xff]
    %v7270 = vld [vmem:[#allocation10 + $0x200] sm:$0xff]
    %v7271 = vld [vmem:[#allocation10 + $0x208] sm:$0xff]
    %v7272 = vld [vmem:[#allocation10 + $0x210] sm:$0xff]
    %v7273 = vld [vmem:[#allocation10 + $0x218] sm:$0xff]
    %v7274 = vld [vmem:[#allocation10 + $0x220] sm:$0xff]
    %v7275 = vld [vmem:[#allocation10 + $0x228] sm:$0xff]
    %v7276 = vld [vmem:[#allocation10 + $0x230] sm:$0xff]
    %v7277 = vld [vmem:[#allocation10 + $0x238] sm:$0xff]
    %v7278 = vld [vmem:[#allocation10 + $0x240] sm:$0xff]
    %v7279 = vld [vmem:[#allocation10 + $0x248] sm:$0xff]
    %v7280 = vld [vmem:[#allocation10 + $0x250] sm:$0xff]
    %v7281 = vld [vmem:[#allocation10 + $0x258] sm:$0xff]
    %v7282 = vld [vmem:[#allocation10 + $0x260] sm:$0xff]
    %v7283 = vld [vmem:[#allocation10 + $0x268] sm:$0xff]
    %v7284 = vld [vmem:[#allocation10 + $0x270] sm:$0xff]
    %v7285 = vld [vmem:[#allocation10 + $0x278] sm:$0xff]
    %v7286 = vld [vmem:[#allocation10 + $0x280] sm:$0xff]
    %v7287 = vld [vmem:[#allocation10 + $0x288] sm:$0xff]
    %v7288 = vld [vmem:[#allocation10 + $0x290] sm:$0xff]
    %v7289 = vld [vmem:[#allocation10 + $0x298] sm:$0xff]
    %v7290 = vld [vmem:[#allocation10 + $0x2a0] sm:$0xff]
    %v7291 = vld [vmem:[#allocation10 + $0x2a8] sm:$0xff]
    %v7292 = vld [vmem:[#allocation10 + $0x2b0] sm:$0xff]
    %v7293 = vld [vmem:[#allocation10 + $0x2b8] sm:$0xff]
    %v7294 = vld [vmem:[#allocation10 + $0x2c0] sm:$0xff]
    %v7295 = vld [vmem:[#allocation10 + $0x2c8] sm:$0xff]
    %v7296 = vld [vmem:[#allocation10 + $0x2d0] sm:$0xff]
    %v7297 = vld [vmem:[#allocation10 + $0x2d8] sm:$0xff]
    %v7298 = vld [vmem:[#allocation10 + $0x2e0] sm:$0xff]
    %v7299 = vld [vmem:[#allocation10 + $0x2e8] sm:$0xff]
    %v7300 = vld [vmem:[#allocation10 + $0x2f0] sm:$0xff]
    %v7301 = vld [vmem:[#allocation10 + $0x2f8] sm:$0xff]
    %v7302 = vld [vmem:[#allocation10 + $0x300] sm:$0xff]
    %v7303 = vld [vmem:[#allocation10 + $0x308] sm:$0xff]
    %v7304 = vld [vmem:[#allocation10 + $0x310] sm:$0xff]
    %v7305 = vld [vmem:[#allocation10 + $0x318] sm:$0xff]
    %v7306 = vld [vmem:[#allocation10 + $0x320] sm:$0xff]
    %v7307 = vld [vmem:[#allocation10 + $0x328] sm:$0xff]
    %v7308 = vld [vmem:[#allocation10 + $0x330] sm:$0xff]
    %v7309 = vld [vmem:[#allocation10 + $0x338] sm:$0xff]
    %v7310 = vld [vmem:[#allocation10 + $0x340] sm:$0xff]
    %v7311 = vld [vmem:[#allocation10 + $0x348] sm:$0xff]
    %v7312 = vld [vmem:[#allocation10 + $0x350] sm:$0xff]
    %v7313 = vld [vmem:[#allocation10 + $0x358] sm:$0xff]
    %v7314 = vld [vmem:[#allocation10 + $0x360] sm:$0xff]
    %v7315 = vld [vmem:[#allocation10 + $0x368] sm:$0xff]
    %v7316 = vld [vmem:[#allocation10 + $0x370] sm:$0xff]
    %v7317 = vld [vmem:[#allocation10 + $0x378] sm:$0xff]
    %v7318 = vld [vmem:[#allocation10 + $0x380] sm:$0xff]
    %v7319 = vld [vmem:[#allocation10 + $0x388] sm:$0xff]
    %v7320 = vld [vmem:[#allocation10 + $0x390] sm:$0xff]
    %v7321 = vld [vmem:[#allocation10 + $0x398] sm:$0xff]
    %v7322 = vld [vmem:[#allocation10 + $0x3a0] sm:$0xff]
    %v7323 = vld [vmem:[#allocation10 + $0x3a8] sm:$0xff]
    %v7324 = vld [vmem:[#allocation10 + $0x3b0] sm:$0xff]
    %v7325 = vld [vmem:[#allocation10 + $0x3b8] sm:$0xff]
    %v7326 = vld [vmem:[#allocation10 + $0x3c0] sm:$0xff]
    %v7327 = vld [vmem:[#allocation10 + $0x3c8] sm:$0xff]
    %v7328 = vld [vmem:[#allocation10 + $0x3d0] sm:$0xff]
    %v7329 = vld [vmem:[#allocation10 + $0x3d8] sm:$0xff]
    %v7330 = vld [vmem:[#allocation10 + $0x3e0] sm:$0xff]
    %v7331 = vld [vmem:[#allocation10 + $0x3e8] sm:$0xff]
    %v7332 = vld [vmem:[#allocation10 + $0x3f0] sm:$0xff]
    %v7333 = vld [vmem:[#allocation10 + $0x3f8] sm:$0xff]
    %v7334 = vld [vmem:[#allocation10 + $0x400] sm:$0xff]
    %v7335 = vld [vmem:[#allocation10 + $0x408] sm:$0xff]
    %v7336 = vld [vmem:[#allocation10 + $0x410] sm:$0xff]
    %v7337 = vld [vmem:[#allocation10 + $0x418] sm:$0xff]
    %v7338 = vld [vmem:[#allocation10 + $0x420] sm:$0xff]
    %v7339 = vld [vmem:[#allocation10 + $0x428] sm:$0xff]
    %v7340 = vld [vmem:[#allocation10 + $0x430] sm:$0xff]
    %v7341 = vld [vmem:[#allocation10 + $0x438] sm:$0xff]
    %v7342 = vld [vmem:[#allocation10 + $0x440] sm:$0xff]
    %v7343 = vld [vmem:[#allocation10 + $0x448] sm:$0xff]
    %v7344 = vld [vmem:[#allocation10 + $0x450] sm:$0xff]
    %v7345 = vld [vmem:[#allocation10 + $0x458] sm:$0xff]
    %v7346 = vld [vmem:[#allocation10 + $0x460] sm:$0xff]
    %v7347 = vld [vmem:[#allocation10 + $0x468] sm:$0xff]
    %v7348 = vld [vmem:[#allocation10 + $0x470] sm:$0xff]
    %v7349 = vld [vmem:[#allocation10 + $0x478] sm:$0xff]
    %v7350 = vld [vmem:[#allocation10 + $0x480] sm:$0xff]
    %v7351 = vld [vmem:[#allocation10 + $0x488] sm:$0xff]
    %v7352 = vld [vmem:[#allocation10 + $0x490] sm:$0xff]
    %v7353 = vld [vmem:[#allocation10 + $0x498] sm:$0xff]
    %v7354 = vld [vmem:[#allocation10 + $0x4a0] sm:$0xff]
    %v7355 = vld [vmem:[#allocation10 + $0x4a8] sm:$0xff]
    %v7356 = vld [vmem:[#allocation10 + $0x4b0] sm:$0xff]
    %v7357 = vld [vmem:[#allocation10 + $0x4b8] sm:$0xff]
    %v7358 = vld [vmem:[#allocation10 + $0x4c0] sm:$0xff]
    %v7359 = vld [vmem:[#allocation10 + $0x4c8] sm:$0xff]
    %v7360 = vld [vmem:[#allocation10 + $0x4d0] sm:$0xff]
    %v7361 = vld [vmem:[#allocation10 + $0x4d8] sm:$0xff]
    %v7362 = vld [vmem:[#allocation10 + $0x4e0] sm:$0xff]
    %v7363 = vld [vmem:[#allocation10 + $0x4e8] sm:$0xff]
    %v7364 = vld [vmem:[#allocation10 + $0x4f0] sm:$0xff]
    %v7365 = vld [vmem:[#allocation10 + $0x4f8] sm:$0xff]
    %v7366 = vld [vmem:[#allocation10 + $0x500] sm:$0xff]
    %v7367 = vld [vmem:[#allocation10 + $0x508] sm:$0xff]
    %v7368 = vld [vmem:[#allocation10 + $0x510] sm:$0xff]
    %v7369 = vld [vmem:[#allocation10 + $0x518] sm:$0xff]
    %v7370 = vld [vmem:[#allocation10 + $0x520] sm:$0xff]
    %v7371 = vld [vmem:[#allocation10 + $0x528] sm:$0xff]
    %v7372 = vld [vmem:[#allocation10 + $0x530] sm:$0xff]
    %v7373 = vld [vmem:[#allocation10 + $0x538] sm:$0xff]
    %v7374 = vld [vmem:[#allocation10 + $0x540] sm:$0xff]
    %v7375 = vld [vmem:[#allocation10 + $0x548] sm:$0xff]
    %v7376 = vld [vmem:[#allocation10 + $0x550] sm:$0xff]
    %v7377 = vld [vmem:[#allocation10 + $0x558] sm:$0xff]
    %v7378 = vld [vmem:[#allocation10 + $0x560] sm:$0xff]
    %v7379 = vld [vmem:[#allocation10 + $0x568] sm:$0xff]
    %v7380 = vld [vmem:[#allocation10 + $0x570] sm:$0xff]
    %v7381 = vld [vmem:[#allocation10 + $0x578] sm:$0xff]
    %v7382 = vld [vmem:[#allocation10 + $0x580] sm:$0xff]
    %v7383 = vld [vmem:[#allocation10 + $0x588] sm:$0xff]
    %v7384 = vld [vmem:[#allocation10 + $0x590] sm:$0xff]
    %v7385 = vld [vmem:[#allocation10 + $0x598] sm:$0xff]
    %v7386 = vld [vmem:[#allocation10 + $0x5a0] sm:$0xff]
    %v7387 = vld [vmem:[#allocation10 + $0x5a8] sm:$0xff]
    %v7388 = vld [vmem:[#allocation10 + $0x5b0] sm:$0xff]
    %v7389 = vld [vmem:[#allocation10 + $0x5b8] sm:$0xff]
    %v7390 = vld [vmem:[#allocation10 + $0x5c0] sm:$0xff]
    %v7391 = vld [vmem:[#allocation10 + $0x5c8] sm:$0xff]
    %v7392 = vld [vmem:[#allocation10 + $0x5d0] sm:$0xff]
    %v7393 = vld [vmem:[#allocation10 + $0x5d8] sm:$0xff]
    %v7394 = vld [vmem:[#allocation10 + $0x5e0] sm:$0xff]
    %v7395 = vld [vmem:[#allocation10 + $0x5e8] sm:$0xff]
    %v7396 = vld [vmem:[#allocation10 + $0x5f0] sm:$0xff]
    %v7397 = vld [vmem:[#allocation10 + $0x5f8] sm:$0xff]
    %v7398 = vld [vmem:[#allocation10 + $0x600] sm:$0xff]
    %v7399 = vld [vmem:[#allocation10 + $0x608] sm:$0xff]
    %v7400 = vld [vmem:[#allocation10 + $0x610] sm:$0xff]
    %v7401 = vld [vmem:[#allocation10 + $0x618] sm:$0xff]
    %v7402 = vld [vmem:[#allocation10 + $0x620] sm:$0xff]
    %v7403 = vld [vmem:[#allocation10 + $0x628] sm:$0xff]
    %v7404 = vld [vmem:[#allocation10 + $0x630] sm:$0xff]
    %v7405 = vld [vmem:[#allocation10 + $0x638] sm:$0xff]
    %v7406 = vld [vmem:[#allocation10 + $0x640] sm:$0xff]
    %v7407 = vld [vmem:[#allocation10 + $0x648] sm:$0xff]
    %v7408 = vld [vmem:[#allocation10 + $0x650] sm:$0xff]
    %v7409 = vld [vmem:[#allocation10 + $0x658] sm:$0xff]
    %v7410 = vld [vmem:[#allocation10 + $0x660] sm:$0xff]
    %v7411 = vld [vmem:[#allocation10 + $0x668] sm:$0xff]
    %v7412 = vld [vmem:[#allocation10 + $0x670] sm:$0xff]
    %v7413 = vld [vmem:[#allocation10 + $0x678] sm:$0xff]
    %v7414 = vld [vmem:[#allocation10 + $0x680] sm:$0xff]
    %v7415 = vld [vmem:[#allocation10 + $0x688] sm:$0xff]
    %v7416 = vld [vmem:[#allocation10 + $0x690] sm:$0xff]
    %v7417 = vld [vmem:[#allocation10 + $0x698] sm:$0xff]
    %v7418 = vld [vmem:[#allocation10 + $0x6a0] sm:$0xff]
    %v7419 = vld [vmem:[#allocation10 + $0x6a8] sm:$0xff]
    %v7420 = vld [vmem:[#allocation10 + $0x6b0] sm:$0xff]
    %v7421 = vld [vmem:[#allocation10 + $0x6b8] sm:$0xff]
    %v7422 = vld [vmem:[#allocation10 + $0x6c0] sm:$0xff]
    %v7423 = vld [vmem:[#allocation10 + $0x6c8] sm:$0xff]
    %v7424 = vld [vmem:[#allocation10 + $0x6d0] sm:$0xff]
    %v7425 = vld [vmem:[#allocation10 + $0x6d8] sm:$0xff]
    %v7426 = vld [vmem:[#allocation10 + $0x6e0] sm:$0xff]
    %v7427 = vld [vmem:[#allocation10 + $0x6e8] sm:$0xff]
    %v7428 = vld [vmem:[#allocation10 + $0x6f0] sm:$0xff]
    %v7429 = vld [vmem:[#allocation10 + $0x6f8] sm:$0xff]
    %v7430 = vld [vmem:[#allocation10 + $0x700] sm:$0xff]
    %v7431 = vld [vmem:[#allocation10 + $0x708] sm:$0xff]
    %v7432 = vld [vmem:[#allocation10 + $0x710] sm:$0xff]
    %v7433 = vld [vmem:[#allocation10 + $0x718] sm:$0xff]
    %v7434 = vld [vmem:[#allocation10 + $0x720] sm:$0xff]
    %v7435 = vld [vmem:[#allocation10 + $0x728] sm:$0xff]
    %v7436 = vld [vmem:[#allocation10 + $0x730] sm:$0xff]
    %v7437 = vld [vmem:[#allocation10 + $0x738] sm:$0xff]
    %v7438 = vld [vmem:[#allocation10 + $0x740] sm:$0xff]
    %v7439 = vld [vmem:[#allocation10 + $0x748] sm:$0xff]
    %v7440 = vld [vmem:[#allocation10 + $0x750] sm:$0xff]
    %v7441 = vld [vmem:[#allocation10 + $0x758] sm:$0xff]
    %v7442 = vld [vmem:[#allocation10 + $0x760] sm:$0xff]
    %v7443 = vld [vmem:[#allocation10 + $0x768] sm:$0xff]
    %v7444 = vld [vmem:[#allocation10 + $0x770] sm:$0xff]
    %v7445 = vld [vmem:[#allocation10 + $0x778] sm:$0xff]
    %v7446 = vld [vmem:[#allocation10 + $0x780] sm:$0xff]
    %v7447 = vld [vmem:[#allocation10 + $0x788] sm:$0xff]
    %v7448 = vld [vmem:[#allocation10 + $0x790] sm:$0xff]
    %v7449 = vld [vmem:[#allocation10 + $0x798] sm:$0xff]
    %v7450 = vld [vmem:[#allocation10 + $0x7a0] sm:$0xff]
    %v7451 = vld [vmem:[#allocation10 + $0x7a8] sm:$0xff]
    %v7452 = vld [vmem:[#allocation10 + $0x7b0] sm:$0xff]
    %v7453 = vld [vmem:[#allocation10 + $0x7b8] sm:$0xff]
    %v7454 = vld [vmem:[#allocation10 + $0x7c0] sm:$0xff]
    %v7455 = vld [vmem:[#allocation10 + $0x7c8] sm:$0xff]
    %v7456 = vld [vmem:[#allocation10 + $0x7d0] sm:$0xff]
    %v7457 = vld [vmem:[#allocation10 + $0x7d8] sm:$0xff]
    %v7458 = vld [vmem:[#allocation10 + $0x7e0] sm:$0xff]
    %v7459 = vld [vmem:[#allocation10 + $0x7e8] sm:$0xff]
    %v7460 = vld [vmem:[#allocation10 + $0x7f0] sm:$0xff]
    %v7461 = vld [vmem:[#allocation10 + $0x7f8] sm:$0xff]
    %v7462 = vpack.c.bf16 %v6764, %v6764
    %v7463 = vpack.c.bf16 %v6771, %v6771
    %v7464 = vpack.c.bf16 %v6778, %v6778
    %v7465 = vpack.c.bf16 %v6785, %v6785
    %v7466 = vpack.c.bf16 %v6792, %v6792
    %v7467 = vpack.c.bf16 %v6799, %v6799
    %v7468 = vpack.c.bf16 %v6806, %v6806
    %v7469 = vpack.c.bf16 %v6813, %v6813
    %v7470 = vpack.c.bf16 %v6820, %v6820
    %v7471 = vpack.c.bf16 %v6827, %v6827
    %v7472 = vpack.c.bf16 %v6834, %v6834
    %v7473 = vpack.c.bf16 %v6841, %v6841
    %v7474 = vpack.c.bf16 %v6848, %v6848
    %v7475 = vpack.c.bf16 %v6855, %v6855
    %v7476 = vpack.c.bf16 %v6862, %v6862
    %v7477 = vpack.c.bf16 %v6869, %v6869
    %v7478 = vpack.c.bf16 %v6876, %v6876
    %v7479 = vpack.c.bf16 %v6883, %v6883
    %v7480 = vpack.c.bf16 %v6890, %v6890
    %v7481 = vpack.c.bf16 %v6897, %v6897
    %v7482 = vpack.c.bf16 %v6904, %v6904
    %v7483 = vpack.c.bf16 %v6911, %v6911
    %v7484 = vpack.c.bf16 %v6918, %v6918
    %v7485 = vpack.c.bf16 %v6925, %v6925
    %v7486 = vpack.c.bf16 %v6932, %v6932
    %v7487 = vpack.c.bf16 %v6939, %v6939
    %v7488 = vpack.c.bf16 %v6946, %v6946
    %v7489 = vpack.c.bf16 %v6953, %v6953
    %v7490 = vpack.c.bf16 %v6960, %v6960
    %v7491 = vpack.c.bf16 %v6967, %v6967
    %v7492 = vpack.c.bf16 %v6974, %v6974
    %v7493 = vpack.c.bf16 %v6981, %v6981
    %v7494 = vpack.c.bf16 %v6988, %v6988
    %v7495 = vpack.c.bf16 %v6995, %v6995
    %v7496 = vpack.c.bf16 %v7002, %v7002
    %v7497 = vpack.c.bf16 %v7009, %v7009
    %v7498 = vpack.c.bf16 %v7016, %v7016
    %v7499 = vpack.c.bf16 %v7023, %v7023
    %v7500 = vpack.c.bf16 %v7030, %v7030
    %v7501 = vpack.c.bf16 %v7037, %v7037
    %v7502 = vpack.c.bf16 %v7044, %v7044
    %v7503 = vpack.c.bf16 %v7051, %v7051
    %v7504 = vpack.c.bf16 %v7058, %v7058
    %v7505 = vpack.c.bf16 %v7065, %v7065
    %v7506 = vpack.c.bf16 %v7072, %v7072
    %v7507 = vpack.c.bf16 %v7079, %v7079
    %v7508 = vpack.c.bf16 %v7086, %v7086
    %v7509 = vpack.c.bf16 %v7093, %v7093
    %v7510 = vpack.c.bf16 %v7100, %v7100
    %v7511 = vpack.c.bf16 %v7107, %v7107
    %v7512 = vpack.c.bf16 %v7114, %v7114
    %v7513 = vpack.c.bf16 %v7121, %v7121
    %v7514 = vpack.c.bf16 %v7128, %v7128
    %v7515 = vpack.c.bf16 %v7135, %v7135
    %v7516 = vpack.c.bf16 %v7142, %v7142
    %v7517 = vpack.c.bf16 %v7149, %v7149
    %v7518 = vpack.c.bf16 %v7156, %v7156
    %v7519 = vpack.c.bf16 %v7163, %v7163
    %v7520 = vpack.c.bf16 %v7170, %v7170
    %v7521 = vpack.c.bf16 %v7177, %v7177
    %v7522 = vpack.c.bf16 %v7184, %v7184
    %v7523 = vpack.c.bf16 %v7191, %v7191
    %v7524 = vpack.c.bf16 %v7198, %v7198
    %v7525 = vpack.c.bf16 %v7205, %v7205
    %v7526 = vld [vmem:[%s20] sm:$0xf]
    %v7528 = vperm.slane %v7526, 0
    %v7529 = vperm.slane %v7526, 1
    %v7530 = vperm.slane %v7526, 2
    %v7531 = vperm.slane %v7526, 3
    %v7600 = vunpack.c.l.b16 %v7462
    %v7601 = vunpack.c.l.b16 %v7463
    %v7602 = vunpack.c.l.b16 %v7464
    %v7603 = vunpack.c.l.b16 %v7465
    %v7604 = vunpack.c.l.b16 %v7466
    %v7605 = vunpack.c.l.b16 %v7467
    %v7606 = vunpack.c.l.b16 %v7468
    %v7607 = vunpack.c.l.b16 %v7469
    %v7608 = vunpack.c.l.b16 %v7470
    %v7609 = vunpack.c.l.b16 %v7471
    %v7610 = vunpack.c.l.b16 %v7472
    %v7611 = vunpack.c.l.b16 %v7473
    %v7612 = vunpack.c.l.b16 %v7474
    %v7613 = vunpack.c.l.b16 %v7475
    %v7614 = vunpack.c.l.b16 %v7476
    %v7615 = vunpack.c.l.b16 %v7477
    %v7616 = vunpack.c.l.b16 %v7478
    %v7617 = vunpack.c.l.b16 %v7479
    %v7618 = vunpack.c.l.b16 %v7480
    %v7619 = vunpack.c.l.b16 %v7481
    %v7620 = vunpack.c.l.b16 %v7482
    %v7621 = vunpack.c.l.b16 %v7483
    %v7622 = vunpack.c.l.b16 %v7484
    %v7623 = vunpack.c.l.b16 %v7485
    %v7624 = vunpack.c.l.b16 %v7486
    %v7625 = vunpack.c.l.b16 %v7487
    %v7626 = vunpack.c.l.b16 %v7488
    %v7627 = vunpack.c.l.b16 %v7489
    %v7628 = vunpack.c.l.b16 %v7490
    %v7629 = vunpack.c.l.b16 %v7491
    %v7630 = vunpack.c.l.b16 %v7492
    %v7631 = vunpack.c.l.b16 %v7493
    %v7632 = vunpack.c.l.b16 %v7494
    %v7633 = vunpack.c.l.b16 %v7495
    %v7634 = vunpack.c.l.b16 %v7496
    %v7635 = vunpack.c.l.b16 %v7497
    %v7636 = vunpack.c.l.b16 %v7498
    %v7637 = vunpack.c.l.b16 %v7499
    %v7638 = vunpack.c.l.b16 %v7500
    %v7639 = vunpack.c.l.b16 %v7501
    %v7640 = vunpack.c.l.b16 %v7502
    %v7641 = vunpack.c.l.b16 %v7503
    %v7642 = vunpack.c.l.b16 %v7504
    %v7643 = vunpack.c.l.b16 %v7505
    %v7644 = vunpack.c.l.b16 %v7506
    %v7645 = vunpack.c.l.b16 %v7507
    %v7646 = vunpack.c.l.b16 %v7508
    %v7647 = vunpack.c.l.b16 %v7509
    %v7648 = vunpack.c.l.b16 %v7510
    %v7649 = vunpack.c.l.b16 %v7511
    %v7650 = vunpack.c.l.b16 %v7512
    %v7651 = vunpack.c.l.b16 %v7513
    %v7652 = vunpack.c.l.b16 %v7514
    %v7653 = vunpack.c.l.b16 %v7515
    %v7654 = vunpack.c.l.b16 %v7516
    %v7655 = vunpack.c.l.b16 %v7517
    %v7656 = vunpack.c.l.b16 %v7518
    %v7657 = vunpack.c.l.b16 %v7519
    %v7658 = vunpack.c.l.b16 %v7520
    %v7659 = vunpack.c.l.b16 %v7521
    %v7660 = vunpack.c.l.b16 %v7522
    %v7661 = vunpack.c.l.b16 %v7523
    %v7662 = vunpack.c.l.b16 %v7524
    %v7663 = vunpack.c.l.b16 %v7525
    %v7664 = vsel %vm2587, %v7608, %v7600
    %v7665 = vsel %vm2589, %v7616, %v7664
    %v7666 = vsel %vm2591, %v7624, %v7665
    %v7667 = vsel %vm2593, %v7632, %v7666
    %v7668 = vsel %vm2595, %v7640, %v7667
    %v7669 = vsel %vm2597, %v7648, %v7668
    %v7670 = vsel %vm2599, %v7656, %v7669
    %v7671 = vsel %vm2587, %v7609, %v7601
    %v7672 = vsel %vm2589, %v7617, %v7671
    %v7673 = vsel %vm2591, %v7625, %v7672
    %v7674 = vsel %vm2593, %v7633, %v7673
    %v7675 = vsel %vm2595, %v7641, %v7674
    %v7676 = vsel %vm2597, %v7649, %v7675
    %v7677 = vsel %vm2599, %v7657, %v7676
    %v7678 = vsel %vm2587, %v7610, %v7602
    %v7679 = vsel %vm2589, %v7618, %v7678
    %v7680 = vsel %vm2591, %v7626, %v7679
    %v7681 = vsel %vm2593, %v7634, %v7680
    %v7682 = vsel %vm2595, %v7642, %v7681
    %v7683 = vsel %vm2597, %v7650, %v7682
    %v7684 = vsel %vm2599, %v7658, %v7683
    %v7685 = vsel %vm2587, %v7611, %v7603
    %v7686 = vsel %vm2589, %v7619, %v7685
    %v7687 = vsel %vm2591, %v7627, %v7686
    %v7688 = vsel %vm2593, %v7635, %v7687
    %v7689 = vsel %vm2595, %v7643, %v7688
    %v7690 = vsel %vm2597, %v7651, %v7689
    %v7691 = vsel %vm2599, %v7659, %v7690
    %v7692 = vsel %vm2587, %v7612, %v7604
    %v7693 = vsel %vm2589, %v7620, %v7692
    %v7694 = vsel %vm2591, %v7628, %v7693
    %v7695 = vsel %vm2593, %v7636, %v7694
    %v7696 = vsel %vm2595, %v7644, %v7695
    %v7697 = vsel %vm2597, %v7652, %v7696
    %v7698 = vsel %vm2599, %v7660, %v7697
    %v7699 = vsel %vm2587, %v7613, %v7605
    %v7700 = vsel %vm2589, %v7621, %v7699
    %v7701 = vsel %vm2591, %v7629, %v7700
    %v7702 = vsel %vm2593, %v7637, %v7701
    %v7703 = vsel %vm2595, %v7645, %v7702
    %v7704 = vsel %vm2597, %v7653, %v7703
    %v7705 = vsel %vm2599, %v7661, %v7704
    %v7706 = vsel %vm2587, %v7614, %v7606
    %v7707 = vsel %vm2589, %v7622, %v7706
    %v7708 = vsel %vm2591, %v7630, %v7707
    %v7709 = vsel %vm2593, %v7638, %v7708
    %v7710 = vsel %vm2595, %v7646, %v7709
    %v7711 = vsel %vm2597, %v7654, %v7710
    %v7712 = vsel %vm2599, %v7662, %v7711
    %v7713 = vsel %vm2587, %v7615, %v7607
    %v7714 = vsel %vm2589, %v7623, %v7713
    %v7715 = vsel %vm2591, %v7631, %v7714
    %v7716 = vsel %vm2593, %v7639, %v7715
    %v7717 = vsel %vm2595, %v7647, %v7716
    %v7718 = vsel %vm2597, %v7655, %v7717
    %v7719 = vsel %vm2599, %v7663, %v7718
    %v7720 = vpack.c.b16 %v7670, %v7670
    %v7721 = vpack.c.b16 %v7677, %v7677
    %v7722 = vpack.c.b16 %v7684, %v7684
    %v7723 = vpack.c.b16 %v7691, %v7691
    %v7724 = vpack.c.b16 %v7698, %v7698
    %v7725 = vpack.c.b16 %v7705, %v7705
    %v7726 = vpack.c.b16 %v7712, %v7712
    %v7727 = vpack.c.b16 %v7719, %v7719
    %v7992 = vunpack.c.l.b16 %v7206
    %v7993 = vunpack.c.h.b16 %v7206
    %v7994 = vunpack.c.l.b16 %v7207
    %v7995 = vunpack.c.h.b16 %v7207
    %v7996 = vunpack.c.l.b16 %v7208
    %v7997 = vunpack.c.h.b16 %v7208
    %v7998 = vunpack.c.l.b16 %v7209
    %v7999 = vunpack.c.h.b16 %v7209
    %v8000 = vunpack.c.l.b16 %v7210
    %v8001 = vunpack.c.h.b16 %v7210
    %v8002 = vunpack.c.l.b16 %v7211
    %v8003 = vunpack.c.h.b16 %v7211
    %v8004 = vunpack.c.l.b16 %v7212
    %v8005 = vunpack.c.h.b16 %v7212
    %v8006 = vunpack.c.l.b16 %v7213
    %v8007 = vunpack.c.h.b16 %v7213
    %v8008 = vunpack.c.l.b16 %v7214
    %v8009 = vunpack.c.h.b16 %v7214
    %v8010 = vunpack.c.l.b16 %v7215
    %v8011 = vunpack.c.h.b16 %v7215
    %v8012 = vunpack.c.l.b16 %v7216
    %v8013 = vunpack.c.h.b16 %v7216
    %v8014 = vunpack.c.l.b16 %v7217
    %v8015 = vunpack.c.h.b16 %v7217
    %v8016 = vunpack.c.l.b16 %v7218
    %v8017 = vunpack.c.h.b16 %v7218
    %v8018 = vunpack.c.l.b16 %v7219
    %v8019 = vunpack.c.h.b16 %v7219
    %v8020 = vunpack.c.l.b16 %v7220
    %v8021 = vunpack.c.h.b16 %v7220
    %v8022 = vunpack.c.l.b16 %v7221
    %v8023 = vunpack.c.h.b16 %v7221
    %v8024 = vunpack.c.l.b16 %v7222
    %v8025 = vunpack.c.h.b16 %v7222
    %v8026 = vunpack.c.l.b16 %v7223
    %v8027 = vunpack.c.h.b16 %v7223
    %v8028 = vunpack.c.l.b16 %v7224
    %v8029 = vunpack.c.h.b16 %v7224
    %v8030 = vunpack.c.l.b16 %v7225
    %v8031 = vunpack.c.h.b16 %v7225
    %v8032 = vunpack.c.l.b16 %v7226
    %v8033 = vunpack.c.h.b16 %v7226
    %v8034 = vunpack.c.l.b16 %v7227
    %v8035 = vunpack.c.h.b16 %v7227
    %v8036 = vunpack.c.l.b16 %v7228
    %v8037 = vunpack.c.h.b16 %v7228
    %v8038 = vunpack.c.l.b16 %v7229
    %v8039 = vunpack.c.h.b16 %v7229
    %v8040 = vunpack.c.l.b16 %v7230
    %v8041 = vunpack.c.h.b16 %v7230
    %v8042 = vunpack.c.l.b16 %v7231
    %v8043 = vunpack.c.h.b16 %v7231
    %v8044 = vunpack.c.l.b16 %v7232
    %v8045 = vunpack.c.h.b16 %v7232
    %v8046 = vunpack.c.l.b16 %v7233
    %v8047 = vunpack.c.h.b16 %v7233
    %v8048 = vunpack.c.l.b16 %v7234
    %v8049 = vunpack.c.h.b16 %v7234
    %v8050 = vunpack.c.l.b16 %v7235
    %v8051 = vunpack.c.h.b16 %v7235
    %v8052 = vunpack.c.l.b16 %v7236
    %v8053 = vunpack.c.h.b16 %v7236
    %v8054 = vunpack.c.l.b16 %v7237
    %v8055 = vunpack.c.h.b16 %v7237
    %v8056 = vunpack.c.l.b16 %v7238
    %v8057 = vunpack.c.h.b16 %v7238
    %v8058 = vunpack.c.l.b16 %v7239
    %v8059 = vunpack.c.h.b16 %v7239
    %v8060 = vunpack.c.l.b16 %v7240
    %v8061 = vunpack.c.h.b16 %v7240
    %v8062 = vunpack.c.l.b16 %v7241
    %v8063 = vunpack.c.h.b16 %v7241
    %v8064 = vunpack.c.l.b16 %v7242
    %v8065 = vunpack.c.h.b16 %v7242
    %v8066 = vunpack.c.l.b16 %v7243
    %v8067 = vunpack.c.h.b16 %v7243
    %v8068 = vunpack.c.l.b16 %v7244
    %v8069 = vunpack.c.h.b16 %v7244
    %v8070 = vunpack.c.l.b16 %v7245
    %v8071 = vunpack.c.h.b16 %v7245
    %v8072 = vunpack.c.l.b16 %v7246
    %v8073 = vunpack.c.h.b16 %v7246
    %v8074 = vunpack.c.l.b16 %v7247
    %v8075 = vunpack.c.h.b16 %v7247
    %v8076 = vunpack.c.l.b16 %v7248
    %v8077 = vunpack.c.h.b16 %v7248
    %v8078 = vunpack.c.l.b16 %v7249
    %v8079 = vunpack.c.h.b16 %v7249
    %v8080 = vunpack.c.l.b16 %v7250
    %v8081 = vunpack.c.h.b16 %v7250
    %v8082 = vunpack.c.l.b16 %v7251
    %v8083 = vunpack.c.h.b16 %v7251
    %v8084 = vunpack.c.l.b16 %v7252
    %v8085 = vunpack.c.h.b16 %v7252
    %v8086 = vunpack.c.l.b16 %v7253
    %v8087 = vunpack.c.h.b16 %v7253
    %v8088 = vunpack.c.l.b16 %v7254
    %v8089 = vunpack.c.h.b16 %v7254
    %v8090 = vunpack.c.l.b16 %v7255
    %v8091 = vunpack.c.h.b16 %v7255
    %v8092 = vunpack.c.l.b16 %v7256
    %v8093 = vunpack.c.h.b16 %v7256
    %v8094 = vunpack.c.l.b16 %v7257
    %v8095 = vunpack.c.h.b16 %v7257
    %v8096 = vunpack.c.l.b16 %v7258
    %v8097 = vunpack.c.h.b16 %v7258
    %v8098 = vunpack.c.l.b16 %v7259
    %v8099 = vunpack.c.h.b16 %v7259
    %v8100 = vunpack.c.l.b16 %v7260
    %v8101 = vunpack.c.h.b16 %v7260
    %v8102 = vunpack.c.l.b16 %v7261
    %v8103 = vunpack.c.h.b16 %v7261
    %v8104 = vunpack.c.l.b16 %v7262
    %v8105 = vunpack.c.h.b16 %v7262
    %v8106 = vunpack.c.l.b16 %v7263
    %v8107 = vunpack.c.h.b16 %v7263
    %v8108 = vunpack.c.l.b16 %v7264
    %v8109 = vunpack.c.h.b16 %v7264
    %v8110 = vunpack.c.l.b16 %v7265
    %v8111 = vunpack.c.h.b16 %v7265
    %v8112 = vunpack.c.l.b16 %v7266
    %v8113 = vunpack.c.h.b16 %v7266
    %v8114 = vunpack.c.l.b16 %v7267
    %v8115 = vunpack.c.h.b16 %v7267
    %v8116 = vunpack.c.l.b16 %v7268
    %v8117 = vunpack.c.h.b16 %v7268
    %v8118 = vunpack.c.l.b16 %v7269
    %v8119 = vunpack.c.h.b16 %v7269
    %v8120 = vunpack.c.l.b16 %v7270
    %v8121 = vunpack.c.h.b16 %v7270
    %v8122 = vunpack.c.l.b16 %v7271
    %v8123 = vunpack.c.h.b16 %v7271
    %v8124 = vunpack.c.l.b16 %v7272
    %v8125 = vunpack.c.h.b16 %v7272
    %v8126 = vunpack.c.l.b16 %v7273
    %v8127 = vunpack.c.h.b16 %v7273
    %v8128 = vunpack.c.l.b16 %v7274
    %v8129 = vunpack.c.h.b16 %v7274
    %v8130 = vunpack.c.l.b16 %v7275
    %v8131 = vunpack.c.h.b16 %v7275
    %v8132 = vunpack.c.l.b16 %v7276
    %v8133 = vunpack.c.h.b16 %v7276
    %v8134 = vunpack.c.l.b16 %v7277
    %v8135 = vunpack.c.h.b16 %v7277
    %v8136 = vunpack.c.l.b16 %v7278
    %v8137 = vunpack.c.h.b16 %v7278
    %v8138 = vunpack.c.l.b16 %v7279
    %v8139 = vunpack.c.h.b16 %v7279
    %v8140 = vunpack.c.l.b16 %v7280
    %v8141 = vunpack.c.h.b16 %v7280
    %v8142 = vunpack.c.l.b16 %v7281
    %v8143 = vunpack.c.h.b16 %v7281
    %v8144 = vunpack.c.l.b16 %v7282
    %v8145 = vunpack.c.h.b16 %v7282
    %v8146 = vunpack.c.l.b16 %v7283
    %v8147 = vunpack.c.h.b16 %v7283
    %v8148 = vunpack.c.l.b16 %v7284
    %v8149 = vunpack.c.h.b16 %v7284
    %v8150 = vunpack.c.l.b16 %v7285
    %v8151 = vunpack.c.h.b16 %v7285
    %v8152 = vunpack.c.l.b16 %v7286
    %v8153 = vunpack.c.h.b16 %v7286
    %v8154 = vunpack.c.l.b16 %v7287
    %v8155 = vunpack.c.h.b16 %v7287
    %v8156 = vunpack.c.l.b16 %v7288
    %v8157 = vunpack.c.h.b16 %v7288
    %v8158 = vunpack.c.l.b16 %v7289
    %v8159 = vunpack.c.h.b16 %v7289
    %v8160 = vunpack.c.l.b16 %v7290
    %v8161 = vunpack.c.h.b16 %v7290
    %v8162 = vunpack.c.l.b16 %v7291
    %v8163 = vunpack.c.h.b16 %v7291
    %v8164 = vunpack.c.l.b16 %v7292
    %v8165 = vunpack.c.h.b16 %v7292
    %v8166 = vunpack.c.l.b16 %v7293
    %v8167 = vunpack.c.h.b16 %v7293
    %v8168 = vunpack.c.l.b16 %v7294
    %v8169 = vunpack.c.h.b16 %v7294
    %v8170 = vunpack.c.l.b16 %v7295
    %v8171 = vunpack.c.h.b16 %v7295
    %v8172 = vunpack.c.l.b16 %v7296
    %v8173 = vunpack.c.h.b16 %v7296
    %v8174 = vunpack.c.l.b16 %v7297
    %v8175 = vunpack.c.h.b16 %v7297
    %v8176 = vunpack.c.l.b16 %v7298
    %v8177 = vunpack.c.h.b16 %v7298
    %v8178 = vunpack.c.l.b16 %v7299
    %v8179 = vunpack.c.h.b16 %v7299
    %v8180 = vunpack.c.l.b16 %v7300
    %v8181 = vunpack.c.h.b16 %v7300
    %v8182 = vunpack.c.l.b16 %v7301
    %v8183 = vunpack.c.h.b16 %v7301
    %v8184 = vunpack.c.l.b16 %v7302
    %v8185 = vunpack.c.h.b16 %v7302
    %v8186 = vunpack.c.l.b16 %v7303
    %v8187 = vunpack.c.h.b16 %v7303
    %v8188 = vunpack.c.l.b16 %v7304
    %v8189 = vunpack.c.h.b16 %v7304
    %v8190 = vunpack.c.l.b16 %v7305
    %v8191 = vunpack.c.h.b16 %v7305
    %v8192 = vunpack.c.l.b16 %v7306
    %v8193 = vunpack.c.h.b16 %v7306
    %v8194 = vunpack.c.l.b16 %v7307
    %v8195 = vunpack.c.h.b16 %v7307
    %v8196 = vunpack.c.l.b16 %v7308
    %v8197 = vunpack.c.h.b16 %v7308
    %v8198 = vunpack.c.l.b16 %v7309
    %v8199 = vunpack.c.h.b16 %v7309
    %v8200 = vunpack.c.l.b16 %v7310
    %v8201 = vunpack.c.h.b16 %v7310
    %v8202 = vunpack.c.l.b16 %v7311
    %v8203 = vunpack.c.h.b16 %v7311
    %v8204 = vunpack.c.l.b16 %v7312
    %v8205 = vunpack.c.h.b16 %v7312
    %v8206 = vunpack.c.l.b16 %v7313
    %v8207 = vunpack.c.h.b16 %v7313
    %v8208 = vunpack.c.l.b16 %v7314
    %v8209 = vunpack.c.h.b16 %v7314
    %v8210 = vunpack.c.l.b16 %v7315
    %v8211 = vunpack.c.h.b16 %v7315
    %v8212 = vunpack.c.l.b16 %v7316
    %v8213 = vunpack.c.h.b16 %v7316
    %v8214 = vunpack.c.l.b16 %v7317
    %v8215 = vunpack.c.h.b16 %v7317
    %v8216 = vunpack.c.l.b16 %v7318
    %v8217 = vunpack.c.h.b16 %v7318
    %v8218 = vunpack.c.l.b16 %v7319
    %v8219 = vunpack.c.h.b16 %v7319
    %v8220 = vunpack.c.l.b16 %v7320
    %v8221 = vunpack.c.h.b16 %v7320
    %v8222 = vunpack.c.l.b16 %v7321
    %v8223 = vunpack.c.h.b16 %v7321
    %v8224 = vunpack.c.l.b16 %v7322
    %v8225 = vunpack.c.h.b16 %v7322
    %v8226 = vunpack.c.l.b16 %v7323
    %v8227 = vunpack.c.h.b16 %v7323
    %v8228 = vunpack.c.l.b16 %v7324
    %v8229 = vunpack.c.h.b16 %v7324
    %v8230 = vunpack.c.l.b16 %v7325
    %v8231 = vunpack.c.h.b16 %v7325
    %v8232 = vunpack.c.l.b16 %v7326
    %v8233 = vunpack.c.h.b16 %v7326
    %v8234 = vunpack.c.l.b16 %v7327
    %v8235 = vunpack.c.h.b16 %v7327
    %v8236 = vunpack.c.l.b16 %v7328
    %v8237 = vunpack.c.h.b16 %v7328
    %v8238 = vunpack.c.l.b16 %v7329
    %v8239 = vunpack.c.h.b16 %v7329
    %v8240 = vunpack.c.l.b16 %v7330
    %v8241 = vunpack.c.h.b16 %v7330
    %v8242 = vunpack.c.l.b16 %v7331
    %v8243 = vunpack.c.h.b16 %v7331
    %v8244 = vunpack.c.l.b16 %v7332
    %v8245 = vunpack.c.h.b16 %v7332
    %v8246 = vunpack.c.l.b16 %v7333
    %v8247 = vunpack.c.h.b16 %v7333
    %v8248 = vunpack.c.l.b16 %v7334
    %v8249 = vunpack.c.h.b16 %v7334
    %v8250 = vunpack.c.l.b16 %v7335
    %v8251 = vunpack.c.h.b16 %v7335
    %v8252 = vunpack.c.l.b16 %v7336
    %v8253 = vunpack.c.h.b16 %v7336
    %v8254 = vunpack.c.l.b16 %v7337
    %v8255 = vunpack.c.h.b16 %v7337
    %v8256 = vunpack.c.l.b16 %v7338
    %v8257 = vunpack.c.h.b16 %v7338
    %v8258 = vunpack.c.l.b16 %v7339
    %v8259 = vunpack.c.h.b16 %v7339
    %v8260 = vunpack.c.l.b16 %v7340
    %v8261 = vunpack.c.h.b16 %v7340
    %v8262 = vunpack.c.l.b16 %v7341
    %v8263 = vunpack.c.h.b16 %v7341
    %v8264 = vunpack.c.l.b16 %v7342
    %v8265 = vunpack.c.h.b16 %v7342
    %v8266 = vunpack.c.l.b16 %v7343
    %v8267 = vunpack.c.h.b16 %v7343
    %v8268 = vunpack.c.l.b16 %v7344
    %v8269 = vunpack.c.h.b16 %v7344
    %v8270 = vunpack.c.l.b16 %v7345
    %v8271 = vunpack.c.h.b16 %v7345
    %v8272 = vunpack.c.l.b16 %v7346
    %v8273 = vunpack.c.h.b16 %v7346
    %v8274 = vunpack.c.l.b16 %v7347
    %v8275 = vunpack.c.h.b16 %v7347
    %v8276 = vunpack.c.l.b16 %v7348
    %v8277 = vunpack.c.h.b16 %v7348
    %v8278 = vunpack.c.l.b16 %v7349
    %v8279 = vunpack.c.h.b16 %v7349
    %v8280 = vunpack.c.l.b16 %v7350
    %v8281 = vunpack.c.h.b16 %v7350
    %v8282 = vunpack.c.l.b16 %v7351
    %v8283 = vunpack.c.h.b16 %v7351
    %v8284 = vunpack.c.l.b16 %v7352
    %v8285 = vunpack.c.h.b16 %v7352
    %v8286 = vunpack.c.l.b16 %v7353
    %v8287 = vunpack.c.h.b16 %v7353
    %v8288 = vunpack.c.l.b16 %v7354
    %v8289 = vunpack.c.h.b16 %v7354
    %v8290 = vunpack.c.l.b16 %v7355
    %v8291 = vunpack.c.h.b16 %v7355
    %v8292 = vunpack.c.l.b16 %v7356
    %v8293 = vunpack.c.h.b16 %v7356
    %v8294 = vunpack.c.l.b16 %v7357
    %v8295 = vunpack.c.h.b16 %v7357
    %v8296 = vunpack.c.l.b16 %v7358
    %v8297 = vunpack.c.h.b16 %v7358
    %v8298 = vunpack.c.l.b16 %v7359
    %v8299 = vunpack.c.h.b16 %v7359
    %v8300 = vunpack.c.l.b16 %v7360
    %v8301 = vunpack.c.h.b16 %v7360
    %v8302 = vunpack.c.l.b16 %v7361
    %v8303 = vunpack.c.h.b16 %v7361
    %v8304 = vunpack.c.l.b16 %v7362
    %v8305 = vunpack.c.h.b16 %v7362
    %v8306 = vunpack.c.l.b16 %v7363
    %v8307 = vunpack.c.h.b16 %v7363
    %v8308 = vunpack.c.l.b16 %v7364
    %v8309 = vunpack.c.h.b16 %v7364
    %v8310 = vunpack.c.l.b16 %v7365
    %v8311 = vunpack.c.h.b16 %v7365
    %v8312 = vunpack.c.l.b16 %v7366
    %v8313 = vunpack.c.h.b16 %v7366
    %v8314 = vunpack.c.l.b16 %v7367
    %v8315 = vunpack.c.h.b16 %v7367
    %v8316 = vunpack.c.l.b16 %v7368
    %v8317 = vunpack.c.h.b16 %v7368
    %v8318 = vunpack.c.l.b16 %v7369
    %v8319 = vunpack.c.h.b16 %v7369
    %v8320 = vunpack.c.l.b16 %v7370
    %v8321 = vunpack.c.h.b16 %v7370
    %v8322 = vunpack.c.l.b16 %v7371
    %v8323 = vunpack.c.h.b16 %v7371
    %v8324 = vunpack.c.l.b16 %v7372
    %v8325 = vunpack.c.h.b16 %v7372
    %v8326 = vunpack.c.l.b16 %v7373
    %v8327 = vunpack.c.h.b16 %v7373
    %v8328 = vunpack.c.l.b16 %v7374
    %v8329 = vunpack.c.h.b16 %v7374
    %v8330 = vunpack.c.l.b16 %v7375
    %v8331 = vunpack.c.h.b16 %v7375
    %v8332 = vunpack.c.l.b16 %v7376
    %v8333 = vunpack.c.h.b16 %v7376
    %v8334 = vunpack.c.l.b16 %v7377
    %v8335 = vunpack.c.h.b16 %v7377
    %v8336 = vunpack.c.l.b16 %v7378
    %v8337 = vunpack.c.h.b16 %v7378
    %v8338 = vunpack.c.l.b16 %v7379
    %v8339 = vunpack.c.h.b16 %v7379
    %v8340 = vunpack.c.l.b16 %v7380
    %v8341 = vunpack.c.h.b16 %v7380
    %v8342 = vunpack.c.l.b16 %v7381
    %v8343 = vunpack.c.h.b16 %v7381
    %v8344 = vunpack.c.l.b16 %v7382
    %v8345 = vunpack.c.h.b16 %v7382
    %v8346 = vunpack.c.l.b16 %v7383
    %v8347 = vunpack.c.h.b16 %v7383
    %v8348 = vunpack.c.l.b16 %v7384
    %v8349 = vunpack.c.h.b16 %v7384
    %v8350 = vunpack.c.l.b16 %v7385
    %v8351 = vunpack.c.h.b16 %v7385
    %v8352 = vunpack.c.l.b16 %v7386
    %v8353 = vunpack.c.h.b16 %v7386
    %v8354 = vunpack.c.l.b16 %v7387
    %v8355 = vunpack.c.h.b16 %v7387
    %v8356 = vunpack.c.l.b16 %v7388
    %v8357 = vunpack.c.h.b16 %v7388
    %v8358 = vunpack.c.l.b16 %v7389
    %v8359 = vunpack.c.h.b16 %v7389
    %v8360 = vunpack.c.l.b16 %v7390
    %v8361 = vunpack.c.h.b16 %v7390
    %v8362 = vunpack.c.l.b16 %v7391
    %v8363 = vunpack.c.h.b16 %v7391
    %v8364 = vunpack.c.l.b16 %v7392
    %v8365 = vunpack.c.h.b16 %v7392
    %v8366 = vunpack.c.l.b16 %v7393
    %v8367 = vunpack.c.h.b16 %v7393
    %v8368 = vunpack.c.l.b16 %v7394
    %v8369 = vunpack.c.h.b16 %v7394
    %v8370 = vunpack.c.l.b16 %v7395
    %v8371 = vunpack.c.h.b16 %v7395
    %v8372 = vunpack.c.l.b16 %v7396
    %v8373 = vunpack.c.h.b16 %v7396
    %v8374 = vunpack.c.l.b16 %v7397
    %v8375 = vunpack.c.h.b16 %v7397
    %v8376 = vunpack.c.l.b16 %v7398
    %v8377 = vunpack.c.h.b16 %v7398
    %v8378 = vunpack.c.l.b16 %v7399
    %v8379 = vunpack.c.h.b16 %v7399
    %v8380 = vunpack.c.l.b16 %v7400
    %v8381 = vunpack.c.h.b16 %v7400
    %v8382 = vunpack.c.l.b16 %v7401
    %v8383 = vunpack.c.h.b16 %v7401
    %v8384 = vunpack.c.l.b16 %v7402
    %v8385 = vunpack.c.h.b16 %v7402
    %v8386 = vunpack.c.l.b16 %v7403
    %v8387 = vunpack.c.h.b16 %v7403
    %v8388 = vunpack.c.l.b16 %v7404
    %v8389 = vunpack.c.h.b16 %v7404
    %v8390 = vunpack.c.l.b16 %v7405
    %v8391 = vunpack.c.h.b16 %v7405
    %v8392 = vunpack.c.l.b16 %v7406
    %v8393 = vunpack.c.h.b16 %v7406
    %v8394 = vunpack.c.l.b16 %v7407
    %v8395 = vunpack.c.h.b16 %v7407
    %v8396 = vunpack.c.l.b16 %v7408
    %v8397 = vunpack.c.h.b16 %v7408
    %v8398 = vunpack.c.l.b16 %v7409
    %v8399 = vunpack.c.h.b16 %v7409
    %v8400 = vunpack.c.l.b16 %v7410
    %v8401 = vunpack.c.h.b16 %v7410
    %v8402 = vunpack.c.l.b16 %v7411
    %v8403 = vunpack.c.h.b16 %v7411
    %v8404 = vunpack.c.l.b16 %v7412
    %v8405 = vunpack.c.h.b16 %v7412
    %v8406 = vunpack.c.l.b16 %v7413
    %v8407 = vunpack.c.h.b16 %v7413
    %v8408 = vunpack.c.l.b16 %v7414
    %v8409 = vunpack.c.h.b16 %v7414
    %v8410 = vunpack.c.l.b16 %v7415
    %v8411 = vunpack.c.h.b16 %v7415
    %v8412 = vunpack.c.l.b16 %v7416
    %v8413 = vunpack.c.h.b16 %v7416
    %v8414 = vunpack.c.l.b16 %v7417
    %v8415 = vunpack.c.h.b16 %v7417
    %v8416 = vunpack.c.l.b16 %v7418
    %v8417 = vunpack.c.h.b16 %v7418
    %v8418 = vunpack.c.l.b16 %v7419
    %v8419 = vunpack.c.h.b16 %v7419
    %v8420 = vunpack.c.l.b16 %v7420
    %v8421 = vunpack.c.h.b16 %v7420
    %v8422 = vunpack.c.l.b16 %v7421
    %v8423 = vunpack.c.h.b16 %v7421
    %v8424 = vunpack.c.l.b16 %v7422
    %v8425 = vunpack.c.h.b16 %v7422
    %v8426 = vunpack.c.l.b16 %v7423
    %v8427 = vunpack.c.h.b16 %v7423
    %v8428 = vunpack.c.l.b16 %v7424
    %v8429 = vunpack.c.h.b16 %v7424
    %v8430 = vunpack.c.l.b16 %v7425
    %v8431 = vunpack.c.h.b16 %v7425
    %v8432 = vunpack.c.l.b16 %v7426
    %v8433 = vunpack.c.h.b16 %v7426
    %v8434 = vunpack.c.l.b16 %v7427
    %v8435 = vunpack.c.h.b16 %v7427
    %v8436 = vunpack.c.l.b16 %v7428
    %v8437 = vunpack.c.h.b16 %v7428
    %v8438 = vunpack.c.l.b16 %v7429
    %v8439 = vunpack.c.h.b16 %v7429
    %v8440 = vunpack.c.l.b16 %v7430
    %v8441 = vunpack.c.h.b16 %v7430
    %v8442 = vunpack.c.l.b16 %v7431
    %v8443 = vunpack.c.h.b16 %v7431
    %v8444 = vunpack.c.l.b16 %v7432
    %v8445 = vunpack.c.h.b16 %v7432
    %v8446 = vunpack.c.l.b16 %v7433
    %v8447 = vunpack.c.h.b16 %v7433
    %v8448 = vunpack.c.l.b16 %v7434
    %v8449 = vunpack.c.h.b16 %v7434
    %v8450 = vunpack.c.l.b16 %v7435
    %v8451 = vunpack.c.h.b16 %v7435
    %v8452 = vunpack.c.l.b16 %v7436
    %v8453 = vunpack.c.h.b16 %v7436
    %v8454 = vunpack.c.l.b16 %v7437
    %v8455 = vunpack.c.h.b16 %v7437
    %v8456 = vunpack.c.l.b16 %v7438
    %v8457 = vunpack.c.h.b16 %v7438
    %v8458 = vunpack.c.l.b16 %v7439
    %v8459 = vunpack.c.h.b16 %v7439
    %v8460 = vunpack.c.l.b16 %v7440
    %v8461 = vunpack.c.h.b16 %v7440
    %v8462 = vunpack.c.l.b16 %v7441
    %v8463 = vunpack.c.h.b16 %v7441
    %v8464 = vunpack.c.l.b16 %v7442
    %v8465 = vunpack.c.h.b16 %v7442
    %v8466 = vunpack.c.l.b16 %v7443
    %v8467 = vunpack.c.h.b16 %v7443
    %v8468 = vunpack.c.l.b16 %v7444
    %v8469 = vunpack.c.h.b16 %v7444
    %v8470 = vunpack.c.l.b16 %v7445
    %v8471 = vunpack.c.h.b16 %v7445
    %v8472 = vunpack.c.l.b16 %v7446
    %v8473 = vunpack.c.h.b16 %v7446
    %v8474 = vunpack.c.l.b16 %v7447
    %v8475 = vunpack.c.h.b16 %v7447
    %v8476 = vunpack.c.l.b16 %v7448
    %v8477 = vunpack.c.h.b16 %v7448
    %v8478 = vunpack.c.l.b16 %v7449
    %v8479 = vunpack.c.h.b16 %v7449
    %v8480 = vunpack.c.l.b16 %v7450
    %v8481 = vunpack.c.h.b16 %v7450
    %v8482 = vunpack.c.l.b16 %v7451
    %v8483 = vunpack.c.h.b16 %v7451
    %v8484 = vunpack.c.l.b16 %v7452
    %v8485 = vunpack.c.h.b16 %v7452
    %v8486 = vunpack.c.l.b16 %v7453
    %v8487 = vunpack.c.h.b16 %v7453
    %v8488 = vunpack.c.l.b16 %v7454
    %v8489 = vunpack.c.h.b16 %v7454
    %v8490 = vunpack.c.l.b16 %v7455
    %v8491 = vunpack.c.h.b16 %v7455
    %v8492 = vunpack.c.l.b16 %v7456
    %v8493 = vunpack.c.h.b16 %v7456
    %v8494 = vunpack.c.l.b16 %v7457
    %v8495 = vunpack.c.h.b16 %v7457
    %v8496 = vunpack.c.l.b16 %v7458
    %v8497 = vunpack.c.h.b16 %v7458
    %v8498 = vunpack.c.l.b16 %v7459
    %v8499 = vunpack.c.h.b16 %v7459
    %v8500 = vunpack.c.l.b16 %v7460
    %v8501 = vunpack.c.h.b16 %v7460
    %v8502 = vunpack.c.l.b16 %v7461
    %v8503 = vunpack.c.h.b16 %v7461
    %v8504 = vpack.c.b16 %v7996, %v7992
    %v8505 = vpack.c.b16 %v7997, %v7993
    %v8506 = vpack.c.b16 %v7998, %v7994
    %v8507 = vpack.c.b16 %v7999, %v7995
    %v8508 = vpack.c.b16 %v8004, %v8000
    %v8509 = vpack.c.b16 %v8005, %v8001
    %v8510 = vpack.c.b16 %v8006, %v8002
    %v8511 = vpack.c.b16 %v8007, %v8003
    %v8512 = vpack.c.b16 %v8012, %v8008
    %v8513 = vpack.c.b16 %v8013, %v8009
    %v8514 = vpack.c.b16 %v8014, %v8010
    %v8515 = vpack.c.b16 %v8015, %v8011
    %v8516 = vpack.c.b16 %v8020, %v8016
    %v8517 = vpack.c.b16 %v8021, %v8017
    %v8518 = vpack.c.b16 %v8022, %v8018
    %v8519 = vpack.c.b16 %v8023, %v8019
    %v8520 = vpack.c.b16 %v8028, %v8024
    %v8521 = vpack.c.b16 %v8029, %v8025
    %v8522 = vpack.c.b16 %v8030, %v8026
    %v8523 = vpack.c.b16 %v8031, %v8027
    %v8524 = vpack.c.b16 %v8036, %v8032
    %v8525 = vpack.c.b16 %v8037, %v8033
    %v8526 = vpack.c.b16 %v8038, %v8034
    %v8527 = vpack.c.b16 %v8039, %v8035
    %v8528 = vpack.c.b16 %v8044, %v8040
    %v8529 = vpack.c.b16 %v8045, %v8041
    %v8530 = vpack.c.b16 %v8046, %v8042
    %v8531 = vpack.c.b16 %v8047, %v8043
    %v8532 = vpack.c.b16 %v8052, %v8048
    %v8533 = vpack.c.b16 %v8053, %v8049
    %v8534 = vpack.c.b16 %v8054, %v8050
    %v8535 = vpack.c.b16 %v8055, %v8051
    %v8536 = vpack.c.b16 %v8060, %v8056
    %v8537 = vpack.c.b16 %v8061, %v8057
    %v8538 = vpack.c.b16 %v8062, %v8058
    %v8539 = vpack.c.b16 %v8063, %v8059
    %v8540 = vpack.c.b16 %v8068, %v8064
    %v8541 = vpack.c.b16 %v8069, %v8065
    %v8542 = vpack.c.b16 %v8070, %v8066
    %v8543 = vpack.c.b16 %v8071, %v8067
    %v8544 = vpack.c.b16 %v8076, %v8072
    %v8545 = vpack.c.b16 %v8077, %v8073
    %v8546 = vpack.c.b16 %v8078, %v8074
    %v8547 = vpack.c.b16 %v8079, %v8075
    %v8548 = vpack.c.b16 %v8084, %v8080
    %v8549 = vpack.c.b16 %v8085, %v8081
    %v8550 = vpack.c.b16 %v8086, %v8082
    %v8551 = vpack.c.b16 %v8087, %v8083
    %v8552 = vpack.c.b16 %v8092, %v8088
    %v8553 = vpack.c.b16 %v8093, %v8089
    %v8554 = vpack.c.b16 %v8094, %v8090
    %v8555 = vpack.c.b16 %v8095, %v8091
    %v8556 = vpack.c.b16 %v8100, %v8096
    %v8557 = vpack.c.b16 %v8101, %v8097
    %v8558 = vpack.c.b16 %v8102, %v8098
    %v8559 = vpack.c.b16 %v8103, %v8099
    %v8560 = vpack.c.b16 %v8108, %v8104
    %v8561 = vpack.c.b16 %v8109, %v8105
    %v8562 = vpack.c.b16 %v8110, %v8106
    %v8563 = vpack.c.b16 %v8111, %v8107
    %v8564 = vpack.c.b16 %v8116, %v8112
    %v8565 = vpack.c.b16 %v8117, %v8113
    %v8566 = vpack.c.b16 %v8118, %v8114
    %v8567 = vpack.c.b16 %v8119, %v8115
    %v8568 = vpack.c.b16 %v8124, %v8120
    %v8569 = vpack.c.b16 %v8125, %v8121
    %v8570 = vpack.c.b16 %v8126, %v8122
    %v8571 = vpack.c.b16 %v8127, %v8123
    %v8572 = vpack.c.b16 %v8132, %v8128
    %v8573 = vpack.c.b16 %v8133, %v8129
    %v8574 = vpack.c.b16 %v8134, %v8130
    %v8575 = vpack.c.b16 %v8135, %v8131
    %v8576 = vpack.c.b16 %v8140, %v8136
    %v8577 = vpack.c.b16 %v8141, %v8137
    %v8578 = vpack.c.b16 %v8142, %v8138
    %v8579 = vpack.c.b16 %v8143, %v8139
    %v8580 = vpack.c.b16 %v8148, %v8144
    %v8581 = vpack.c.b16 %v8149, %v8145
    %v8582 = vpack.c.b16 %v8150, %v8146
    %v8583 = vpack.c.b16 %v8151, %v8147
    %v8584 = vpack.c.b16 %v8156, %v8152
    %v8585 = vpack.c.b16 %v8157, %v8153
    %v8586 = vpack.c.b16 %v8158, %v8154
    %v8587 = vpack.c.b16 %v8159, %v8155
    %v8588 = vpack.c.b16 %v8164, %v8160
    %v8589 = vpack.c.b16 %v8165, %v8161
    %v8590 = vpack.c.b16 %v8166, %v8162
    %v8591 = vpack.c.b16 %v8167, %v8163
    %v8592 = vpack.c.b16 %v8172, %v8168
    %v8593 = vpack.c.b16 %v8173, %v8169
    %v8594 = vpack.c.b16 %v8174, %v8170
    %v8595 = vpack.c.b16 %v8175, %v8171
    %v8596 = vpack.c.b16 %v8180, %v8176
    %v8597 = vpack.c.b16 %v8181, %v8177
    %v8598 = vpack.c.b16 %v8182, %v8178
    %v8599 = vpack.c.b16 %v8183, %v8179
    %v8600 = vpack.c.b16 %v8188, %v8184
    %v8601 = vpack.c.b16 %v8189, %v8185
    %v8602 = vpack.c.b16 %v8190, %v8186
    %v8603 = vpack.c.b16 %v8191, %v8187
    %v8604 = vpack.c.b16 %v8196, %v8192
    %v8605 = vpack.c.b16 %v8197, %v8193
    %v8606 = vpack.c.b16 %v8198, %v8194
    %v8607 = vpack.c.b16 %v8199, %v8195
    %v8608 = vpack.c.b16 %v8204, %v8200
    %v8609 = vpack.c.b16 %v8205, %v8201
    %v8610 = vpack.c.b16 %v8206, %v8202
    %v8611 = vpack.c.b16 %v8207, %v8203
    %v8612 = vpack.c.b16 %v8212, %v8208
    %v8613 = vpack.c.b16 %v8213, %v8209
    %v8614 = vpack.c.b16 %v8214, %v8210
    %v8615 = vpack.c.b16 %v8215, %v8211
    %v8616 = vpack.c.b16 %v8220, %v8216
    %v8617 = vpack.c.b16 %v8221, %v8217
    %v8618 = vpack.c.b16 %v8222, %v8218
    %v8619 = vpack.c.b16 %v8223, %v8219
    %v8620 = vpack.c.b16 %v8228, %v8224
    %v8621 = vpack.c.b16 %v8229, %v8225
    %v8622 = vpack.c.b16 %v8230, %v8226
    %v8623 = vpack.c.b16 %v8231, %v8227
    %v8624 = vpack.c.b16 %v8236, %v8232
    %v8625 = vpack.c.b16 %v8237, %v8233
    %v8626 = vpack.c.b16 %v8238, %v8234
    %v8627 = vpack.c.b16 %v8239, %v8235
    %v8628 = vpack.c.b16 %v8244, %v8240
    %v8629 = vpack.c.b16 %v8245, %v8241
    %v8630 = vpack.c.b16 %v8246, %v8242
    %v8631 = vpack.c.b16 %v8247, %v8243
    %v8632 = vpack.c.b16 %v8252, %v8248
    %v8633 = vpack.c.b16 %v8253, %v8249
    %v8634 = vpack.c.b16 %v8254, %v8250
    %v8635 = vpack.c.b16 %v8255, %v8251
    %v8636 = vpack.c.b16 %v8260, %v8256
    %v8637 = vpack.c.b16 %v8261, %v8257
    %v8638 = vpack.c.b16 %v8262, %v8258
    %v8639 = vpack.c.b16 %v8263, %v8259
    %v8640 = vpack.c.b16 %v8268, %v8264
    %v8641 = vpack.c.b16 %v8269, %v8265
    %v8642 = vpack.c.b16 %v8270, %v8266
    %v8643 = vpack.c.b16 %v8271, %v8267
    %v8644 = vpack.c.b16 %v8276, %v8272
    %v8645 = vpack.c.b16 %v8277, %v8273
    %v8646 = vpack.c.b16 %v8278, %v8274
    %v8647 = vpack.c.b16 %v8279, %v8275
    %v8648 = vpack.c.b16 %v8284, %v8280
    %v8649 = vpack.c.b16 %v8285, %v8281
    %v8650 = vpack.c.b16 %v8286, %v8282
    %v8651 = vpack.c.b16 %v8287, %v8283
    %v8652 = vpack.c.b16 %v8292, %v8288
    %v8653 = vpack.c.b16 %v8293, %v8289
    %v8654 = vpack.c.b16 %v8294, %v8290
    %v8655 = vpack.c.b16 %v8295, %v8291
    %v8656 = vpack.c.b16 %v8300, %v8296
    %v8657 = vpack.c.b16 %v8301, %v8297
    %v8658 = vpack.c.b16 %v8302, %v8298
    %v8659 = vpack.c.b16 %v8303, %v8299
    %v8660 = vpack.c.b16 %v8308, %v8304
    %v8661 = vpack.c.b16 %v8309, %v8305
    %v8662 = vpack.c.b16 %v8310, %v8306
    %v8663 = vpack.c.b16 %v8311, %v8307
    %v8664 = vpack.c.b16 %v8316, %v8312
    %v8665 = vpack.c.b16 %v8317, %v8313
    %v8666 = vpack.c.b16 %v8318, %v8314
    %v8667 = vpack.c.b16 %v8319, %v8315
    %v8668 = vpack.c.b16 %v8324, %v8320
    %v8669 = vpack.c.b16 %v8325, %v8321
    %v8670 = vpack.c.b16 %v8326, %v8322
    %v8671 = vpack.c.b16 %v8327, %v8323
    %v8672 = vpack.c.b16 %v8332, %v8328
    %v8673 = vpack.c.b16 %v8333, %v8329
    %v8674 = vpack.c.b16 %v8334, %v8330
    %v8675 = vpack.c.b16 %v8335, %v8331
    %v8676 = vpack.c.b16 %v8340, %v8336
    %v8677 = vpack.c.b16 %v8341, %v8337
    %v8678 = vpack.c.b16 %v8342, %v8338
    %v8679 = vpack.c.b16 %v8343, %v8339
    %v8680 = vpack.c.b16 %v8348, %v8344
    %v8681 = vpack.c.b16 %v8349, %v8345
    %v8682 = vpack.c.b16 %v8350, %v8346
    %v8683 = vpack.c.b16 %v8351, %v8347
    %v8684 = vpack.c.b16 %v8356, %v8352
    %v8685 = vpack.c.b16 %v8357, %v8353
    %v8686 = vpack.c.b16 %v8358, %v8354
    %v8687 = vpack.c.b16 %v8359, %v8355
    %v8688 = vpack.c.b16 %v8364, %v8360
    %v8689 = vpack.c.b16 %v8365, %v8361
    %v8690 = vpack.c.b16 %v8366, %v8362
    %v8691 = vpack.c.b16 %v8367, %v8363
    %v8692 = vpack.c.b16 %v8372, %v8368
    %v8693 = vpack.c.b16 %v8373, %v8369
    %v8694 = vpack.c.b16 %v8374, %v8370
    %v8695 = vpack.c.b16 %v8375, %v8371
    %v8696 = vpack.c.b16 %v8380, %v8376
    %v8697 = vpack.c.b16 %v8381, %v8377
    %v8698 = vpack.c.b16 %v8382, %v8378
    %v8699 = vpack.c.b16 %v8383, %v8379
    %v8700 = vpack.c.b16 %v8388, %v8384
    %v8701 = vpack.c.b16 %v8389, %v8385
    %v8702 = vpack.c.b16 %v8390, %v8386
    %v8703 = vpack.c.b16 %v8391, %v8387
    %v8704 = vpack.c.b16 %v8396, %v8392
    %v8705 = vpack.c.b16 %v8397, %v8393
    %v8706 = vpack.c.b16 %v8398, %v8394
    %v8707 = vpack.c.b16 %v8399, %v8395
    %v8708 = vpack.c.b16 %v8404, %v8400
    %v8709 = vpack.c.b16 %v8405, %v8401
    %v8710 = vpack.c.b16 %v8406, %v8402
    %v8711 = vpack.c.b16 %v8407, %v8403
    %v8712 = vpack.c.b16 %v8412, %v8408
    %v8713 = vpack.c.b16 %v8413, %v8409
    %v8714 = vpack.c.b16 %v8414, %v8410
    %v8715 = vpack.c.b16 %v8415, %v8411
    %v8716 = vpack.c.b16 %v8420, %v8416
    %v8717 = vpack.c.b16 %v8421, %v8417
    %v8718 = vpack.c.b16 %v8422, %v8418
    %v8719 = vpack.c.b16 %v8423, %v8419
    %v8720 = vpack.c.b16 %v8428, %v8424
    %v8721 = vpack.c.b16 %v8429, %v8425
    %v8722 = vpack.c.b16 %v8430, %v8426
    %v8723 = vpack.c.b16 %v8431, %v8427
    %v8724 = vpack.c.b16 %v8436, %v8432
    %v8725 = vpack.c.b16 %v8437, %v8433
    %v8726 = vpack.c.b16 %v8438, %v8434
    %v8727 = vpack.c.b16 %v8439, %v8435
    %v8728 = vpack.c.b16 %v8444, %v8440
    %v8729 = vpack.c.b16 %v8445, %v8441
    %v8730 = vpack.c.b16 %v8446, %v8442
    %v8731 = vpack.c.b16 %v8447, %v8443
    %v8732 = vpack.c.b16 %v8452, %v8448
    %v8733 = vpack.c.b16 %v8453, %v8449
    %v8734 = vpack.c.b16 %v8454, %v8450
    %v8735 = vpack.c.b16 %v8455, %v8451
    %v8736 = vpack.c.b16 %v8460, %v8456
    %v8737 = vpack.c.b16 %v8461, %v8457
    %v8738 = vpack.c.b16 %v8462, %v8458
    %v8739 = vpack.c.b16 %v8463, %v8459
    %v8740 = vpack.c.b16 %v8468, %v8464
    %v8741 = vpack.c.b16 %v8469, %v8465
    %v8742 = vpack.c.b16 %v8470, %v8466
    %v8743 = vpack.c.b16 %v8471, %v8467
    %v8744 = vpack.c.b16 %v8476, %v8472
    %v8745 = vpack.c.b16 %v8477, %v8473
    %v8746 = vpack.c.b16 %v8478, %v8474
    %v8747 = vpack.c.b16 %v8479, %v8475
    %v8748 = vpack.c.b16 %v8484, %v8480
    %v8749 = vpack.c.b16 %v8485, %v8481
    %v8750 = vpack.c.b16 %v8486, %v8482
    %v8751 = vpack.c.b16 %v8487, %v8483
    %v8752 = vpack.c.b16 %v8492, %v8488
    %v8753 = vpack.c.b16 %v8493, %v8489
    %v8754 = vpack.c.b16 %v8494, %v8490
    %v8755 = vpack.c.b16 %v8495, %v8491
    %v8756 = vpack.c.b16 %v8500, %v8496
    %v8757 = vpack.c.b16 %v8501, %v8497
    %v8758 = vpack.c.b16 %v8502, %v8498
    %v8759 = vpack.c.b16 %v8503, %v8499
    %9016 = vmatpush.bf16.msra.mxu0 %v8532
    %9017 = vmatpush.bf16.msra.mxu0 %v8528
    %9018 = vmatpush.bf16.msra.mxu0 %v8524
    %9019 = vmatpush.bf16.msra.mxu0 %v8520
    %9020 = vmatpush.bf16.msra.mxu0 %v8516
    %9021 = vmatpush.bf16.msra.mxu0 %v8512
    %9022 = vmatpush.bf16.msra.mxu0 %v8508
    %9023 = vmatpush.bf16.msra.mxu0 %v8504
    %9024 = vmatmul.bf16.gmra.mxu0 %v7720
    %v9025 = vpop.f32.mrf.mxu0
    %v9026 = vadd.f32 %v7528, %v9025
    %v9027 = vpop.f32.mrf.mxu0
    %9028 = vdwg.mxu0
    %9029 = vmatpush.bf16.msra.mxu0 %v8564
    %9030 = vmatpush.bf16.msra.mxu0 %v8560
    %9031 = vmatpush.bf16.msra.mxu0 %v8556
    %9032 = vmatpush.bf16.msra.mxu0 %v8552
    %9033 = vmatpush.bf16.msra.mxu0 %v8548
    %9034 = vmatpush.bf16.msra.mxu0 %v8544
    %9035 = vmatpush.bf16.msra.mxu0 %v8540
    %9036 = vmatpush.bf16.msra.mxu0 %v8536
    %9037 = vmatmul.bf16.gmra.mxu0 %v7721
    %v9038 = vpop.f32.mrf.mxu0
    %v9039 = vadd.f32 %v9026, %v9038
    %v9040 = vpop.f32.mrf.mxu0
    %9041 = vdwg.mxu0
    %9042 = vmatpush.bf16.msra.mxu0 %v8596
    %9043 = vmatpush.bf16.msra.mxu0 %v8592
    %9044 = vmatpush.bf16.msra.mxu0 %v8588
    %9045 = vmatpush.bf16.msra.mxu0 %v8584
    %9046 = vmatpush.bf16.msra.mxu0 %v8580
    %9047 = vmatpush.bf16.msra.mxu0 %v8576
    %9048 = vmatpush.bf16.msra.mxu0 %v8572
    %9049 = vmatpush.bf16.msra.mxu0 %v8568
    %9050 = vmatmul.bf16.gmra.mxu0 %v7722
    %v9051 = vpop.f32.mrf.mxu0
    %v9052 = vadd.f32 %v9039, %v9051
    %v9053 = vpop.f32.mrf.mxu0
    %9054 = vdwg.mxu0
    %9055 = vmatpush.bf16.msra.mxu0 %v8628
    %9056 = vmatpush.bf16.msra.mxu0 %v8624
    %9057 = vmatpush.bf16.msra.mxu0 %v8620
    %9058 = vmatpush.bf16.msra.mxu0 %v8616
    %9059 = vmatpush.bf16.msra.mxu0 %v8612
    %9060 = vmatpush.bf16.msra.mxu0 %v8608
    %9061 = vmatpush.bf16.msra.mxu0 %v8604
    %9062 = vmatpush.bf16.msra.mxu0 %v8600
    %9063 = vmatmul.bf16.gmra.mxu0 %v7723
    %v9064 = vpop.f32.mrf.mxu0
    %v9065 = vadd.f32 %v9052, %v9064
    %v9066 = vpop.f32.mrf.mxu0
    %9067 = vdwg.mxu0
    %9068 = vmatpush.bf16.msra.mxu0 %v8660
    %9069 = vmatpush.bf16.msra.mxu0 %v8656
    %9070 = vmatpush.bf16.msra.mxu0 %v8652
    %9071 = vmatpush.bf16.msra.mxu0 %v8648
    %9072 = vmatpush.bf16.msra.mxu0 %v8644
    %9073 = vmatpush.bf16.msra.mxu0 %v8640
    %9074 = vmatpush.bf16.msra.mxu0 %v8636
    %9075 = vmatpush.bf16.msra.mxu0 %v8632
    %9076 = vmatmul.bf16.gmra.mxu0 %v7724
    %v9077 = vpop.f32.mrf.mxu0
    %v9078 = vadd.f32 %v9065, %v9077
    %v9079 = vpop.f32.mrf.mxu0
    %9080 = vdwg.mxu0
    %9081 = vmatpush.bf16.msra.mxu0 %v8692
    %9082 = vmatpush.bf16.msra.mxu0 %v8688
    %9083 = vmatpush.bf16.msra.mxu0 %v8684
    %9084 = vmatpush.bf16.msra.mxu0 %v8680
    %9085 = vmatpush.bf16.msra.mxu0 %v8676
    %9086 = vmatpush.bf16.msra.mxu0 %v8672
    %9087 = vmatpush.bf16.msra.mxu0 %v8668
    %9088 = vmatpush.bf16.msra.mxu0 %v8664
    %9089 = vmatmul.bf16.gmra.mxu0 %v7725
    %v9090 = vpop.f32.mrf.mxu0
    %v9091 = vadd.f32 %v9078, %v9090
    %v9092 = vpop.f32.mrf.mxu0
    %9093 = vdwg.mxu0
    %9094 = vmatpush.bf16.msra.mxu0 %v8724
    %9095 = vmatpush.bf16.msra.mxu0 %v8720
    %9096 = vmatpush.bf16.msra.mxu0 %v8716
    %9097 = vmatpush.bf16.msra.mxu0 %v8712
    %9098 = vmatpush.bf16.msra.mxu0 %v8708
    %9099 = vmatpush.bf16.msra.mxu0 %v8704
    %9100 = vmatpush.bf16.msra.mxu0 %v8700
    %9101 = vmatpush.bf16.msra.mxu0 %v8696
    %9102 = vmatmul.bf16.gmra.mxu0 %v7726
    %v9103 = vpop.f32.mrf.mxu0
    %v9104 = vadd.f32 %v9091, %v9103
    %v9105 = vpop.f32.mrf.mxu0
    %9106 = vdwg.mxu0
    %9107 = vmatpush.bf16.msra.mxu0 %v8756
    %9108 = vmatpush.bf16.msra.mxu0 %v8752
    %9109 = vmatpush.bf16.msra.mxu0 %v8748
    %9110 = vmatpush.bf16.msra.mxu0 %v8744
    %9111 = vmatpush.bf16.msra.mxu0 %v8740
    %9112 = vmatpush.bf16.msra.mxu0 %v8736
    %9113 = vmatpush.bf16.msra.mxu0 %v8732
    %9114 = vmatpush.bf16.msra.mxu0 %v8728
    %9115 = vmatmul.bf16.gmra.mxu0 %v7727
    %v9116 = vpop.f32.mrf.mxu0
    %v9117 = vadd.f32 %v9104, %v9116
    %v9118 = vpop.f32.mrf.mxu0
    %9119 = vdwg.mxu0
    %9120 = vmatpush.bf16.msra.mxu0 %v8533
    %9121 = vmatpush.bf16.msra.mxu0 %v8529
    %9122 = vmatpush.bf16.msra.mxu0 %v8525
    %9123 = vmatpush.bf16.msra.mxu0 %v8521
    %9124 = vmatpush.bf16.msra.mxu0 %v8517
    %9125 = vmatpush.bf16.msra.mxu0 %v8513
    %9126 = vmatpush.bf16.msra.mxu0 %v8509
    %9127 = vmatpush.bf16.msra.mxu0 %v8505
    %9128 = vmatmul.bf16.gmra.mxu0 %v7720
    %v9129 = vpop.f32.mrf.mxu0
    %v9130 = vadd.f32 %v7529, %v9129
    %v9131 = vpop.f32.mrf.mxu0
    %9132 = vdwg.mxu0
    %9133 = vmatpush.bf16.msra.mxu0 %v8565
    %9134 = vmatpush.bf16.msra.mxu0 %v8561
    %9135 = vmatpush.bf16.msra.mxu0 %v8557
    %9136 = vmatpush.bf16.msra.mxu0 %v8553
    %9137 = vmatpush.bf16.msra.mxu0 %v8549
    %9138 = vmatpush.bf16.msra.mxu0 %v8545
    %9139 = vmatpush.bf16.msra.mxu0 %v8541
    %9140 = vmatpush.bf16.msra.mxu0 %v8537
    %9141 = vmatmul.bf16.gmra.mxu0 %v7721
    %v9142 = vpop.f32.mrf.mxu0
    %v9143 = vadd.f32 %v9130, %v9142
    %v9144 = vpop.f32.mrf.mxu0
    %9145 = vdwg.mxu0
    %9146 = vmatpush.bf16.msra.mxu0 %v8597
    %9147 = vmatpush.bf16.msra.mxu0 %v8593
    %9148 = vmatpush.bf16.msra.mxu0 %v8589
    %9149 = vmatpush.bf16.msra.mxu0 %v8585
    %9150 = vmatpush.bf16.msra.mxu0 %v8581
    %9151 = vmatpush.bf16.msra.mxu0 %v8577
    %9152 = vmatpush.bf16.msra.mxu0 %v8573
    %9153 = vmatpush.bf16.msra.mxu0 %v8569
    %9154 = vmatmul.bf16.gmra.mxu0 %v7722
    %v9155 = vpop.f32.mrf.mxu0
    %v9156 = vadd.f32 %v9143, %v9155
    %v9157 = vpop.f32.mrf.mxu0
    %9158 = vdwg.mxu0
    %9159 = vmatpush.bf16.msra.mxu0 %v8629
    %9160 = vmatpush.bf16.msra.mxu0 %v8625
    %9161 = vmatpush.bf16.msra.mxu0 %v8621
    %9162 = vmatpush.bf16.msra.mxu0 %v8617
    %9163 = vmatpush.bf16.msra.mxu0 %v8613
    %9164 = vmatpush.bf16.msra.mxu0 %v8609
    %9165 = vmatpush.bf16.msra.mxu0 %v8605
    %9166 = vmatpush.bf16.msra.mxu0 %v8601
    %9167 = vmatmul.bf16.gmra.mxu0 %v7723
    %v9168 = vpop.f32.mrf.mxu0
    %v9169 = vadd.f32 %v9156, %v9168
    %v9170 = vpop.f32.mrf.mxu0
    %9171 = vdwg.mxu0
    %9172 = vmatpush.bf16.msra.mxu0 %v8661
    %9173 = vmatpush.bf16.msra.mxu0 %v8657
    %9174 = vmatpush.bf16.msra.mxu0 %v8653
    %9175 = vmatpush.bf16.msra.mxu0 %v8649
    %9176 = vmatpush.bf16.msra.mxu0 %v8645
    %9177 = vmatpush.bf16.msra.mxu0 %v8641
    %9178 = vmatpush.bf16.msra.mxu0 %v8637
    %9179 = vmatpush.bf16.msra.mxu0 %v8633
    %9180 = vmatmul.bf16.gmra.mxu0 %v7724
    %v9181 = vpop.f32.mrf.mxu0
    %v9182 = vadd.f32 %v9169, %v9181
    %v9183 = vpop.f32.mrf.mxu0
    %9184 = vdwg.mxu0
    %9185 = vmatpush.bf16.msra.mxu0 %v8693
    %9186 = vmatpush.bf16.msra.mxu0 %v8689
    %9187 = vmatpush.bf16.msra.mxu0 %v8685
    %9188 = vmatpush.bf16.msra.mxu0 %v8681
    %9189 = vmatpush.bf16.msra.mxu0 %v8677
    %9190 = vmatpush.bf16.msra.mxu0 %v8673
    %9191 = vmatpush.bf16.msra.mxu0 %v8669
    %9192 = vmatpush.bf16.msra.mxu0 %v8665
    %9193 = vmatmul.bf16.gmra.mxu0 %v7725
    %v9194 = vpop.f32.mrf.mxu0
    %v9195 = vadd.f32 %v9182, %v9194
    %v9196 = vpop.f32.mrf.mxu0
    %9197 = vdwg.mxu0
    %9198 = vmatpush.bf16.msra.mxu0 %v8725
    %9199 = vmatpush.bf16.msra.mxu0 %v8721
    %9200 = vmatpush.bf16.msra.mxu0 %v8717
    %9201 = vmatpush.bf16.msra.mxu0 %v8713
    %9202 = vmatpush.bf16.msra.mxu0 %v8709
    %9203 = vmatpush.bf16.msra.mxu0 %v8705
    %9204 = vmatpush.bf16.msra.mxu0 %v8701
    %9205 = vmatpush.bf16.msra.mxu0 %v8697
    %9206 = vmatmul.bf16.gmra.mxu0 %v7726
    %v9207 = vpop.f32.mrf.mxu0
    %v9208 = vadd.f32 %v9195, %v9207
    %v9209 = vpop.f32.mrf.mxu0
    %9210 = vdwg.mxu0
    %9211 = vmatpush.bf16.msra.mxu0 %v8757
    %9212 = vmatpush.bf16.msra.mxu0 %v8753
    %9213 = vmatpush.bf16.msra.mxu0 %v8749
    %9214 = vmatpush.bf16.msra.mxu0 %v8745
    %9215 = vmatpush.bf16.msra.mxu0 %v8741
    %9216 = vmatpush.bf16.msra.mxu0 %v8737
    %9217 = vmatpush.bf16.msra.mxu0 %v8733
    %9218 = vmatpush.bf16.msra.mxu0 %v8729
    %9219 = vmatmul.bf16.gmra.mxu0 %v7727
    %v9220 = vpop.f32.mrf.mxu0
    %v9221 = vadd.f32 %v9208, %v9220
    %v9222 = vpop.f32.mrf.mxu0
    %9223 = vdwg.mxu0
    %9224 = vmatpush.bf16.msra.mxu0 %v8534
    %9225 = vmatpush.bf16.msra.mxu0 %v8530
    %9226 = vmatpush.bf16.msra.mxu0 %v8526
    %9227 = vmatpush.bf16.msra.mxu0 %v8522
    %9228 = vmatpush.bf16.msra.mxu0 %v8518
    %9229 = vmatpush.bf16.msra.mxu0 %v8514
    %9230 = vmatpush.bf16.msra.mxu0 %v8510
    %9231 = vmatpush.bf16.msra.mxu0 %v8506
    %9232 = vmatmul.bf16.gmra.mxu0 %v7720
    %v9233 = vpop.f32.mrf.mxu0
    %v9234 = vadd.f32 %v7530, %v9233
    %v9235 = vpop.f32.mrf.mxu0
    %9236 = vdwg.mxu0
    %9237 = vmatpush.bf16.msra.mxu0 %v8566
    %9238 = vmatpush.bf16.msra.mxu0 %v8562
    %9239 = vmatpush.bf16.msra.mxu0 %v8558
    %9240 = vmatpush.bf16.msra.mxu0 %v8554
    %9241 = vmatpush.bf16.msra.mxu0 %v8550
    %9242 = vmatpush.bf16.msra.mxu0 %v8546
    %9243 = vmatpush.bf16.msra.mxu0 %v8542
    %9244 = vmatpush.bf16.msra.mxu0 %v8538
    %9245 = vmatmul.bf16.gmra.mxu0 %v7721
    %v9246 = vpop.f32.mrf.mxu0
    %v9247 = vadd.f32 %v9234, %v9246
    %v9248 = vpop.f32.mrf.mxu0
    %9249 = vdwg.mxu0
    %9250 = vmatpush.bf16.msra.mxu0 %v8598
    %9251 = vmatpush.bf16.msra.mxu0 %v8594
    %9252 = vmatpush.bf16.msra.mxu0 %v8590
    %9253 = vmatpush.bf16.msra.mxu0 %v8586
    %9254 = vmatpush.bf16.msra.mxu0 %v8582
    %9255 = vmatpush.bf16.msra.mxu0 %v8578
    %9256 = vmatpush.bf16.msra.mxu0 %v8574
    %9257 = vmatpush.bf16.msra.mxu0 %v8570
    %9258 = vmatmul.bf16.gmra.mxu0 %v7722
    %v9259 = vpop.f32.mrf.mxu0
    %v9260 = vadd.f32 %v9247, %v9259
    %v9261 = vpop.f32.mrf.mxu0
    %9262 = vdwg.mxu0
    %9263 = vmatpush.bf16.msra.mxu0 %v8630
    %9264 = vmatpush.bf16.msra.mxu0 %v8626
    %9265 = vmatpush.bf16.msra.mxu0 %v8622
    %9266 = vmatpush.bf16.msra.mxu0 %v8618
    %9267 = vmatpush.bf16.msra.mxu0 %v8614
    %9268 = vmatpush.bf16.msra.mxu0 %v8610
    %9269 = vmatpush.bf16.msra.mxu0 %v8606
    %9270 = vmatpush.bf16.msra.mxu0 %v8602
    %9271 = vmatmul.bf16.gmra.mxu0 %v7723
    %v9272 = vpop.f32.mrf.mxu0
    %v9273 = vadd.f32 %v9260, %v9272
    %v9274 = vpop.f32.mrf.mxu0
    %9275 = vdwg.mxu0
    %9276 = vmatpush.bf16.msra.mxu0 %v8662
    %9277 = vmatpush.bf16.msra.mxu0 %v8658
    %9278 = vmatpush.bf16.msra.mxu0 %v8654
    %9279 = vmatpush.bf16.msra.mxu0 %v8650
    %9280 = vmatpush.bf16.msra.mxu0 %v8646
    %9281 = vmatpush.bf16.msra.mxu0 %v8642
    %9282 = vmatpush.bf16.msra.mxu0 %v8638
    %9283 = vmatpush.bf16.msra.mxu0 %v8634
    %9284 = vmatmul.bf16.gmra.mxu0 %v7724
    %v9285 = vpop.f32.mrf.mxu0
    %v9286 = vadd.f32 %v9273, %v9285
    %v9287 = vpop.f32.mrf.mxu0
    %9288 = vdwg.mxu0
    %9289 = vmatpush.bf16.msra.mxu0 %v8694
    %9290 = vmatpush.bf16.msra.mxu0 %v8690
    %9291 = vmatpush.bf16.msra.mxu0 %v8686
    %9292 = vmatpush.bf16.msra.mxu0 %v8682
    %9293 = vmatpush.bf16.msra.mxu0 %v8678
    %9294 = vmatpush.bf16.msra.mxu0 %v8674
    %9295 = vmatpush.bf16.msra.mxu0 %v8670
    %9296 = vmatpush.bf16.msra.mxu0 %v8666
    %9297 = vmatmul.bf16.gmra.mxu0 %v7725
    %v9298 = vpop.f32.mrf.mxu0
    %v9299 = vadd.f32 %v9286, %v9298
    %v9300 = vpop.f32.mrf.mxu0
    %9301 = vdwg.mxu0
    %9302 = vmatpush.bf16.msra.mxu0 %v8726
    %9303 = vmatpush.bf16.msra.mxu0 %v8722
    %9304 = vmatpush.bf16.msra.mxu0 %v8718
    %9305 = vmatpush.bf16.msra.mxu0 %v8714
    %9306 = vmatpush.bf16.msra.mxu0 %v8710
    %9307 = vmatpush.bf16.msra.mxu0 %v8706
    %9308 = vmatpush.bf16.msra.mxu0 %v8702
    %9309 = vmatpush.bf16.msra.mxu0 %v8698
    %9310 = vmatmul.bf16.gmra.mxu0 %v7726
    %v9311 = vpop.f32.mrf.mxu0
    %v9312 = vadd.f32 %v9299, %v9311
    %v9313 = vpop.f32.mrf.mxu0
    %9314 = vdwg.mxu0
    %9315 = vmatpush.bf16.msra.mxu0 %v8758
    %9316 = vmatpush.bf16.msra.mxu0 %v8754
    %9317 = vmatpush.bf16.msra.mxu0 %v8750
    %9318 = vmatpush.bf16.msra.mxu0 %v8746
    %9319 = vmatpush.bf16.msra.mxu0 %v8742
    %9320 = vmatpush.bf16.msra.mxu0 %v8738
    %9321 = vmatpush.bf16.msra.mxu0 %v8734
    %9322 = vmatpush.bf16.msra.mxu0 %v8730
    %9323 = vmatmul.bf16.gmra.mxu0 %v7727
    %v9324 = vpop.f32.mrf.mxu0
    %v9325 = vadd.f32 %v9312, %v9324
    %v9326 = vpop.f32.mrf.mxu0
    %9327 = vdwg.mxu0
    %9328 = vmatpush.bf16.msra.mxu0 %v8535
    %9329 = vmatpush.bf16.msra.mxu0 %v8531
    %9330 = vmatpush.bf16.msra.mxu0 %v8527
    %9331 = vmatpush.bf16.msra.mxu0 %v8523
    %9332 = vmatpush.bf16.msra.mxu0 %v8519
    %9333 = vmatpush.bf16.msra.mxu0 %v8515
    %9334 = vmatpush.bf16.msra.mxu0 %v8511
    %9335 = vmatpush.bf16.msra.mxu0 %v8507
    %9336 = vmatmul.bf16.gmra.mxu0 %v7720
    %v9337 = vpop.f32.mrf.mxu0
    %v9338 = vadd.f32 %v7531, %v9337
    %v9339 = vpop.f32.mrf.mxu0
    %9340 = vdwg.mxu0
    %9341 = vmatpush.bf16.msra.mxu0 %v8567
    %9342 = vmatpush.bf16.msra.mxu0 %v8563
    %9343 = vmatpush.bf16.msra.mxu0 %v8559
    %9344 = vmatpush.bf16.msra.mxu0 %v8555
    %9345 = vmatpush.bf16.msra.mxu0 %v8551
    %9346 = vmatpush.bf16.msra.mxu0 %v8547
    %9347 = vmatpush.bf16.msra.mxu0 %v8543
    %9348 = vmatpush.bf16.msra.mxu0 %v8539
    %9349 = vmatmul.bf16.gmra.mxu0 %v7721
    %v9350 = vpop.f32.mrf.mxu0
    %v9351 = vadd.f32 %v9338, %v9350
    %v9352 = vpop.f32.mrf.mxu0
    %9353 = vdwg.mxu0
    %9354 = vmatpush.bf16.msra.mxu0 %v8599
    %9355 = vmatpush.bf16.msra.mxu0 %v8595
    %9356 = vmatpush.bf16.msra.mxu0 %v8591
    %9357 = vmatpush.bf16.msra.mxu0 %v8587
    %9358 = vmatpush.bf16.msra.mxu0 %v8583
    %9359 = vmatpush.bf16.msra.mxu0 %v8579
    %9360 = vmatpush.bf16.msra.mxu0 %v8575
    %9361 = vmatpush.bf16.msra.mxu0 %v8571
    %9362 = vmatmul.bf16.gmra.mxu0 %v7722
    %v9363 = vpop.f32.mrf.mxu0
    %v9364 = vadd.f32 %v9351, %v9363
    %v9365 = vpop.f32.mrf.mxu0
    %9366 = vdwg.mxu0
    %9367 = vmatpush.bf16.msra.mxu0 %v8631
    %9368 = vmatpush.bf16.msra.mxu0 %v8627
    %9369 = vmatpush.bf16.msra.mxu0 %v8623
    %9370 = vmatpush.bf16.msra.mxu0 %v8619
    %9371 = vmatpush.bf16.msra.mxu0 %v8615
    %9372 = vmatpush.bf16.msra.mxu0 %v8611
    %9373 = vmatpush.bf16.msra.mxu0 %v8607
    %9374 = vmatpush.bf16.msra.mxu0 %v8603
    %9375 = vmatmul.bf16.gmra.mxu0 %v7723
    %v9376 = vpop.f32.mrf.mxu0
    %v9377 = vadd.f32 %v9364, %v9376
    %v9378 = vpop.f32.mrf.mxu0
    %9379 = vdwg.mxu0
    %9380 = vmatpush.bf16.msra.mxu0 %v8663
    %9381 = vmatpush.bf16.msra.mxu0 %v8659
    %9382 = vmatpush.bf16.msra.mxu0 %v8655
    %9383 = vmatpush.bf16.msra.mxu0 %v8651
    %9384 = vmatpush.bf16.msra.mxu0 %v8647
    %9385 = vmatpush.bf16.msra.mxu0 %v8643
    %9386 = vmatpush.bf16.msra.mxu0 %v8639
    %9387 = vmatpush.bf16.msra.mxu0 %v8635
    %9388 = vmatmul.bf16.gmra.mxu0 %v7724
    %v9389 = vpop.f32.mrf.mxu0
    %v9390 = vadd.f32 %v9377, %v9389
    %v9391 = vpop.f32.mrf.mxu0
    %9392 = vdwg.mxu0
    %9393 = vmatpush.bf16.msra.mxu0 %v8695
    %9394 = vmatpush.bf16.msra.mxu0 %v8691
    %9395 = vmatpush.bf16.msra.mxu0 %v8687
    %9396 = vmatpush.bf16.msra.mxu0 %v8683
    %9397 = vmatpush.bf16.msra.mxu0 %v8679
    %9398 = vmatpush.bf16.msra.mxu0 %v8675
    %9399 = vmatpush.bf16.msra.mxu0 %v8671
    %9400 = vmatpush.bf16.msra.mxu0 %v8667
    %9401 = vmatmul.bf16.gmra.mxu0 %v7725
    %v9402 = vpop.f32.mrf.mxu0
    %v9403 = vadd.f32 %v9390, %v9402
    %v9404 = vpop.f32.mrf.mxu0
    %9405 = vdwg.mxu0
    %9406 = vmatpush.bf16.msra.mxu0 %v8727
    %9407 = vmatpush.bf16.msra.mxu0 %v8723
    %9408 = vmatpush.bf16.msra.mxu0 %v8719
    %9409 = vmatpush.bf16.msra.mxu0 %v8715
    %9410 = vmatpush.bf16.msra.mxu0 %v8711
    %9411 = vmatpush.bf16.msra.mxu0 %v8707
    %9412 = vmatpush.bf16.msra.mxu0 %v8703
    %9413 = vmatpush.bf16.msra.mxu0 %v8699
    %9414 = vmatmul.bf16.gmra.mxu0 %v7726
    %v9415 = vpop.f32.mrf.mxu0
    %v9416 = vadd.f32 %v9403, %v9415
    %v9417 = vpop.f32.mrf.mxu0
    %9418 = vdwg.mxu0
    %9419 = vmatpush.bf16.msra.mxu0 %v8759
    %9420 = vmatpush.bf16.msra.mxu0 %v8755
    %9421 = vmatpush.bf16.msra.mxu0 %v8751
    %9422 = vmatpush.bf16.msra.mxu0 %v8747
    %9423 = vmatpush.bf16.msra.mxu0 %v8743
    %9424 = vmatpush.bf16.msra.mxu0 %v8739
    %9425 = vmatpush.bf16.msra.mxu0 %v8735
    %9426 = vmatpush.bf16.msra.mxu0 %v8731
    %9427 = vmatmul.bf16.gmra.mxu0 %v7727
    %v9428 = vpop.f32.mrf.mxu0
    %v9429 = vadd.f32 %v9416, %v9428
    %v9430 = vpop.f32.mrf.mxu0
    %9431 = vdwg.mxu0
    %v9432 = vmax.f32 %v9117, 0.0
    %v9433 = vmax.f32 %v9221, 0.0
    %v9434 = vmax.f32 %v9325, 0.0
    %v9435 = vmax.f32 %v9429, 0.0
    %v9436 = vld [vmem:[#allocation11] sm:$0xff]
    %v9437 = vld [vmem:[#allocation11 + $0x8] sm:$0xff]
    %v9438 = vld [vmem:[#allocation11 + $0x10] sm:$0xff]
    %v9439 = vld [vmem:[#allocation11 + $0x18] sm:$0xff]
    %v9440 = vld [vmem:[#allocation11 + $0x20] sm:$0xff]
    %v9441 = vld [vmem:[#allocation11 + $0x28] sm:$0xff]
    %v9442 = vld [vmem:[#allocation11 + $0x30] sm:$0xff]
    %v9443 = vld [vmem:[#allocation11 + $0x38] sm:$0xff]
    %v9444 = vld [vmem:[#allocation11 + $0x40] sm:$0xff]
    %v9445 = vld [vmem:[#allocation11 + $0x48] sm:$0xff]
    %v9446 = vld [vmem:[#allocation11 + $0x50] sm:$0xff]
    %v9447 = vld [vmem:[#allocation11 + $0x58] sm:$0xff]
    %v9448 = vld [vmem:[#allocation11 + $0x60] sm:$0xff]
    %v9449 = vld [vmem:[#allocation11 + $0x68] sm:$0xff]
    %v9450 = vld [vmem:[#allocation11 + $0x70] sm:$0xff]
    %v9451 = vld [vmem:[#allocation11 + $0x78] sm:$0xff]
    %v9452 = vld [vmem:[#allocation11 + $0x80] sm:$0xff]
    %v9453 = vld [vmem:[#allocation11 + $0x88] sm:$0xff]
    %v9454 = vld [vmem:[#allocation11 + $0x90] sm:$0xff]
    %v9455 = vld [vmem:[#allocation11 + $0x98] sm:$0xff]
    %v9456 = vld [vmem:[#allocation11 + $0xa0] sm:$0xff]
    %v9457 = vld [vmem:[#allocation11 + $0xa8] sm:$0xff]
    %v9458 = vld [vmem:[#allocation11 + $0xb0] sm:$0xff]
    %v9459 = vld [vmem:[#allocation11 + $0xb8] sm:$0xff]
    %v9460 = vld [vmem:[#allocation11 + $0xc0] sm:$0xff]
    %v9461 = vld [vmem:[#allocation11 + $0xc8] sm:$0xff]
    %v9462 = vld [vmem:[#allocation11 + $0xd0] sm:$0xff]
    %v9463 = vld [vmem:[#allocation11 + $0xd8] sm:$0xff]
    %v9464 = vld [vmem:[#allocation11 + $0xe0] sm:$0xff]
    %v9465 = vld [vmem:[#allocation11 + $0xe8] sm:$0xff]
    %v9466 = vld [vmem:[#allocation11 + $0xf0] sm:$0xff]
    %v9467 = vld [vmem:[#allocation11 + $0xf8] sm:$0xff]
    %v9468 = vld [vmem:[#allocation11 + $0x100] sm:$0xff]
    %v9469 = vld [vmem:[#allocation11 + $0x108] sm:$0xff]
    %v9470 = vld [vmem:[#allocation11 + $0x110] sm:$0xff]
    %v9471 = vld [vmem:[#allocation11 + $0x118] sm:$0xff]
    %v9472 = vld [vmem:[#allocation11 + $0x120] sm:$0xff]
    %v9473 = vld [vmem:[#allocation11 + $0x128] sm:$0xff]
    %v9474 = vld [vmem:[#allocation11 + $0x130] sm:$0xff]
    %v9475 = vld [vmem:[#allocation11 + $0x138] sm:$0xff]
    %v9476 = vld [vmem:[#allocation11 + $0x140] sm:$0xff]
    %v9477 = vld [vmem:[#allocation11 + $0x148] sm:$0xff]
    %v9478 = vld [vmem:[#allocation11 + $0x150] sm:$0xff]
    %v9479 = vld [vmem:[#allocation11 + $0x158] sm:$0xff]
    %v9480 = vld [vmem:[#allocation11 + $0x160] sm:$0xff]
    %v9481 = vld [vmem:[#allocation11 + $0x168] sm:$0xff]
    %v9482 = vld [vmem:[#allocation11 + $0x170] sm:$0xff]
    %v9483 = vld [vmem:[#allocation11 + $0x178] sm:$0xff]
    %v9484 = vld [vmem:[#allocation11 + $0x180] sm:$0xff]
    %v9485 = vld [vmem:[#allocation11 + $0x188] sm:$0xff]
    %v9486 = vld [vmem:[#allocation11 + $0x190] sm:$0xff]
    %v9487 = vld [vmem:[#allocation11 + $0x198] sm:$0xff]
    %v9488 = vld [vmem:[#allocation11 + $0x1a0] sm:$0xff]
    %v9489 = vld [vmem:[#allocation11 + $0x1a8] sm:$0xff]
    %v9490 = vld [vmem:[#allocation11 + $0x1b0] sm:$0xff]
    %v9491 = vld [vmem:[#allocation11 + $0x1b8] sm:$0xff]
    %v9492 = vld [vmem:[#allocation11 + $0x1c0] sm:$0xff]
    %v9493 = vld [vmem:[#allocation11 + $0x1c8] sm:$0xff]
    %v9494 = vld [vmem:[#allocation11 + $0x1d0] sm:$0xff]
    %v9495 = vld [vmem:[#allocation11 + $0x1d8] sm:$0xff]
    %v9496 = vld [vmem:[#allocation11 + $0x1e0] sm:$0xff]
    %v9497 = vld [vmem:[#allocation11 + $0x1e8] sm:$0xff]
    %v9498 = vld [vmem:[#allocation11 + $0x1f0] sm:$0xff]
    %v9499 = vld [vmem:[#allocation11 + $0x1f8] sm:$0xff]
    %v9500 = vpack.c.bf16 %v9432, %v9432
    %v9501 = vpack.c.bf16 %v9433, %v9433
    %v9502 = vpack.c.bf16 %v9434, %v9434
    %v9503 = vpack.c.bf16 %v9435, %v9435
    %v9504 = vld [vmem:[%s22] sm:$0x3]
    %v9506 = vperm.slane %v9504, 0
    %v9507 = vperm.slane %v9504, 1
    %v9574 = vunpack.c.l.b16 %v9436
    %v9575 = vunpack.c.h.b16 %v9436
    %v9576 = vunpack.c.l.b16 %v9437
    %v9577 = vunpack.c.h.b16 %v9437
    %v9578 = vunpack.c.l.b16 %v9438
    %v9579 = vunpack.c.h.b16 %v9438
    %v9580 = vunpack.c.l.b16 %v9439
    %v9581 = vunpack.c.h.b16 %v9439
    %v9582 = vunpack.c.l.b16 %v9440
    %v9583 = vunpack.c.h.b16 %v9440
    %v9584 = vunpack.c.l.b16 %v9441
    %v9585 = vunpack.c.h.b16 %v9441
    %v9586 = vunpack.c.l.b16 %v9442
    %v9587 = vunpack.c.h.b16 %v9442
    %v9588 = vunpack.c.l.b16 %v9443
    %v9589 = vunpack.c.h.b16 %v9443
    %v9590 = vunpack.c.l.b16 %v9444
    %v9591 = vunpack.c.h.b16 %v9444
    %v9592 = vunpack.c.l.b16 %v9445
    %v9593 = vunpack.c.h.b16 %v9445
    %v9594 = vunpack.c.l.b16 %v9446
    %v9595 = vunpack.c.h.b16 %v9446
    %v9596 = vunpack.c.l.b16 %v9447
    %v9597 = vunpack.c.h.b16 %v9447
    %v9598 = vunpack.c.l.b16 %v9448
    %v9599 = vunpack.c.h.b16 %v9448
    %v9600 = vunpack.c.l.b16 %v9449
    %v9601 = vunpack.c.h.b16 %v9449
    %v9602 = vunpack.c.l.b16 %v9450
    %v9603 = vunpack.c.h.b16 %v9450
    %v9604 = vunpack.c.l.b16 %v9451
    %v9605 = vunpack.c.h.b16 %v9451
    %v9606 = vunpack.c.l.b16 %v9452
    %v9607 = vunpack.c.h.b16 %v9452
    %v9608 = vunpack.c.l.b16 %v9453
    %v9609 = vunpack.c.h.b16 %v9453
    %v9610 = vunpack.c.l.b16 %v9454
    %v9611 = vunpack.c.h.b16 %v9454
    %v9612 = vunpack.c.l.b16 %v9455
    %v9613 = vunpack.c.h.b16 %v9455
    %v9614 = vunpack.c.l.b16 %v9456
    %v9615 = vunpack.c.h.b16 %v9456
    %v9616 = vunpack.c.l.b16 %v9457
    %v9617 = vunpack.c.h.b16 %v9457
    %v9618 = vunpack.c.l.b16 %v9458
    %v9619 = vunpack.c.h.b16 %v9458
    %v9620 = vunpack.c.l.b16 %v9459
    %v9621 = vunpack.c.h.b16 %v9459
    %v9622 = vunpack.c.l.b16 %v9460
    %v9623 = vunpack.c.h.b16 %v9460
    %v9624 = vunpack.c.l.b16 %v9461
    %v9625 = vunpack.c.h.b16 %v9461
    %v9626 = vunpack.c.l.b16 %v9462
    %v9627 = vunpack.c.h.b16 %v9462
    %v9628 = vunpack.c.l.b16 %v9463
    %v9629 = vunpack.c.h.b16 %v9463
    %v9630 = vunpack.c.l.b16 %v9464
    %v9631 = vunpack.c.h.b16 %v9464
    %v9632 = vunpack.c.l.b16 %v9465
    %v9633 = vunpack.c.h.b16 %v9465
    %v9634 = vunpack.c.l.b16 %v9466
    %v9635 = vunpack.c.h.b16 %v9466
    %v9636 = vunpack.c.l.b16 %v9467
    %v9637 = vunpack.c.h.b16 %v9467
    %v9638 = vunpack.c.l.b16 %v9468
    %v9639 = vunpack.c.h.b16 %v9468
    %v9640 = vunpack.c.l.b16 %v9469
    %v9641 = vunpack.c.h.b16 %v9469
    %v9642 = vunpack.c.l.b16 %v9470
    %v9643 = vunpack.c.h.b16 %v9470
    %v9644 = vunpack.c.l.b16 %v9471
    %v9645 = vunpack.c.h.b16 %v9471
    %v9646 = vunpack.c.l.b16 %v9472
    %v9647 = vunpack.c.h.b16 %v9472
    %v9648 = vunpack.c.l.b16 %v9473
    %v9649 = vunpack.c.h.b16 %v9473
    %v9650 = vunpack.c.l.b16 %v9474
    %v9651 = vunpack.c.h.b16 %v9474
    %v9652 = vunpack.c.l.b16 %v9475
    %v9653 = vunpack.c.h.b16 %v9475
    %v9654 = vunpack.c.l.b16 %v9476
    %v9655 = vunpack.c.h.b16 %v9476
    %v9656 = vunpack.c.l.b16 %v9477
    %v9657 = vunpack.c.h.b16 %v9477
    %v9658 = vunpack.c.l.b16 %v9478
    %v9659 = vunpack.c.h.b16 %v9478
    %v9660 = vunpack.c.l.b16 %v9479
    %v9661 = vunpack.c.h.b16 %v9479
    %v9662 = vunpack.c.l.b16 %v9480
    %v9663 = vunpack.c.h.b16 %v9480
    %v9664 = vunpack.c.l.b16 %v9481
    %v9665 = vunpack.c.h.b16 %v9481
    %v9666 = vunpack.c.l.b16 %v9482
    %v9667 = vunpack.c.h.b16 %v9482
    %v9668 = vunpack.c.l.b16 %v9483
    %v9669 = vunpack.c.h.b16 %v9483
    %v9670 = vunpack.c.l.b16 %v9484
    %v9671 = vunpack.c.h.b16 %v9484
    %v9672 = vunpack.c.l.b16 %v9485
    %v9673 = vunpack.c.h.b16 %v9485
    %v9674 = vunpack.c.l.b16 %v9486
    %v9675 = vunpack.c.h.b16 %v9486
    %v9676 = vunpack.c.l.b16 %v9487
    %v9677 = vunpack.c.h.b16 %v9487
    %v9678 = vunpack.c.l.b16 %v9488
    %v9679 = vunpack.c.h.b16 %v9488
    %v9680 = vunpack.c.l.b16 %v9489
    %v9681 = vunpack.c.h.b16 %v9489
    %v9682 = vunpack.c.l.b16 %v9490
    %v9683 = vunpack.c.h.b16 %v9490
    %v9684 = vunpack.c.l.b16 %v9491
    %v9685 = vunpack.c.h.b16 %v9491
    %v9686 = vunpack.c.l.b16 %v9492
    %v9687 = vunpack.c.h.b16 %v9492
    %v9688 = vunpack.c.l.b16 %v9493
    %v9689 = vunpack.c.h.b16 %v9493
    %v9690 = vunpack.c.l.b16 %v9494
    %v9691 = vunpack.c.h.b16 %v9494
    %v9692 = vunpack.c.l.b16 %v9495
    %v9693 = vunpack.c.h.b16 %v9495
    %v9694 = vunpack.c.l.b16 %v9496
    %v9695 = vunpack.c.h.b16 %v9496
    %v9696 = vunpack.c.l.b16 %v9497
    %v9697 = vunpack.c.h.b16 %v9497
    %v9698 = vunpack.c.l.b16 %v9498
    %v9699 = vunpack.c.h.b16 %v9498
    %v9700 = vunpack.c.l.b16 %v9499
    %v9701 = vunpack.c.h.b16 %v9499
    %v9702 = vpack.c.b16 %v9576, %v9574
    %v9703 = vpack.c.b16 %v9577, %v9575
    %v9704 = vpack.c.b16 %v9580, %v9578
    %v9705 = vpack.c.b16 %v9581, %v9579
    %v9706 = vpack.c.b16 %v9584, %v9582
    %v9707 = vpack.c.b16 %v9585, %v9583
    %v9708 = vpack.c.b16 %v9588, %v9586
    %v9709 = vpack.c.b16 %v9589, %v9587
    %v9710 = vpack.c.b16 %v9592, %v9590
    %v9711 = vpack.c.b16 %v9593, %v9591
    %v9712 = vpack.c.b16 %v9596, %v9594
    %v9713 = vpack.c.b16 %v9597, %v9595
    %v9714 = vpack.c.b16 %v9600, %v9598
    %v9715 = vpack.c.b16 %v9601, %v9599
    %v9716 = vpack.c.b16 %v9604, %v9602
    %v9717 = vpack.c.b16 %v9605, %v9603
    %v9718 = vpack.c.b16 %v9608, %v9606
    %v9719 = vpack.c.b16 %v9609, %v9607
    %v9720 = vpack.c.b16 %v9612, %v9610
    %v9721 = vpack.c.b16 %v9613, %v9611
    %v9722 = vpack.c.b16 %v9616, %v9614
    %v9723 = vpack.c.b16 %v9617, %v9615
    %v9724 = vpack.c.b16 %v9620, %v9618
    %v9725 = vpack.c.b16 %v9621, %v9619
    %v9726 = vpack.c.b16 %v9624, %v9622
    %v9727 = vpack.c.b16 %v9625, %v9623
    %v9728 = vpack.c.b16 %v9628, %v9626
    %v9729 = vpack.c.b16 %v9629, %v9627
    %v9730 = vpack.c.b16 %v9632, %v9630
    %v9731 = vpack.c.b16 %v9633, %v9631
    %v9732 = vpack.c.b16 %v9636, %v9634
    %v9733 = vpack.c.b16 %v9637, %v9635
    %v9734 = vpack.c.b16 %v9640, %v9638
    %v9735 = vpack.c.b16 %v9641, %v9639
    %v9736 = vpack.c.b16 %v9644, %v9642
    %v9737 = vpack.c.b16 %v9645, %v9643
    %v9738 = vpack.c.b16 %v9648, %v9646
    %v9739 = vpack.c.b16 %v9649, %v9647
    %v9740 = vpack.c.b16 %v9652, %v9650
    %v9741 = vpack.c.b16 %v9653, %v9651
    %v9742 = vpack.c.b16 %v9656, %v9654
    %v9743 = vpack.c.b16 %v9657, %v9655
    %v9744 = vpack.c.b16 %v9660, %v9658
    %v9745 = vpack.c.b16 %v9661, %v9659
    %v9746 = vpack.c.b16 %v9664, %v9662
    %v9747 = vpack.c.b16 %v9665, %v9663
    %v9748 = vpack.c.b16 %v9668, %v9666
    %v9749 = vpack.c.b16 %v9669, %v9667
    %v9750 = vpack.c.b16 %v9672, %v9670
    %v9751 = vpack.c.b16 %v9673, %v9671
    %v9752 = vpack.c.b16 %v9676, %v9674
    %v9753 = vpack.c.b16 %v9677, %v9675
    %v9754 = vpack.c.b16 %v9680, %v9678
    %v9755 = vpack.c.b16 %v9681, %v9679
    %v9756 = vpack.c.b16 %v9684, %v9682
    %v9757 = vpack.c.b16 %v9685, %v9683
    %v9758 = vpack.c.b16 %v9688, %v9686
    %v9759 = vpack.c.b16 %v9689, %v9687
    %v9760 = vpack.c.b16 %v9692, %v9690
    %v9761 = vpack.c.b16 %v9693, %v9691
    %v9762 = vpack.c.b16 %v9696, %v9694
    %v9763 = vpack.c.b16 %v9697, %v9695
    %v9764 = vpack.c.b16 %v9700, %v9698
    %v9765 = vpack.c.b16 %v9701, %v9699
    %9830 = vmatpush.bf16.msra.mxu0 %v9716
    %9831 = vmatpush.bf16.msra.mxu0 %v9714
    %9832 = vmatpush.bf16.msra.mxu0 %v9712
    %9833 = vmatpush.bf16.msra.mxu0 %v9710
    %9834 = vmatpush.bf16.msra.mxu0 %v9708
    %9835 = vmatpush.bf16.msra.mxu0 %v9706
    %9836 = vmatpush.bf16.msra.mxu0 %v9704
    %9837 = vmatpush.bf16.msra.mxu0 %v9702
    %9838 = vmatmul.bf16.gmra.mxu0 %v9500
    %v9839 = vpop.f32.mrf.mxu0
    %v9840 = vadd.f32 %v9506, %v9839
    %v9841 = vpop.f32.mrf.mxu0
    %9842 = vdwg.mxu0
    %9843 = vmatpush.bf16.msra.mxu0 %v9732
    %9844 = vmatpush.bf16.msra.mxu0 %v9730
    %9845 = vmatpush.bf16.msra.mxu0 %v9728
    %9846 = vmatpush.bf16.msra.mxu0 %v9726
    %9847 = vmatpush.bf16.msra.mxu0 %v9724
    %9848 = vmatpush.bf16.msra.mxu0 %v9722
    %9849 = vmatpush.bf16.msra.mxu0 %v9720
    %9850 = vmatpush.bf16.msra.mxu0 %v9718
    %9851 = vmatmul.bf16.gmra.mxu0 %v9501
    %v9852 = vpop.f32.mrf.mxu0
    %v9853 = vadd.f32 %v9840, %v9852
    %v9854 = vpop.f32.mrf.mxu0
    %9855 = vdwg.mxu0
    %9856 = vmatpush.bf16.msra.mxu0 %v9748
    %9857 = vmatpush.bf16.msra.mxu0 %v9746
    %9858 = vmatpush.bf16.msra.mxu0 %v9744
    %9859 = vmatpush.bf16.msra.mxu0 %v9742
    %9860 = vmatpush.bf16.msra.mxu0 %v9740
    %9861 = vmatpush.bf16.msra.mxu0 %v9738
    %9862 = vmatpush.bf16.msra.mxu0 %v9736
    %9863 = vmatpush.bf16.msra.mxu0 %v9734
    %9864 = vmatmul.bf16.gmra.mxu0 %v9502
    %v9865 = vpop.f32.mrf.mxu0
    %v9866 = vadd.f32 %v9853, %v9865
    %v9867 = vpop.f32.mrf.mxu0
    %9868 = vdwg.mxu0
    %9869 = vmatpush.bf16.msra.mxu0 %v9764
    %9870 = vmatpush.bf16.msra.mxu0 %v9762
    %9871 = vmatpush.bf16.msra.mxu0 %v9760
    %9872 = vmatpush.bf16.msra.mxu0 %v9758
    %9873 = vmatpush.bf16.msra.mxu0 %v9756
    %9874 = vmatpush.bf16.msra.mxu0 %v9754
    %9875 = vmatpush.bf16.msra.mxu0 %v9752
    %9876 = vmatpush.bf16.msra.mxu0 %v9750
    %9877 = vmatmul.bf16.gmra.mxu0 %v9503
    %v9878 = vpop.f32.mrf.mxu0
    %v9879 = vadd.f32 %v9866, %v9878
    %v9880 = vpop.f32.mrf.mxu0
    %9881 = vdwg.mxu0
    %9882 = vmatpush.bf16.msra.mxu0 %v9717
    %9883 = vmatpush.bf16.msra.mxu0 %v9715
    %9884 = vmatpush.bf16.msra.mxu0 %v9713
    %9885 = vmatpush.bf16.msra.mxu0 %v9711
    %9886 = vmatpush.bf16.msra.mxu0 %v9709
    %9887 = vmatpush.bf16.msra.mxu0 %v9707
    %9888 = vmatpush.bf16.msra.mxu0 %v9705
    %9889 = vmatpush.bf16.msra.mxu0 %v9703
    %9890 = vmatmul.bf16.gmra.mxu0 %v9500
    %v9891 = vpop.f32.mrf.mxu0
    %v9892 = vadd.f32 %v9507, %v9891
    %v9893 = vpop.f32.mrf.mxu0
    %9894 = vdwg.mxu0
    %9895 = vmatpush.bf16.msra.mxu0 %v9733
    %9896 = vmatpush.bf16.msra.mxu0 %v9731
    %9897 = vmatpush.bf16.msra.mxu0 %v9729
    %9898 = vmatpush.bf16.msra.mxu0 %v9727
    %9899 = vmatpush.bf16.msra.mxu0 %v9725
    %9900 = vmatpush.bf16.msra.mxu0 %v9723
    %9901 = vmatpush.bf16.msra.mxu0 %v9721
    %9902 = vmatpush.bf16.msra.mxu0 %v9719
    %9903 = vmatmul.bf16.gmra.mxu0 %v9501
    %v9904 = vpop.f32.mrf.mxu0
    %v9905 = vadd.f32 %v9892, %v9904
    %v9906 = vpop.f32.mrf.mxu0
    %9907 = vdwg.mxu0
    %9908 = vmatpush.bf16.msra.mxu0 %v9749
    %9909 = vmatpush.bf16.msra.mxu0 %v9747
    %9910 = vmatpush.bf16.msra.mxu0 %v9745
    %9911 = vmatpush.bf16.msra.mxu0 %v9743
    %9912 = vmatpush.bf16.msra.mxu0 %v9741
    %9913 = vmatpush.bf16.msra.mxu0 %v9739
    %9914 = vmatpush.bf16.msra.mxu0 %v9737
    %9915 = vmatpush.bf16.msra.mxu0 %v9735
    %9916 = vmatmul.bf16.gmra.mxu0 %v9502
    %v9917 = vpop.f32.mrf.mxu0
    %v9918 = vadd.f32 %v9905, %v9917
    %v9919 = vpop.f32.mrf.mxu0
    %9920 = vdwg.mxu0
    %9921 = vmatpush.bf16.msra.mxu0 %v9765
    %9922 = vmatpush.bf16.msra.mxu0 %v9763
    %9923 = vmatpush.bf16.msra.mxu0 %v9761
    %9924 = vmatpush.bf16.msra.mxu0 %v9759
    %9925 = vmatpush.bf16.msra.mxu0 %v9757
    %9926 = vmatpush.bf16.msra.mxu0 %v9755
    %9927 = vmatpush.bf16.msra.mxu0 %v9753
    %9928 = vmatpush.bf16.msra.mxu0 %v9751
    %9929 = vmatmul.bf16.gmra.mxu0 %v9503
    %v9930 = vpop.f32.mrf.mxu0
    %v9931 = vadd.f32 %v9918, %v9930
    %v9932 = vpop.f32.mrf.mxu0
    %9933 = vdwg.mxu0
    %v9934 = vmax.f32 %v9879, 0.0
    %v9935 = vmax.f32 %v9931, 0.0
    %v9936 = vld [vmem:[%s23] sm:$0xff]
    %v9937 = vld [vmem:[%s23 + $0x8] sm:$0xff]
    %v9938 = vld [vmem:[%s23 + $0x10] sm:$0xff]
    %v9939 = vld [vmem:[%s23 + $0x18] sm:$0xff]
    %v9940 = vld [vmem:[%s23 + $0x20] sm:$0xff]
    %v9941 = vld [vmem:[%s23 + $0x28] sm:$0xff]
    %v9942 = vld [vmem:[%s23 + $0x30] sm:$0xff]
    %v9943 = vld [vmem:[%s23 + $0x38] sm:$0xff]
    %v9944 = vld [vmem:[%s23 + $0x40] sm:$0xff]
    %v9945 = vld [vmem:[%s23 + $0x48] sm:$0xff]
    %v9946 = vld [vmem:[%s23 + $0x50] sm:$0xff]
    %v9947 = vld [vmem:[%s23 + $0x58] sm:$0xff]
    %v9948 = vld [vmem:[%s23 + $0x60] sm:$0xff]
    %v9949 = vld [vmem:[%s23 + $0x68] sm:$0xff]
    %v9950 = vld [vmem:[%s23 + $0x70] sm:$0xff]
    %v9951 = vld [vmem:[%s23 + $0x78] sm:$0xff]
    %v9952 = vld [vmem:[%s23 + $0x80] sm:$0xff]
    %v9953 = vld [vmem:[%s23 + $0x88] sm:$0xff]
    %v9954 = vld [vmem:[%s23 + $0x90] sm:$0xff]
    %v9955 = vld [vmem:[%s23 + $0x98] sm:$0xff]
    %v9956 = vld [vmem:[%s23 + $0xa0] sm:$0xff]
    %v9957 = vld [vmem:[%s23 + $0xa8] sm:$0xff]
    %v9958 = vld [vmem:[%s23 + $0xb0] sm:$0xff]
    %v9959 = vld [vmem:[%s23 + $0xb8] sm:$0xff]
    %v9960 = vld [vmem:[%s23 + $0xc0] sm:$0xff]
    %v9961 = vld [vmem:[%s23 + $0xc8] sm:$0xff]
    %v9962 = vld [vmem:[%s23 + $0xd0] sm:$0xff]
    %v9963 = vld [vmem:[%s23 + $0xd8] sm:$0xff]
    %v9964 = vld [vmem:[%s23 + $0xe0] sm:$0xff]
    %v9965 = vld [vmem:[%s23 + $0xe8] sm:$0xff]
    %v9966 = vld [vmem:[%s23 + $0xf0] sm:$0xff]
    %v9967 = vld [vmem:[%s23 + $0xf8] sm:$0xff]
    %v9968 = vld [vmem:[%s24] sm:$0x1]
    %v9970 = vperm.slane %v9968, 0
    %9972 = vmatpush.msra.mxu0 %v9951
    %9973 = vmatpush.msra.mxu0 %v9950
    %9974 = vmatpush.msra.mxu0 %v9949
    %9975 = vmatpush.msra.mxu0 %v9948
    %9976 = vmatpush.msra.mxu0 %v9947
    %9977 = vmatpush.msra.mxu0 %v9946
    %9978 = vmatpush.msra.mxu0 %v9945
    %9979 = vmatpush.msra.mxu0 %v9944
    %9980 = vmatpush.msra.mxu0 %v9943
    %9981 = vmatpush.msra.mxu0 %v9942
    %9982 = vmatpush.msra.mxu0 %v9941
    %9983 = vmatpush.msra.mxu0 %v9940
    %9984 = vmatpush.msra.mxu0 %v9939
    %9985 = vmatpush.msra.mxu0 %v9938
    %9986 = vmatpush.msra.mxu0 %v9937
    %9987 = vmatpush.msra.mxu0 %v9936
    %9988 = vmatmul.f32.gmra.mxu0 %v9934
    %v9989 = vpop.f32.mrf.mxu0
    %v9990 = vadd.f32 %v9970, %v9989
    %9991 = vdwg.mxu0
    %9992 = vmatpush.msra.mxu0 %v9967
    %9993 = vmatpush.msra.mxu0 %v9966
    %9994 = vmatpush.msra.mxu0 %v9965
    %9995 = vmatpush.msra.mxu0 %v9964
    %9996 = vmatpush.msra.mxu0 %v9963
    %9997 = vmatpush.msra.mxu0 %v9962
    %9998 = vmatpush.msra.mxu0 %v9961
    %9999 = vmatpush.msra.mxu0 %v9960
    %10000 = vmatpush.msra.mxu0 %v9959
    %10001 = vmatpush.msra.mxu0 %v9958
    %10002 = vmatpush.msra.mxu0 %v9957
    %10003 = vmatpush.msra.mxu0 %v9956
    %10004 = vmatpush.msra.mxu0 %v9955
    %10005 = vmatpush.msra.mxu0 %v9954
    %10006 = vmatpush.msra.mxu0 %v9953
    %10007 = vmatpush.msra.mxu0 %v9952
    %10008 = vmatmul.f32.gmra.mxu0 %v9935
    %v10009 = vpop.f32.mrf.mxu0
    %v10010 = vadd.f32 %v9990, %v10009
    %10011 = vdwg.mxu0
    %10012 = vst [vmem:[#allocation13] sm:$0xff] %v10010
    // Predicated region
    $region126: #{tpu_custom_call.1} parent=1 // pred_check
      _
    $region127: #{tpu_custom_call.1} parent=1 // pred_check_branch
      %10014 = sbr.rel (0) target = $region129
    $region128: #{tpu_custom_call.1} parent=1 // pred_region
      %10016 = vsyncadd [#allocation4], 0
      %s10018 = sshll.u32 [#allocation13], 4
      %s10019 = int_to_ptr.vmem [resolvable:$true] %s10018
      %s10020 = sshll.u32 %s25, 4
      %s10021 = int_to_ptr.hbm [resolvable:$true] %s10020
      %10023 = dma.vmem_to_hbm [thread:$0]  %s10019, 128, %s10021, [#allocation4]
    $region129: #{tpu_custom_call.1} parent=1 // pred_fallthru
      _
    // Predicated region
    $region130: #{tpu_custom_call.1} parent=1 // pred_check
      _
    $region131: #{tpu_custom_call.1} parent=1 // pred_check_branch
      %10025 = sbr.rel (0) target = $region133
    $region132: #{tpu_custom_call.1} parent=1 // pred_region
      %10027 = dma.done [#allocation4], 128
    $region133: #{tpu_custom_call.1} parent=1 // pred_fallthru
      _
    %10028 = vsyncpa [#allocation3], 1
    %10029 = vsyncpa [#allocation6], 1
    %10030 = vsyncpa [#allocation9], 1
    %10031 = vsyncpa [#allocation12], 1
    %10032 = vsyncpa [#allocation4], 1

</llo_original>
